<compile_context>
chip_gen: v7x
topology: tpu7x:2x2x1
jax: 0.10.0
libtpu: 0.0.40
codegen_flags: <defaults>
</compile_context>

<pallas_src>
import functools

import jax
import jax.numpy as jnp
from jax.experimental import pallas as pl
from jax.experimental.pallas import tpu as pltpu


# ---------------------------------------------------------------------------
# Shared 9-tap (1,3,3) conv gather: accumulating matmuls on shifted flat views
# of a ((H+4)*Wp, Cin) zero-padded, channels-last slab.
# ---------------------------------------------------------------------------
def _conv_taps(x_ref, w_ref, Hr, tap_offsets):
    acc = jnp.dot(x_ref[pl.ds(tap_offsets[0], Hr), :], w_ref[0],
                  preferred_element_type=jnp.float32)
    for k in range(1, 9):
        acc = acc + jnp.dot(x_ref[pl.ds(tap_offsets[k], Hr), :], w_ref[k],
                            preferred_element_type=jnp.float32)
    return acc  # (Hr, Cpad) f32, stays local (never round-trips an out ref)


# ---------------------------------------------------------------------------
# Pass 1: per-(batch, frame) partial GroupNorm stats of the raw conv output.
# No conv intermediate is materialized in HBM.
# ---------------------------------------------------------------------------
def _conv_stats_kernel(x_ref, w_ref, stats_ref, *, H, W, Wp, tap_offsets):
    # x_ref:     ((H+4)*Wp, Cin) bf16   zero-padded, row-major over (H+4, Wp)
    # w_ref:     (9, Cin, Cpad)  bf16   tap-major conv weight (lane padded)
    # stats_ref: (2, Cpad)       f32    row 0: sum(y), row 1: sum(y*y) over the
    #                                   H*W valid positions of this slab
    Hr = H * Wp
    acc = _conv_taps(x_ref, w_ref, Hr, tap_offsets)

    # Mask out the junk (width-pad) columns of every row for the stats.
    u = jax.lax.broadcasted_iota(jnp.int32, (Hr, 1), 0) % Wp
    valid = jnp.logical_and(u >= 1, u <= W).astype(jnp.float32)       # (Hr, 1)
    am = acc * valid
    stats_ref[0:1, :] = jnp.sum(am, axis=0, keepdims=True)
    stats_ref[1:2, :] = jnp.sum(am * am, axis=0, keepdims=True)


# ---------------------------------------------------------------------------
# Pass 2: recompute the conv, apply the folded per-(batch, channel) affine
# (conv bias + GroupNorm + optional scale/shift) and SiLU, store Cout lanes.
# ---------------------------------------------------------------------------
def _conv_affine_silu_kernel(x_ref, w_ref, a_ref, b_ref, o_ref, *,
                             H, W, Wp, tap_offsets):
    # a_ref, b_ref: (1, Cout) f32 folded affine;  o_ref: (Hr, Cout)
    Hr = H * Wp
    cout = o_ref.shape[-1]
    acc = _conv_taps(x_ref, w_ref, Hr, tap_offsets)[:, :cout]   # drop lane pad
    z = acc * a_ref[...] + b_ref[...]
    # exact SiLU, single EUP op:  z * sigmoid(z) = 0.5 * z * (1 + tanh(z/2))
    o_ref[...] = (0.5 * z * (jnp.tanh(0.5 * z) + 1.0)).astype(o_ref.dtype)


def block_forward(x, w, b, gamma, beta, scale_shift=None, *, groups=8, eps=1e-5):
    """x: (B, Cin, T, H, W) float32 (NCDHW). Returns (B, Cout, T, H, W) f32."""
    B, Cin, T, H, W = x.shape
    Cout = w.shape[0]
    assert Cout % groups == 0, "dim_out must be divisible by groups"

    LANE = 128
    Cpad = ((Cout + LANE - 1) // LANE) * LANE   # lane-dense matmul N dim
    Wp = W + 2                                  # width incl. two zero-pad cols
    Hpad = H + 4                                # 2 top / 2 bottom pad rows
    Hr = H * Wp                                 # flat rows per (b, t) slab

    # ---- layout glue (read ~2x input instead of a 9x im2col) ----
    x_cl = jnp.transpose(x, (0, 2, 3, 4, 1))                     # (B,T,H,W,Cin)
    x_pad = jnp.pad(x_cl, ((0, 0), (0, 0), (2, 2), (1, 1), (0, 0)))
    x_flat = x_pad.reshape(B, T, Hpad * Wp, Cin).astype(jnp.bfloat16)

    # conv weight (Cout,Cin,1,3,3) -> (kh,kw,Cin,Cout) -> (9, Cin, Cpad), bf16
    wk = jnp.transpose(w[:, :, 0], (2, 3, 1, 0)).reshape(9, Cin, Cout)
    wk = jnp.pad(wk, ((0, 0), (0, 0), (0, Cpad - Cout))).astype(jnp.bfloat16)

    # flat offset of tap (dh, dw) relative to the flat output index
    tap_offsets = tuple((dh + 1) * Wp + dw - 1
                        for dh in range(3) for dw in range(3))

    cparams = pltpu.CompilerParams(
        dimension_semantics=("parallel", "parallel"),
        vmem_limit_bytes=32 * 1024 * 1024)

    # ---- pass 1: stats only ----
    k1 = functools.partial(_conv_stats_kernel, H=H, W=W, Wp=Wp,
                           tap_offsets=tap_offsets)
    stats = pl.pallas_call(
        k1,
        out_shape=jax.ShapeDtypeStruct((B, T, 2, Cpad), jnp.float32),
        grid_spec=pltpu.PrefetchScalarGridSpec(
            num_scalar_prefetch=0,
            grid=(B, T),
            in_specs=[
                pl.BlockSpec((None, None, Hpad * Wp, Cin),
                             lambda bi, ti: (bi, ti, 0, 0)),
                pl.BlockSpec((9, Cin, Cpad), lambda bi, ti: (0, 0, 0)),
            ],
            out_specs=pl.BlockSpec((None, None, 2, Cpad),
                                   lambda bi, ti: (bi, ti, 0, 0)),
        ),
        compiler_params=cparams,
    )(x_flat, wk)

    # ---- tiny (B, C)-sized reduction + affine fold (plain JAX / f32) ----
    psum = stats.sum(axis=1)                     # (B, 2, Cpad)
    s_sum = psum[:, 0, :Cout]
    ss_sum = psum[:, 1, :Cout]
    Mcnt = jnp.float32(T * H * W)
    mu = s_sum / Mcnt                            # per-channel mean of raw y
    m2 = ss_sum / Mcnt                           # per-channel E[y^2]

    bvec = b.astype(jnp.float32)[None, :]        # (1, Cout) conv bias
    mean_cb = mu + bvec                          # mean of (y + bias)
    m2_cb = m2 + 2.0 * bvec * mu + bvec * bvec   # E[(y + bias)^2]

    Cg = Cout // groups
    mean_g = mean_cb.reshape(B, groups, Cg).mean(axis=-1)          # (B, G)
    m2_g = m2_cb.reshape(B, groups, Cg).mean(axis=-1)
    # NOTE: E[y^2] - E[y]^2 in f32 can lose precision when |mean| >> std; fine
    # at DDPM activation scales (documented review concern).
    var_g = jnp.maximum(m2_g - mean_g * mean_g, 0.0)
    inv_g = jax.lax.rsqrt(var_g + eps)
    mean_c = jnp.repeat(mean_g, Cg, axis=1)                        # (B, Cout)
    inv_c = jnp.repeat(inv_g, Cg, axis=1)

    gam = gamma.astype(jnp.float32)[None, :]
    bet = beta.astype(jnp.float32)[None, :]
    if scale_shift is None:
        sc1 = jnp.ones((B, Cout), jnp.float32)
        sh = jnp.zeros((B, Cout), jnp.float32)
    else:
        scale, shift = scale_shift
        sc1 = scale.reshape(B, Cout).astype(jnp.float32) + 1.0
        sh = shift.reshape(B, Cout).astype(jnp.float32)

    # out = SiLU(A*y + Bc) == SiLU(((y + b - mean)*inv*gamma + beta)*(scale+1)+shift)
    A = inv_c * gam * sc1
    Bc = ((bvec - mean_c) * inv_c * gam + bet) * sc1 + sh
    a_in = A[:, None, :]                          # (B, 1, Cout)
    b_in = Bc[:, None, :]

    # ---- pass 2: conv recompute + fused affine + SiLU ----
    k2 = functools.partial(_conv_affine_silu_kernel, H=H, W=W, Wp=Wp,
                           tap_offsets=tap_offsets)
    out_flat = pl.pallas_call(
        k2,
        out_shape=jax.ShapeDtypeStruct((B, T, Hr, Cout), jnp.float32),
        grid_spec=pltpu.PrefetchScalarGridSpec(
            num_scalar_prefetch=0,
            grid=(B, T),
            in_specs=[
                pl.BlockSpec((None, None, Hpad * Wp, Cin),
                             lambda bi, ti: (bi, ti, 0, 0)),
                pl.BlockSpec((9, Cin, Cpad), lambda bi, ti: (0, 0, 0)),
                pl.BlockSpec((None, 1, Cout), lambda bi, ti: (bi, 0, 0)),
                pl.BlockSpec((None, 1, Cout), lambda bi, ti: (bi, 0, 0)),
            ],
            out_specs=pl.BlockSpec((None, None, Hr, Cout),
                                   lambda bi, ti: (bi, ti, 0, 0)),
        ),
        compiler_params=cparams,
    )(x_flat, wk, a_in, b_in)

    # Width-pad column removal fuses into the (interface-mandated) transpose.
    out = out_flat.reshape(B, T, H, Wp, Cout)[:, :, :, 1:W + 1, :]
    return jnp.transpose(out, (0, 4, 1, 2, 3))                     # NCDHW


# ---------------- pure-JAX reference for validation ----------------
def block_reference(x, w, b, gamma, beta, scale_shift, groups=8, eps=1e-5):
    y = jax.lax.conv_general_dilated(
        x, w, window_strides=(1, 1, 1),
        padding=((0, 0), (1, 1), (1, 1)),
        dimension_numbers=("NCDHW", "OIDHW", "NCDHW"))
    y = y + b[None, :, None, None, None]
    B, C = y.shape[0], y.shape[1]
    G = groups
    yg = y.reshape(B, G, C // G, *y.shape[2:])
    mean = yg.mean(axis=(2, 3, 4, 5), keepdims=True)
    var = ((yg - mean) ** 2).mean(axis=(2, 3, 4, 5), keepdims=True)
    yn = ((yg - mean) / jnp.sqrt(var + eps)).reshape(y.shape)
    yn = yn * gamma[None, :, None, None, None] + beta[None, :, None, None, None]
    if scale_shift is not None:
        scale, shift = scale_shift
        yn = yn * (scale + 1.0) + shift
    return yn * jax.nn.sigmoid(yn)


if __name__ == "__main__":
    key = jax.random.PRNGKey(0)
    B, Cin, Cout, T, H, W, groups = 2, 8, 16, 4, 16, 16, 8

    k = jax.random.split(key, 7)
    x = jax.random.normal(k[0], (B, Cin, T, H, W), jnp.float32)
    w = 0.1 * jax.random.normal(k[1], (Cout, Cin, 1, 3, 3), jnp.float32)
    b = 0.1 * jax.random.normal(k[2], (Cout,), jnp.float32)
    gamma = 1.0 + 0.1 * jax.random.normal(k[3], (Cout,), jnp.float32)
    beta = 0.1 * jax.random.normal(k[4], (Cout,), jnp.float32)
    scale = 0.2 * jax.random.normal(k[5], (B, Cout, 1, 1, 1), jnp.float32)
    shift = 0.2 * jax.random.normal(k[6], (B, Cout, 1, 1, 1), jnp.float32)
    scale_shift = (scale, shift)

    fwd = jax.jit(functools.partial(block_forward, groups=groups))

    out = jax.block_until_ready(fwd(x, w, b, gamma, beta, scale_shift))
    ref = jax.block_until_ready(
        block_reference(x, w, b, gamma, beta, scale_shift, groups=groups))
    assert out.shape == (B, Cout, T, H, W), out.shape
    err = float(jnp.max(jnp.abs(out - ref)))
    # bf16 MXU operands -> small extra error vs the f32 reference
    assert err < 5e-2, f"max abs error too large: {err}"

    # also exercise the scale_shift=None path
    out2 = jax.block_until_ready(fwd(x, w, b, gamma, beta, None))
    ref2 = jax.block_until_ready(
        block_reference(x, w, b, gamma, beta, None, groups=groups))
    err2 = float(jnp.max(jnp.abs(out2 - ref2)))
    assert err2 < 5e-2, f"max abs error (no scale_shift) too large: {err2}"

    print("KERNEL_OK")
</pallas_src>

<mosaic_0001>
module attributes {stable_mosaic.version = 11 : i64} {
  func.func @_conv_stats_kernel(%arg0: i32, %arg1: i32, %arg2: memref<1x1x360x8xbf16, #tpu.memory_space<vmem>>, %arg3: memref<9x8x128xbf16, #tpu.memory_space<vmem>>, %arg4: memref<1x1x2x128xf32, #tpu.memory_space<vmem>>) attributes {dimension_semantics = [#tpu.dimension_semantics<parallel>, #tpu.dimension_semantics<parallel>], iteration_bounds = array<i64: 2, 4>, scalar_prefetch = 0 : i64, scratch_operands = 0 : i64, tpu.core_type = #tpu.core_type<tc>, window_params = [{transform_indices = @transform_0, window_bounds = array<i64: 1, 1, 360, 8>}, {pipeline_mode = #tpu.pipeline_mode<synchronous>, transform_indices = @transform_1, window_bounds = array<i64: 9, 8, 128>}, {transform_indices = @transform_2, window_bounds = array<i64: 1, 1, 2, 128>}]} {
    %c0 = arith.constant 0 : index
    %c0_0 = arith.constant 0 : index
    %c17 = arith.constant 17 : index
    %c0_1 = arith.constant 0 : index
    %0 = vector.load %arg2[%c0, %c0_0, %c17, %c0_1] : memref<1x1x360x8xbf16, #tpu.memory_space<vmem>>, vector<1x1x288x8xbf16>
    %1 = vector.shape_cast %0 : vector<1x1x288x8xbf16> to vector<288x8xbf16>
    %c0_2 = arith.constant 0 : index
    %c0_3 = arith.constant 0 : index
    %c0_4 = arith.constant 0 : index
    %2 = vector.load %arg3[%c0_2, %c0_3, %c0_4] : memref<9x8x128xbf16, #tpu.memory_space<vmem>>, vector<1x8x128xbf16>
    %3 = vector.shape_cast %2 : vector<1x8x128xbf16> to vector<8x128xbf16>
    %cst = arith.constant dense<0.000000e+00> : vector<288x128xf32>
    %4 = tpu.matmul %1, %3, %cst {dimension_numbers = #tpu.dot_dimension_numbers<[1], [0], [0], [1], [0, 0, 1, 1], [], []>} : vector<288x8xbf16>, vector<8x128xbf16>, vector<288x128xf32> -> vector<288x128xf32>
    %c0_5 = arith.constant 0 : index
    %c0_6 = arith.constant 0 : index
    %c18 = arith.constant 18 : index
    %c0_7 = arith.constant 0 : index
    %5 = vector.load %arg2[%c0_5, %c0_6, %c18, %c0_7] : memref<1x1x360x8xbf16, #tpu.memory_space<vmem>>, vector<1x1x288x8xbf16>
    %6 = vector.shape_cast %5 : vector<1x1x288x8xbf16> to vector<288x8xbf16>
    %c1 = arith.constant 1 : index
    %c0_8 = arith.constant 0 : index
    %c0_9 = arith.constant 0 : index
    %7 = vector.load %arg3[%c1, %c0_8, %c0_9] : memref<9x8x128xbf16, #tpu.memory_space<vmem>>, vector<1x8x128xbf16>
    %8 = vector.shape_cast %7 : vector<1x8x128xbf16> to vector<8x128xbf16>
    %cst_10 = arith.constant dense<0.000000e+00> : vector<288x128xf32>
    %9 = tpu.matmul %6, %8, %cst_10 {dimension_numbers = #tpu.dot_dimension_numbers<[1], [0], [0], [1], [0, 0, 1, 1], [], []>} : vector<288x8xbf16>, vector<8x128xbf16>, vector<288x128xf32> -> vector<288x128xf32>
    %10 = arith.addf %4, %9 : vector<288x128xf32>
    %c0_11 = arith.constant 0 : index
    %c0_12 = arith.constant 0 : index
    %c19 = arith.constant 19 : index
    %c0_13 = arith.constant 0 : index
    %11 = vector.load %arg2[%c0_11, %c0_12, %c19, %c0_13] : memref<1x1x360x8xbf16, #tpu.memory_space<vmem>>, vector<1x1x288x8xbf16>
    %12 = vector.shape_cast %11 : vector<1x1x288x8xbf16> to vector<288x8xbf16>
    %c2 = arith.constant 2 : index
    %c0_14 = arith.constant 0 : index
    %c0_15 = arith.constant 0 : index
    %13 = vector.load %arg3[%c2, %c0_14, %c0_15] : memref<9x8x128xbf16, #tpu.memory_space<vmem>>, vector<1x8x128xbf16>
    %14 = vector.shape_cast %13 : vector<1x8x128xbf16> to vector<8x128xbf16>
    %cst_16 = arith.constant dense<0.000000e+00> : vector<288x128xf32>
    %15 = tpu.matmul %12, %14, %cst_16 {dimension_numbers = #tpu.dot_dimension_numbers<[1], [0], [0], [1], [0, 0, 1, 1], [], []>} : vector<288x8xbf16>, vector<8x128xbf16>, vector<288x128xf32> -> vector<288x128xf32>
    %16 = arith.addf %10, %15 : vector<288x128xf32>
    %c0_17 = arith.constant 0 : index
    %c0_18 = arith.constant 0 : index
    %c35 = arith.constant 35 : index
    %c0_19 = arith.constant 0 : index
    %17 = vector.load %arg2[%c0_17, %c0_18, %c35, %c0_19] : memref<1x1x360x8xbf16, #tpu.memory_space<vmem>>, vector<1x1x288x8xbf16>
    %18 = vector.shape_cast %17 : vector<1x1x288x8xbf16> to vector<288x8xbf16>
    %c3 = arith.constant 3 : index
    %c0_20 = arith.constant 0 : index
    %c0_21 = arith.constant 0 : index
    %19 = vector.load %arg3[%c3, %c0_20, %c0_21] : memref<9x8x128xbf16, #tpu.memory_space<vmem>>, vector<1x8x128xbf16>
    %20 = vector.shape_cast %19 : vector<1x8x128xbf16> to vector<8x128xbf16>
    %cst_22 = arith.constant dense<0.000000e+00> : vector<288x128xf32>
    %21 = tpu.matmul %18, %20, %cst_22 {dimension_numbers = #tpu.dot_dimension_numbers<[1], [0], [0], [1], [0, 0, 1, 1], [], []>} : vector<288x8xbf16>, vector<8x128xbf16>, vector<288x128xf32> -> vector<288x128xf32>
    %22 = arith.addf %16, %21 : vector<288x128xf32>
    %c0_23 = arith.constant 0 : index
    %c0_24 = arith.constant 0 : index
    %c36 = arith.constant 36 : index
    %c0_25 = arith.constant 0 : index
    %23 = vector.load %arg2[%c0_23, %c0_24, %c36, %c0_25] : memref<1x1x360x8xbf16, #tpu.memory_space<vmem>>, vector<1x1x288x8xbf16>
    %24 = vector.shape_cast %23 : vector<1x1x288x8xbf16> to vector<288x8xbf16>
    %c4 = arith.constant 4 : index
    %c0_26 = arith.constant 0 : index
    %c0_27 = arith.constant 0 : index
    %25 = vector.load %arg3[%c4, %c0_26, %c0_27] : memref<9x8x128xbf16, #tpu.memory_space<vmem>>, vector<1x8x128xbf16>
    %26 = vector.shape_cast %25 : vector<1x8x128xbf16> to vector<8x128xbf16>
    %cst_28 = arith.constant dense<0.000000e+00> : vector<288x128xf32>
    %27 = tpu.matmul %24, %26, %cst_28 {dimension_numbers = #tpu.dot_dimension_numbers<[1], [0], [0], [1], [0, 0, 1, 1], [], []>} : vector<288x8xbf16>, vector<8x128xbf16>, vector<288x128xf32> -> vector<288x128xf32>
    %28 = arith.addf %22, %27 : vector<288x128xf32>
    %c0_29 = arith.constant 0 : index
    %c0_30 = arith.constant 0 : index
    %c37 = arith.constant 37 : index
    %c0_31 = arith.constant 0 : index
    %29 = vector.load %arg2[%c0_29, %c0_30, %c37, %c0_31] : memref<1x1x360x8xbf16, #tpu.memory_space<vmem>>, vector<1x1x288x8xbf16>
    %30 = vector.shape_cast %29 : vector<1x1x288x8xbf16> to vector<288x8xbf16>
    %c5 = arith.constant 5 : index
    %c0_32 = arith.constant 0 : index
    %c0_33 = arith.constant 0 : index
    %31 = vector.load %arg3[%c5, %c0_32, %c0_33] : memref<9x8x128xbf16, #tpu.memory_space<vmem>>, vector<1x8x128xbf16>
    %32 = vector.shape_cast %31 : vector<1x8x128xbf16> to vector<8x128xbf16>
    %cst_34 = arith.constant dense<0.000000e+00> : vector<288x128xf32>
    %33 = tpu.matmul %30, %32, %cst_34 {dimension_numbers = #tpu.dot_dimension_numbers<[1], [0], [0], [1], [0, 0, 1, 1], [], []>} : vector<288x8xbf16>, vector<8x128xbf16>, vector<288x128xf32> -> vector<288x128xf32>
    %34 = arith.addf %28, %33 : vector<288x128xf32>
    %c0_35 = arith.constant 0 : index
    %c0_36 = arith.constant 0 : index
    %c53 = arith.constant 53 : index
    %c0_37 = arith.constant 0 : index
    %35 = vector.load %arg2[%c0_35, %c0_36, %c53, %c0_37] : memref<1x1x360x8xbf16, #tpu.memory_space<vmem>>, vector<1x1x288x8xbf16>
    %36 = vector.shape_cast %35 : vector<1x1x288x8xbf16> to vector<288x8xbf16>
    %c6 = arith.constant 6 : index
    %c0_38 = arith.constant 0 : index
    %c0_39 = arith.constant 0 : index
    %37 = vector.load %arg3[%c6, %c0_38, %c0_39] : memref<9x8x128xbf16, #tpu.memory_space<vmem>>, vector<1x8x128xbf16>
    %38 = vector.shape_cast %37 : vector<1x8x128xbf16> to vector<8x128xbf16>
    %cst_40 = arith.constant dense<0.000000e+00> : vector<288x128xf32>
    %39 = tpu.matmul %36, %38, %cst_40 {dimension_numbers = #tpu.dot_dimension_numbers<[1], [0], [0], [1], [0, 0, 1, 1], [], []>} : vector<288x8xbf16>, vector<8x128xbf16>, vector<288x128xf32> -> vector<288x128xf32>
    %40 = arith.addf %34, %39 : vector<288x128xf32>
    %c0_41 = arith.constant 0 : index
    %c0_42 = arith.constant 0 : index
    %c54 = arith.constant 54 : index
    %c0_43 = arith.constant 0 : index
    %41 = vector.load %arg2[%c0_41, %c0_42, %c54, %c0_43] : memref<1x1x360x8xbf16, #tpu.memory_space<vmem>>, vector<1x1x288x8xbf16>
    %42 = vector.shape_cast %41 : vector<1x1x288x8xbf16> to vector<288x8xbf16>
    %c7 = arith.constant 7 : index
    %c0_44 = arith.constant 0 : index
    %c0_45 = arith.constant 0 : index
    %43 = vector.load %arg3[%c7, %c0_44, %c0_45] : memref<9x8x128xbf16, #tpu.memory_space<vmem>>, vector<1x8x128xbf16>
    %44 = vector.shape_cast %43 : vector<1x8x128xbf16> to vector<8x128xbf16>
    %cst_46 = arith.constant dense<0.000000e+00> : vector<288x128xf32>
    %45 = tpu.matmul %42, %44, %cst_46 {dimension_numbers = #tpu.dot_dimension_numbers<[1], [0], [0], [1], [0, 0, 1, 1], [], []>} : vector<288x8xbf16>, vector<8x128xbf16>, vector<288x128xf32> -> vector<288x128xf32>
    %46 = arith.addf %40, %45 : vector<288x128xf32>
    %c0_47 = arith.constant 0 : index
    %c0_48 = arith.constant 0 : index
    %c55 = arith.constant 55 : index
    %c0_49 = arith.constant 0 : index
    %47 = vector.load %arg2[%c0_47, %c0_48, %c55, %c0_49] : memref<1x1x360x8xbf16, #tpu.memory_space<vmem>>, vector<1x1x288x8xbf16>
    %48 = vector.shape_cast %47 : vector<1x1x288x8xbf16> to vector<288x8xbf16>
    %c8 = arith.constant 8 : index
    %c0_50 = arith.constant 0 : index
    %c0_51 = arith.constant 0 : index
    %49 = vector.load %arg3[%c8, %c0_50, %c0_51] : memref<9x8x128xbf16, #tpu.memory_space<vmem>>, vector<1x8x128xbf16>
    %50 = vector.shape_cast %49 : vector<1x8x128xbf16> to vector<8x128xbf16>
    %cst_52 = arith.constant dense<0.000000e+00> : vector<288x128xf32>
    %51 = tpu.matmul %48, %50, %cst_52 {dimension_numbers = #tpu.dot_dimension_numbers<[1], [0], [0], [1], [0, 0, 1, 1], [], []>} : vector<288x8xbf16>, vector<8x128xbf16>, vector<288x128xf32> -> vector<288x128xf32>
    %52 = arith.addf %46, %51 : vector<288x128xf32>
    %53 = tpu.iota {dimensions = array<i32: 0>} : vector<288x1xi32>
    %c18_i32 = arith.constant 18 : i32
    %c0_i32 = arith.constant 0 : i32
    %54 = arith.cmpi eq, %c18_i32, %c0_i32 : i32
    %c1_i32 = arith.constant 1 : i32
    %55 = arith.select %54, %c1_i32, %c18_i32 : i32
    %56 = vector.broadcast %55 : i32 to vector<288x1xi32>
    %57 = arith.remsi %53, %56 : vector<288x1xi32>
    %c0_i32_53 = arith.constant 0 : i32
    %58 = vector.broadcast %c0_i32_53 : i32 to vector<288x1xi32>
    %59 = arith.cmpi ne, %57, %58 : vector<288x1xi32>
    %c0_i32_54 = arith.constant 0 : i32
    %60 = vector.broadcast %c0_i32_54 : i32 to vector<288x1xi32>
    %61 = arith.cmpi slt, %57, %60 : vector<288x1xi32>
    %c0_i32_55 = arith.constant 0 : i32
    %62 = arith.cmpi slt, %55, %c0_i32_55 : i32
    %63 = vector.broadcast %62 : i1 to vector<288x1xi1>
    %64 = vector.broadcast %63 : vector<288x1xi1> to vector<288x1xi1>
    %65 = arith.xori %61, %64 : vector<288x1xi1>
    %66 = arith.andi %65, %59 : vector<288x1xi1>
    %67 = vector.broadcast %55 : i32 to vector<288x1xi32>
    %68 = arith.addi %57, %67 : vector<288x1xi32>
    %69 = arith.select %66, %68, %57 : vector<288x1xi1>, vector<288x1xi32>
    %c1_i32_56 = arith.constant 1 : i32
    %70 = vector.broadcast %c1_i32_56 : i32 to vector<288x1xi32>
    %71 = arith.cmpi sge, %69, %70 : vector<288x1xi32>
    %c16_i32 = arith.constant 16 : i32
    %72 = vector.broadcast %c16_i32 : i32 to vector<288x1xi32>
    %73 = arith.cmpi sle, %69, %72 : vector<288x1xi32>
    %74 = arith.andi %71, %73 : vector<288x1xi1>
    %75 = arith.extui %74 : vector<288x1xi1> to vector<288x1xi32>
    %76 = arith.sitofp %75 : vector<288x1xi32> to vector<288x1xf32>
    %77 = vector.broadcast %76 : vector<288x1xf32> to vector<288x128xf32>
    %78 = arith.mulf %52, %77 : vector<288x128xf32>
    %cst_57 = arith.constant dense<0.000000e+00> : vector<128xf32>
    %79 = vector.multi_reduction <add>, %78, %cst_57 [0] : vector<288x128xf32> to vector<128xf32>
    %80 = vector.shape_cast %79 : vector<128xf32> to vector<1x128xf32>
    %c0_58 = arith.constant 0 : index
    %c0_59 = arith.constant 0 : index
    %c0_60 = arith.constant 0 : index
    %c0_61 = arith.constant 0 : index
    %81 = vector.load %arg4[%c0_58, %c0_59, %c0_60, %c0_61] : memref<1x1x2x128xf32, #tpu.memory_space<vmem>>, vector<1x1x1x128xf32>
    %82 = vector.shape_cast %81 : vector<1x1x1x128xf32> to vector<1x128xf32>
    %83 = vector.shape_cast %80 : vector<1x128xf32> to vector<1x1x1x128xf32>
    tpu.vector_store %arg4[%c0_58, %c0_59, %c0_60, %c0_61], %83 {strides = array<i32>} : memref<1x1x2x128xf32, #tpu.memory_space<vmem>>, vector<1x1x1x128xf32>,
    %84 = arith.mulf %78, %78 : vector<288x128xf32>
    %cst_62 = arith.constant dense<0.000000e+00> : vector<128xf32>
    %85 = vector.multi_reduction <add>, %84, %cst_62 [0] : vector<288x128xf32> to vector<128xf32>
    %86 = vector.shape_cast %85 : vector<128xf32> to vector<1x128xf32>
    %c0_63 = arith.constant 0 : index
    %c0_64 = arith.constant 0 : index
    %c1_65 = arith.constant 1 : index
    %c0_66 = arith.constant 0 : index
    %87 = vector.load %arg4[%c0_63, %c0_64, %c1_65, %c0_66] : memref<1x1x2x128xf32, #tpu.memory_space<vmem>>, vector<1x1x1x128xf32>
    %88 = vector.shape_cast %87 : vector<1x1x1x128xf32> to vector<1x128xf32>
    %89 = vector.shape_cast %86 : vector<1x128xf32> to vector<1x1x1x128xf32>
    tpu.vector_store %arg4[%c0_63, %c0_64, %c1_65, %c0_66], %89 {strides = array<i32>} : memref<1x1x2x128xf32, #tpu.memory_space<vmem>>, vector<1x1x1x128xf32>,
    return
  }
  func.func @transform_0(%arg0: i32, %arg1: i32) -> (i32, i32, i32, i32) {
    %c0_i32 = arith.constant 0 : i32
    %c0_i32_0 = arith.constant 0 : i32
    %c0_i32_1 = arith.constant 0 : i32
    return %arg0, %arg1, %c0_i32, %c0_i32_0 : i32, i32, i32, i32
  }
  func.func @transform_1(%arg0: i32, %arg1: i32) -> (i32, i32, i32) {
    %c0_i32 = arith.constant 0 : i32
    %c0_i32_0 = arith.constant 0 : i32
    %c0_i32_1 = arith.constant 0 : i32
    %c0_i32_2 = arith.constant 0 : i32
    return %c0_i32, %c0_i32_0, %c0_i32_1 : i32, i32, i32
  }
  func.func @transform_2(%arg0: i32, %arg1: i32) -> (i32, i32, i32, i32) {
    %c0_i32 = arith.constant 0 : i32
    %c0_i32_0 = arith.constant 0 : i32
    %c0_i32_1 = arith.constant 0 : i32
    return %arg0, %arg1, %c0_i32, %c0_i32_0 : i32, i32, i32, i32
  }
}

module attributes {stable_mosaic.version = 11 : i64} {
  func.func @_conv_affine_silu_kernel(%arg0: i32, %arg1: i32, %arg2: memref<1x1x360x8xbf16, #tpu.memory_space<vmem>>, %arg3: memref<9x8x128xbf16, #tpu.memory_space<vmem>>, %arg4: memref<1x1x16xf32, #tpu.memory_space<vmem>>, %arg5: memref<1x1x16xf32, #tpu.memory_space<vmem>>, %arg6: memref<1x1x288x16xf32, #tpu.memory_space<vmem>>) attributes {dimension_semantics = [#tpu.dimension_semantics<parallel>, #tpu.dimension_semantics<parallel>], iteration_bounds = array<i64: 2, 4>, scalar_prefetch = 0 : i64, scratch_operands = 0 : i64, tpu.core_type = #tpu.core_type<tc>, window_params = [{transform_indices = @transform_0, window_bounds = array<i64: 1, 1, 360, 8>}, {pipeline_mode = #tpu.pipeline_mode<synchronous>, transform_indices = @transform_1, window_bounds = array<i64: 9, 8, 128>}, {transform_indices = @transform_2, window_bounds = array<i64: 1, 1, 16>}, {transform_indices = @transform_3, window_bounds = array<i64: 1, 1, 16>}, {transform_indices = @transform_4, window_bounds = array<i64: 1, 1, 288, 16>}]} {
    %c0 = arith.constant 0 : index
    %c0_0 = arith.constant 0 : index
    %c17 = arith.constant 17 : index
    %c0_1 = arith.constant 0 : index
    %0 = vector.load %arg2[%c0, %c0_0, %c17, %c0_1] : memref<1x1x360x8xbf16, #tpu.memory_space<vmem>>, vector<1x1x288x8xbf16>
    %1 = vector.shape_cast %0 : vector<1x1x288x8xbf16> to vector<288x8xbf16>
    %c0_2 = arith.constant 0 : index
    %c0_3 = arith.constant 0 : index
    %c0_4 = arith.constant 0 : index
    %2 = vector.load %arg3[%c0_2, %c0_3, %c0_4] : memref<9x8x128xbf16, #tpu.memory_space<vmem>>, vector<1x8x128xbf16>
    %3 = vector.shape_cast %2 : vector<1x8x128xbf16> to vector<8x128xbf16>
    %cst = arith.constant dense<0.000000e+00> : vector<288x128xf32>
    %4 = tpu.matmul %1, %3, %cst {dimension_numbers = #tpu.dot_dimension_numbers<[1], [0], [0], [1], [0, 0, 1, 1], [], []>} : vector<288x8xbf16>, vector<8x128xbf16>, vector<288x128xf32> -> vector<288x128xf32>
    %c0_5 = arith.constant 0 : index
    %c0_6 = arith.constant 0 : index
    %c18 = arith.constant 18 : index
    %c0_7 = arith.constant 0 : index
    %5 = vector.load %arg2[%c0_5, %c0_6, %c18, %c0_7] : memref<1x1x360x8xbf16, #tpu.memory_space<vmem>>, vector<1x1x288x8xbf16>
    %6 = vector.shape_cast %5 : vector<1x1x288x8xbf16> to vector<288x8xbf16>
    %c1 = arith.constant 1 : index
    %c0_8 = arith.constant 0 : index
    %c0_9 = arith.constant 0 : index
    %7 = vector.load %arg3[%c1, %c0_8, %c0_9] : memref<9x8x128xbf16, #tpu.memory_space<vmem>>, vector<1x8x128xbf16>
    %8 = vector.shape_cast %7 : vector<1x8x128xbf16> to vector<8x128xbf16>
    %cst_10 = arith.constant dense<0.000000e+00> : vector<288x128xf32>
    %9 = tpu.matmul %6, %8, %cst_10 {dimension_numbers = #tpu.dot_dimension_numbers<[1], [0], [0], [1], [0, 0, 1, 1], [], []>} : vector<288x8xbf16>, vector<8x128xbf16>, vector<288x128xf32> -> vector<288x128xf32>
    %10 = arith.addf %4, %9 : vector<288x128xf32>
    %c0_11 = arith.constant 0 : index
    %c0_12 = arith.constant 0 : index
    %c19 = arith.constant 19 : index
    %c0_13 = arith.constant 0 : index
    %11 = vector.load %arg2[%c0_11, %c0_12, %c19, %c0_13] : memref<1x1x360x8xbf16, #tpu.memory_space<vmem>>, vector<1x1x288x8xbf16>
    %12 = vector.shape_cast %11 : vector<1x1x288x8xbf16> to vector<288x8xbf16>
    %c2 = arith.constant 2 : index
    %c0_14 = arith.constant 0 : index
    %c0_15 = arith.constant 0 : index
    %13 = vector.load %arg3[%c2, %c0_14, %c0_15] : memref<9x8x128xbf16, #tpu.memory_space<vmem>>, vector<1x8x128xbf16>
    %14 = vector.shape_cast %13 : vector<1x8x128xbf16> to vector<8x128xbf16>
    %cst_16 = arith.constant dense<0.000000e+00> : vector<288x128xf32>
    %15 = tpu.matmul %12, %14, %cst_16 {dimension_numbers = #tpu.dot_dimension_numbers<[1], [0], [0], [1], [0, 0, 1, 1], [], []>} : vector<288x8xbf16>, vector<8x128xbf16>, vector<288x128xf32> -> vector<288x128xf32>
    %16 = arith.addf %10, %15 : vector<288x128xf32>
    %c0_17 = arith.constant 0 : index
    %c0_18 = arith.constant 0 : index
    %c35 = arith.constant 35 : index
    %c0_19 = arith.constant 0 : index
    %17 = vector.load %arg2[%c0_17, %c0_18, %c35, %c0_19] : memref<1x1x360x8xbf16, #tpu.memory_space<vmem>>, vector<1x1x288x8xbf16>
    %18 = vector.shape_cast %17 : vector<1x1x288x8xbf16> to vector<288x8xbf16>
    %c3 = arith.constant 3 : index
    %c0_20 = arith.constant 0 : index
    %c0_21 = arith.constant 0 : index
    %19 = vector.load %arg3[%c3, %c0_20, %c0_21] : memref<9x8x128xbf16, #tpu.memory_space<vmem>>, vector<1x8x128xbf16>
    %20 = vector.shape_cast %19 : vector<1x8x128xbf16> to vector<8x128xbf16>
    %cst_22 = arith.constant dense<0.000000e+00> : vector<288x128xf32>
    %21 = tpu.matmul %18, %20, %cst_22 {dimension_numbers = #tpu.dot_dimension_numbers<[1], [0], [0], [1], [0, 0, 1, 1], [], []>} : vector<288x8xbf16>, vector<8x128xbf16>, vector<288x128xf32> -> vector<288x128xf32>
    %22 = arith.addf %16, %21 : vector<288x128xf32>
    %c0_23 = arith.constant 0 : index
    %c0_24 = arith.constant 0 : index
    %c36 = arith.constant 36 : index
    %c0_25 = arith.constant 0 : index
    %23 = vector.load %arg2[%c0_23, %c0_24, %c36, %c0_25] : memref<1x1x360x8xbf16, #tpu.memory_space<vmem>>, vector<1x1x288x8xbf16>
    %24 = vector.shape_cast %23 : vector<1x1x288x8xbf16> to vector<288x8xbf16>
    %c4 = arith.constant 4 : index
    %c0_26 = arith.constant 0 : index
    %c0_27 = arith.constant 0 : index
    %25 = vector.load %arg3[%c4, %c0_26, %c0_27] : memref<9x8x128xbf16, #tpu.memory_space<vmem>>, vector<1x8x128xbf16>
    %26 = vector.shape_cast %25 : vector<1x8x128xbf16> to vector<8x128xbf16>
    %cst_28 = arith.constant dense<0.000000e+00> : vector<288x128xf32>
    %27 = tpu.matmul %24, %26, %cst_28 {dimension_numbers = #tpu.dot_dimension_numbers<[1], [0], [0], [1], [0, 0, 1, 1], [], []>} : vector<288x8xbf16>, vector<8x128xbf16>, vector<288x128xf32> -> vector<288x128xf32>
    %28 = arith.addf %22, %27 : vector<288x128xf32>
    %c0_29 = arith.constant 0 : index
    %c0_30 = arith.constant 0 : index
    %c37 = arith.constant 37 : index
    %c0_31 = arith.constant 0 : index
    %29 = vector.load %arg2[%c0_29, %c0_30, %c37, %c0_31] : memref<1x1x360x8xbf16, #tpu.memory_space<vmem>>, vector<1x1x288x8xbf16>
    %30 = vector.shape_cast %29 : vector<1x1x288x8xbf16> to vector<288x8xbf16>
    %c5 = arith.constant 5 : index
    %c0_32 = arith.constant 0 : index
    %c0_33 = arith.constant 0 : index
    %31 = vector.load %arg3[%c5, %c0_32, %c0_33] : memref<9x8x128xbf16, #tpu.memory_space<vmem>>, vector<1x8x128xbf16>
    %32 = vector.shape_cast %31 : vector<1x8x128xbf16> to vector<8x128xbf16>
    %cst_34 = arith.constant dense<0.000000e+00> : vector<288x128xf32>
    %33 = tpu.matmul %30, %32, %cst_34 {dimension_numbers = #tpu.dot_dimension_numbers<[1], [0], [0], [1], [0, 0, 1, 1], [], []>} : vector<288x8xbf16>, vector<8x128xbf16>, vector<288x128xf32> -> vector<288x128xf32>
    %34 = arith.addf %28, %33 : vector<288x128xf32>
    %c0_35 = arith.constant 0 : index
    %c0_36 = arith.constant 0 : index
    %c53 = arith.constant 53 : index
    %c0_37 = arith.constant 0 : index
    %35 = vector.load %arg2[%c0_35, %c0_36, %c53, %c0_37] : memref<1x1x360x8xbf16, #tpu.memory_space<vmem>>, vector<1x1x288x8xbf16>
    %36 = vector.shape_cast %35 : vector<1x1x288x8xbf16> to vector<288x8xbf16>
    %c6 = arith.constant 6 : index
    %c0_38 = arith.constant 0 : index
    %c0_39 = arith.constant 0 : index
    %37 = vector.load %arg3[%c6, %c0_38, %c0_39] : memref<9x8x128xbf16, #tpu.memory_space<vmem>>, vector<1x8x128xbf16>
    %38 = vector.shape_cast %37 : vector<1x8x128xbf16> to vector<8x128xbf16>
    %cst_40 = arith.constant dense<0.000000e+00> : vector<288x128xf32>
    %39 = tpu.matmul %36, %38, %cst_40 {dimension_numbers = #tpu.dot_dimension_numbers<[1], [0], [0], [1], [0, 0, 1, 1], [], []>} : vector<288x8xbf16>, vector<8x128xbf16>, vector<288x128xf32> -> vector<288x128xf32>
    %40 = arith.addf %34, %39 : vector<288x128xf32>
    %c0_41 = arith.constant 0 : index
    %c0_42 = arith.constant 0 : index
    %c54 = arith.constant 54 : index
    %c0_43 = arith.constant 0 : index
    %41 = vector.load %arg2[%c0_41, %c0_42, %c54, %c0_43] : memref<1x1x360x8xbf16, #tpu.memory_space<vmem>>, vector<1x1x288x8xbf16>
    %42 = vector.shape_cast %41 : vector<1x1x288x8xbf16> to vector<288x8xbf16>
    %c7 = arith.constant 7 : index
    %c0_44 = arith.constant 0 : index
    %c0_45 = arith.constant 0 : index
    %43 = vector.load %arg3[%c7, %c0_44, %c0_45] : memref<9x8x128xbf16, #tpu.memory_space<vmem>>, vector<1x8x128xbf16>
    %44 = vector.shape_cast %43 : vector<1x8x128xbf16> to vector<8x128xbf16>
    %cst_46 = arith.constant dense<0.000000e+00> : vector<288x128xf32>
    %45 = tpu.matmul %42, %44, %cst_46 {dimension_numbers = #tpu.dot_dimension_numbers<[1], [0], [0], [1], [0, 0, 1, 1], [], []>} : vector<288x8xbf16>, vector<8x128xbf16>, vector<288x128xf32> -> vector<288x128xf32>
    %46 = arith.addf %40, %45 : vector<288x128xf32>
    %c0_47 = arith.constant 0 : index
    %c0_48 = arith.constant 0 : index
    %c55 = arith.constant 55 : index
    %c0_49 = arith.constant 0 : index
    %47 = vector.load %arg2[%c0_47, %c0_48, %c55, %c0_49] : memref<1x1x360x8xbf16, #tpu.memory_space<vmem>>, vector<1x1x288x8xbf16>
    %48 = vector.shape_cast %47 : vector<1x1x288x8xbf16> to vector<288x8xbf16>
    %c8 = arith.constant 8 : index
    %c0_50 = arith.constant 0 : index
    %c0_51 = arith.constant 0 : index
    %49 = vector.load %arg3[%c8, %c0_50, %c0_51] : memref<9x8x128xbf16, #tpu.memory_space<vmem>>, vector<1x8x128xbf16>
    %50 = vector.shape_cast %49 : vector<1x8x128xbf16> to vector<8x128xbf16>
    %cst_52 = arith.constant dense<0.000000e+00> : vector<288x128xf32>
    %51 = tpu.matmul %48, %50, %cst_52 {dimension_numbers = #tpu.dot_dimension_numbers<[1], [0], [0], [1], [0, 0, 1, 1], [], []>} : vector<288x8xbf16>, vector<8x128xbf16>, vector<288x128xf32> -> vector<288x128xf32>
    %52 = arith.addf %46, %51 : vector<288x128xf32>
    %53 = vector.extract_strided_slice %52 {offsets = [0, 0], sizes = [288, 16], strides = [1, 1]} : vector<288x128xf32> to vector<288x16xf32>
    %c0_53 = arith.constant 0 : index
    %c0_54 = arith.constant 0 : index
    %c0_55 = arith.constant 0 : index
    %54 = vector.load %arg4[%c0_53, %c0_54, %c0_55] : memref<1x1x16xf32, #tpu.memory_space<vmem>>, vector<1x1x16xf32>
    %55 = vector.shape_cast %54 : vector<1x1x16xf32> to vector<1x16xf32>
    %56 = vector.broadcast %55 : vector<1x16xf32> to vector<288x16xf32>
    %57 = arith.mulf %53, %56 : vector<288x16xf32>
    %c0_56 = arith.constant 0 : index
    %c0_57 = arith.constant 0 : index
    %c0_58 = arith.constant 0 : index
    %58 = vector.load %arg5[%c0_56, %c0_57, %c0_58] : memref<1x1x16xf32, #tpu.memory_space<vmem>>, vector<1x1x16xf32>
    %59 = vector.shape_cast %58 : vector<1x1x16xf32> to vector<1x16xf32>
    %60 = vector.broadcast %59 : vector<1x16xf32> to vector<288x16xf32>
    %61 = arith.addf %57, %60 : vector<288x16xf32>
    %cst_59 = arith.constant 5.000000e-01 : f32
    %62 = vector.broadcast %cst_59 : f32 to vector<288x16xf32>
    %63 = arith.mulf %62, %61 : vector<288x16xf32>
    %cst_60 = arith.constant 5.000000e-01 : f32
    %64 = vector.broadcast %cst_60 : f32 to vector<288x16xf32>
    %65 = arith.mulf %64, %61 : vector<288x16xf32>
    %66 = math.tanh %65 : vector<288x16xf32>
    %cst_61 = arith.constant 1.000000e+00 : f32
    %67 = vector.broadcast %cst_61 : f32 to vector<288x16xf32>
    %68 = arith.addf %66, %67 : vector<288x16xf32>
    %69 = arith.mulf %63, %68 : vector<288x16xf32>
    %c0_62 = arith.constant 0 : index
    %c0_63 = arith.constant 0 : index
    %c0_64 = arith.constant 0 : index
    %c0_65 = arith.constant 0 : index
    %70 = vector.load %arg6[%c0_62, %c0_63, %c0_64, %c0_65] : memref<1x1x288x16xf32, #tpu.memory_space<vmem>>, vector<1x1x288x16xf32>
    %71 = vector.shape_cast %70 : vector<1x1x288x16xf32> to vector<288x16xf32>
    %72 = vector.shape_cast %69 : vector<288x16xf32> to vector<1x1x288x16xf32>
    tpu.vector_store %arg6[%c0_62, %c0_63, %c0_64, %c0_65], %72 {strides = array<i32>} : memref<1x1x288x16xf32, #tpu.memory_space<vmem>>, vector<1x1x288x16xf32>,
    return
  }
  func.func @transform_0(%arg0: i32, %arg1: i32) -> (i32, i32, i32, i32) {
    %c0_i32 = arith.constant 0 : i32
    %c0_i32_0 = arith.constant 0 : i32
    %c0_i32_1 = arith.constant 0 : i32
    return %arg0, %arg1, %c0_i32, %c0_i32_0 : i32, i32, i32, i32
  }
  func.func @transform_1(%arg0: i32, %arg1: i32) -> (i32, i32, i32) {
    %c0_i32 = arith.constant 0 : i32
    %c0_i32_0 = arith.constant 0 : i32
    %c0_i32_1 = arith.constant 0 : i32
    %c0_i32_2 = arith.constant 0 : i32
    return %c0_i32, %c0_i32_0, %c0_i32_1 : i32, i32, i32
  }
  func.func @transform_2(%arg0: i32, %arg1: i32) -> (i32, i32, i32) {
    %c0_i32 = arith.constant 0 : i32
    %c0_i32_0 = arith.constant 0 : i32
    %c0_i32_1 = arith.constant 0 : i32
    return %arg0, %c0_i32, %c0_i32_0 : i32, i32, i32
  }
  func.func @transform_3(%arg0: i32, %arg1: i32) -> (i32, i32, i32) {
    %c0_i32 = arith.constant 0 : i32
    %c0_i32_0 = arith.constant 0 : i32
    %c0_i32_1 = arith.constant 0 : i32
    return %arg0, %c0_i32, %c0_i32_0 : i32, i32, i32
  }
  func.func @transform_4(%arg0: i32, %arg1: i32) -> (i32, i32, i32, i32) {
    %c0_i32 = arith.constant 0 : i32
    %c0_i32_0 = arith.constant 0 : i32
    %c0_i32_1 = arith.constant 0 : i32
    return %arg0, %arg1, %c0_i32, %c0_i32_0 : i32, i32, i32, i32
  }
}

</mosaic_0001>

<llo_original>
// kernel: block_forward.2
$region0: #{block_forward.2}
  #allocation0 [shape = 'u32[]', space=smem, size = 0x4, offset = 0x4, fixed_abs, tag = 'smem constant byte address 0x4 - core index']
  #allocation1 [shape = 'u32[144,128]{1,0:T(1,128)}', space=vmem, size = 0x12000, scoped, tag = 'internal scratch']
  %s0 = inlined_call_operand.vmem [shape: bf16[2,4,360,8], index: 0, kind: input, shape index: {}]
  %s1 = inlined_call_operand.vmem [shape: bf16[9,8,128], index: 1, kind: input, shape index: {}]
  %s2 = inlined_call_operand.vmem [shape: f32[2,4,2,128], index: 2, kind: output, shape index: {}]
  %s3 = sld [smem:[#allocation0]]
  $region41: #{block_forward.2} parent=0
    _
  %s5 = ssub.s32 1, %s3
  %s6 = scalar_select 0, %s5, %s3
  loop: start=0, step=1, limit=10
  $region2: #{block_forward.2} parent=0 // loop_pre_header
    _
  $region3: #{block_forward.2} parent=0 // loop_header
    %s8 = sphi 0, %s12
    %p9 = scmp.ge.s32.totalorder %s8, 10
    %s15 = sphi 0, %s27
    %s16 = sphi 0, %s23
    %s17 = sphi 0, %s15
    %s18 = sphi 0, %s16
    %s19 = sphi 0, %s17
    %s20 = sphi 0, %s18
    %s32 = sphi 0, %s34
    %s35 = sphi 0, %s32
    %s36 = sphi 0, %s35
    %s52 = sphi 0, %s36
    %s56 = sphi 0, %s56
    %s58 = sphi 0, %s56
    %s59 = sphi 0, %s58
    %s73 = sphi 0, %s59
    %s81 = sphi 0, %s83
    %s84 = sphi 0, %s81
    %s85 = sphi 0, %s84
    %s101 = sphi 0, %s85
  $region4: #{block_forward.2} parent=0 // loop_header_branch
    %11 = sbr.rel (%p9) target = $region8
  $region5: #{block_forward.2} parent=0 // loop_body
    %s13 = ssub.s32 %s8, 1
    %s14 = ssub.s32 %s8, 2
    %s21 = sadd.s32 1, %s16
    %p22 = scmp.ge.s32.totalorder %s21, 4
    %s23 = scalar_select %p22, 0, %s21
    %s24 = sadd.s32 1, %s15
    %s25 = scalar_select %p22, %s24, %s15
    %p26 = scmp.ge.s32.totalorder %s25, 2
    %s27 = scalar_select %p26, 0, %s25
    %s28 = ssub.s32 %s15, %s27
    %s29 = ssub.s32 %s16, %s23
    %s30 = sor.u32 %s28, %s29
    %p31 = scmp.eq.s32.totalorder %s30, 0
    %s33 = sadd.s32 %s32, 1
    %s34 = scalar_select %p31, %s32, %s33
    %p37 = pneg %p31
    %p38 = scmp.eq.s32.totalorder %s8, 7
    %p39 = por %p37, %p38
    %p40 = scmp.ne.s32.totalorder %s32, %s35
    %p41 = scmp.eq.s32.totalorder %s8, 0
    %p42 = por %p40, %p41
    %p43 = scmp.ne.s32.totalorder %s32, %s35
    %p44 = scmp.eq.s32.totalorder %s13, 7
    %p45 = por %p43, %p44
    %p46 = scmp.ne.s32.totalorder %s35, %s36
    %p47 = scmp.eq.s32.totalorder %s13, 0
    %p48 = por %p46, %p47
    %p49 = scmp.ne.s32.totalorder %s35, %s36
    %p50 = scmp.eq.s32.totalorder %s14, 7
    %p51 = por %p49, %p50
    %p53 = scmp.ne.s32.totalorder %s36, %s52
    %p54 = scmp.eq.s32.totalorder %s14, 0
    %p55 = por %p53, %p54
    %s57 = sadd.s32 %s56, 1
    %p60 = scmp.eq.s32.totalorder %s8, 7
    %p61 = scmp.ne.s32.totalorder %s56, %s58
    %p62 = scmp.eq.s32.totalorder %s8, 0
    %p63 = por %p61, %p62
    %p64 = scmp.ne.s32.totalorder %s56, %s58
    %p65 = scmp.eq.s32.totalorder %s13, 7
    %p66 = por %p64, %p65
    %p67 = scmp.ne.s32.totalorder %s58, %s59
    %p68 = scmp.eq.s32.totalorder %s13, 0
    %p69 = por %p67, %p68
    %p70 = scmp.ne.s32.totalorder %s58, %s59
    %p71 = scmp.eq.s32.totalorder %s14, 7
    %p72 = por %p70, %p71
    %p74 = scmp.ne.s32.totalorder %s59, %s73
    %p75 = scmp.eq.s32.totalorder %s14, 0
    %p76 = por %p74, %p75
    %s77 = ssub.s32 %s15, %s27
    %s78 = ssub.s32 %s16, %s23
    %s79 = sor.u32 %s77, %s78
    %p80 = scmp.eq.s32.totalorder %s79, 0
    %s82 = sadd.s32 %s81, 1
    %s83 = scalar_select %p80, %s81, %s82
    %p86 = pneg %p80
    %p87 = scmp.eq.s32.totalorder %s8, 7
    %p88 = por %p86, %p87
    %p89 = scmp.ne.s32.totalorder %s81, %s84
    %p90 = scmp.eq.s32.totalorder %s8, 0
    %p91 = por %p89, %p90
    %p92 = scmp.ne.s32.totalorder %s81, %s84
    %p93 = scmp.eq.s32.totalorder %s13, 7
    %p94 = por %p92, %p93
    %p95 = scmp.ne.s32.totalorder %s84, %s85
    %p96 = scmp.eq.s32.totalorder %s13, 0
    %p97 = por %p95, %p96
    %p98 = scmp.ne.s32.totalorder %s84, %s85
    %p99 = scmp.eq.s32.totalorder %s14, 7
    %p100 = por %p98, %p99
    %p102 = scmp.ne.s32.totalorder %s85, %s101
    %p103 = scmp.eq.s32.totalorder %s14, 0
    %p104 = por %p102, %p103
    %p105 = scmp.le.s32.totalorder 1, %s8
    %p106 = scmp.lt.s32.totalorder %s8, 9
    %p107 = pnand %p105, %p106
    %p108 = pneg %p107
    // Predicated region
    $region9: #{block_forward.2} parent=5 // pred_check
      _
    $region10: #{block_forward.2} parent=5 // pred_check_branch
      %110 = sbr.rel (%p107) target = $region12
    $region11: #{block_forward.2} parent=5 // pred_region
      %s111 = ssub.s32 %s8, 1
      // Predicated region
      $region13: #{block_forward.2} parent=11 // pred_check
        %p112 = pneg %p69
      $region14: #{block_forward.2} parent=11 // pred_check_branch
        %114 = sbr.rel (%p112) target = $region16
      $region15: #{block_forward.2} parent=11 // pred_region
        _
      $region16: #{block_forward.2} parent=11 // pred_fallthru
        _
    $region12: #{block_forward.2} parent=5 // pred_fallthru
      _
    %p115 = scmp.lt.s32.totalorder %s8, 8
    // Predicated region
    $region17: #{block_forward.2} parent=5 // pred_check
      %p116 = pneg %p115
    $region18: #{block_forward.2} parent=5 // pred_check_branch
      %118 = sbr.rel (%p116) target = $region20
    $region19: #{block_forward.2} parent=5 // pred_region
      // Predicated region
      $region21: #{block_forward.2} parent=19 // pred_check
        %p119 = pneg %p42
      $region22: #{block_forward.2} parent=19 // pred_check_branch
        %121 = sbr.rel (%p119) target = $region24
      $region23: #{block_forward.2} parent=19 // pred_region
        %p122 = scmp.lt.s32.totalorder %s15, 1
        %s123 = scalar_select %p122, %s15, 1
        %p124 = scmp.lt.s32.totalorder %s16, 3
        %s125 = scalar_select %p124, %s16, 3
        %s126 = smul.addr %s125, 45
        %s127 = smul.addr %s123, 180
        %s128 = sadd.s32 %s126, %s127
        %s129 = smul.addr %s128, 4
        %s130 = scalar_lea.vmem %s0, %s129
      $region24: #{block_forward.2} parent=19 // pred_fallthru
        _
    $region20: #{block_forward.2} parent=5 // pred_fallthru
      _
    %p131 = scmp.le.s32.totalorder 1, %s8
    %p132 = scmp.lt.s32.totalorder %s8, 9
    %p133 = pnand %p131, %p132
    %p134 = pneg %p133
    // Predicated region
    $region25: #{block_forward.2} parent=5 // pred_check
      _
    $region26: #{block_forward.2} parent=5 // pred_check_branch
      %136 = sbr.rel (%p133) target = $region28
    $region27: #{block_forward.2} parent=5 // pred_region
      %s137 = ssub.s32 %s8, 1
      %p138 = scmp.lt.s32.totalorder %s17, 1
      %s139 = scalar_select %p138, %s17, 1
      %p140 = scmp.lt.s32.totalorder %s18, 3
      %s141 = scalar_select %p140, %s18, 3
      %s142 = smul.addr %s141, 45
      %s143 = smul.addr %s139, 180
      %s144 = sadd.s32 %s142, %s143
      %s145 = smul.addr %s144, 4
      %s146 = scalar_lea.vmem %s0, %s145
      %p147 = pneg %p48
      %p148 = pneg %p45
      %p149 = pneg %p69
      %p150 = pneg %p66
      %p151 = pneg %p97
      %p152 = pneg %p94
      %p153 = scmp.lt.s32.totalorder %s17, 1
      %s154 = scalar_select %p153, %s17, 1
      %p155 = scmp.lt.s32.totalorder %s18, 3
      %s156 = scalar_select %p155, %s18, 3
      %s157 = smul.addr %s154, 4
      %s158 = sadd.s32 %s156, %s157
      %s159 = smul.addr %s158, 2
      %s160 = scalar_lea.vmem %s2, %s159
      %p161 = scmp.lt.s32.totalorder %s17, 1
      %s162 = scalar_select %p161, %s17, 1
      %p163 = scmp.lt.s32.totalorder %s18, 3
      %s164 = scalar_select %p163, %s18, 3
      %s165 = smul.addr %s164, 45
      %s166 = smul.addr %s162, 180
      %s167 = sadd.s32 %s165, %s166
      %s168 = smul.addr %s167, 4
      %s169 = scalar_lea.vmem %s0, %s168
      %p170 = scmp.lt.s32.totalorder %s17, 1
      %s171 = scalar_select %p170, %s17, 1
      %p172 = scmp.lt.s32.totalorder %s18, 3
      %s173 = scalar_select %p172, %s18, 3
      %s174 = smul.addr %s171, 4
      %s175 = sadd.s32 %s173, %s174
      %s176 = smul.addr %s175, 2
      %s177 = scalar_lea.vmem %s2, %s176
      %v179 = vld [vmem:[%s169 + $0x8] sm:$0xf]
      %v180 = vld [vmem:[%s169 + $0xc] sm:$0xf]
      %v181 = vld [vmem:[%s169 + $0x10] sm:$0xf]
      %v182 = vld [vmem:[%s169 + $0x14] sm:$0xf]
      %v183 = vld [vmem:[%s169 + $0x18] sm:$0xf]
      %v184 = vld [vmem:[%s169 + $0x1c] sm:$0xf]
      %v185 = vld [vmem:[%s169 + $0x20] sm:$0xf]
      %v186 = vld [vmem:[%s169 + $0x24] sm:$0xf]
      %v187 = vld [vmem:[%s169 + $0x28] sm:$0xf]
      %v188 = vld [vmem:[%s169 + $0x2c] sm:$0xf]
      %v189 = vld [vmem:[%s169 + $0x30] sm:$0xf]
      %v190 = vld [vmem:[%s169 + $0x34] sm:$0xf]
      %v191 = vld [vmem:[%s169 + $0x38] sm:$0xf]
      %v192 = vld [vmem:[%s169 + $0x3c] sm:$0xf]
      %v193 = vld [vmem:[%s169 + $0x40] sm:$0xf]
      %v194 = vld [vmem:[%s169 + $0x44] sm:$0xf]
      %v195 = vld [vmem:[%s169 + $0x48] sm:$0xf]
      %v196 = vld [vmem:[%s169 + $0x4c] sm:$0xf]
      %v197 = vld [vmem:[%s169 + $0x50] sm:$0xf]
      %v198 = vld [vmem:[%s169 + $0x54] sm:$0xf]
      %v199 = vld [vmem:[%s169 + $0x58] sm:$0xf]
      %v200 = vld [vmem:[%s169 + $0x5c] sm:$0xf]
      %v201 = vld [vmem:[%s169 + $0x60] sm:$0xf]
      %v202 = vld [vmem:[%s169 + $0x64] sm:$0xf]
      %v203 = vld [vmem:[%s169 + $0x68] sm:$0xf]
      %v204 = vld [vmem:[%s169 + $0x6c] sm:$0xf]
      %v205 = vld [vmem:[%s169 + $0x70] sm:$0xf]
      %v206 = vld [vmem:[%s169 + $0x74] sm:$0xf]
      %v207 = vld [vmem:[%s169 + $0x78] sm:$0xf]
      %v208 = vld [vmem:[%s169 + $0x7c] sm:$0xf]
      %v209 = vld [vmem:[%s169 + $0x80] sm:$0xf]
      %v210 = vld [vmem:[%s169 + $0x84] sm:$0xf]
      %v211 = vld [vmem:[%s169 + $0x88] sm:$0xf]
      %v212 = vld [vmem:[%s169 + $0x8c] sm:$0xf]
      %v213 = vld [vmem:[%s169 + $0x90] sm:$0xf]
      %v214 = vld [vmem:[%s169 + $0x94] sm:$0xf]
      %v215 = vld [vmem:[%s169 + $0x98] sm:$0x1]
      %v216 = vld [vmem:[%s1] sm:$0xf]
      %v217 = vld [vmem:[%s169 + $0x8] sm:$0xe]
      %s218 = scalar_lea.vmem %s1, 4
      %v219 = vld [vmem:[%s218] sm:$0xf]
      %v257 = vunpack.c.l.b16 %v217
      %v258 = vunpack.c.l.b16 %v180
      %v259 = vunpack.c.l.b16 %v181
      %v260 = vunpack.c.l.b16 %v182
      %v261 = vunpack.c.l.b16 %v183
      %v262 = vunpack.c.l.b16 %v184
      %v263 = vunpack.c.l.b16 %v185
      %v264 = vunpack.c.l.b16 %v186
      %v265 = vunpack.c.l.b16 %v187
      %v266 = vunpack.c.l.b16 %v188
      %v267 = vunpack.c.l.b16 %v189
      %v268 = vunpack.c.l.b16 %v190
      %v269 = vunpack.c.l.b16 %v191
      %v270 = vunpack.c.l.b16 %v192
      %v271 = vunpack.c.l.b16 %v193
      %v272 = vunpack.c.l.b16 %v194
      %v273 = vunpack.c.l.b16 %v195
      %v274 = vunpack.c.l.b16 %v196
      %v275 = vunpack.c.l.b16 %v197
      %v276 = vunpack.c.l.b16 %v198
      %v277 = vunpack.c.l.b16 %v199
      %v278 = vunpack.c.l.b16 %v200
      %v279 = vunpack.c.l.b16 %v201
      %v280 = vunpack.c.l.b16 %v202
      %v281 = vunpack.c.l.b16 %v203
      %v282 = vunpack.c.l.b16 %v204
      %v283 = vunpack.c.l.b16 %v205
      %v284 = vunpack.c.l.b16 %v206
      %v285 = vunpack.c.l.b16 %v207
      %v286 = vunpack.c.l.b16 %v208
      %v287 = vunpack.c.l.b16 %v209
      %v288 = vunpack.c.l.b16 %v210
      %v289 = vunpack.c.l.b16 %v211
      %v290 = vunpack.c.l.b16 %v212
      %v291 = vunpack.c.l.b16 %v213
      %v292 = vunpack.c.l.b16 %v214
      %v293 = vunpack.c.l.b16 %v215
      %v294 = vpack.c.b16 %v258, %v257
      %v295 = vpack.c.b16 %v260, %v259
      %v296 = vpack.c.b16 %v262, %v261
      %v297 = vpack.c.b16 %v264, %v263
      %v298 = vpack.c.b16 %v266, %v265
      %v299 = vpack.c.b16 %v268, %v267
      %v300 = vpack.c.b16 %v270, %v269
      %v301 = vpack.c.b16 %v272, %v271
      %v302 = vpack.c.b16 %v274, %v273
      %v303 = vpack.c.b16 %v276, %v275
      %v304 = vpack.c.b16 %v278, %v277
      %v305 = vpack.c.b16 %v280, %v279
      %v306 = vpack.c.b16 %v282, %v281
      %v307 = vpack.c.b16 %v284, %v283
      %v308 = vpack.c.b16 %v286, %v285
      %v309 = vpack.c.b16 %v288, %v287
      %v310 = vpack.c.b16 %v290, %v289
      %v311 = vpack.c.b16 %v292, %v291
      %v312 = vpack.c.b16 %v293, %v293
      %vm313 = vcmask 1046528
      %v314 = vrot.slane %v294, 1
      %v315 = vrot.slane %v295, 1
      %v316 = vsel %vm313, %v314, %v315
      %v317 = vrot.slane %v296, 1
      %v318 = vsel %vm313, %v315, %v317
      %v319 = vrot.slane %v297, 1
      %v320 = vsel %vm313, %v317, %v319
      %v321 = vrot.slane %v298, 1
      %v322 = vsel %vm313, %v319, %v321
      %v323 = vrot.slane %v299, 1
      %v324 = vsel %vm313, %v321, %v323
      %v325 = vrot.slane %v300, 1
      %v326 = vsel %vm313, %v323, %v325
      %v327 = vrot.slane %v301, 1
      %v328 = vsel %vm313, %v325, %v327
      %v329 = vrot.slane %v302, 1
      %v330 = vsel %vm313, %v327, %v329
      %v331 = vrot.slane %v303, 1
      %v332 = vsel %vm313, %v329, %v331
      %v333 = vrot.slane %v304, 1
      %v334 = vsel %vm313, %v331, %v333
      %v335 = vrot.slane %v305, 1
      %v336 = vsel %vm313, %v333, %v335
      %v337 = vrot.slane %v306, 1
      %v338 = vsel %vm313, %v335, %v337
      %v339 = vrot.slane %v307, 1
      %v340 = vsel %vm313, %v337, %v339
      %v341 = vrot.slane %v308, 1
      %v342 = vsel %vm313, %v339, %v341
      %v343 = vrot.slane %v309, 1
      %v344 = vsel %vm313, %v341, %v343
      %v345 = vrot.slane %v310, 1
      %v346 = vsel %vm313, %v343, %v345
      %v347 = vrot.slane %v311, 1
      %v348 = vsel %vm313, %v345, %v347
      %v349 = vrot.slane %v312, 1
      %v350 = vsel %vm313, %v347, %v349
      %vm351 = vcmask 64512
      %v353 = vsel %vm351, %v316, 0
      %v356 = vsel %vm351, %v318, 0
      %v359 = vsel %vm351, %v320, 0
      %v362 = vsel %vm351, %v322, 0
      %v365 = vsel %vm351, %v324, 0
      %v368 = vsel %vm351, %v326, 0
      %v371 = vsel %vm351, %v328, 0
      %v374 = vsel %vm351, %v330, 0
      %v377 = vsel %vm351, %v332, 0
      %v380 = vsel %vm351, %v334, 0
      %v383 = vsel %vm351, %v336, 0
      %v386 = vsel %vm351, %v338, 0
      %v389 = vsel %vm351, %v340, 0
      %v392 = vsel %vm351, %v342, 0
      %v395 = vsel %vm351, %v344, 0
      %v398 = vsel %vm351, %v346, 0
      %v401 = vsel %vm351, %v348, 0
      %v404 = vsel %vm351, %v350, 0
      %vm406 = vcmask 1043456
      %v408 = vsel %vm406, %v219, 0
      %410 = vmatprep.subr.bf16.mxu0 0
      %411 = vmatpush1.bf16.msra.mxu0 %v408
      %412 = vmatprep.subr.bf16.mxu0 0
      %413 = vmatpush1.bf16.msra.mxu0 0
      %414 = vmatprep.subr.bf16.mxu0 0
      %415 = vmatpush1.bf16.msra.mxu0 0
      %416 = vmatprep.subr.bf16.mxu0 0
      %417 = vmatpush1.bf16.msra.mxu0 0
      %418 = vmatprep.subr.bf16.mxu0 0
      %419 = vmatpush1.bf16.msra.mxu0 0
      %420 = vmatprep.subr.bf16.mxu0 0
      %421 = vmatpush1.bf16.msra.mxu0 0
      %422 = vmatprep.subr.bf16.mxu0 0
      %423 = vmatpush1.bf16.msra.mxu0 0
      %424 = vmatprep.subr.bf16.mxu0 0
      %425 = vmatpush1.bf16.msra.mxu0 0
      %426 = vmatprep.subr.bf16.mxu0 0
      %427 = vmatpush1.bf16.msra.mxu0 0
      %428 = vmatprep.subr.bf16.mxu0 0
      %429 = vmatpush1.bf16.msra.mxu0 0
      %430 = vmatprep.subr.bf16.mxu0 0
      %431 = vmatpush1.bf16.msra.mxu0 0
      %432 = vmatprep.subr.bf16.mxu0 0
      %433 = vmatpush1.bf16.msra.mxu0 0
      %434 = vmatprep.subr.bf16.mxu0 0
      %435 = vmatpush1.bf16.msra.mxu0 0
      %436 = vmatprep.subr.bf16.mxu0 0
      %437 = vmatpush1.bf16.msra.mxu0 0
      %438 = vmatprep.subr.bf16.mxu0 0
      %439 = vmatpush1.bf16.msra.mxu0 0
      %440 = vmatprep.subr.bf16.mxu0 0
      %441 = vmatpush1.bf16.msra.mxu0 0
      %442 = vmatprep.mubr.bf16.mxu0 0
      %443 = vmatmul.mubr.bf16.gmra.mrb[0].mxu0 %v353
      %v444 = vpop.f32.mrb[0].mxu0
      %v445 = vadd.f32 0.0, %v444
      %v446 = vpop.f32.mrb[0].mxu0
      %v447 = vpop.f32.mrb[0].mxu0
      %v448 = vadd.f32 0.0, %v447
      %v449 = vpop.f32.mrb[0].mxu0
      %450 = vmatprep.mubr.bf16.mxu0 0
      %451 = vmatmul.mubr.bf16.gmra.mrb[0].mxu0 %v356
      %v452 = vpop.f32.mrb[0].mxu0
      %v453 = vadd.f32 0.0, %v452
      %v454 = vpop.f32.mrb[0].mxu0
      %v455 = vpop.f32.mrb[0].mxu0
      %v456 = vadd.f32 0.0, %v455
      %v457 = vpop.f32.mrb[0].mxu0
      %458 = vmatprep.mubr.bf16.mxu0 0
      %459 = vmatmul.mubr.bf16.gmra.mrb[0].mxu0 %v359
      %v460 = vpop.f32.mrb[0].mxu0
      %v461 = vadd.f32 0.0, %v460
      %v462 = vpop.f32.mrb[0].mxu0
      %v463 = vpop.f32.mrb[0].mxu0
      %v464 = vadd.f32 0.0, %v463
      %v465 = vpop.f32.mrb[0].mxu0
      %466 = vmatprep.mubr.bf16.mxu0 0
      %467 = vmatmul.mubr.bf16.gmra.mrb[0].mxu0 %v362
      %v468 = vpop.f32.mrb[0].mxu0
      %v469 = vadd.f32 0.0, %v468
      %v470 = vpop.f32.mrb[0].mxu0
      %v471 = vpop.f32.mrb[0].mxu0
      %v472 = vadd.f32 0.0, %v471
      %v473 = vpop.f32.mrb[0].mxu0
      %474 = vmatprep.mubr.bf16.mxu0 0
      %475 = vmatmul.mubr.bf16.gmra.mrb[0].mxu0 %v365
      %v476 = vpop.f32.mrb[0].mxu0
      %v477 = vadd.f32 0.0, %v476
      %v478 = vpop.f32.mrb[0].mxu0
      %v479 = vpop.f32.mrb[0].mxu0
      %v480 = vadd.f32 0.0, %v479
      %v481 = vpop.f32.mrb[0].mxu0
      %482 = vmatprep.mubr.bf16.mxu0 0
      %483 = vmatmul.mubr.bf16.gmra.mrb[0].mxu0 %v368
      %v484 = vpop.f32.mrb[0].mxu0
      %v485 = vadd.f32 0.0, %v484
      %v486 = vpop.f32.mrb[0].mxu0
      %v487 = vpop.f32.mrb[0].mxu0
      %v488 = vadd.f32 0.0, %v487
      %v489 = vpop.f32.mrb[0].mxu0
      %490 = vmatprep.mubr.bf16.mxu0 0
      %491 = vmatmul.mubr.bf16.gmra.mrb[0].mxu0 %v371
      %v492 = vpop.f32.mrb[0].mxu0
      %v493 = vadd.f32 0.0, %v492
      %v494 = vpop.f32.mrb[0].mxu0
      %v495 = vpop.f32.mrb[0].mxu0
      %v496 = vadd.f32 0.0, %v495
      %v497 = vpop.f32.mrb[0].mxu0
      %498 = vmatprep.mubr.bf16.mxu0 0
      %499 = vmatmul.mubr.bf16.gmra.mrb[0].mxu0 %v374
      %v500 = vpop.f32.mrb[0].mxu0
      %v501 = vadd.f32 0.0, %v500
      %v502 = vpop.f32.mrb[0].mxu0
      %v503 = vpop.f32.mrb[0].mxu0
      %v504 = vadd.f32 0.0, %v503
      %v505 = vpop.f32.mrb[0].mxu0
      %506 = vmatprep.mubr.bf16.mxu0 0
      %507 = vmatmul.mubr.bf16.gmra.mrb[0].mxu0 %v377
      %v508 = vpop.f32.mrb[0].mxu0
      %v509 = vadd.f32 0.0, %v508
      %v510 = vpop.f32.mrb[0].mxu0
      %v511 = vpop.f32.mrb[0].mxu0
      %v512 = vadd.f32 0.0, %v511
      %v513 = vpop.f32.mrb[0].mxu0
      %514 = vmatprep.mubr.bf16.mxu0 0
      %515 = vmatmul.mubr.bf16.gmra.mrb[0].mxu0 %v380
      %v516 = vpop.f32.mrb[0].mxu0
      %v517 = vadd.f32 0.0, %v516
      %v518 = vpop.f32.mrb[0].mxu0
      %v519 = vpop.f32.mrb[0].mxu0
      %v520 = vadd.f32 0.0, %v519
      %v521 = vpop.f32.mrb[0].mxu0
      %522 = vmatprep.mubr.bf16.mxu0 0
      %523 = vmatmul.mubr.bf16.gmra.mrb[0].mxu0 %v383
      %v524 = vpop.f32.mrb[0].mxu0
      %v525 = vadd.f32 0.0, %v524
      %v526 = vpop.f32.mrb[0].mxu0
      %v527 = vpop.f32.mrb[0].mxu0
      %v528 = vadd.f32 0.0, %v527
      %v529 = vpop.f32.mrb[0].mxu0
      %530 = vmatprep.mubr.bf16.mxu0 0
      %531 = vmatmul.mubr.bf16.gmra.mrb[0].mxu0 %v386
      %v532 = vpop.f32.mrb[0].mxu0
      %v533 = vadd.f32 0.0, %v532
      %v534 = vpop.f32.mrb[0].mxu0
      %v535 = vpop.f32.mrb[0].mxu0
      %v536 = vadd.f32 0.0, %v535
      %v537 = vpop.f32.mrb[0].mxu0
      %538 = vmatprep.mubr.bf16.mxu0 0
      %539 = vmatmul.mubr.bf16.gmra.mrb[0].mxu0 %v389
      %v540 = vpop.f32.mrb[0].mxu0
      %v541 = vadd.f32 0.0, %v540
      %v542 = vpop.f32.mrb[0].mxu0
      %v543 = vpop.f32.mrb[0].mxu0
      %v544 = vadd.f32 0.0, %v543
      %v545 = vpop.f32.mrb[0].mxu0
      %546 = vmatprep.mubr.bf16.mxu0 0
      %547 = vmatmul.mubr.bf16.gmra.mrb[0].mxu0 %v392
      %v548 = vpop.f32.mrb[0].mxu0
      %v549 = vadd.f32 0.0, %v548
      %v550 = vpop.f32.mrb[0].mxu0
      %v551 = vpop.f32.mrb[0].mxu0
      %v552 = vadd.f32 0.0, %v551
      %v553 = vpop.f32.mrb[0].mxu0
      %554 = vmatprep.mubr.bf16.mxu0 0
      %555 = vmatmul.mubr.bf16.gmra.mrb[0].mxu0 %v395
      %v556 = vpop.f32.mrb[0].mxu0
      %v557 = vadd.f32 0.0, %v556
      %v558 = vpop.f32.mrb[0].mxu0
      %v559 = vpop.f32.mrb[0].mxu0
      %v560 = vadd.f32 0.0, %v559
      %v561 = vpop.f32.mrb[0].mxu0
      %562 = vmatprep.mubr.bf16.mxu0 0
      %563 = vmatmul.mubr.bf16.gmra.mrb[0].mxu0 %v398
      %v564 = vpop.f32.mrb[0].mxu0
      %v565 = vadd.f32 0.0, %v564
      %v566 = vpop.f32.mrb[0].mxu0
      %v567 = vpop.f32.mrb[0].mxu0
      %v568 = vadd.f32 0.0, %v567
      %v569 = vpop.f32.mrb[0].mxu0
      %570 = vmatprep.mubr.bf16.mxu0 0
      %571 = vmatmul.mubr.bf16.gmra.mrb[0].mxu0 %v401
      %v572 = vpop.f32.mrb[0].mxu0
      %v573 = vadd.f32 0.0, %v572
      %v574 = vpop.f32.mrb[0].mxu0
      %v575 = vpop.f32.mrb[0].mxu0
      %v576 = vadd.f32 0.0, %v575
      %v577 = vpop.f32.mrb[0].mxu0
      %578 = vmatprep.mubr.bf16.mxu0 0
      %579 = vmatmul.mubr.bf16.gmra.mrb[0].mxu0 %v404
      %v580 = vpop.f32.mrb[0].mxu0
      %v581 = vadd.f32 0.0, %v580
      %v582 = vpop.f32.mrb[0].mxu0
      %v583 = vpop.f32.mrb[0].mxu0
      %v584 = vadd.f32 0.0, %v583
      %v585 = vpop.f32.mrb[0].mxu0
      %586 = vdwg.mxu0
      %v588 = vunpack.c.l.b16 %v179
      %v589 = vpack.c.b16 %v258, %v588
      %vm590 = vsmask.f32 7424
      %v592 = vshrl.u32 %v589, 16
      %v594 = vshll.u32 %v589, 16
      %v596 = vrot.slane %v594, 1
      %v597 = vor.u32 %v592, %v596
      %v599 = vshll.u32 %v295, 16
      %v601 = vrot.slane %v599, 1
      %v602 = vsel %vm590, %v597, %v601
      %v603 = vshrl.u32 %v295, 16
      %v605 = vor.u32 %v603, %v601
      %v607 = vshll.u32 %v296, 16
      %v609 = vrot.slane %v607, 1
      %v610 = vsel %vm590, %v605, %v609
      %v611 = vshrl.u32 %v296, 16
      %v613 = vor.u32 %v611, %v609
      %v615 = vshll.u32 %v297, 16
      %v617 = vrot.slane %v615, 1
      %v618 = vsel %vm590, %v613, %v617
      %v619 = vshrl.u32 %v297, 16
      %v621 = vor.u32 %v619, %v617
      %v623 = vshll.u32 %v298, 16
      %v625 = vrot.slane %v623, 1
      %v626 = vsel %vm590, %v621, %v625
      %v627 = vshrl.u32 %v298, 16
      %v629 = vor.u32 %v627, %v625
      %v631 = vshll.u32 %v299, 16
      %v633 = vrot.slane %v631, 1
      %v634 = vsel %vm590, %v629, %v633
      %v635 = vshrl.u32 %v299, 16
      %v637 = vor.u32 %v635, %v633
      %v639 = vshll.u32 %v300, 16
      %v641 = vrot.slane %v639, 1
      %v642 = vsel %vm590, %v637, %v641
      %v643 = vshrl.u32 %v300, 16
      %v645 = vor.u32 %v643, %v641
      %v647 = vshll.u32 %v301, 16
      %v649 = vrot.slane %v647, 1
      %v650 = vsel %vm590, %v645, %v649
      %v651 = vshrl.u32 %v301, 16
      %v653 = vor.u32 %v651, %v649
      %v655 = vshll.u32 %v302, 16
      %v657 = vrot.slane %v655, 1
      %v658 = vsel %vm590, %v653, %v657
      %v659 = vshrl.u32 %v302, 16
      %v661 = vor.u32 %v659, %v657
      %v663 = vshll.u32 %v303, 16
      %v665 = vrot.slane %v663, 1
      %v666 = vsel %vm590, %v661, %v665
      %v667 = vshrl.u32 %v303, 16
      %v669 = vor.u32 %v667, %v665
      %v671 = vshll.u32 %v304, 16
      %v673 = vrot.slane %v671, 1
      %v674 = vsel %vm590, %v669, %v673
      %v675 = vshrl.u32 %v304, 16
      %v677 = vor.u32 %v675, %v673
      %v679 = vshll.u32 %v305, 16
      %v681 = vrot.slane %v679, 1
      %v682 = vsel %vm590, %v677, %v681
      %v683 = vshrl.u32 %v305, 16
      %v685 = vor.u32 %v683, %v681
      %v687 = vshll.u32 %v306, 16
      %v689 = vrot.slane %v687, 1
      %v690 = vsel %vm590, %v685, %v689
      %v691 = vshrl.u32 %v306, 16
      %v693 = vor.u32 %v691, %v689
      %v695 = vshll.u32 %v307, 16
      %v697 = vrot.slane %v695, 1
      %v698 = vsel %vm590, %v693, %v697
      %v699 = vshrl.u32 %v307, 16
      %v701 = vor.u32 %v699, %v697
      %v703 = vshll.u32 %v308, 16
      %v705 = vrot.slane %v703, 1
      %v706 = vsel %vm590, %v701, %v705
      %v707 = vshrl.u32 %v308, 16
      %v709 = vor.u32 %v707, %v705
      %v711 = vshll.u32 %v309, 16
      %v713 = vrot.slane %v711, 1
      %v714 = vsel %vm590, %v709, %v713
      %v715 = vshrl.u32 %v309, 16
      %v717 = vor.u32 %v715, %v713
      %v719 = vshll.u32 %v310, 16
      %v721 = vrot.slane %v719, 1
      %v722 = vsel %vm590, %v717, %v721
      %v723 = vshrl.u32 %v310, 16
      %v725 = vor.u32 %v723, %v721
      %v727 = vshll.u32 %v311, 16
      %v729 = vrot.slane %v727, 1
      %v730 = vsel %vm590, %v725, %v729
      %v731 = vshrl.u32 %v311, 16
      %v733 = vor.u32 %v731, %v729
      %v735 = vshll.u32 %v312, 16
      %v737 = vrot.slane %v735, 1
      %v738 = vsel %vm590, %v733, %v737
      %v740 = vsel %vm351, %v602, 0
      %v743 = vsel %vm351, %v610, 0
      %v746 = vsel %vm351, %v618, 0
      %v749 = vsel %vm351, %v626, 0
      %v752 = vsel %vm351, %v634, 0
      %v755 = vsel %vm351, %v642, 0
      %v758 = vsel %vm351, %v650, 0
      %v761 = vsel %vm351, %v658, 0
      %v764 = vsel %vm351, %v666, 0
      %v767 = vsel %vm351, %v674, 0
      %v770 = vsel %vm351, %v682, 0
      %v773 = vsel %vm351, %v690, 0
      %v776 = vsel %vm351, %v698, 0
      %v779 = vsel %vm351, %v706, 0
      %v782 = vsel %vm351, %v714, 0
      %v785 = vsel %vm351, %v722, 0
      %v788 = vsel %vm351, %v730, 0
      %v791 = vsel %vm351, %v738, 0
      %v794 = vsel %vm406, %v216, 0
      %796 = vmatprep.subr.bf16.mxu0 0
      %797 = vmatpush1.bf16.msra.mxu0 %v794
      %798 = vmatprep.subr.bf16.mxu0 0
      %799 = vmatpush1.bf16.msra.mxu0 0
      %800 = vmatprep.subr.bf16.mxu0 0
      %801 = vmatpush1.bf16.msra.mxu0 0
      %802 = vmatprep.subr.bf16.mxu0 0
      %803 = vmatpush1.bf16.msra.mxu0 0
      %804 = vmatprep.subr.bf16.mxu0 0
      %805 = vmatpush1.bf16.msra.mxu0 0
      %806 = vmatprep.subr.bf16.mxu0 0
      %807 = vmatpush1.bf16.msra.mxu0 0
      %808 = vmatprep.subr.bf16.mxu0 0
      %809 = vmatpush1.bf16.msra.mxu0 0
      %810 = vmatprep.subr.bf16.mxu0 0
      %811 = vmatpush1.bf16.msra.mxu0 0
      %812 = vmatprep.subr.bf16.mxu0 0
      %813 = vmatpush1.bf16.msra.mxu0 0
      %814 = vmatprep.subr.bf16.mxu0 0
      %815 = vmatpush1.bf16.msra.mxu0 0
      %816 = vmatprep.subr.bf16.mxu0 0
      %817 = vmatpush1.bf16.msra.mxu0 0
      %818 = vmatprep.subr.bf16.mxu0 0
      %819 = vmatpush1.bf16.msra.mxu0 0
      %820 = vmatprep.subr.bf16.mxu0 0
      %821 = vmatpush1.bf16.msra.mxu0 0
      %822 = vmatprep.subr.bf16.mxu0 0
      %823 = vmatpush1.bf16.msra.mxu0 0
      %824 = vmatprep.subr.bf16.mxu0 0
      %825 = vmatpush1.bf16.msra.mxu0 0
      %826 = vmatprep.subr.bf16.mxu0 0
      %827 = vmatpush1.bf16.msra.mxu0 0
      %828 = vmatprep.mubr.bf16.mxu0 0
      %829 = vmatmul.mubr.bf16.gmra.mrb[0].mxu0 %v740
      %v830 = vpop.f32.mrb[0].mxu0
      %v831 = vadd.f32 %v445, %v830
      %v832 = vpop.f32.mrb[0].mxu0
      %v833 = vpop.f32.mrb[0].mxu0
      %v834 = vadd.f32 %v448, %v833
      %v835 = vpop.f32.mrb[0].mxu0
      %836 = vmatprep.mubr.bf16.mxu0 0
      %837 = vmatmul.mubr.bf16.gmra.mrb[0].mxu0 %v743
      %v838 = vpop.f32.mrb[0].mxu0
      %v839 = vadd.f32 %v453, %v838
      %v840 = vpop.f32.mrb[0].mxu0
      %v841 = vpop.f32.mrb[0].mxu0
      %v842 = vadd.f32 %v456, %v841
      %v843 = vpop.f32.mrb[0].mxu0
      %844 = vmatprep.mubr.bf16.mxu0 0
      %845 = vmatmul.mubr.bf16.gmra.mrb[0].mxu0 %v746
      %v846 = vpop.f32.mrb[0].mxu0
      %v847 = vadd.f32 %v461, %v846
      %v848 = vpop.f32.mrb[0].mxu0
      %v849 = vpop.f32.mrb[0].mxu0
      %v850 = vadd.f32 %v464, %v849
      %v851 = vpop.f32.mrb[0].mxu0
      %852 = vmatprep.mubr.bf16.mxu0 0
      %853 = vmatmul.mubr.bf16.gmra.mrb[0].mxu0 %v749
      %v854 = vpop.f32.mrb[0].mxu0
      %v855 = vadd.f32 %v469, %v854
      %v856 = vpop.f32.mrb[0].mxu0
      %v857 = vpop.f32.mrb[0].mxu0
      %v858 = vadd.f32 %v472, %v857
      %v859 = vpop.f32.mrb[0].mxu0
      %860 = vmatprep.mubr.bf16.mxu0 0
      %861 = vmatmul.mubr.bf16.gmra.mrb[0].mxu0 %v752
      %v862 = vpop.f32.mrb[0].mxu0
      %v863 = vadd.f32 %v477, %v862
      %v864 = vpop.f32.mrb[0].mxu0
      %v865 = vpop.f32.mrb[0].mxu0
      %v866 = vadd.f32 %v480, %v865
      %v867 = vpop.f32.mrb[0].mxu0
      %868 = vmatprep.mubr.bf16.mxu0 0
      %869 = vmatmul.mubr.bf16.gmra.mrb[0].mxu0 %v755
      %v870 = vpop.f32.mrb[0].mxu0
      %v871 = vadd.f32 %v485, %v870
      %v872 = vpop.f32.mrb[0].mxu0
      %v873 = vpop.f32.mrb[0].mxu0
      %v874 = vadd.f32 %v488, %v873
      %v875 = vpop.f32.mrb[0].mxu0
      %876 = vmatprep.mubr.bf16.mxu0 0
      %877 = vmatmul.mubr.bf16.gmra.mrb[0].mxu0 %v758
      %v878 = vpop.f32.mrb[0].mxu0
      %v879 = vadd.f32 %v493, %v878
      %v880 = vpop.f32.mrb[0].mxu0
      %v881 = vpop.f32.mrb[0].mxu0
      %v882 = vadd.f32 %v496, %v881
      %v883 = vpop.f32.mrb[0].mxu0
      %884 = vmatprep.mubr.bf16.mxu0 0
      %885 = vmatmul.mubr.bf16.gmra.mrb[0].mxu0 %v761
      %v886 = vpop.f32.mrb[0].mxu0
      %v887 = vadd.f32 %v501, %v886
      %v888 = vpop.f32.mrb[0].mxu0
      %v889 = vpop.f32.mrb[0].mxu0
      %v890 = vadd.f32 %v504, %v889
      %v891 = vpop.f32.mrb[0].mxu0
      %892 = vmatprep.mubr.bf16.mxu0 0
      %893 = vmatmul.mubr.bf16.gmra.mrb[0].mxu0 %v764
      %v894 = vpop.f32.mrb[0].mxu0
      %v895 = vadd.f32 %v509, %v894
      %v896 = vpop.f32.mrb[0].mxu0
      %v897 = vpop.f32.mrb[0].mxu0
      %v898 = vadd.f32 %v512, %v897
      %v899 = vpop.f32.mrb[0].mxu0
      %900 = vmatprep.mubr.bf16.mxu0 0
      %901 = vmatmul.mubr.bf16.gmra.mrb[0].mxu0 %v767
      %v902 = vpop.f32.mrb[0].mxu0
      %v903 = vadd.f32 %v517, %v902
      %v904 = vpop.f32.mrb[0].mxu0
      %v905 = vpop.f32.mrb[0].mxu0
      %v906 = vadd.f32 %v520, %v905
      %v907 = vpop.f32.mrb[0].mxu0
      %908 = vmatprep.mubr.bf16.mxu0 0
      %909 = vmatmul.mubr.bf16.gmra.mrb[0].mxu0 %v770
      %v910 = vpop.f32.mrb[0].mxu0
      %v911 = vadd.f32 %v525, %v910
      %v912 = vpop.f32.mrb[0].mxu0
      %v913 = vpop.f32.mrb[0].mxu0
      %v914 = vadd.f32 %v528, %v913
      %v915 = vpop.f32.mrb[0].mxu0
      %916 = vmatprep.mubr.bf16.mxu0 0
      %917 = vmatmul.mubr.bf16.gmra.mrb[0].mxu0 %v773
      %v918 = vpop.f32.mrb[0].mxu0
      %v919 = vadd.f32 %v533, %v918
      %v920 = vpop.f32.mrb[0].mxu0
      %v921 = vpop.f32.mrb[0].mxu0
      %v922 = vadd.f32 %v536, %v921
      %v923 = vpop.f32.mrb[0].mxu0
      %924 = vmatprep.mubr.bf16.mxu0 0
      %925 = vmatmul.mubr.bf16.gmra.mrb[0].mxu0 %v776
      %v926 = vpop.f32.mrb[0].mxu0
      %v927 = vadd.f32 %v541, %v926
      %v928 = vpop.f32.mrb[0].mxu0
      %v929 = vpop.f32.mrb[0].mxu0
      %v930 = vadd.f32 %v544, %v929
      %v931 = vpop.f32.mrb[0].mxu0
      %932 = vmatprep.mubr.bf16.mxu0 0
      %933 = vmatmul.mubr.bf16.gmra.mrb[0].mxu0 %v779
      %v934 = vpop.f32.mrb[0].mxu0
      %v935 = vadd.f32 %v549, %v934
      %v936 = vpop.f32.mrb[0].mxu0
      %v937 = vpop.f32.mrb[0].mxu0
      %v938 = vadd.f32 %v552, %v937
      %v939 = vpop.f32.mrb[0].mxu0
      %940 = vmatprep.mubr.bf16.mxu0 0
      %941 = vmatmul.mubr.bf16.gmra.mrb[0].mxu0 %v782
      %v942 = vpop.f32.mrb[0].mxu0
      %v943 = vadd.f32 %v557, %v942
      %v944 = vpop.f32.mrb[0].mxu0
      %v945 = vpop.f32.mrb[0].mxu0
      %v946 = vadd.f32 %v560, %v945
      %v947 = vpop.f32.mrb[0].mxu0
      %948 = vmatprep.mubr.bf16.mxu0 0
      %949 = vmatmul.mubr.bf16.gmra.mrb[0].mxu0 %v785
      %v950 = vpop.f32.mrb[0].mxu0
      %v951 = vadd.f32 %v565, %v950
      %v952 = vpop.f32.mrb[0].mxu0
      %v953 = vpop.f32.mrb[0].mxu0
      %v954 = vadd.f32 %v568, %v953
      %v955 = vpop.f32.mrb[0].mxu0
      %956 = vmatprep.mubr.bf16.mxu0 0
      %957 = vmatmul.mubr.bf16.gmra.mrb[0].mxu0 %v788
      %v958 = vpop.f32.mrb[0].mxu0
      %v959 = vadd.f32 %v573, %v958
      %v960 = vpop.f32.mrb[0].mxu0
      %v961 = vpop.f32.mrb[0].mxu0
      %v962 = vadd.f32 %v576, %v961
      %v963 = vpop.f32.mrb[0].mxu0
      %964 = vmatprep.mubr.bf16.mxu0 0
      %965 = vmatmul.mubr.bf16.gmra.mrb[0].mxu0 %v791
      %v966 = vpop.f32.mrb[0].mxu0
      %v967 = vadd.f32 %v581, %v966
      %v968 = vpop.f32.mrb[0].mxu0
      %v969 = vpop.f32.mrb[0].mxu0
      %v970 = vadd.f32 %v584, %v969
      %v971 = vpop.f32.mrb[0].mxu0
      %972 = vdwg.mxu0
      %v973 = vld [vmem:[%s169 + $0x98] sm:$0x3]
      %s974 = scalar_lea.vmem %s1, 8
      %v975 = vld [vmem:[%s974] sm:$0xf]
      %v977 = vunpack.c.l.b16 %v973
      %v978 = vpack.c.b16 %v977, %v977
      %vm979 = vsmask.f32 6400
      %v981 = vshrl.u32 %v294, 16
      %v983 = vrot.slane %v981, 1
      %v984 = vshll.u32 %v294, 16
      %v986 = vrot.slane %v984, 2
      %v987 = vor.u32 %v983, %v986
      %v988 = vrot.slane %v603, 1
      %v989 = vrot.slane %v599, 2
      %v990 = vor.u32 %v988, %v989
      %v991 = vsel %vm979, %v987, %v990
      %v992 = vrot.slane %v611, 1
      %v993 = vrot.slane %v607, 2
      %v994 = vor.u32 %v992, %v993
      %v995 = vsel %vm979, %v990, %v994
      %v996 = vrot.slane %v619, 1
      %v997 = vrot.slane %v615, 2
      %v998 = vor.u32 %v996, %v997
      %v999 = vsel %vm979, %v994, %v998
      %v1000 = vrot.slane %v627, 1
      %v1001 = vrot.slane %v623, 2
      %v1002 = vor.u32 %v1000, %v1001
      %v1003 = vsel %vm979, %v998, %v1002
      %v1004 = vrot.slane %v635, 1
      %v1005 = vrot.slane %v631, 2
      %v1006 = vor.u32 %v1004, %v1005
      %v1007 = vsel %vm979, %v1002, %v1006
      %v1008 = vrot.slane %v643, 1
      %v1009 = vrot.slane %v639, 2
      %v1010 = vor.u32 %v1008, %v1009
      %v1011 = vsel %vm979, %v1006, %v1010
      %v1012 = vrot.slane %v651, 1
      %v1013 = vrot.slane %v647, 2
      %v1014 = vor.u32 %v1012, %v1013
      %v1015 = vsel %vm979, %v1010, %v1014
      %v1016 = vrot.slane %v659, 1
      %v1017 = vrot.slane %v655, 2
      %v1018 = vor.u32 %v1016, %v1017
      %v1019 = vsel %vm979, %v1014, %v1018
      %v1020 = vrot.slane %v667, 1
      %v1021 = vrot.slane %v663, 2
      %v1022 = vor.u32 %v1020, %v1021
      %v1023 = vsel %vm979, %v1018, %v1022
      %v1024 = vrot.slane %v675, 1
      %v1025 = vrot.slane %v671, 2
      %v1026 = vor.u32 %v1024, %v1025
      %v1027 = vsel %vm979, %v1022, %v1026
      %v1028 = vrot.slane %v683, 1
      %v1029 = vrot.slane %v679, 2
      %v1030 = vor.u32 %v1028, %v1029
      %v1031 = vsel %vm979, %v1026, %v1030
      %v1032 = vrot.slane %v691, 1
      %v1033 = vrot.slane %v687, 2
      %v1034 = vor.u32 %v1032, %v1033
      %v1035 = vsel %vm979, %v1030, %v1034
      %v1036 = vrot.slane %v699, 1
      %v1037 = vrot.slane %v695, 2
      %v1038 = vor.u32 %v1036, %v1037
      %v1039 = vsel %vm979, %v1034, %v1038
      %v1040 = vrot.slane %v707, 1
      %v1041 = vrot.slane %v703, 2
      %v1042 = vor.u32 %v1040, %v1041
      %v1043 = vsel %vm979, %v1038, %v1042
      %v1044 = vrot.slane %v715, 1
      %v1045 = vrot.slane %v711, 2
      %v1046 = vor.u32 %v1044, %v1045
      %v1047 = vsel %vm979, %v1042, %v1046
      %v1048 = vrot.slane %v723, 1
      %v1049 = vrot.slane %v719, 2
      %v1050 = vor.u32 %v1048, %v1049
      %v1051 = vsel %vm979, %v1046, %v1050
      %v1052 = vrot.slane %v731, 1
      %v1053 = vrot.slane %v727, 2
      %v1054 = vor.u32 %v1052, %v1053
      %v1055 = vsel %vm979, %v1050, %v1054
      %v1057 = vshrl.u32 %v978, 16
      %v1059 = vrot.slane %v1057, 1
      %v1060 = vshll.u32 %v978, 16
      %v1062 = vrot.slane %v1060, 2
      %v1063 = vor.u32 %v1059, %v1062
      %v1064 = vsel %vm979, %v1054, %v1063
      %v1066 = vsel %vm351, %v991, 0
      %v1069 = vsel %vm351, %v995, 0
      %v1072 = vsel %vm351, %v999, 0
      %v1075 = vsel %vm351, %v1003, 0
      %v1078 = vsel %vm351, %v1007, 0
      %v1081 = vsel %vm351, %v1011, 0
      %v1084 = vsel %vm351, %v1015, 0
      %v1087 = vsel %vm351, %v1019, 0
      %v1090 = vsel %vm351, %v1023, 0
      %v1093 = vsel %vm351, %v1027, 0
      %v1096 = vsel %vm351, %v1031, 0
      %v1099 = vsel %vm351, %v1035, 0
      %v1102 = vsel %vm351, %v1039, 0
      %v1105 = vsel %vm351, %v1043, 0
      %v1108 = vsel %vm351, %v1047, 0
      %v1111 = vsel %vm351, %v1051, 0
      %v1114 = vsel %vm351, %v1055, 0
      %v1117 = vsel %vm351, %v1064, 0
      %v1120 = vsel %vm406, %v975, 0
      %1122 = vmatprep.subr.bf16.mxu0 0
      %1123 = vmatpush1.bf16.msra.mxu0 %v1120
      %1124 = vmatprep.subr.bf16.mxu0 0
      %1125 = vmatpush1.bf16.msra.mxu0 0
      %1126 = vmatprep.subr.bf16.mxu0 0
      %1127 = vmatpush1.bf16.msra.mxu0 0
      %1128 = vmatprep.subr.bf16.mxu0 0
      %1129 = vmatpush1.bf16.msra.mxu0 0
      %1130 = vmatprep.subr.bf16.mxu0 0
      %1131 = vmatpush1.bf16.msra.mxu0 0
      %1132 = vmatprep.subr.bf16.mxu0 0
      %1133 = vmatpush1.bf16.msra.mxu0 0
      %1134 = vmatprep.subr.bf16.mxu0 0
      %1135 = vmatpush1.bf16.msra.mxu0 0
      %1136 = vmatprep.subr.bf16.mxu0 0
      %1137 = vmatpush1.bf16.msra.mxu0 0
      %1138 = vmatprep.subr.bf16.mxu0 0
      %1139 = vmatpush1.bf16.msra.mxu0 0
      %1140 = vmatprep.subr.bf16.mxu0 0
      %1141 = vmatpush1.bf16.msra.mxu0 0
      %1142 = vmatprep.subr.bf16.mxu0 0
      %1143 = vmatpush1.bf16.msra.mxu0 0
      %1144 = vmatprep.subr.bf16.mxu0 0
      %1145 = vmatpush1.bf16.msra.mxu0 0
      %1146 = vmatprep.subr.bf16.mxu0 0
      %1147 = vmatpush1.bf16.msra.mxu0 0
      %1148 = vmatprep.subr.bf16.mxu0 0
      %1149 = vmatpush1.bf16.msra.mxu0 0
      %1150 = vmatprep.subr.bf16.mxu0 0
      %1151 = vmatpush1.bf16.msra.mxu0 0
      %1152 = vmatprep.subr.bf16.mxu0 0
      %1153 = vmatpush1.bf16.msra.mxu0 0
      %1154 = vmatprep.mubr.bf16.mxu0 0
      %1155 = vmatmul.mubr.bf16.gmra.mrb[0].mxu0 %v1066
      %v1156 = vpop.f32.mrb[0].mxu0
      %v1157 = vadd.f32 0.0, %v1156
      %v1158 = vpop.f32.mrb[0].mxu0
      %v1159 = vpop.f32.mrb[0].mxu0
      %v1160 = vadd.f32 0.0, %v1159
      %v1161 = vpop.f32.mrb[0].mxu0
      %1162 = vmatprep.mubr.bf16.mxu0 0
      %1163 = vmatmul.mubr.bf16.gmra.mrb[0].mxu0 %v1069
      %v1164 = vpop.f32.mrb[0].mxu0
      %v1165 = vadd.f32 0.0, %v1164
      %v1166 = vpop.f32.mrb[0].mxu0
      %v1167 = vpop.f32.mrb[0].mxu0
      %v1168 = vadd.f32 0.0, %v1167
      %v1169 = vpop.f32.mrb[0].mxu0
      %1170 = vmatprep.mubr.bf16.mxu0 0
      %1171 = vmatmul.mubr.bf16.gmra.mrb[0].mxu0 %v1072
      %v1172 = vpop.f32.mrb[0].mxu0
      %v1173 = vadd.f32 0.0, %v1172
      %v1174 = vpop.f32.mrb[0].mxu0
      %v1175 = vpop.f32.mrb[0].mxu0
      %v1176 = vadd.f32 0.0, %v1175
      %v1177 = vpop.f32.mrb[0].mxu0
      %1178 = vmatprep.mubr.bf16.mxu0 0
      %1179 = vmatmul.mubr.bf16.gmra.mrb[0].mxu0 %v1075
      %v1180 = vpop.f32.mrb[0].mxu0
      %v1181 = vadd.f32 0.0, %v1180
      %v1182 = vpop.f32.mrb[0].mxu0
      %v1183 = vpop.f32.mrb[0].mxu0
      %v1184 = vadd.f32 0.0, %v1183
      %v1185 = vpop.f32.mrb[0].mxu0
      %1186 = vmatprep.mubr.bf16.mxu0 0
      %1187 = vmatmul.mubr.bf16.gmra.mrb[0].mxu0 %v1078
      %v1188 = vpop.f32.mrb[0].mxu0
      %v1189 = vadd.f32 0.0, %v1188
      %v1190 = vpop.f32.mrb[0].mxu0
      %v1191 = vpop.f32.mrb[0].mxu0
      %v1192 = vadd.f32 0.0, %v1191
      %v1193 = vpop.f32.mrb[0].mxu0
      %1194 = vmatprep.mubr.bf16.mxu0 0
      %1195 = vmatmul.mubr.bf16.gmra.mrb[0].mxu0 %v1081
      %v1196 = vpop.f32.mrb[0].mxu0
      %v1197 = vadd.f32 0.0, %v1196
      %v1198 = vpop.f32.mrb[0].mxu0
      %v1199 = vpop.f32.mrb[0].mxu0
      %v1200 = vadd.f32 0.0, %v1199
      %v1201 = vpop.f32.mrb[0].mxu0
      %1202 = vmatprep.mubr.bf16.mxu0 0
      %1203 = vmatmul.mubr.bf16.gmra.mrb[0].mxu0 %v1084
      %v1204 = vpop.f32.mrb[0].mxu0
      %v1205 = vadd.f32 0.0, %v1204
      %v1206 = vpop.f32.mrb[0].mxu0
      %v1207 = vpop.f32.mrb[0].mxu0
      %v1208 = vadd.f32 0.0, %v1207
      %v1209 = vpop.f32.mrb[0].mxu0
      %1210 = vmatprep.mubr.bf16.mxu0 0
      %1211 = vmatmul.mubr.bf16.gmra.mrb[0].mxu0 %v1087
      %v1212 = vpop.f32.mrb[0].mxu0
      %v1213 = vadd.f32 0.0, %v1212
      %v1214 = vpop.f32.mrb[0].mxu0
      %v1215 = vpop.f32.mrb[0].mxu0
      %v1216 = vadd.f32 0.0, %v1215
      %v1217 = vpop.f32.mrb[0].mxu0
      %1218 = vmatprep.mubr.bf16.mxu0 0
      %1219 = vmatmul.mubr.bf16.gmra.mrb[0].mxu0 %v1090
      %v1220 = vpop.f32.mrb[0].mxu0
      %v1221 = vadd.f32 0.0, %v1220
      %v1222 = vpop.f32.mrb[0].mxu0
      %v1223 = vpop.f32.mrb[0].mxu0
      %v1224 = vadd.f32 0.0, %v1223
      %v1225 = vpop.f32.mrb[0].mxu0
      %1226 = vmatprep.mubr.bf16.mxu0 0
      %1227 = vmatmul.mubr.bf16.gmra.mrb[0].mxu0 %v1093
      %v1228 = vpop.f32.mrb[0].mxu0
      %v1229 = vadd.f32 0.0, %v1228
      %v1230 = vpop.f32.mrb[0].mxu0
      %v1231 = vpop.f32.mrb[0].mxu0
      %v1232 = vadd.f32 0.0, %v1231
      %v1233 = vpop.f32.mrb[0].mxu0
      %1234 = vmatprep.mubr.bf16.mxu0 0
      %1235 = vmatmul.mubr.bf16.gmra.mrb[0].mxu0 %v1096
      %v1236 = vpop.f32.mrb[0].mxu0
      %v1237 = vadd.f32 0.0, %v1236
      %v1238 = vpop.f32.mrb[0].mxu0
      %v1239 = vpop.f32.mrb[0].mxu0
      %v1240 = vadd.f32 0.0, %v1239
      %v1241 = vpop.f32.mrb[0].mxu0
      %1242 = vmatprep.mubr.bf16.mxu0 0
      %1243 = vmatmul.mubr.bf16.gmra.mrb[0].mxu0 %v1099
      %v1244 = vpop.f32.mrb[0].mxu0
      %v1245 = vadd.f32 0.0, %v1244
      %v1246 = vpop.f32.mrb[0].mxu0
      %v1247 = vpop.f32.mrb[0].mxu0
      %v1248 = vadd.f32 0.0, %v1247
      %v1249 = vpop.f32.mrb[0].mxu0
      %1250 = vmatprep.mubr.bf16.mxu0 0
      %1251 = vmatmul.mubr.bf16.gmra.mrb[0].mxu0 %v1102
      %v1252 = vpop.f32.mrb[0].mxu0
      %v1253 = vadd.f32 0.0, %v1252
      %v1254 = vpop.f32.mrb[0].mxu0
      %v1255 = vpop.f32.mrb[0].mxu0
      %v1256 = vadd.f32 0.0, %v1255
      %v1257 = vpop.f32.mrb[0].mxu0
      %1258 = vmatprep.mubr.bf16.mxu0 0
      %1259 = vmatmul.mubr.bf16.gmra.mrb[0].mxu0 %v1105
      %v1260 = vpop.f32.mrb[0].mxu0
      %v1261 = vadd.f32 0.0, %v1260
      %v1262 = vpop.f32.mrb[0].mxu0
      %v1263 = vpop.f32.mrb[0].mxu0
      %v1264 = vadd.f32 0.0, %v1263
      %v1265 = vpop.f32.mrb[0].mxu0
      %1266 = vmatprep.mubr.bf16.mxu0 0
      %1267 = vmatmul.mubr.bf16.gmra.mrb[0].mxu0 %v1108
      %v1268 = vpop.f32.mrb[0].mxu0
      %v1269 = vadd.f32 0.0, %v1268
      %v1270 = vpop.f32.mrb[0].mxu0
      %v1271 = vpop.f32.mrb[0].mxu0
      %v1272 = vadd.f32 0.0, %v1271
      %v1273 = vpop.f32.mrb[0].mxu0
      %1274 = vmatprep.mubr.bf16.mxu0 0
      %1275 = vmatmul.mubr.bf16.gmra.mrb[0].mxu0 %v1111
      %v1276 = vpop.f32.mrb[0].mxu0
      %v1277 = vadd.f32 0.0, %v1276
      %v1278 = vpop.f32.mrb[0].mxu0
      %v1279 = vpop.f32.mrb[0].mxu0
      %v1280 = vadd.f32 0.0, %v1279
      %v1281 = vpop.f32.mrb[0].mxu0
      %1282 = vmatprep.mubr.bf16.mxu0 0
      %1283 = vmatmul.mubr.bf16.gmra.mrb[0].mxu0 %v1114
      %v1284 = vpop.f32.mrb[0].mxu0
      %v1285 = vadd.f32 0.0, %v1284
      %v1286 = vpop.f32.mrb[0].mxu0
      %v1287 = vpop.f32.mrb[0].mxu0
      %v1288 = vadd.f32 0.0, %v1287
      %v1289 = vpop.f32.mrb[0].mxu0
      %1290 = vmatprep.mubr.bf16.mxu0 0
      %1291 = vmatmul.mubr.bf16.gmra.mrb[0].mxu0 %v1117
      %v1292 = vpop.f32.mrb[0].mxu0
      %v1293 = vadd.f32 0.0, %v1292
      %v1294 = vpop.f32.mrb[0].mxu0
      %v1295 = vpop.f32.mrb[0].mxu0
      %v1296 = vadd.f32 0.0, %v1295
      %v1297 = vpop.f32.mrb[0].mxu0
      %1298 = vdwg.mxu0
      %v1299 = vadd.f32 %v831, %v1157
      %v1300 = vadd.f32 %v834, %v1160
      %v1301 = vadd.f32 %v839, %v1165
      %v1302 = vadd.f32 %v842, %v1168
      %v1303 = vadd.f32 %v847, %v1173
      %v1304 = vadd.f32 %v850, %v1176
      %v1305 = vadd.f32 %v855, %v1181
      %v1306 = vadd.f32 %v858, %v1184
      %v1307 = vadd.f32 %v863, %v1189
      %v1308 = vadd.f32 %v866, %v1192
      %v1309 = vadd.f32 %v871, %v1197
      %v1310 = vadd.f32 %v874, %v1200
      %v1311 = vadd.f32 %v879, %v1205
      %v1312 = vadd.f32 %v882, %v1208
      %v1313 = vadd.f32 %v887, %v1213
      %v1314 = vadd.f32 %v890, %v1216
      %v1315 = vadd.f32 %v895, %v1221
      %v1316 = vadd.f32 %v898, %v1224
      %v1317 = vadd.f32 %v903, %v1229
      %v1318 = vadd.f32 %v906, %v1232
      %v1319 = vadd.f32 %v911, %v1237
      %v1320 = vadd.f32 %v914, %v1240
      %v1321 = vadd.f32 %v919, %v1245
      %v1322 = vadd.f32 %v922, %v1248
      %v1323 = vadd.f32 %v927, %v1253
      %v1324 = vadd.f32 %v930, %v1256
      %v1325 = vadd.f32 %v935, %v1261
      %v1326 = vadd.f32 %v938, %v1264
      %v1327 = vadd.f32 %v943, %v1269
      %v1328 = vadd.f32 %v946, %v1272
      %v1329 = vadd.f32 %v951, %v1277
      %v1330 = vadd.f32 %v954, %v1280
      %v1331 = vadd.f32 %v959, %v1285
      %v1332 = vadd.f32 %v962, %v1288
      %v1333 = vadd.f32 %v967, %v1293
      %v1334 = vadd.f32 %v970, %v1296
      %v1335 = vld [vmem:[%s169 + $0x10] sm:$0xe]
      %v1336 = vld [vmem:[%s169 + $0x14] sm:$0xf]
      %v1337 = vld [vmem:[%s169 + $0x18] sm:$0xf]
      %v1338 = vld [vmem:[%s169 + $0x1c] sm:$0xf]
      %v1339 = vld [vmem:[%s169 + $0x20] sm:$0xf]
      %v1340 = vld [vmem:[%s169 + $0x24] sm:$0xf]
      %v1341 = vld [vmem:[%s169 + $0x28] sm:$0xf]
      %v1342 = vld [vmem:[%s169 + $0x2c] sm:$0xf]
      %v1343 = vld [vmem:[%s169 + $0x30] sm:$0xf]
      %v1344 = vld [vmem:[%s169 + $0x34] sm:$0xf]
      %v1345 = vld [vmem:[%s169 + $0x38] sm:$0xf]
      %v1346 = vld [vmem:[%s169 + $0x3c] sm:$0xf]
      %v1347 = vld [vmem:[%s169 + $0x40] sm:$0xf]
      %v1348 = vld [vmem:[%s169 + $0x44] sm:$0xf]
      %v1349 = vld [vmem:[%s169 + $0x48] sm:$0xf]
      %v1350 = vld [vmem:[%s169 + $0x4c] sm:$0xf]
      %v1351 = vld [vmem:[%s169 + $0x50] sm:$0xf]
      %v1352 = vld [vmem:[%s169 + $0x54] sm:$0xf]
      %v1353 = vld [vmem:[%s169 + $0x58] sm:$0xf]
      %v1354 = vld [vmem:[%s169 + $0x5c] sm:$0xf]
      %v1355 = vld [vmem:[%s169 + $0x60] sm:$0xf]
      %v1356 = vld [vmem:[%s169 + $0x64] sm:$0xf]
      %v1357 = vld [vmem:[%s169 + $0x68] sm:$0xf]
      %v1358 = vld [vmem:[%s169 + $0x6c] sm:$0xf]
      %v1359 = vld [vmem:[%s169 + $0x70] sm:$0xf]
      %v1360 = vld [vmem:[%s169 + $0x74] sm:$0xf]
      %v1361 = vld [vmem:[%s169 + $0x78] sm:$0xf]
      %v1362 = vld [vmem:[%s169 + $0x7c] sm:$0xf]
      %v1363 = vld [vmem:[%s169 + $0x80] sm:$0xf]
      %v1364 = vld [vmem:[%s169 + $0x84] sm:$0xf]
      %v1365 = vld [vmem:[%s169 + $0x88] sm:$0xf]
      %v1366 = vld [vmem:[%s169 + $0x8c] sm:$0xf]
      %v1367 = vld [vmem:[%s169 + $0x90] sm:$0xf]
      %v1368 = vld [vmem:[%s169 + $0x94] sm:$0xf]
      %v1369 = vld [vmem:[%s169 + $0x98] sm:$0xf]
      %v1370 = vld [vmem:[%s169 + $0x9c] sm:$0xf]
      %v1371 = vld [vmem:[%s169 + $0xa0] sm:$0x3]
      %s1372 = scalar_lea.vmem %s1, 12
      %v1373 = vld [vmem:[%s1372] sm:$0xf]
      %v1411 = vunpack.c.l.b16 %v1335
      %v1412 = vunpack.c.l.b16 %v1336
      %v1413 = vunpack.c.l.b16 %v1337
      %v1414 = vunpack.c.l.b16 %v1338
      %v1415 = vunpack.c.l.b16 %v1339
      %v1416 = vunpack.c.l.b16 %v1340
      %v1417 = vunpack.c.l.b16 %v1341
      %v1418 = vunpack.c.l.b16 %v1342
      %v1419 = vunpack.c.l.b16 %v1343
      %v1420 = vunpack.c.l.b16 %v1344
      %v1421 = vunpack.c.l.b16 %v1345
      %v1422 = vunpack.c.l.b16 %v1346
      %v1423 = vunpack.c.l.b16 %v1347
      %v1424 = vunpack.c.l.b16 %v1348
      %v1425 = vunpack.c.l.b16 %v1349
      %v1426 = vunpack.c.l.b16 %v1350
      %v1427 = vunpack.c.l.b16 %v1351
      %v1428 = vunpack.c.l.b16 %v1352
      %v1429 = vunpack.c.l.b16 %v1353
      %v1430 = vunpack.c.l.b16 %v1354
      %v1431 = vunpack.c.l.b16 %v1355
      %v1432 = vunpack.c.l.b16 %v1356
      %v1433 = vunpack.c.l.b16 %v1357
      %v1434 = vunpack.c.l.b16 %v1358
      %v1435 = vunpack.c.l.b16 %v1359
      %v1436 = vunpack.c.l.b16 %v1360
      %v1437 = vunpack.c.l.b16 %v1361
      %v1438 = vunpack.c.l.b16 %v1362
      %v1439 = vunpack.c.l.b16 %v1363
      %v1440 = vunpack.c.l.b16 %v1364
      %v1441 = vunpack.c.l.b16 %v1365
      %v1442 = vunpack.c.l.b16 %v1366
      %v1443 = vunpack.c.l.b16 %v1367
      %v1444 = vunpack.c.l.b16 %v1368
      %v1445 = vunpack.c.l.b16 %v1369
      %v1446 = vunpack.c.l.b16 %v1370
      %v1447 = vunpack.c.l.b16 %v1371
      %v1448 = vpack.c.b16 %v1412, %v1411
      %v1449 = vpack.c.b16 %v1414, %v1413
      %v1450 = vpack.c.b16 %v1416, %v1415
      %v1451 = vpack.c.b16 %v1418, %v1417
      %v1452 = vpack.c.b16 %v1420, %v1419
      %v1453 = vpack.c.b16 %v1422, %v1421
      %v1454 = vpack.c.b16 %v1424, %v1423
      %v1455 = vpack.c.b16 %v1426, %v1425
      %v1456 = vpack.c.b16 %v1428, %v1427
      %v1457 = vpack.c.b16 %v1430, %v1429
      %v1458 = vpack.c.b16 %v1432, %v1431
      %v1459 = vpack.c.b16 %v1434, %v1433
      %v1460 = vpack.c.b16 %v1436, %v1435
      %v1461 = vpack.c.b16 %v1438, %v1437
      %v1462 = vpack.c.b16 %v1440, %v1439
      %v1463 = vpack.c.b16 %v1442, %v1441
      %v1464 = vpack.c.b16 %v1444, %v1443
      %v1465 = vpack.c.b16 %v1446, %v1445
      %v1466 = vpack.c.b16 %v1447, %v1447
      %v1468 = vshrl.u32 %v1448, 16
      %v1470 = vrot.slane %v1468, 1
      %v1471 = vshll.u32 %v1448, 16
      %v1473 = vrot.slane %v1471, 2
      %v1474 = vor.u32 %v1470, %v1473
      %v1476 = vshrl.u32 %v1449, 16
      %v1478 = vrot.slane %v1476, 1
      %v1479 = vshll.u32 %v1449, 16
      %v1481 = vrot.slane %v1479, 2
      %v1482 = vor.u32 %v1478, %v1481
      %v1483 = vsel %vm979, %v1474, %v1482
      %v1485 = vshrl.u32 %v1450, 16
      %v1487 = vrot.slane %v1485, 1
      %v1488 = vshll.u32 %v1450, 16
      %v1490 = vrot.slane %v1488, 2
      %v1491 = vor.u32 %v1487, %v1490
      %v1492 = vsel %vm979, %v1482, %v1491
      %v1494 = vshrl.u32 %v1451, 16
      %v1496 = vrot.slane %v1494, 1
      %v1497 = vshll.u32 %v1451, 16
      %v1499 = vrot.slane %v1497, 2
      %v1500 = vor.u32 %v1496, %v1499
      %v1501 = vsel %vm979, %v1491, %v1500
      %v1503 = vshrl.u32 %v1452, 16
      %v1505 = vrot.slane %v1503, 1
      %v1506 = vshll.u32 %v1452, 16
      %v1508 = vrot.slane %v1506, 2
      %v1509 = vor.u32 %v1505, %v1508
      %v1510 = vsel %vm979, %v1500, %v1509
      %v1512 = vshrl.u32 %v1453, 16
      %v1514 = vrot.slane %v1512, 1
      %v1515 = vshll.u32 %v1453, 16
      %v1517 = vrot.slane %v1515, 2
      %v1518 = vor.u32 %v1514, %v1517
      %v1519 = vsel %vm979, %v1509, %v1518
      %v1521 = vshrl.u32 %v1454, 16
      %v1523 = vrot.slane %v1521, 1
      %v1524 = vshll.u32 %v1454, 16
      %v1526 = vrot.slane %v1524, 2
      %v1527 = vor.u32 %v1523, %v1526
      %v1528 = vsel %vm979, %v1518, %v1527
      %v1530 = vshrl.u32 %v1455, 16
      %v1532 = vrot.slane %v1530, 1
      %v1533 = vshll.u32 %v1455, 16
      %v1535 = vrot.slane %v1533, 2
      %v1536 = vor.u32 %v1532, %v1535
      %v1537 = vsel %vm979, %v1527, %v1536
      %v1539 = vshrl.u32 %v1456, 16
      %v1541 = vrot.slane %v1539, 1
      %v1542 = vshll.u32 %v1456, 16
      %v1544 = vrot.slane %v1542, 2
      %v1545 = vor.u32 %v1541, %v1544
      %v1546 = vsel %vm979, %v1536, %v1545
      %v1548 = vshrl.u32 %v1457, 16
      %v1550 = vrot.slane %v1548, 1
      %v1551 = vshll.u32 %v1457, 16
      %v1553 = vrot.slane %v1551, 2
      %v1554 = vor.u32 %v1550, %v1553
      %v1555 = vsel %vm979, %v1545, %v1554
      %v1557 = vshrl.u32 %v1458, 16
      %v1559 = vrot.slane %v1557, 1
      %v1560 = vshll.u32 %v1458, 16
      %v1562 = vrot.slane %v1560, 2
      %v1563 = vor.u32 %v1559, %v1562
      %v1564 = vsel %vm979, %v1554, %v1563
      %v1566 = vshrl.u32 %v1459, 16
      %v1568 = vrot.slane %v1566, 1
      %v1569 = vshll.u32 %v1459, 16
      %v1571 = vrot.slane %v1569, 2
      %v1572 = vor.u32 %v1568, %v1571
      %v1573 = vsel %vm979, %v1563, %v1572
      %v1575 = vshrl.u32 %v1460, 16
      %v1577 = vrot.slane %v1575, 1
      %v1578 = vshll.u32 %v1460, 16
      %v1580 = vrot.slane %v1578, 2
      %v1581 = vor.u32 %v1577, %v1580
      %v1582 = vsel %vm979, %v1572, %v1581
      %v1584 = vshrl.u32 %v1461, 16
      %v1586 = vrot.slane %v1584, 1
      %v1587 = vshll.u32 %v1461, 16
      %v1589 = vrot.slane %v1587, 2
      %v1590 = vor.u32 %v1586, %v1589
      %v1591 = vsel %vm979, %v1581, %v1590
      %v1593 = vshrl.u32 %v1462, 16
      %v1595 = vrot.slane %v1593, 1
      %v1596 = vshll.u32 %v1462, 16
      %v1598 = vrot.slane %v1596, 2
      %v1599 = vor.u32 %v1595, %v1598
      %v1600 = vsel %vm979, %v1590, %v1599
      %v1602 = vshrl.u32 %v1463, 16
      %v1604 = vrot.slane %v1602, 1
      %v1605 = vshll.u32 %v1463, 16
      %v1607 = vrot.slane %v1605, 2
      %v1608 = vor.u32 %v1604, %v1607
      %v1609 = vsel %vm979, %v1599, %v1608
      %v1611 = vshrl.u32 %v1464, 16
      %v1613 = vrot.slane %v1611, 1
      %v1614 = vshll.u32 %v1464, 16
      %v1616 = vrot.slane %v1614, 2
      %v1617 = vor.u32 %v1613, %v1616
      %v1618 = vsel %vm979, %v1608, %v1617
      %v1620 = vshrl.u32 %v1465, 16
      %v1622 = vrot.slane %v1620, 1
      %v1623 = vshll.u32 %v1465, 16
      %v1625 = vrot.slane %v1623, 2
      %v1626 = vor.u32 %v1622, %v1625
      %v1627 = vsel %vm979, %v1617, %v1626
      %v1629 = vshrl.u32 %v1466, 16
      %v1631 = vrot.slane %v1629, 1
      %v1632 = vshll.u32 %v1466, 16
      %v1634 = vrot.slane %v1632, 2
      %v1635 = vor.u32 %v1631, %v1634
      %v1636 = vsel %vm979, %v1626, %v1635
      %v1638 = vsel %vm351, %v1483, 0
      %v1641 = vsel %vm351, %v1492, 0
      %v1644 = vsel %vm351, %v1501, 0
      %v1647 = vsel %vm351, %v1510, 0
      %v1650 = vsel %vm351, %v1519, 0
      %v1653 = vsel %vm351, %v1528, 0
      %v1656 = vsel %vm351, %v1537, 0
      %v1659 = vsel %vm351, %v1546, 0
      %v1662 = vsel %vm351, %v1555, 0
      %v1665 = vsel %vm351, %v1564, 0
      %v1668 = vsel %vm351, %v1573, 0
      %v1671 = vsel %vm351, %v1582, 0
      %v1674 = vsel %vm351, %v1591, 0
      %v1677 = vsel %vm351, %v1600, 0
      %v1680 = vsel %vm351, %v1609, 0
      %v1683 = vsel %vm351, %v1618, 0
      %v1686 = vsel %vm351, %v1627, 0
      %v1689 = vsel %vm351, %v1636, 0
      %v1692 = vsel %vm406, %v1373, 0
      %1694 = vmatprep.subr.bf16.mxu0 0
      %1695 = vmatpush1.bf16.msra.mxu0 %v1692
      %1696 = vmatprep.subr.bf16.mxu0 0
      %1697 = vmatpush1.bf16.msra.mxu0 0
      %1698 = vmatprep.subr.bf16.mxu0 0
      %1699 = vmatpush1.bf16.msra.mxu0 0
      %1700 = vmatprep.subr.bf16.mxu0 0
      %1701 = vmatpush1.bf16.msra.mxu0 0
      %1702 = vmatprep.subr.bf16.mxu0 0
      %1703 = vmatpush1.bf16.msra.mxu0 0
      %1704 = vmatprep.subr.bf16.mxu0 0
      %1705 = vmatpush1.bf16.msra.mxu0 0
      %1706 = vmatprep.subr.bf16.mxu0 0
      %1707 = vmatpush1.bf16.msra.mxu0 0
      %1708 = vmatprep.subr.bf16.mxu0 0
      %1709 = vmatpush1.bf16.msra.mxu0 0
      %1710 = vmatprep.subr.bf16.mxu0 0
      %1711 = vmatpush1.bf16.msra.mxu0 0
      %1712 = vmatprep.subr.bf16.mxu0 0
      %1713 = vmatpush1.bf16.msra.mxu0 0
      %1714 = vmatprep.subr.bf16.mxu0 0
      %1715 = vmatpush1.bf16.msra.mxu0 0
      %1716 = vmatprep.subr.bf16.mxu0 0
      %1717 = vmatpush1.bf16.msra.mxu0 0
      %1718 = vmatprep.subr.bf16.mxu0 0
      %1719 = vmatpush1.bf16.msra.mxu0 0
      %1720 = vmatprep.subr.bf16.mxu0 0
      %1721 = vmatpush1.bf16.msra.mxu0 0
      %1722 = vmatprep.subr.bf16.mxu0 0
      %1723 = vmatpush1.bf16.msra.mxu0 0
      %1724 = vmatprep.subr.bf16.mxu0 0
      %1725 = vmatpush1.bf16.msra.mxu0 0
      %1726 = vmatprep.mubr.bf16.mxu0 0
      %1727 = vmatmul.mubr.bf16.gmra.mrb[0].mxu0 %v1638
      %v1728 = vpop.f32.mrb[0].mxu0
      %v1729 = vadd.f32 0.0, %v1728
      %v1730 = vpop.f32.mrb[0].mxu0
      %v1731 = vpop.f32.mrb[0].mxu0
      %v1732 = vadd.f32 0.0, %v1731
      %v1733 = vpop.f32.mrb[0].mxu0
      %1734 = vmatprep.mubr.bf16.mxu0 0
      %1735 = vmatmul.mubr.bf16.gmra.mrb[0].mxu0 %v1641
      %v1736 = vpop.f32.mrb[0].mxu0
      %v1737 = vadd.f32 0.0, %v1736
      %v1738 = vpop.f32.mrb[0].mxu0
      %v1739 = vpop.f32.mrb[0].mxu0
      %v1740 = vadd.f32 0.0, %v1739
      %v1741 = vpop.f32.mrb[0].mxu0
      %1742 = vmatprep.mubr.bf16.mxu0 0
      %1743 = vmatmul.mubr.bf16.gmra.mrb[0].mxu0 %v1644
      %v1744 = vpop.f32.mrb[0].mxu0
      %v1745 = vadd.f32 0.0, %v1744
      %v1746 = vpop.f32.mrb[0].mxu0
      %v1747 = vpop.f32.mrb[0].mxu0
      %v1748 = vadd.f32 0.0, %v1747
      %v1749 = vpop.f32.mrb[0].mxu0
      %1750 = vmatprep.mubr.bf16.mxu0 0
      %1751 = vmatmul.mubr.bf16.gmra.mrb[0].mxu0 %v1647
      %v1752 = vpop.f32.mrb[0].mxu0
      %v1753 = vadd.f32 0.0, %v1752
      %v1754 = vpop.f32.mrb[0].mxu0
      %v1755 = vpop.f32.mrb[0].mxu0
      %v1756 = vadd.f32 0.0, %v1755
      %v1757 = vpop.f32.mrb[0].mxu0
      %1758 = vmatprep.mubr.bf16.mxu0 0
      %1759 = vmatmul.mubr.bf16.gmra.mrb[0].mxu0 %v1650
      %v1760 = vpop.f32.mrb[0].mxu0
      %v1761 = vadd.f32 0.0, %v1760
      %v1762 = vpop.f32.mrb[0].mxu0
      %v1763 = vpop.f32.mrb[0].mxu0
      %v1764 = vadd.f32 0.0, %v1763
      %v1765 = vpop.f32.mrb[0].mxu0
      %1766 = vmatprep.mubr.bf16.mxu0 0
      %1767 = vmatmul.mubr.bf16.gmra.mrb[0].mxu0 %v1653
      %v1768 = vpop.f32.mrb[0].mxu0
      %v1769 = vadd.f32 0.0, %v1768
      %v1770 = vpop.f32.mrb[0].mxu0
      %v1771 = vpop.f32.mrb[0].mxu0
      %v1772 = vadd.f32 0.0, %v1771
      %v1773 = vpop.f32.mrb[0].mxu0
      %1774 = vmatprep.mubr.bf16.mxu0 0
      %1775 = vmatmul.mubr.bf16.gmra.mrb[0].mxu0 %v1656
      %v1776 = vpop.f32.mrb[0].mxu0
      %v1777 = vadd.f32 0.0, %v1776
      %v1778 = vpop.f32.mrb[0].mxu0
      %v1779 = vpop.f32.mrb[0].mxu0
      %v1780 = vadd.f32 0.0, %v1779
      %v1781 = vpop.f32.mrb[0].mxu0
      %1782 = vmatprep.mubr.bf16.mxu0 0
      %1783 = vmatmul.mubr.bf16.gmra.mrb[0].mxu0 %v1659
      %v1784 = vpop.f32.mrb[0].mxu0
      %v1785 = vadd.f32 0.0, %v1784
      %v1786 = vpop.f32.mrb[0].mxu0
      %v1787 = vpop.f32.mrb[0].mxu0
      %v1788 = vadd.f32 0.0, %v1787
      %v1789 = vpop.f32.mrb[0].mxu0
      %1790 = vmatprep.mubr.bf16.mxu0 0
      %1791 = vmatmul.mubr.bf16.gmra.mrb[0].mxu0 %v1662
      %v1792 = vpop.f32.mrb[0].mxu0
      %v1793 = vadd.f32 0.0, %v1792
      %v1794 = vpop.f32.mrb[0].mxu0
      %v1795 = vpop.f32.mrb[0].mxu0
      %v1796 = vadd.f32 0.0, %v1795
      %v1797 = vpop.f32.mrb[0].mxu0
      %1798 = vmatprep.mubr.bf16.mxu0 0
      %1799 = vmatmul.mubr.bf16.gmra.mrb[0].mxu0 %v1665
      %v1800 = vpop.f32.mrb[0].mxu0
      %v1801 = vadd.f32 0.0, %v1800
      %v1802 = vpop.f32.mrb[0].mxu0
      %v1803 = vpop.f32.mrb[0].mxu0
      %v1804 = vadd.f32 0.0, %v1803
      %v1805 = vpop.f32.mrb[0].mxu0
      %1806 = vmatprep.mubr.bf16.mxu0 0
      %1807 = vmatmul.mubr.bf16.gmra.mrb[0].mxu0 %v1668
      %v1808 = vpop.f32.mrb[0].mxu0
      %v1809 = vadd.f32 0.0, %v1808
      %v1810 = vpop.f32.mrb[0].mxu0
      %v1811 = vpop.f32.mrb[0].mxu0
      %v1812 = vadd.f32 0.0, %v1811
      %v1813 = vpop.f32.mrb[0].mxu0
      %1814 = vmatprep.mubr.bf16.mxu0 0
      %1815 = vmatmul.mubr.bf16.gmra.mrb[0].mxu0 %v1671
      %v1816 = vpop.f32.mrb[0].mxu0
      %v1817 = vadd.f32 0.0, %v1816
      %v1818 = vpop.f32.mrb[0].mxu0
      %v1819 = vpop.f32.mrb[0].mxu0
      %v1820 = vadd.f32 0.0, %v1819
      %v1821 = vpop.f32.mrb[0].mxu0
      %1822 = vmatprep.mubr.bf16.mxu0 0
      %1823 = vmatmul.mubr.bf16.gmra.mrb[0].mxu0 %v1674
      %v1824 = vpop.f32.mrb[0].mxu0
      %v1825 = vadd.f32 0.0, %v1824
      %v1826 = vpop.f32.mrb[0].mxu0
      %v1827 = vpop.f32.mrb[0].mxu0
      %v1828 = vadd.f32 0.0, %v1827
      %v1829 = vpop.f32.mrb[0].mxu0
      %1830 = vmatprep.mubr.bf16.mxu0 0
      %1831 = vmatmul.mubr.bf16.gmra.mrb[0].mxu0 %v1677
      %v1832 = vpop.f32.mrb[0].mxu0
      %v1833 = vadd.f32 0.0, %v1832
      %v1834 = vpop.f32.mrb[0].mxu0
      %v1835 = vpop.f32.mrb[0].mxu0
      %v1836 = vadd.f32 0.0, %v1835
      %v1837 = vpop.f32.mrb[0].mxu0
      %1838 = vmatprep.mubr.bf16.mxu0 0
      %1839 = vmatmul.mubr.bf16.gmra.mrb[0].mxu0 %v1680
      %v1840 = vpop.f32.mrb[0].mxu0
      %v1841 = vadd.f32 0.0, %v1840
      %v1842 = vpop.f32.mrb[0].mxu0
      %v1843 = vpop.f32.mrb[0].mxu0
      %v1844 = vadd.f32 0.0, %v1843
      %v1845 = vpop.f32.mrb[0].mxu0
      %1846 = vmatprep.mubr.bf16.mxu0 0
      %1847 = vmatmul.mubr.bf16.gmra.mrb[0].mxu0 %v1683
      %v1848 = vpop.f32.mrb[0].mxu0
      %v1849 = vadd.f32 0.0, %v1848
      %v1850 = vpop.f32.mrb[0].mxu0
      %v1851 = vpop.f32.mrb[0].mxu0
      %v1852 = vadd.f32 0.0, %v1851
      %v1853 = vpop.f32.mrb[0].mxu0
      %1854 = vmatprep.mubr.bf16.mxu0 0
      %1855 = vmatmul.mubr.bf16.gmra.mrb[0].mxu0 %v1686
      %v1856 = vpop.f32.mrb[0].mxu0
      %v1857 = vadd.f32 0.0, %v1856
      %v1858 = vpop.f32.mrb[0].mxu0
      %v1859 = vpop.f32.mrb[0].mxu0
      %v1860 = vadd.f32 0.0, %v1859
      %v1861 = vpop.f32.mrb[0].mxu0
      %1862 = vmatprep.mubr.bf16.mxu0 0
      %1863 = vmatmul.mubr.bf16.gmra.mrb[0].mxu0 %v1689
      %v1864 = vpop.f32.mrb[0].mxu0
      %v1865 = vadd.f32 0.0, %v1864
      %v1866 = vpop.f32.mrb[0].mxu0
      %v1867 = vpop.f32.mrb[0].mxu0
      %v1868 = vadd.f32 0.0, %v1867
      %v1869 = vpop.f32.mrb[0].mxu0
      %1870 = vdwg.mxu0
      %v1871 = vadd.f32 %v1299, %v1729
      %v1872 = vadd.f32 %v1300, %v1732
      %v1873 = vadd.f32 %v1301, %v1737
      %v1874 = vadd.f32 %v1302, %v1740
      %v1875 = vadd.f32 %v1303, %v1745
      %v1876 = vadd.f32 %v1304, %v1748
      %v1877 = vadd.f32 %v1305, %v1753
      %v1878 = vadd.f32 %v1306, %v1756
      %v1879 = vadd.f32 %v1307, %v1761
      %v1880 = vadd.f32 %v1308, %v1764
      %v1881 = vadd.f32 %v1309, %v1769
      %v1882 = vadd.f32 %v1310, %v1772
      %v1883 = vadd.f32 %v1311, %v1777
      %v1884 = vadd.f32 %v1312, %v1780
      %v1885 = vadd.f32 %v1313, %v1785
      %v1886 = vadd.f32 %v1314, %v1788
      %v1887 = vadd.f32 %v1315, %v1793
      %v1888 = vadd.f32 %v1316, %v1796
      %v1889 = vadd.f32 %v1317, %v1801
      %v1890 = vadd.f32 %v1318, %v1804
      %v1891 = vadd.f32 %v1319, %v1809
      %v1892 = vadd.f32 %v1320, %v1812
      %v1893 = vadd.f32 %v1321, %v1817
      %v1894 = vadd.f32 %v1322, %v1820
      %v1895 = vadd.f32 %v1323, %v1825
      %v1896 = vadd.f32 %v1324, %v1828
      %v1897 = vadd.f32 %v1325, %v1833
      %v1898 = vadd.f32 %v1326, %v1836
      %v1899 = vadd.f32 %v1327, %v1841
      %v1900 = vadd.f32 %v1328, %v1844
      %v1901 = vadd.f32 %v1329, %v1849
      %v1902 = vadd.f32 %v1330, %v1852
      %v1903 = vadd.f32 %v1331, %v1857
      %v1904 = vadd.f32 %v1332, %v1860
      %v1905 = vadd.f32 %v1333, %v1865
      %v1906 = vadd.f32 %v1334, %v1868
      %v1907 = vld [vmem:[%s169 + $0x10] sm:$0xc]
      %s1908 = scalar_lea.vmem %s1, 16
      %v1909 = vld [vmem:[%s1908] sm:$0xf]
      %v1911 = vunpack.c.l.b16 %v1907
      %v1912 = vpack.c.b16 %v1412, %v1911
      %vm1913 = vcmask 1045504
      %v1914 = vrot.slane %v1912, 2
      %v1915 = vrot.slane %v1449, 2
      %v1916 = vsel %vm1913, %v1914, %v1915
      %v1917 = vrot.slane %v1450, 2
      %v1918 = vsel %vm1913, %v1915, %v1917
      %v1919 = vrot.slane %v1451, 2
      %v1920 = vsel %vm1913, %v1917, %v1919
      %v1921 = vrot.slane %v1452, 2
      %v1922 = vsel %vm1913, %v1919, %v1921
      %v1923 = vrot.slane %v1453, 2
      %v1924 = vsel %vm1913, %v1921, %v1923
      %v1925 = vrot.slane %v1454, 2
      %v1926 = vsel %vm1913, %v1923, %v1925
      %v1927 = vrot.slane %v1455, 2
      %v1928 = vsel %vm1913, %v1925, %v1927
      %v1929 = vrot.slane %v1456, 2
      %v1930 = vsel %vm1913, %v1927, %v1929
      %v1931 = vrot.slane %v1457, 2
      %v1932 = vsel %vm1913, %v1929, %v1931
      %v1933 = vrot.slane %v1458, 2
      %v1934 = vsel %vm1913, %v1931, %v1933
      %v1935 = vrot.slane %v1459, 2
      %v1936 = vsel %vm1913, %v1933, %v1935
      %v1937 = vrot.slane %v1460, 2
      %v1938 = vsel %vm1913, %v1935, %v1937
      %v1939 = vrot.slane %v1461, 2
      %v1940 = vsel %vm1913, %v1937, %v1939
      %v1941 = vrot.slane %v1462, 2
      %v1942 = vsel %vm1913, %v1939, %v1941
      %v1943 = vrot.slane %v1463, 2
      %v1944 = vsel %vm1913, %v1941, %v1943
      %v1945 = vrot.slane %v1464, 2
      %v1946 = vsel %vm1913, %v1943, %v1945
      %v1947 = vrot.slane %v1465, 2
      %v1948 = vsel %vm1913, %v1945, %v1947
      %v1949 = vrot.slane %v1466, 2
      %v1950 = vsel %vm1913, %v1947, %v1949
      %v1952 = vsel %vm351, %v1916, 0
      %v1955 = vsel %vm351, %v1918, 0
      %v1958 = vsel %vm351, %v1920, 0
      %v1961 = vsel %vm351, %v1922, 0
      %v1964 = vsel %vm351, %v1924, 0
      %v1967 = vsel %vm351, %v1926, 0
      %v1970 = vsel %vm351, %v1928, 0
      %v1973 = vsel %vm351, %v1930, 0
      %v1976 = vsel %vm351, %v1932, 0
      %v1979 = vsel %vm351, %v1934, 0
      %v1982 = vsel %vm351, %v1936, 0
      %v1985 = vsel %vm351, %v1938, 0
      %v1988 = vsel %vm351, %v1940, 0
      %v1991 = vsel %vm351, %v1942, 0
      %v1994 = vsel %vm351, %v1944, 0
      %v1997 = vsel %vm351, %v1946, 0
      %v2000 = vsel %vm351, %v1948, 0
      %v2003 = vsel %vm351, %v1950, 0
      %v2006 = vsel %vm406, %v1909, 0
      %2008 = vmatprep.subr.bf16.mxu0 0
      %2009 = vmatpush1.bf16.msra.mxu0 %v2006
      %2010 = vmatprep.subr.bf16.mxu0 0
      %2011 = vmatpush1.bf16.msra.mxu0 0
      %2012 = vmatprep.subr.bf16.mxu0 0
      %2013 = vmatpush1.bf16.msra.mxu0 0
      %2014 = vmatprep.subr.bf16.mxu0 0
      %2015 = vmatpush1.bf16.msra.mxu0 0
      %2016 = vmatprep.subr.bf16.mxu0 0
      %2017 = vmatpush1.bf16.msra.mxu0 0
      %2018 = vmatprep.subr.bf16.mxu0 0
      %2019 = vmatpush1.bf16.msra.mxu0 0
      %2020 = vmatprep.subr.bf16.mxu0 0
      %2021 = vmatpush1.bf16.msra.mxu0 0
      %2022 = vmatprep.subr.bf16.mxu0 0
      %2023 = vmatpush1.bf16.msra.mxu0 0
      %2024 = vmatprep.subr.bf16.mxu0 0
      %2025 = vmatpush1.bf16.msra.mxu0 0
      %2026 = vmatprep.subr.bf16.mxu0 0
      %2027 = vmatpush1.bf16.msra.mxu0 0
      %2028 = vmatprep.subr.bf16.mxu0 0
      %2029 = vmatpush1.bf16.msra.mxu0 0
      %2030 = vmatprep.subr.bf16.mxu0 0
      %2031 = vmatpush1.bf16.msra.mxu0 0
      %2032 = vmatprep.subr.bf16.mxu0 0
      %2033 = vmatpush1.bf16.msra.mxu0 0
      %2034 = vmatprep.subr.bf16.mxu0 0
      %2035 = vmatpush1.bf16.msra.mxu0 0
      %2036 = vmatprep.subr.bf16.mxu0 0
      %2037 = vmatpush1.bf16.msra.mxu0 0
      %2038 = vmatprep.subr.bf16.mxu0 0
      %2039 = vmatpush1.bf16.msra.mxu0 0
      %2040 = vmatprep.mubr.bf16.mxu0 0
      %2041 = vmatmul.mubr.bf16.gmra.mrb[0].mxu0 %v1952
      %v2042 = vpop.f32.mrb[0].mxu0
      %v2043 = vadd.f32 0.0, %v2042
      %v2044 = vpop.f32.mrb[0].mxu0
      %v2045 = vpop.f32.mrb[0].mxu0
      %v2046 = vadd.f32 0.0, %v2045
      %v2047 = vpop.f32.mrb[0].mxu0
      %2048 = vmatprep.mubr.bf16.mxu0 0
      %2049 = vmatmul.mubr.bf16.gmra.mrb[0].mxu0 %v1955
      %v2050 = vpop.f32.mrb[0].mxu0
      %v2051 = vadd.f32 0.0, %v2050
      %v2052 = vpop.f32.mrb[0].mxu0
      %v2053 = vpop.f32.mrb[0].mxu0
      %v2054 = vadd.f32 0.0, %v2053
      %v2055 = vpop.f32.mrb[0].mxu0
      %2056 = vmatprep.mubr.bf16.mxu0 0
      %2057 = vmatmul.mubr.bf16.gmra.mrb[0].mxu0 %v1958
      %v2058 = vpop.f32.mrb[0].mxu0
      %v2059 = vadd.f32 0.0, %v2058
      %v2060 = vpop.f32.mrb[0].mxu0
      %v2061 = vpop.f32.mrb[0].mxu0
      %v2062 = vadd.f32 0.0, %v2061
      %v2063 = vpop.f32.mrb[0].mxu0
      %2064 = vmatprep.mubr.bf16.mxu0 0
      %2065 = vmatmul.mubr.bf16.gmra.mrb[0].mxu0 %v1961
      %v2066 = vpop.f32.mrb[0].mxu0
      %v2067 = vadd.f32 0.0, %v2066
      %v2068 = vpop.f32.mrb[0].mxu0
      %v2069 = vpop.f32.mrb[0].mxu0
      %v2070 = vadd.f32 0.0, %v2069
      %v2071 = vpop.f32.mrb[0].mxu0
      %2072 = vmatprep.mubr.bf16.mxu0 0
      %2073 = vmatmul.mubr.bf16.gmra.mrb[0].mxu0 %v1964
      %v2074 = vpop.f32.mrb[0].mxu0
      %v2075 = vadd.f32 0.0, %v2074
      %v2076 = vpop.f32.mrb[0].mxu0
      %v2077 = vpop.f32.mrb[0].mxu0
      %v2078 = vadd.f32 0.0, %v2077
      %v2079 = vpop.f32.mrb[0].mxu0
      %2080 = vmatprep.mubr.bf16.mxu0 0
      %2081 = vmatmul.mubr.bf16.gmra.mrb[0].mxu0 %v1967
      %v2082 = vpop.f32.mrb[0].mxu0
      %v2083 = vadd.f32 0.0, %v2082
      %v2084 = vpop.f32.mrb[0].mxu0
      %v2085 = vpop.f32.mrb[0].mxu0
      %v2086 = vadd.f32 0.0, %v2085
      %v2087 = vpop.f32.mrb[0].mxu0
      %2088 = vmatprep.mubr.bf16.mxu0 0
      %2089 = vmatmul.mubr.bf16.gmra.mrb[0].mxu0 %v1970
      %v2090 = vpop.f32.mrb[0].mxu0
      %v2091 = vadd.f32 0.0, %v2090
      %v2092 = vpop.f32.mrb[0].mxu0
      %v2093 = vpop.f32.mrb[0].mxu0
      %v2094 = vadd.f32 0.0, %v2093
      %v2095 = vpop.f32.mrb[0].mxu0
      %2096 = vmatprep.mubr.bf16.mxu0 0
      %2097 = vmatmul.mubr.bf16.gmra.mrb[0].mxu0 %v1973
      %v2098 = vpop.f32.mrb[0].mxu0
      %v2099 = vadd.f32 0.0, %v2098
      %v2100 = vpop.f32.mrb[0].mxu0
      %v2101 = vpop.f32.mrb[0].mxu0
      %v2102 = vadd.f32 0.0, %v2101
      %v2103 = vpop.f32.mrb[0].mxu0
      %2104 = vmatprep.mubr.bf16.mxu0 0
      %2105 = vmatmul.mubr.bf16.gmra.mrb[0].mxu0 %v1976
      %v2106 = vpop.f32.mrb[0].mxu0
      %v2107 = vadd.f32 0.0, %v2106
      %v2108 = vpop.f32.mrb[0].mxu0
      %v2109 = vpop.f32.mrb[0].mxu0
      %v2110 = vadd.f32 0.0, %v2109
      %v2111 = vpop.f32.mrb[0].mxu0
      %2112 = vmatprep.mubr.bf16.mxu0 0
      %2113 = vmatmul.mubr.bf16.gmra.mrb[0].mxu0 %v1979
      %v2114 = vpop.f32.mrb[0].mxu0
      %v2115 = vadd.f32 0.0, %v2114
      %v2116 = vpop.f32.mrb[0].mxu0
      %v2117 = vpop.f32.mrb[0].mxu0
      %v2118 = vadd.f32 0.0, %v2117
      %v2119 = vpop.f32.mrb[0].mxu0
      %2120 = vmatprep.mubr.bf16.mxu0 0
      %2121 = vmatmul.mubr.bf16.gmra.mrb[0].mxu0 %v1982
      %v2122 = vpop.f32.mrb[0].mxu0
      %v2123 = vadd.f32 0.0, %v2122
      %v2124 = vpop.f32.mrb[0].mxu0
      %v2125 = vpop.f32.mrb[0].mxu0
      %v2126 = vadd.f32 0.0, %v2125
      %v2127 = vpop.f32.mrb[0].mxu0
      %2128 = vmatprep.mubr.bf16.mxu0 0
      %2129 = vmatmul.mubr.bf16.gmra.mrb[0].mxu0 %v1985
      %v2130 = vpop.f32.mrb[0].mxu0
      %v2131 = vadd.f32 0.0, %v2130
      %v2132 = vpop.f32.mrb[0].mxu0
      %v2133 = vpop.f32.mrb[0].mxu0
      %v2134 = vadd.f32 0.0, %v2133
      %v2135 = vpop.f32.mrb[0].mxu0
      %2136 = vmatprep.mubr.bf16.mxu0 0
      %2137 = vmatmul.mubr.bf16.gmra.mrb[0].mxu0 %v1988
      %v2138 = vpop.f32.mrb[0].mxu0
      %v2139 = vadd.f32 0.0, %v2138
      %v2140 = vpop.f32.mrb[0].mxu0
      %v2141 = vpop.f32.mrb[0].mxu0
      %v2142 = vadd.f32 0.0, %v2141
      %v2143 = vpop.f32.mrb[0].mxu0
      %2144 = vmatprep.mubr.bf16.mxu0 0
      %2145 = vmatmul.mubr.bf16.gmra.mrb[0].mxu0 %v1991
      %v2146 = vpop.f32.mrb[0].mxu0
      %v2147 = vadd.f32 0.0, %v2146
      %v2148 = vpop.f32.mrb[0].mxu0
      %v2149 = vpop.f32.mrb[0].mxu0
      %v2150 = vadd.f32 0.0, %v2149
      %v2151 = vpop.f32.mrb[0].mxu0
      %2152 = vmatprep.mubr.bf16.mxu0 0
      %2153 = vmatmul.mubr.bf16.gmra.mrb[0].mxu0 %v1994
      %v2154 = vpop.f32.mrb[0].mxu0
      %v2155 = vadd.f32 0.0, %v2154
      %v2156 = vpop.f32.mrb[0].mxu0
      %v2157 = vpop.f32.mrb[0].mxu0
      %v2158 = vadd.f32 0.0, %v2157
      %v2159 = vpop.f32.mrb[0].mxu0
      %2160 = vmatprep.mubr.bf16.mxu0 0
      %2161 = vmatmul.mubr.bf16.gmra.mrb[0].mxu0 %v1997
      %v2162 = vpop.f32.mrb[0].mxu0
      %v2163 = vadd.f32 0.0, %v2162
      %v2164 = vpop.f32.mrb[0].mxu0
      %v2165 = vpop.f32.mrb[0].mxu0
      %v2166 = vadd.f32 0.0, %v2165
      %v2167 = vpop.f32.mrb[0].mxu0
      %2168 = vmatprep.mubr.bf16.mxu0 0
      %2169 = vmatmul.mubr.bf16.gmra.mrb[0].mxu0 %v2000
      %v2170 = vpop.f32.mrb[0].mxu0
      %v2171 = vadd.f32 0.0, %v2170
      %v2172 = vpop.f32.mrb[0].mxu0
      %v2173 = vpop.f32.mrb[0].mxu0
      %v2174 = vadd.f32 0.0, %v2173
      %v2175 = vpop.f32.mrb[0].mxu0
      %2176 = vmatprep.mubr.bf16.mxu0 0
      %2177 = vmatmul.mubr.bf16.gmra.mrb[0].mxu0 %v2003
      %v2178 = vpop.f32.mrb[0].mxu0
      %v2179 = vadd.f32 0.0, %v2178
      %v2180 = vpop.f32.mrb[0].mxu0
      %v2181 = vpop.f32.mrb[0].mxu0
      %v2182 = vadd.f32 0.0, %v2181
      %v2183 = vpop.f32.mrb[0].mxu0
      %2184 = vdwg.mxu0
      %v2185 = vadd.f32 %v1871, %v2043
      %v2186 = vadd.f32 %v1872, %v2046
      %v2187 = vadd.f32 %v1873, %v2051
      %v2188 = vadd.f32 %v1874, %v2054
      %v2189 = vadd.f32 %v1875, %v2059
      %v2190 = vadd.f32 %v1876, %v2062
      %v2191 = vadd.f32 %v1877, %v2067
      %v2192 = vadd.f32 %v1878, %v2070
      %v2193 = vadd.f32 %v1879, %v2075
      %v2194 = vadd.f32 %v1880, %v2078
      %v2195 = vadd.f32 %v1881, %v2083
      %v2196 = vadd.f32 %v1882, %v2086
      %v2197 = vadd.f32 %v1883, %v2091
      %v2198 = vadd.f32 %v1884, %v2094
      %v2199 = vadd.f32 %v1885, %v2099
      %v2200 = vadd.f32 %v1886, %v2102
      %v2201 = vadd.f32 %v1887, %v2107
      %v2202 = vadd.f32 %v1888, %v2110
      %v2203 = vadd.f32 %v1889, %v2115
      %v2204 = vadd.f32 %v1890, %v2118
      %v2205 = vadd.f32 %v1891, %v2123
      %v2206 = vadd.f32 %v1892, %v2126
      %v2207 = vadd.f32 %v1893, %v2131
      %v2208 = vadd.f32 %v1894, %v2134
      %v2209 = vadd.f32 %v1895, %v2139
      %v2210 = vadd.f32 %v1896, %v2142
      %v2211 = vadd.f32 %v1897, %v2147
      %v2212 = vadd.f32 %v1898, %v2150
      %v2213 = vadd.f32 %v1899, %v2155
      %v2214 = vadd.f32 %v1900, %v2158
      %v2215 = vadd.f32 %v1901, %v2163
      %v2216 = vadd.f32 %v1902, %v2166
      %v2217 = vadd.f32 %v1903, %v2171
      %v2218 = vadd.f32 %v1904, %v2174
      %v2219 = vadd.f32 %v1905, %v2179
      %v2220 = vadd.f32 %v1906, %v2182
      %v2221 = vld [vmem:[%s169 + $0xa0] sm:$0x7]
      %s2222 = scalar_lea.vmem %s1, 20
      %v2223 = vld [vmem:[%s2222] sm:$0xf]
      %v2225 = vunpack.c.l.b16 %v2221
      %v2226 = vpack.c.b16 %v2225, %v2225
      %vm2227 = vsmask.f32 5376
      %v2229 = vshrl.u32 %v1912, 16
      %v2231 = vrot.slane %v2229, 2
      %v2232 = vshll.u32 %v1912, 16
      %v2234 = vrot.slane %v2232, 3
      %v2235 = vor.u32 %v2231, %v2234
      %v2236 = vrot.slane %v1476, 2
      %v2237 = vrot.slane %v1479, 3
      %v2238 = vor.u32 %v2236, %v2237
      %v2239 = vsel %vm2227, %v2235, %v2238
      %v2240 = vrot.slane %v1485, 2
      %v2241 = vrot.slane %v1488, 3
      %v2242 = vor.u32 %v2240, %v2241
      %v2243 = vsel %vm2227, %v2238, %v2242
      %v2244 = vrot.slane %v1494, 2
      %v2245 = vrot.slane %v1497, 3
      %v2246 = vor.u32 %v2244, %v2245
      %v2247 = vsel %vm2227, %v2242, %v2246
      %v2248 = vrot.slane %v1503, 2
      %v2249 = vrot.slane %v1506, 3
      %v2250 = vor.u32 %v2248, %v2249
      %v2251 = vsel %vm2227, %v2246, %v2250
      %v2252 = vrot.slane %v1512, 2
      %v2253 = vrot.slane %v1515, 3
      %v2254 = vor.u32 %v2252, %v2253
      %v2255 = vsel %vm2227, %v2250, %v2254
      %v2256 = vrot.slane %v1521, 2
      %v2257 = vrot.slane %v1524, 3
      %v2258 = vor.u32 %v2256, %v2257
      %v2259 = vsel %vm2227, %v2254, %v2258
      %v2260 = vrot.slane %v1530, 2
      %v2261 = vrot.slane %v1533, 3
      %v2262 = vor.u32 %v2260, %v2261
      %v2263 = vsel %vm2227, %v2258, %v2262
      %v2264 = vrot.slane %v1539, 2
      %v2265 = vrot.slane %v1542, 3
      %v2266 = vor.u32 %v2264, %v2265
      %v2267 = vsel %vm2227, %v2262, %v2266
      %v2268 = vrot.slane %v1548, 2
      %v2269 = vrot.slane %v1551, 3
      %v2270 = vor.u32 %v2268, %v2269
      %v2271 = vsel %vm2227, %v2266, %v2270
      %v2272 = vrot.slane %v1557, 2
      %v2273 = vrot.slane %v1560, 3
      %v2274 = vor.u32 %v2272, %v2273
      %v2275 = vsel %vm2227, %v2270, %v2274
      %v2276 = vrot.slane %v1566, 2
      %v2277 = vrot.slane %v1569, 3
      %v2278 = vor.u32 %v2276, %v2277
      %v2279 = vsel %vm2227, %v2274, %v2278
      %v2280 = vrot.slane %v1575, 2
      %v2281 = vrot.slane %v1578, 3
      %v2282 = vor.u32 %v2280, %v2281
      %v2283 = vsel %vm2227, %v2278, %v2282
      %v2284 = vrot.slane %v1584, 2
      %v2285 = vrot.slane %v1587, 3
      %v2286 = vor.u32 %v2284, %v2285
      %v2287 = vsel %vm2227, %v2282, %v2286
      %v2288 = vrot.slane %v1593, 2
      %v2289 = vrot.slane %v1596, 3
      %v2290 = vor.u32 %v2288, %v2289
      %v2291 = vsel %vm2227, %v2286, %v2290
      %v2292 = vrot.slane %v1602, 2
      %v2293 = vrot.slane %v1605, 3
      %v2294 = vor.u32 %v2292, %v2293
      %v2295 = vsel %vm2227, %v2290, %v2294
      %v2296 = vrot.slane %v1611, 2
      %v2297 = vrot.slane %v1614, 3
      %v2298 = vor.u32 %v2296, %v2297
      %v2299 = vsel %vm2227, %v2294, %v2298
      %v2300 = vrot.slane %v1620, 2
      %v2301 = vrot.slane %v1623, 3
      %v2302 = vor.u32 %v2300, %v2301
      %v2303 = vsel %vm2227, %v2298, %v2302
      %v2305 = vshrl.u32 %v2226, 16
      %v2307 = vrot.slane %v2305, 2
      %v2308 = vshll.u32 %v2226, 16
      %v2310 = vrot.slane %v2308, 3
      %v2311 = vor.u32 %v2307, %v2310
      %v2312 = vsel %vm2227, %v2302, %v2311
      %v2314 = vsel %vm351, %v2239, 0
      %v2317 = vsel %vm351, %v2243, 0
      %v2320 = vsel %vm351, %v2247, 0
      %v2323 = vsel %vm351, %v2251, 0
      %v2326 = vsel %vm351, %v2255, 0
      %v2329 = vsel %vm351, %v2259, 0
      %v2332 = vsel %vm351, %v2263, 0
      %v2335 = vsel %vm351, %v2267, 0
      %v2338 = vsel %vm351, %v2271, 0
      %v2341 = vsel %vm351, %v2275, 0
      %v2344 = vsel %vm351, %v2279, 0
      %v2347 = vsel %vm351, %v2283, 0
      %v2350 = vsel %vm351, %v2287, 0
      %v2353 = vsel %vm351, %v2291, 0
      %v2356 = vsel %vm351, %v2295, 0
      %v2359 = vsel %vm351, %v2299, 0
      %v2362 = vsel %vm351, %v2303, 0
      %v2365 = vsel %vm351, %v2312, 0
      %v2368 = vsel %vm406, %v2223, 0
      %2370 = vmatprep.subr.bf16.mxu0 0
      %2371 = vmatpush1.bf16.msra.mxu0 %v2368
      %2372 = vmatprep.subr.bf16.mxu0 0
      %2373 = vmatpush1.bf16.msra.mxu0 0
      %2374 = vmatprep.subr.bf16.mxu0 0
      %2375 = vmatpush1.bf16.msra.mxu0 0
      %2376 = vmatprep.subr.bf16.mxu0 0
      %2377 = vmatpush1.bf16.msra.mxu0 0
      %2378 = vmatprep.subr.bf16.mxu0 0
      %2379 = vmatpush1.bf16.msra.mxu0 0
      %2380 = vmatprep.subr.bf16.mxu0 0
      %2381 = vmatpush1.bf16.msra.mxu0 0
      %2382 = vmatprep.subr.bf16.mxu0 0
      %2383 = vmatpush1.bf16.msra.mxu0 0
      %2384 = vmatprep.subr.bf16.mxu0 0
      %2385 = vmatpush1.bf16.msra.mxu0 0
      %2386 = vmatprep.subr.bf16.mxu0 0
      %2387 = vmatpush1.bf16.msra.mxu0 0
      %2388 = vmatprep.subr.bf16.mxu0 0
      %2389 = vmatpush1.bf16.msra.mxu0 0
      %2390 = vmatprep.subr.bf16.mxu0 0
      %2391 = vmatpush1.bf16.msra.mxu0 0
      %2392 = vmatprep.subr.bf16.mxu0 0
      %2393 = vmatpush1.bf16.msra.mxu0 0
      %2394 = vmatprep.subr.bf16.mxu0 0
      %2395 = vmatpush1.bf16.msra.mxu0 0
      %2396 = vmatprep.subr.bf16.mxu0 0
      %2397 = vmatpush1.bf16.msra.mxu0 0
      %2398 = vmatprep.subr.bf16.mxu0 0
      %2399 = vmatpush1.bf16.msra.mxu0 0
      %2400 = vmatprep.subr.bf16.mxu0 0
      %2401 = vmatpush1.bf16.msra.mxu0 0
      %2402 = vmatprep.mubr.bf16.mxu0 0
      %2403 = vmatmul.mubr.bf16.gmra.mrb[0].mxu0 %v2314
      %v2404 = vpop.f32.mrb[0].mxu0
      %v2405 = vadd.f32 0.0, %v2404
      %v2406 = vpop.f32.mrb[0].mxu0
      %v2407 = vpop.f32.mrb[0].mxu0
      %v2408 = vadd.f32 0.0, %v2407
      %v2409 = vpop.f32.mrb[0].mxu0
      %2410 = vmatprep.mubr.bf16.mxu0 0
      %2411 = vmatmul.mubr.bf16.gmra.mrb[0].mxu0 %v2317
      %v2412 = vpop.f32.mrb[0].mxu0
      %v2413 = vadd.f32 0.0, %v2412
      %v2414 = vpop.f32.mrb[0].mxu0
      %v2415 = vpop.f32.mrb[0].mxu0
      %v2416 = vadd.f32 0.0, %v2415
      %v2417 = vpop.f32.mrb[0].mxu0
      %2418 = vmatprep.mubr.bf16.mxu0 0
      %2419 = vmatmul.mubr.bf16.gmra.mrb[0].mxu0 %v2320
      %v2420 = vpop.f32.mrb[0].mxu0
      %v2421 = vadd.f32 0.0, %v2420
      %v2422 = vpop.f32.mrb[0].mxu0
      %v2423 = vpop.f32.mrb[0].mxu0
      %v2424 = vadd.f32 0.0, %v2423
      %v2425 = vpop.f32.mrb[0].mxu0
      %2426 = vmatprep.mubr.bf16.mxu0 0
      %2427 = vmatmul.mubr.bf16.gmra.mrb[0].mxu0 %v2323
      %v2428 = vpop.f32.mrb[0].mxu0
      %v2429 = vadd.f32 0.0, %v2428
      %v2430 = vpop.f32.mrb[0].mxu0
      %v2431 = vpop.f32.mrb[0].mxu0
      %v2432 = vadd.f32 0.0, %v2431
      %v2433 = vpop.f32.mrb[0].mxu0
      %2434 = vmatprep.mubr.bf16.mxu0 0
      %2435 = vmatmul.mubr.bf16.gmra.mrb[0].mxu0 %v2326
      %v2436 = vpop.f32.mrb[0].mxu0
      %v2437 = vadd.f32 0.0, %v2436
      %v2438 = vpop.f32.mrb[0].mxu0
      %v2439 = vpop.f32.mrb[0].mxu0
      %v2440 = vadd.f32 0.0, %v2439
      %v2441 = vpop.f32.mrb[0].mxu0
      %2442 = vmatprep.mubr.bf16.mxu0 0
      %2443 = vmatmul.mubr.bf16.gmra.mrb[0].mxu0 %v2329
      %v2444 = vpop.f32.mrb[0].mxu0
      %v2445 = vadd.f32 0.0, %v2444
      %v2446 = vpop.f32.mrb[0].mxu0
      %v2447 = vpop.f32.mrb[0].mxu0
      %v2448 = vadd.f32 0.0, %v2447
      %v2449 = vpop.f32.mrb[0].mxu0
      %2450 = vmatprep.mubr.bf16.mxu0 0
      %2451 = vmatmul.mubr.bf16.gmra.mrb[0].mxu0 %v2332
      %v2452 = vpop.f32.mrb[0].mxu0
      %v2453 = vadd.f32 0.0, %v2452
      %v2454 = vpop.f32.mrb[0].mxu0
      %v2455 = vpop.f32.mrb[0].mxu0
      %v2456 = vadd.f32 0.0, %v2455
      %v2457 = vpop.f32.mrb[0].mxu0
      %2458 = vmatprep.mubr.bf16.mxu0 0
      %2459 = vmatmul.mubr.bf16.gmra.mrb[0].mxu0 %v2335
      %v2460 = vpop.f32.mrb[0].mxu0
      %v2461 = vadd.f32 0.0, %v2460
      %v2462 = vpop.f32.mrb[0].mxu0
      %v2463 = vpop.f32.mrb[0].mxu0
      %v2464 = vadd.f32 0.0, %v2463
      %v2465 = vpop.f32.mrb[0].mxu0
      %2466 = vmatprep.mubr.bf16.mxu0 0
      %2467 = vmatmul.mubr.bf16.gmra.mrb[0].mxu0 %v2338
      %v2468 = vpop.f32.mrb[0].mxu0
      %v2469 = vadd.f32 0.0, %v2468
      %v2470 = vpop.f32.mrb[0].mxu0
      %v2471 = vpop.f32.mrb[0].mxu0
      %v2472 = vadd.f32 0.0, %v2471
      %v2473 = vpop.f32.mrb[0].mxu0
      %2474 = vmatprep.mubr.bf16.mxu0 0
      %2475 = vmatmul.mubr.bf16.gmra.mrb[0].mxu0 %v2341
      %v2476 = vpop.f32.mrb[0].mxu0
      %v2477 = vadd.f32 0.0, %v2476
      %v2478 = vpop.f32.mrb[0].mxu0
      %v2479 = vpop.f32.mrb[0].mxu0
      %v2480 = vadd.f32 0.0, %v2479
      %v2481 = vpop.f32.mrb[0].mxu0
      %2482 = vmatprep.mubr.bf16.mxu0 0
      %2483 = vmatmul.mubr.bf16.gmra.mrb[0].mxu0 %v2344
      %v2484 = vpop.f32.mrb[0].mxu0
      %v2485 = vadd.f32 0.0, %v2484
      %v2486 = vpop.f32.mrb[0].mxu0
      %v2487 = vpop.f32.mrb[0].mxu0
      %v2488 = vadd.f32 0.0, %v2487
      %v2489 = vpop.f32.mrb[0].mxu0
      %2490 = vmatprep.mubr.bf16.mxu0 0
      %2491 = vmatmul.mubr.bf16.gmra.mrb[0].mxu0 %v2347
      %v2492 = vpop.f32.mrb[0].mxu0
      %v2493 = vadd.f32 0.0, %v2492
      %v2494 = vpop.f32.mrb[0].mxu0
      %v2495 = vpop.f32.mrb[0].mxu0
      %v2496 = vadd.f32 0.0, %v2495
      %v2497 = vpop.f32.mrb[0].mxu0
      %2498 = vmatprep.mubr.bf16.mxu0 0
      %2499 = vmatmul.mubr.bf16.gmra.mrb[0].mxu0 %v2350
      %v2500 = vpop.f32.mrb[0].mxu0
      %v2501 = vadd.f32 0.0, %v2500
      %v2502 = vpop.f32.mrb[0].mxu0
      %v2503 = vpop.f32.mrb[0].mxu0
      %v2504 = vadd.f32 0.0, %v2503
      %v2505 = vpop.f32.mrb[0].mxu0
      %2506 = vmatprep.mubr.bf16.mxu0 0
      %2507 = vmatmul.mubr.bf16.gmra.mrb[0].mxu0 %v2353
      %v2508 = vpop.f32.mrb[0].mxu0
      %v2509 = vadd.f32 0.0, %v2508
      %v2510 = vpop.f32.mrb[0].mxu0
      %v2511 = vpop.f32.mrb[0].mxu0
      %v2512 = vadd.f32 0.0, %v2511
      %v2513 = vpop.f32.mrb[0].mxu0
      %2514 = vmatprep.mubr.bf16.mxu0 0
      %2515 = vmatmul.mubr.bf16.gmra.mrb[0].mxu0 %v2356
      %v2516 = vpop.f32.mrb[0].mxu0
      %v2517 = vadd.f32 0.0, %v2516
      %v2518 = vpop.f32.mrb[0].mxu0
      %v2519 = vpop.f32.mrb[0].mxu0
      %v2520 = vadd.f32 0.0, %v2519
      %v2521 = vpop.f32.mrb[0].mxu0
      %2522 = vmatprep.mubr.bf16.mxu0 0
      %2523 = vmatmul.mubr.bf16.gmra.mrb[0].mxu0 %v2359
      %v2524 = vpop.f32.mrb[0].mxu0
      %v2525 = vadd.f32 0.0, %v2524
      %v2526 = vpop.f32.mrb[0].mxu0
      %v2527 = vpop.f32.mrb[0].mxu0
      %v2528 = vadd.f32 0.0, %v2527
      %v2529 = vpop.f32.mrb[0].mxu0
      %2530 = vmatprep.mubr.bf16.mxu0 0
      %2531 = vmatmul.mubr.bf16.gmra.mrb[0].mxu0 %v2362
      %v2532 = vpop.f32.mrb[0].mxu0
      %v2533 = vadd.f32 0.0, %v2532
      %v2534 = vpop.f32.mrb[0].mxu0
      %v2535 = vpop.f32.mrb[0].mxu0
      %v2536 = vadd.f32 0.0, %v2535
      %v2537 = vpop.f32.mrb[0].mxu0
      %2538 = vmatprep.mubr.bf16.mxu0 0
      %2539 = vmatmul.mubr.bf16.gmra.mrb[0].mxu0 %v2365
      %v2540 = vpop.f32.mrb[0].mxu0
      %v2541 = vadd.f32 0.0, %v2540
      %v2542 = vpop.f32.mrb[0].mxu0
      %v2543 = vpop.f32.mrb[0].mxu0
      %v2544 = vadd.f32 0.0, %v2543
      %v2545 = vpop.f32.mrb[0].mxu0
      %2546 = vdwg.mxu0
      %v2547 = vadd.f32 %v2185, %v2405
      %v2548 = vadd.f32 %v2186, %v2408
      %v2549 = vadd.f32 %v2187, %v2413
      %v2550 = vadd.f32 %v2188, %v2416
      %v2551 = vadd.f32 %v2189, %v2421
      %v2552 = vadd.f32 %v2190, %v2424
      %v2553 = vadd.f32 %v2191, %v2429
      %v2554 = vadd.f32 %v2192, %v2432
      %v2555 = vadd.f32 %v2193, %v2437
      %v2556 = vadd.f32 %v2194, %v2440
      %v2557 = vadd.f32 %v2195, %v2445
      %v2558 = vadd.f32 %v2196, %v2448
      %v2559 = vadd.f32 %v2197, %v2453
      %v2560 = vadd.f32 %v2198, %v2456
      %v2561 = vadd.f32 %v2199, %v2461
      %v2562 = vadd.f32 %v2200, %v2464
      %v2563 = vadd.f32 %v2201, %v2469
      %v2564 = vadd.f32 %v2202, %v2472
      %v2565 = vadd.f32 %v2203, %v2477
      %v2566 = vadd.f32 %v2204, %v2480
      %v2567 = vadd.f32 %v2205, %v2485
      %v2568 = vadd.f32 %v2206, %v2488
      %v2569 = vadd.f32 %v2207, %v2493
      %v2570 = vadd.f32 %v2208, %v2496
      %v2571 = vadd.f32 %v2209, %v2501
      %v2572 = vadd.f32 %v2210, %v2504
      %v2573 = vadd.f32 %v2211, %v2509
      %v2574 = vadd.f32 %v2212, %v2512
      %v2575 = vadd.f32 %v2213, %v2517
      %v2576 = vadd.f32 %v2214, %v2520
      %v2577 = vadd.f32 %v2215, %v2525
      %v2578 = vadd.f32 %v2216, %v2528
      %v2579 = vadd.f32 %v2217, %v2533
      %v2580 = vadd.f32 %v2218, %v2536
      %v2581 = vadd.f32 %v2219, %v2541
      %v2582 = vadd.f32 %v2220, %v2544
      %v2583 = vld [vmem:[%s169 + $0x18] sm:$0xc]
      %v2584 = vld [vmem:[%s169 + $0x1c] sm:$0xf]
      %v2585 = vld [vmem:[%s169 + $0x20] sm:$0xf]
      %v2586 = vld [vmem:[%s169 + $0x24] sm:$0xf]
      %v2587 = vld [vmem:[%s169 + $0x28] sm:$0xf]
      %v2588 = vld [vmem:[%s169 + $0x2c] sm:$0xf]
      %v2589 = vld [vmem:[%s169 + $0x30] sm:$0xf]
      %v2590 = vld [vmem:[%s169 + $0x34] sm:$0xf]
      %v2591 = vld [vmem:[%s169 + $0x38] sm:$0xf]
      %v2592 = vld [vmem:[%s169 + $0x3c] sm:$0xf]
      %v2593 = vld [vmem:[%s169 + $0x40] sm:$0xf]
      %v2594 = vld [vmem:[%s169 + $0x44] sm:$0xf]
      %v2595 = vld [vmem:[%s169 + $0x48] sm:$0xf]
      %v2596 = vld [vmem:[%s169 + $0x4c] sm:$0xf]
      %v2597 = vld [vmem:[%s169 + $0x50] sm:$0xf]
      %v2598 = vld [vmem:[%s169 + $0x54] sm:$0xf]
      %v2599 = vld [vmem:[%s169 + $0x58] sm:$0xf]
      %v2600 = vld [vmem:[%s169 + $0x5c] sm:$0xf]
      %v2601 = vld [vmem:[%s169 + $0x60] sm:$0xf]
      %v2602 = vld [vmem:[%s169 + $0x64] sm:$0xf]
      %v2603 = vld [vmem:[%s169 + $0x68] sm:$0xf]
      %v2604 = vld [vmem:[%s169 + $0x6c] sm:$0xf]
      %v2605 = vld [vmem:[%s169 + $0x70] sm:$0xf]
      %v2606 = vld [vmem:[%s169 + $0x74] sm:$0xf]
      %v2607 = vld [vmem:[%s169 + $0x78] sm:$0xf]
      %v2608 = vld [vmem:[%s169 + $0x7c] sm:$0xf]
      %v2609 = vld [vmem:[%s169 + $0x80] sm:$0xf]
      %v2610 = vld [vmem:[%s169 + $0x84] sm:$0xf]
      %v2611 = vld [vmem:[%s169 + $0x88] sm:$0xf]
      %v2612 = vld [vmem:[%s169 + $0x8c] sm:$0xf]
      %v2613 = vld [vmem:[%s169 + $0x90] sm:$0xf]
      %v2614 = vld [vmem:[%s169 + $0x94] sm:$0xf]
      %v2615 = vld [vmem:[%s169 + $0x98] sm:$0xf]
      %v2616 = vld [vmem:[%s169 + $0x9c] sm:$0xf]
      %v2617 = vld [vmem:[%s169 + $0xa0] sm:$0xf]
      %v2618 = vld [vmem:[%s169 + $0xa4] sm:$0xf]
      %v2619 = vld [vmem:[%s169 + $0xa8] sm:$0x7]
      %s2620 = scalar_lea.vmem %s1, 24
      %v2621 = vld [vmem:[%s2620] sm:$0xf]
      %v2659 = vunpack.c.l.b16 %v2583
      %v2660 = vunpack.c.l.b16 %v2584
      %v2661 = vunpack.c.l.b16 %v2585
      %v2662 = vunpack.c.l.b16 %v2586
      %v2663 = vunpack.c.l.b16 %v2587
      %v2664 = vunpack.c.l.b16 %v2588
      %v2665 = vunpack.c.l.b16 %v2589
      %v2666 = vunpack.c.l.b16 %v2590
      %v2667 = vunpack.c.l.b16 %v2591
      %v2668 = vunpack.c.l.b16 %v2592
      %v2669 = vunpack.c.l.b16 %v2593
      %v2670 = vunpack.c.l.b16 %v2594
      %v2671 = vunpack.c.l.b16 %v2595
      %v2672 = vunpack.c.l.b16 %v2596
      %v2673 = vunpack.c.l.b16 %v2597
      %v2674 = vunpack.c.l.b16 %v2598
      %v2675 = vunpack.c.l.b16 %v2599
      %v2676 = vunpack.c.l.b16 %v2600
      %v2677 = vunpack.c.l.b16 %v2601
      %v2678 = vunpack.c.l.b16 %v2602
      %v2679 = vunpack.c.l.b16 %v2603
      %v2680 = vunpack.c.l.b16 %v2604
      %v2681 = vunpack.c.l.b16 %v2605
      %v2682 = vunpack.c.l.b16 %v2606
      %v2683 = vunpack.c.l.b16 %v2607
      %v2684 = vunpack.c.l.b16 %v2608
      %v2685 = vunpack.c.l.b16 %v2609
      %v2686 = vunpack.c.l.b16 %v2610
      %v2687 = vunpack.c.l.b16 %v2611
      %v2688 = vunpack.c.l.b16 %v2612
      %v2689 = vunpack.c.l.b16 %v2613
      %v2690 = vunpack.c.l.b16 %v2614
      %v2691 = vunpack.c.l.b16 %v2615
      %v2692 = vunpack.c.l.b16 %v2616
      %v2693 = vunpack.c.l.b16 %v2617
      %v2694 = vunpack.c.l.b16 %v2618
      %v2695 = vunpack.c.l.b16 %v2619
      %v2696 = vpack.c.b16 %v2660, %v2659
      %v2697 = vpack.c.b16 %v2662, %v2661
      %v2698 = vpack.c.b16 %v2664, %v2663
      %v2699 = vpack.c.b16 %v2666, %v2665
      %v2700 = vpack.c.b16 %v2668, %v2667
      %v2701 = vpack.c.b16 %v2670, %v2669
      %v2702 = vpack.c.b16 %v2672, %v2671
      %v2703 = vpack.c.b16 %v2674, %v2673
      %v2704 = vpack.c.b16 %v2676, %v2675
      %v2705 = vpack.c.b16 %v2678, %v2677
      %v2706 = vpack.c.b16 %v2680, %v2679
      %v2707 = vpack.c.b16 %v2682, %v2681
      %v2708 = vpack.c.b16 %v2684, %v2683
      %v2709 = vpack.c.b16 %v2686, %v2685
      %v2710 = vpack.c.b16 %v2688, %v2687
      %v2711 = vpack.c.b16 %v2690, %v2689
      %v2712 = vpack.c.b16 %v2692, %v2691
      %v2713 = vpack.c.b16 %v2694, %v2693
      %v2714 = vpack.c.b16 %v2695, %v2695
      %v2716 = vshrl.u32 %v2696, 16
      %v2718 = vrot.slane %v2716, 2
      %v2719 = vshll.u32 %v2696, 16
      %v2721 = vrot.slane %v2719, 3
      %v2722 = vor.u32 %v2718, %v2721
      %v2724 = vshrl.u32 %v2697, 16
      %v2726 = vrot.slane %v2724, 2
      %v2727 = vshll.u32 %v2697, 16
      %v2729 = vrot.slane %v2727, 3
      %v2730 = vor.u32 %v2726, %v2729
      %v2731 = vsel %vm2227, %v2722, %v2730
      %v2733 = vshrl.u32 %v2698, 16
      %v2735 = vrot.slane %v2733, 2
      %v2736 = vshll.u32 %v2698, 16
      %v2738 = vrot.slane %v2736, 3
      %v2739 = vor.u32 %v2735, %v2738
      %v2740 = vsel %vm2227, %v2730, %v2739
      %v2742 = vshrl.u32 %v2699, 16
      %v2744 = vrot.slane %v2742, 2
      %v2745 = vshll.u32 %v2699, 16
      %v2747 = vrot.slane %v2745, 3
      %v2748 = vor.u32 %v2744, %v2747
      %v2749 = vsel %vm2227, %v2739, %v2748
      %v2751 = vshrl.u32 %v2700, 16
      %v2753 = vrot.slane %v2751, 2
      %v2754 = vshll.u32 %v2700, 16
      %v2756 = vrot.slane %v2754, 3
      %v2757 = vor.u32 %v2753, %v2756
      %v2758 = vsel %vm2227, %v2748, %v2757
      %v2760 = vshrl.u32 %v2701, 16
      %v2762 = vrot.slane %v2760, 2
      %v2763 = vshll.u32 %v2701, 16
      %v2765 = vrot.slane %v2763, 3
      %v2766 = vor.u32 %v2762, %v2765
      %v2767 = vsel %vm2227, %v2757, %v2766
      %v2769 = vshrl.u32 %v2702, 16
      %v2771 = vrot.slane %v2769, 2
      %v2772 = vshll.u32 %v2702, 16
      %v2774 = vrot.slane %v2772, 3
      %v2775 = vor.u32 %v2771, %v2774
      %v2776 = vsel %vm2227, %v2766, %v2775
      %v2778 = vshrl.u32 %v2703, 16
      %v2780 = vrot.slane %v2778, 2
      %v2781 = vshll.u32 %v2703, 16
      %v2783 = vrot.slane %v2781, 3
      %v2784 = vor.u32 %v2780, %v2783
      %v2785 = vsel %vm2227, %v2775, %v2784
      %v2787 = vshrl.u32 %v2704, 16
      %v2789 = vrot.slane %v2787, 2
      %v2790 = vshll.u32 %v2704, 16
      %v2792 = vrot.slane %v2790, 3
      %v2793 = vor.u32 %v2789, %v2792
      %v2794 = vsel %vm2227, %v2784, %v2793
      %v2796 = vshrl.u32 %v2705, 16
      %v2798 = vrot.slane %v2796, 2
      %v2799 = vshll.u32 %v2705, 16
      %v2801 = vrot.slane %v2799, 3
      %v2802 = vor.u32 %v2798, %v2801
      %v2803 = vsel %vm2227, %v2793, %v2802
      %v2805 = vshrl.u32 %v2706, 16
      %v2807 = vrot.slane %v2805, 2
      %v2808 = vshll.u32 %v2706, 16
      %v2810 = vrot.slane %v2808, 3
      %v2811 = vor.u32 %v2807, %v2810
      %v2812 = vsel %vm2227, %v2802, %v2811
      %v2814 = vshrl.u32 %v2707, 16
      %v2816 = vrot.slane %v2814, 2
      %v2817 = vshll.u32 %v2707, 16
      %v2819 = vrot.slane %v2817, 3
      %v2820 = vor.u32 %v2816, %v2819
      %v2821 = vsel %vm2227, %v2811, %v2820
      %v2823 = vshrl.u32 %v2708, 16
      %v2825 = vrot.slane %v2823, 2
      %v2826 = vshll.u32 %v2708, 16
      %v2828 = vrot.slane %v2826, 3
      %v2829 = vor.u32 %v2825, %v2828
      %v2830 = vsel %vm2227, %v2820, %v2829
      %v2832 = vshrl.u32 %v2709, 16
      %v2834 = vrot.slane %v2832, 2
      %v2835 = vshll.u32 %v2709, 16
      %v2837 = vrot.slane %v2835, 3
      %v2838 = vor.u32 %v2834, %v2837
      %v2839 = vsel %vm2227, %v2829, %v2838
      %v2841 = vshrl.u32 %v2710, 16
      %v2843 = vrot.slane %v2841, 2
      %v2844 = vshll.u32 %v2710, 16
      %v2846 = vrot.slane %v2844, 3
      %v2847 = vor.u32 %v2843, %v2846
      %v2848 = vsel %vm2227, %v2838, %v2847
      %v2850 = vshrl.u32 %v2711, 16
      %v2852 = vrot.slane %v2850, 2
      %v2853 = vshll.u32 %v2711, 16
      %v2855 = vrot.slane %v2853, 3
      %v2856 = vor.u32 %v2852, %v2855
      %v2857 = vsel %vm2227, %v2847, %v2856
      %v2859 = vshrl.u32 %v2712, 16
      %v2861 = vrot.slane %v2859, 2
      %v2862 = vshll.u32 %v2712, 16
      %v2864 = vrot.slane %v2862, 3
      %v2865 = vor.u32 %v2861, %v2864
      %v2866 = vsel %vm2227, %v2856, %v2865
      %v2868 = vshrl.u32 %v2713, 16
      %v2870 = vrot.slane %v2868, 2
      %v2871 = vshll.u32 %v2713, 16
      %v2873 = vrot.slane %v2871, 3
      %v2874 = vor.u32 %v2870, %v2873
      %v2875 = vsel %vm2227, %v2865, %v2874
      %v2877 = vshrl.u32 %v2714, 16
      %v2879 = vrot.slane %v2877, 2
      %v2880 = vshll.u32 %v2714, 16
      %v2882 = vrot.slane %v2880, 3
      %v2883 = vor.u32 %v2879, %v2882
      %v2884 = vsel %vm2227, %v2874, %v2883
      %v2886 = vsel %vm351, %v2731, 0
      %v2889 = vsel %vm351, %v2740, 0
      %v2892 = vsel %vm351, %v2749, 0
      %v2895 = vsel %vm351, %v2758, 0
      %v2898 = vsel %vm351, %v2767, 0
      %v2901 = vsel %vm351, %v2776, 0
      %v2904 = vsel %vm351, %v2785, 0
      %v2907 = vsel %vm351, %v2794, 0
      %v2910 = vsel %vm351, %v2803, 0
      %v2913 = vsel %vm351, %v2812, 0
      %v2916 = vsel %vm351, %v2821, 0
      %v2919 = vsel %vm351, %v2830, 0
      %v2922 = vsel %vm351, %v2839, 0
      %v2925 = vsel %vm351, %v2848, 0
      %v2928 = vsel %vm351, %v2857, 0
      %v2931 = vsel %vm351, %v2866, 0
      %v2934 = vsel %vm351, %v2875, 0
      %v2937 = vsel %vm351, %v2884, 0
      %v2940 = vsel %vm406, %v2621, 0
      %2942 = vmatprep.subr.bf16.mxu0 0
      %2943 = vmatpush1.bf16.msra.mxu0 %v2940
      %2944 = vmatprep.subr.bf16.mxu0 0
      %2945 = vmatpush1.bf16.msra.mxu0 0
      %2946 = vmatprep.subr.bf16.mxu0 0
      %2947 = vmatpush1.bf16.msra.mxu0 0
      %2948 = vmatprep.subr.bf16.mxu0 0
      %2949 = vmatpush1.bf16.msra.mxu0 0
      %2950 = vmatprep.subr.bf16.mxu0 0
      %2951 = vmatpush1.bf16.msra.mxu0 0
      %2952 = vmatprep.subr.bf16.mxu0 0
      %2953 = vmatpush1.bf16.msra.mxu0 0
      %2954 = vmatprep.subr.bf16.mxu0 0
      %2955 = vmatpush1.bf16.msra.mxu0 0
      %2956 = vmatprep.subr.bf16.mxu0 0
      %2957 = vmatpush1.bf16.msra.mxu0 0
      %2958 = vmatprep.subr.bf16.mxu0 0
      %2959 = vmatpush1.bf16.msra.mxu0 0
      %2960 = vmatprep.subr.bf16.mxu0 0
      %2961 = vmatpush1.bf16.msra.mxu0 0
      %2962 = vmatprep.subr.bf16.mxu0 0
      %2963 = vmatpush1.bf16.msra.mxu0 0
      %2964 = vmatprep.subr.bf16.mxu0 0
      %2965 = vmatpush1.bf16.msra.mxu0 0
      %2966 = vmatprep.subr.bf16.mxu0 0
      %2967 = vmatpush1.bf16.msra.mxu0 0
      %2968 = vmatprep.subr.bf16.mxu0 0
      %2969 = vmatpush1.bf16.msra.mxu0 0
      %2970 = vmatprep.subr.bf16.mxu0 0
      %2971 = vmatpush1.bf16.msra.mxu0 0
      %2972 = vmatprep.subr.bf16.mxu0 0
      %2973 = vmatpush1.bf16.msra.mxu0 0
      %2974 = vmatprep.mubr.bf16.mxu0 0
      %2975 = vmatmul.mubr.bf16.gmra.mrb[0].mxu0 %v2886
      %v2976 = vpop.f32.mrb[0].mxu0
      %v2977 = vadd.f32 0.0, %v2976
      %v2978 = vpop.f32.mrb[0].mxu0
      %v2979 = vpop.f32.mrb[0].mxu0
      %v2980 = vadd.f32 0.0, %v2979
      %v2981 = vpop.f32.mrb[0].mxu0
      %2982 = vmatprep.mubr.bf16.mxu0 0
      %2983 = vmatmul.mubr.bf16.gmra.mrb[0].mxu0 %v2889
      %v2984 = vpop.f32.mrb[0].mxu0
      %v2985 = vadd.f32 0.0, %v2984
      %v2986 = vpop.f32.mrb[0].mxu0
      %v2987 = vpop.f32.mrb[0].mxu0
      %v2988 = vadd.f32 0.0, %v2987
      %v2989 = vpop.f32.mrb[0].mxu0
      %2990 = vmatprep.mubr.bf16.mxu0 0
      %2991 = vmatmul.mubr.bf16.gmra.mrb[0].mxu0 %v2892
      %v2992 = vpop.f32.mrb[0].mxu0
      %v2993 = vadd.f32 0.0, %v2992
      %v2994 = vpop.f32.mrb[0].mxu0
      %v2995 = vpop.f32.mrb[0].mxu0
      %v2996 = vadd.f32 0.0, %v2995
      %v2997 = vpop.f32.mrb[0].mxu0
      %2998 = vmatprep.mubr.bf16.mxu0 0
      %2999 = vmatmul.mubr.bf16.gmra.mrb[0].mxu0 %v2895
      %v3000 = vpop.f32.mrb[0].mxu0
      %v3001 = vadd.f32 0.0, %v3000
      %v3002 = vpop.f32.mrb[0].mxu0
      %v3003 = vpop.f32.mrb[0].mxu0
      %v3004 = vadd.f32 0.0, %v3003
      %v3005 = vpop.f32.mrb[0].mxu0
      %3006 = vmatprep.mubr.bf16.mxu0 0
      %3007 = vmatmul.mubr.bf16.gmra.mrb[0].mxu0 %v2898
      %v3008 = vpop.f32.mrb[0].mxu0
      %v3009 = vadd.f32 0.0, %v3008
      %v3010 = vpop.f32.mrb[0].mxu0
      %v3011 = vpop.f32.mrb[0].mxu0
      %v3012 = vadd.f32 0.0, %v3011
      %v3013 = vpop.f32.mrb[0].mxu0
      %3014 = vmatprep.mubr.bf16.mxu0 0
      %3015 = vmatmul.mubr.bf16.gmra.mrb[0].mxu0 %v2901
      %v3016 = vpop.f32.mrb[0].mxu0
      %v3017 = vadd.f32 0.0, %v3016
      %v3018 = vpop.f32.mrb[0].mxu0
      %v3019 = vpop.f32.mrb[0].mxu0
      %v3020 = vadd.f32 0.0, %v3019
      %v3021 = vpop.f32.mrb[0].mxu0
      %3022 = vmatprep.mubr.bf16.mxu0 0
      %3023 = vmatmul.mubr.bf16.gmra.mrb[0].mxu0 %v2904
      %v3024 = vpop.f32.mrb[0].mxu0
      %v3025 = vadd.f32 0.0, %v3024
      %v3026 = vpop.f32.mrb[0].mxu0
      %v3027 = vpop.f32.mrb[0].mxu0
      %v3028 = vadd.f32 0.0, %v3027
      %v3029 = vpop.f32.mrb[0].mxu0
      %3030 = vmatprep.mubr.bf16.mxu0 0
      %3031 = vmatmul.mubr.bf16.gmra.mrb[0].mxu0 %v2907
      %v3032 = vpop.f32.mrb[0].mxu0
      %v3033 = vadd.f32 0.0, %v3032
      %v3034 = vpop.f32.mrb[0].mxu0
      %v3035 = vpop.f32.mrb[0].mxu0
      %v3036 = vadd.f32 0.0, %v3035
      %v3037 = vpop.f32.mrb[0].mxu0
      %3038 = vmatprep.mubr.bf16.mxu0 0
      %3039 = vmatmul.mubr.bf16.gmra.mrb[0].mxu0 %v2910
      %v3040 = vpop.f32.mrb[0].mxu0
      %v3041 = vadd.f32 0.0, %v3040
      %v3042 = vpop.f32.mrb[0].mxu0
      %v3043 = vpop.f32.mrb[0].mxu0
      %v3044 = vadd.f32 0.0, %v3043
      %v3045 = vpop.f32.mrb[0].mxu0
      %3046 = vmatprep.mubr.bf16.mxu0 0
      %3047 = vmatmul.mubr.bf16.gmra.mrb[0].mxu0 %v2913
      %v3048 = vpop.f32.mrb[0].mxu0
      %v3049 = vadd.f32 0.0, %v3048
      %v3050 = vpop.f32.mrb[0].mxu0
      %v3051 = vpop.f32.mrb[0].mxu0
      %v3052 = vadd.f32 0.0, %v3051
      %v3053 = vpop.f32.mrb[0].mxu0
      %3054 = vmatprep.mubr.bf16.mxu0 0
      %3055 = vmatmul.mubr.bf16.gmra.mrb[0].mxu0 %v2916
      %v3056 = vpop.f32.mrb[0].mxu0
      %v3057 = vadd.f32 0.0, %v3056
      %v3058 = vpop.f32.mrb[0].mxu0
      %v3059 = vpop.f32.mrb[0].mxu0
      %v3060 = vadd.f32 0.0, %v3059
      %v3061 = vpop.f32.mrb[0].mxu0
      %3062 = vmatprep.mubr.bf16.mxu0 0
      %3063 = vmatmul.mubr.bf16.gmra.mrb[0].mxu0 %v2919
      %v3064 = vpop.f32.mrb[0].mxu0
      %v3065 = vadd.f32 0.0, %v3064
      %v3066 = vpop.f32.mrb[0].mxu0
      %v3067 = vpop.f32.mrb[0].mxu0
      %v3068 = vadd.f32 0.0, %v3067
      %v3069 = vpop.f32.mrb[0].mxu0
      %3070 = vmatprep.mubr.bf16.mxu0 0
      %3071 = vmatmul.mubr.bf16.gmra.mrb[0].mxu0 %v2922
      %v3072 = vpop.f32.mrb[0].mxu0
      %v3073 = vadd.f32 0.0, %v3072
      %v3074 = vpop.f32.mrb[0].mxu0
      %v3075 = vpop.f32.mrb[0].mxu0
      %v3076 = vadd.f32 0.0, %v3075
      %v3077 = vpop.f32.mrb[0].mxu0
      %3078 = vmatprep.mubr.bf16.mxu0 0
      %3079 = vmatmul.mubr.bf16.gmra.mrb[0].mxu0 %v2925
      %v3080 = vpop.f32.mrb[0].mxu0
      %v3081 = vadd.f32 0.0, %v3080
      %v3082 = vpop.f32.mrb[0].mxu0
      %v3083 = vpop.f32.mrb[0].mxu0
      %v3084 = vadd.f32 0.0, %v3083
      %v3085 = vpop.f32.mrb[0].mxu0
      %3086 = vmatprep.mubr.bf16.mxu0 0
      %3087 = vmatmul.mubr.bf16.gmra.mrb[0].mxu0 %v2928
      %v3088 = vpop.f32.mrb[0].mxu0
      %v3089 = vadd.f32 0.0, %v3088
      %v3090 = vpop.f32.mrb[0].mxu0
      %v3091 = vpop.f32.mrb[0].mxu0
      %v3092 = vadd.f32 0.0, %v3091
      %v3093 = vpop.f32.mrb[0].mxu0
      %3094 = vmatprep.mubr.bf16.mxu0 0
      %3095 = vmatmul.mubr.bf16.gmra.mrb[0].mxu0 %v2931
      %v3096 = vpop.f32.mrb[0].mxu0
      %v3097 = vadd.f32 0.0, %v3096
      %v3098 = vpop.f32.mrb[0].mxu0
      %v3099 = vpop.f32.mrb[0].mxu0
      %v3100 = vadd.f32 0.0, %v3099
      %v3101 = vpop.f32.mrb[0].mxu0
      %3102 = vmatprep.mubr.bf16.mxu0 0
      %3103 = vmatmul.mubr.bf16.gmra.mrb[0].mxu0 %v2934
      %v3104 = vpop.f32.mrb[0].mxu0
      %v3105 = vadd.f32 0.0, %v3104
      %v3106 = vpop.f32.mrb[0].mxu0
      %v3107 = vpop.f32.mrb[0].mxu0
      %v3108 = vadd.f32 0.0, %v3107
      %v3109 = vpop.f32.mrb[0].mxu0
      %3110 = vmatprep.mubr.bf16.mxu0 0
      %3111 = vmatmul.mubr.bf16.gmra.mrb[0].mxu0 %v2937
      %v3112 = vpop.f32.mrb[0].mxu0
      %v3113 = vadd.f32 0.0, %v3112
      %v3114 = vpop.f32.mrb[0].mxu0
      %v3115 = vpop.f32.mrb[0].mxu0
      %v3116 = vadd.f32 0.0, %v3115
      %v3117 = vpop.f32.mrb[0].mxu0
      %3118 = vdwg.mxu0
      %v3119 = vadd.f32 %v2547, %v2977
      %v3120 = vadd.f32 %v2548, %v2980
      %v3121 = vadd.f32 %v2549, %v2985
      %v3122 = vadd.f32 %v2550, %v2988
      %v3123 = vadd.f32 %v2551, %v2993
      %v3124 = vadd.f32 %v2552, %v2996
      %v3125 = vadd.f32 %v2553, %v3001
      %v3126 = vadd.f32 %v2554, %v3004
      %v3127 = vadd.f32 %v2555, %v3009
      %v3128 = vadd.f32 %v2556, %v3012
      %v3129 = vadd.f32 %v2557, %v3017
      %v3130 = vadd.f32 %v2558, %v3020
      %v3131 = vadd.f32 %v2559, %v3025
      %v3132 = vadd.f32 %v2560, %v3028
      %v3133 = vadd.f32 %v2561, %v3033
      %v3134 = vadd.f32 %v2562, %v3036
      %v3135 = vadd.f32 %v2563, %v3041
      %v3136 = vadd.f32 %v2564, %v3044
      %v3137 = vadd.f32 %v2565, %v3049
      %v3138 = vadd.f32 %v2566, %v3052
      %v3139 = vadd.f32 %v2567, %v3057
      %v3140 = vadd.f32 %v2568, %v3060
      %v3141 = vadd.f32 %v2569, %v3065
      %v3142 = vadd.f32 %v2570, %v3068
      %v3143 = vadd.f32 %v2571, %v3073
      %v3144 = vadd.f32 %v2572, %v3076
      %v3145 = vadd.f32 %v2573, %v3081
      %v3146 = vadd.f32 %v2574, %v3084
      %v3147 = vadd.f32 %v2575, %v3089
      %v3148 = vadd.f32 %v2576, %v3092
      %v3149 = vadd.f32 %v2577, %v3097
      %v3150 = vadd.f32 %v2578, %v3100
      %v3151 = vadd.f32 %v2579, %v3105
      %v3152 = vadd.f32 %v2580, %v3108
      %v3153 = vadd.f32 %v2581, %v3113
      %v3154 = vadd.f32 %v2582, %v3116
      %v3155 = vld [vmem:[%s169 + $0x18] sm:$0x8]
      %s3156 = scalar_lea.vmem %s1, 28
      %v3157 = vld [vmem:[%s3156] sm:$0xf]
      %v3159 = vunpack.c.l.b16 %v3155
      %v3160 = vpack.c.b16 %v2660, %v3159
      %vm3161 = vcmask 1044480
      %v3162 = vrot.slane %v3160, 3
      %v3163 = vrot.slane %v2697, 3
      %v3164 = vsel %vm3161, %v3162, %v3163
      %v3165 = vrot.slane %v2698, 3
      %v3166 = vsel %vm3161, %v3163, %v3165
      %v3167 = vrot.slane %v2699, 3
      %v3168 = vsel %vm3161, %v3165, %v3167
      %v3169 = vrot.slane %v2700, 3
      %v3170 = vsel %vm3161, %v3167, %v3169
      %v3171 = vrot.slane %v2701, 3
      %v3172 = vsel %vm3161, %v3169, %v3171
      %v3173 = vrot.slane %v2702, 3
      %v3174 = vsel %vm3161, %v3171, %v3173
      %v3175 = vrot.slane %v2703, 3
      %v3176 = vsel %vm3161, %v3173, %v3175
      %v3177 = vrot.slane %v2704, 3
      %v3178 = vsel %vm3161, %v3175, %v3177
      %v3179 = vrot.slane %v2705, 3
      %v3180 = vsel %vm3161, %v3177, %v3179
      %v3181 = vrot.slane %v2706, 3
      %v3182 = vsel %vm3161, %v3179, %v3181
      %v3183 = vrot.slane %v2707, 3
      %v3184 = vsel %vm3161, %v3181, %v3183
      %v3185 = vrot.slane %v2708, 3
      %v3186 = vsel %vm3161, %v3183, %v3185
      %v3187 = vrot.slane %v2709, 3
      %v3188 = vsel %vm3161, %v3185, %v3187
      %v3189 = vrot.slane %v2710, 3
      %v3190 = vsel %vm3161, %v3187, %v3189
      %v3191 = vrot.slane %v2711, 3
      %v3192 = vsel %vm3161, %v3189, %v3191
      %v3193 = vrot.slane %v2712, 3
      %v3194 = vsel %vm3161, %v3191, %v3193
      %v3195 = vrot.slane %v2713, 3
      %v3196 = vsel %vm3161, %v3193, %v3195
      %v3197 = vrot.slane %v2714, 3
      %v3198 = vsel %vm3161, %v3195, %v3197
      %v3200 = vsel %vm351, %v3164, 0
      %v3203 = vsel %vm351, %v3166, 0
      %v3206 = vsel %vm351, %v3168, 0
      %v3209 = vsel %vm351, %v3170, 0
      %v3212 = vsel %vm351, %v3172, 0
      %v3215 = vsel %vm351, %v3174, 0
      %v3218 = vsel %vm351, %v3176, 0
      %v3221 = vsel %vm351, %v3178, 0
      %v3224 = vsel %vm351, %v3180, 0
      %v3227 = vsel %vm351, %v3182, 0
      %v3230 = vsel %vm351, %v3184, 0
      %v3233 = vsel %vm351, %v3186, 0
      %v3236 = vsel %vm351, %v3188, 0
      %v3239 = vsel %vm351, %v3190, 0
      %v3242 = vsel %vm351, %v3192, 0
      %v3245 = vsel %vm351, %v3194, 0
      %v3248 = vsel %vm351, %v3196, 0
      %v3251 = vsel %vm351, %v3198, 0
      %v3254 = vsel %vm406, %v3157, 0
      %3256 = vmatprep.subr.bf16.mxu0 0
      %3257 = vmatpush1.bf16.msra.mxu0 %v3254
      %3258 = vmatprep.subr.bf16.mxu0 0
      %3259 = vmatpush1.bf16.msra.mxu0 0
      %3260 = vmatprep.subr.bf16.mxu0 0
      %3261 = vmatpush1.bf16.msra.mxu0 0
      %3262 = vmatprep.subr.bf16.mxu0 0
      %3263 = vmatpush1.bf16.msra.mxu0 0
      %3264 = vmatprep.subr.bf16.mxu0 0
      %3265 = vmatpush1.bf16.msra.mxu0 0
      %3266 = vmatprep.subr.bf16.mxu0 0
      %3267 = vmatpush1.bf16.msra.mxu0 0
      %3268 = vmatprep.subr.bf16.mxu0 0
      %3269 = vmatpush1.bf16.msra.mxu0 0
      %3270 = vmatprep.subr.bf16.mxu0 0
      %3271 = vmatpush1.bf16.msra.mxu0 0
      %3272 = vmatprep.subr.bf16.mxu0 0
      %3273 = vmatpush1.bf16.msra.mxu0 0
      %3274 = vmatprep.subr.bf16.mxu0 0
      %3275 = vmatpush1.bf16.msra.mxu0 0
      %3276 = vmatprep.subr.bf16.mxu0 0
      %3277 = vmatpush1.bf16.msra.mxu0 0
      %3278 = vmatprep.subr.bf16.mxu0 0
      %3279 = vmatpush1.bf16.msra.mxu0 0
      %3280 = vmatprep.subr.bf16.mxu0 0
      %3281 = vmatpush1.bf16.msra.mxu0 0
      %3282 = vmatprep.subr.bf16.mxu0 0
      %3283 = vmatpush1.bf16.msra.mxu0 0
      %3284 = vmatprep.subr.bf16.mxu0 0
      %3285 = vmatpush1.bf16.msra.mxu0 0
      %3286 = vmatprep.subr.bf16.mxu0 0
      %3287 = vmatpush1.bf16.msra.mxu0 0
      %3288 = vmatprep.mubr.bf16.mxu0 0
      %3289 = vmatmul.mubr.bf16.gmra.mrb[0].mxu0 %v3200
      %v3290 = vpop.f32.mrb[0].mxu0
      %v3291 = vadd.f32 0.0, %v3290
      %v3292 = vpop.f32.mrb[0].mxu0
      %v3293 = vpop.f32.mrb[0].mxu0
      %v3294 = vadd.f32 0.0, %v3293
      %v3295 = vpop.f32.mrb[0].mxu0
      %3296 = vmatprep.mubr.bf16.mxu0 0
      %3297 = vmatmul.mubr.bf16.gmra.mrb[0].mxu0 %v3203
      %v3298 = vpop.f32.mrb[0].mxu0
      %v3299 = vadd.f32 0.0, %v3298
      %v3300 = vpop.f32.mrb[0].mxu0
      %v3301 = vpop.f32.mrb[0].mxu0
      %v3302 = vadd.f32 0.0, %v3301
      %v3303 = vpop.f32.mrb[0].mxu0
      %3304 = vmatprep.mubr.bf16.mxu0 0
      %3305 = vmatmul.mubr.bf16.gmra.mrb[0].mxu0 %v3206
      %v3306 = vpop.f32.mrb[0].mxu0
      %v3307 = vadd.f32 0.0, %v3306
      %v3308 = vpop.f32.mrb[0].mxu0
      %v3309 = vpop.f32.mrb[0].mxu0
      %v3310 = vadd.f32 0.0, %v3309
      %v3311 = vpop.f32.mrb[0].mxu0
      %3312 = vmatprep.mubr.bf16.mxu0 0
      %3313 = vmatmul.mubr.bf16.gmra.mrb[0].mxu0 %v3209
      %v3314 = vpop.f32.mrb[0].mxu0
      %v3315 = vadd.f32 0.0, %v3314
      %v3316 = vpop.f32.mrb[0].mxu0
      %v3317 = vpop.f32.mrb[0].mxu0
      %v3318 = vadd.f32 0.0, %v3317
      %v3319 = vpop.f32.mrb[0].mxu0
      %3320 = vmatprep.mubr.bf16.mxu0 0
      %3321 = vmatmul.mubr.bf16.gmra.mrb[0].mxu0 %v3212
      %v3322 = vpop.f32.mrb[0].mxu0
      %v3323 = vadd.f32 0.0, %v3322
      %v3324 = vpop.f32.mrb[0].mxu0
      %v3325 = vpop.f32.mrb[0].mxu0
      %v3326 = vadd.f32 0.0, %v3325
      %v3327 = vpop.f32.mrb[0].mxu0
      %3328 = vmatprep.mubr.bf16.mxu0 0
      %3329 = vmatmul.mubr.bf16.gmra.mrb[0].mxu0 %v3215
      %v3330 = vpop.f32.mrb[0].mxu0
      %v3331 = vadd.f32 0.0, %v3330
      %v3332 = vpop.f32.mrb[0].mxu0
      %v3333 = vpop.f32.mrb[0].mxu0
      %v3334 = vadd.f32 0.0, %v3333
      %v3335 = vpop.f32.mrb[0].mxu0
      %3336 = vmatprep.mubr.bf16.mxu0 0
      %3337 = vmatmul.mubr.bf16.gmra.mrb[0].mxu0 %v3218
      %v3338 = vpop.f32.mrb[0].mxu0
      %v3339 = vadd.f32 0.0, %v3338
      %v3340 = vpop.f32.mrb[0].mxu0
      %v3341 = vpop.f32.mrb[0].mxu0
      %v3342 = vadd.f32 0.0, %v3341
      %v3343 = vpop.f32.mrb[0].mxu0
      %3344 = vmatprep.mubr.bf16.mxu0 0
      %3345 = vmatmul.mubr.bf16.gmra.mrb[0].mxu0 %v3221
      %v3346 = vpop.f32.mrb[0].mxu0
      %v3347 = vadd.f32 0.0, %v3346
      %v3348 = vpop.f32.mrb[0].mxu0
      %v3349 = vpop.f32.mrb[0].mxu0
      %v3350 = vadd.f32 0.0, %v3349
      %v3351 = vpop.f32.mrb[0].mxu0
      %3352 = vmatprep.mubr.bf16.mxu0 0
      %3353 = vmatmul.mubr.bf16.gmra.mrb[0].mxu0 %v3224
      %v3354 = vpop.f32.mrb[0].mxu0
      %v3355 = vadd.f32 0.0, %v3354
      %v3356 = vpop.f32.mrb[0].mxu0
      %v3357 = vpop.f32.mrb[0].mxu0
      %v3358 = vadd.f32 0.0, %v3357
      %v3359 = vpop.f32.mrb[0].mxu0
      %3360 = vmatprep.mubr.bf16.mxu0 0
      %3361 = vmatmul.mubr.bf16.gmra.mrb[0].mxu0 %v3227
      %v3362 = vpop.f32.mrb[0].mxu0
      %v3363 = vadd.f32 0.0, %v3362
      %v3364 = vpop.f32.mrb[0].mxu0
      %v3365 = vpop.f32.mrb[0].mxu0
      %v3366 = vadd.f32 0.0, %v3365
      %v3367 = vpop.f32.mrb[0].mxu0
      %3368 = vmatprep.mubr.bf16.mxu0 0
      %3369 = vmatmul.mubr.bf16.gmra.mrb[0].mxu0 %v3230
      %v3370 = vpop.f32.mrb[0].mxu0
      %v3371 = vadd.f32 0.0, %v3370
      %v3372 = vpop.f32.mrb[0].mxu0
      %v3373 = vpop.f32.mrb[0].mxu0
      %v3374 = vadd.f32 0.0, %v3373
      %v3375 = vpop.f32.mrb[0].mxu0
      %3376 = vmatprep.mubr.bf16.mxu0 0
      %3377 = vmatmul.mubr.bf16.gmra.mrb[0].mxu0 %v3233
      %v3378 = vpop.f32.mrb[0].mxu0
      %v3379 = vadd.f32 0.0, %v3378
      %v3380 = vpop.f32.mrb[0].mxu0
      %v3381 = vpop.f32.mrb[0].mxu0
      %v3382 = vadd.f32 0.0, %v3381
      %v3383 = vpop.f32.mrb[0].mxu0
      %3384 = vmatprep.mubr.bf16.mxu0 0
      %3385 = vmatmul.mubr.bf16.gmra.mrb[0].mxu0 %v3236
      %v3386 = vpop.f32.mrb[0].mxu0
      %v3387 = vadd.f32 0.0, %v3386
      %v3388 = vpop.f32.mrb[0].mxu0
      %v3389 = vpop.f32.mrb[0].mxu0
      %v3390 = vadd.f32 0.0, %v3389
      %v3391 = vpop.f32.mrb[0].mxu0
      %3392 = vmatprep.mubr.bf16.mxu0 0
      %3393 = vmatmul.mubr.bf16.gmra.mrb[0].mxu0 %v3239
      %v3394 = vpop.f32.mrb[0].mxu0
      %v3395 = vadd.f32 0.0, %v3394
      %v3396 = vpop.f32.mrb[0].mxu0
      %v3397 = vpop.f32.mrb[0].mxu0
      %v3398 = vadd.f32 0.0, %v3397
      %v3399 = vpop.f32.mrb[0].mxu0
      %3400 = vmatprep.mubr.bf16.mxu0 0
      %3401 = vmatmul.mubr.bf16.gmra.mrb[0].mxu0 %v3242
      %v3402 = vpop.f32.mrb[0].mxu0
      %v3403 = vadd.f32 0.0, %v3402
      %v3404 = vpop.f32.mrb[0].mxu0
      %v3405 = vpop.f32.mrb[0].mxu0
      %v3406 = vadd.f32 0.0, %v3405
      %v3407 = vpop.f32.mrb[0].mxu0
      %3408 = vmatprep.mubr.bf16.mxu0 0
      %3409 = vmatmul.mubr.bf16.gmra.mrb[0].mxu0 %v3245
      %v3410 = vpop.f32.mrb[0].mxu0
      %v3411 = vadd.f32 0.0, %v3410
      %v3412 = vpop.f32.mrb[0].mxu0
      %v3413 = vpop.f32.mrb[0].mxu0
      %v3414 = vadd.f32 0.0, %v3413
      %v3415 = vpop.f32.mrb[0].mxu0
      %3416 = vmatprep.mubr.bf16.mxu0 0
      %3417 = vmatmul.mubr.bf16.gmra.mrb[0].mxu0 %v3248
      %v3418 = vpop.f32.mrb[0].mxu0
      %v3419 = vadd.f32 0.0, %v3418
      %v3420 = vpop.f32.mrb[0].mxu0
      %v3421 = vpop.f32.mrb[0].mxu0
      %v3422 = vadd.f32 0.0, %v3421
      %v3423 = vpop.f32.mrb[0].mxu0
      %3424 = vmatprep.mubr.bf16.mxu0 0
      %3425 = vmatmul.mubr.bf16.gmra.mrb[0].mxu0 %v3251
      %v3426 = vpop.f32.mrb[0].mxu0
      %v3427 = vadd.f32 0.0, %v3426
      %v3428 = vpop.f32.mrb[0].mxu0
      %v3429 = vpop.f32.mrb[0].mxu0
      %v3430 = vadd.f32 0.0, %v3429
      %v3431 = vpop.f32.mrb[0].mxu0
      %3432 = vdwg.mxu0
      %v3433 = vadd.f32 %v3119, %v3291
      %v3434 = vadd.f32 %v3120, %v3294
      %v3435 = vadd.f32 %v3121, %v3299
      %v3436 = vadd.f32 %v3122, %v3302
      %v3437 = vadd.f32 %v3123, %v3307
      %v3438 = vadd.f32 %v3124, %v3310
      %v3439 = vadd.f32 %v3125, %v3315
      %v3440 = vadd.f32 %v3126, %v3318
      %v3441 = vadd.f32 %v3127, %v3323
      %v3442 = vadd.f32 %v3128, %v3326
      %v3443 = vadd.f32 %v3129, %v3331
      %v3444 = vadd.f32 %v3130, %v3334
      %v3445 = vadd.f32 %v3131, %v3339
      %v3446 = vadd.f32 %v3132, %v3342
      %v3447 = vadd.f32 %v3133, %v3347
      %v3448 = vadd.f32 %v3134, %v3350
      %v3449 = vadd.f32 %v3135, %v3355
      %v3450 = vadd.f32 %v3136, %v3358
      %v3451 = vadd.f32 %v3137, %v3363
      %v3452 = vadd.f32 %v3138, %v3366
      %v3453 = vadd.f32 %v3139, %v3371
      %v3454 = vadd.f32 %v3140, %v3374
      %v3455 = vadd.f32 %v3141, %v3379
      %v3456 = vadd.f32 %v3142, %v3382
      %v3457 = vadd.f32 %v3143, %v3387
      %v3458 = vadd.f32 %v3144, %v3390
      %v3459 = vadd.f32 %v3145, %v3395
      %v3460 = vadd.f32 %v3146, %v3398
      %v3461 = vadd.f32 %v3147, %v3403
      %v3462 = vadd.f32 %v3148, %v3406
      %v3463 = vadd.f32 %v3149, %v3411
      %v3464 = vadd.f32 %v3150, %v3414
      %v3465 = vadd.f32 %v3151, %v3419
      %v3466 = vadd.f32 %v3152, %v3422
      %v3467 = vadd.f32 %v3153, %v3427
      %v3468 = vadd.f32 %v3154, %v3430
      %v3469 = vld [vmem:[%s169 + $0xa8] sm:$0xf]
      %s3470 = scalar_lea.vmem %s1, 32
      %v3471 = vld [vmem:[%s3470] sm:$0xf]
      %v3473 = vunpack.c.l.b16 %v3469
      %v3474 = vpack.c.b16 %v3473, %v3473
      %vm3475 = vsmask.f32 4352
      %v3477 = vshrl.u32 %v3160, 16
      %v3479 = vrot.slane %v3477, 3
      %v3480 = vshll.u32 %v3160, 16
      %v3482 = vrot.slane %v3480, 4
      %v3483 = vor.u32 %v3479, %v3482
      %v3484 = vrot.slane %v2724, 3
      %v3485 = vrot.slane %v2727, 4
      %v3486 = vor.u32 %v3484, %v3485
      %v3487 = vsel %vm3475, %v3483, %v3486
      %v3488 = vrot.slane %v2733, 3
      %v3489 = vrot.slane %v2736, 4
      %v3490 = vor.u32 %v3488, %v3489
      %v3491 = vsel %vm3475, %v3486, %v3490
      %v3492 = vrot.slane %v2742, 3
      %v3493 = vrot.slane %v2745, 4
      %v3494 = vor.u32 %v3492, %v3493
      %v3495 = vsel %vm3475, %v3490, %v3494
      %v3496 = vrot.slane %v2751, 3
      %v3497 = vrot.slane %v2754, 4
      %v3498 = vor.u32 %v3496, %v3497
      %v3499 = vsel %vm3475, %v3494, %v3498
      %v3500 = vrot.slane %v2760, 3
      %v3501 = vrot.slane %v2763, 4
      %v3502 = vor.u32 %v3500, %v3501
      %v3503 = vsel %vm3475, %v3498, %v3502
      %v3504 = vrot.slane %v2769, 3
      %v3505 = vrot.slane %v2772, 4
      %v3506 = vor.u32 %v3504, %v3505
      %v3507 = vsel %vm3475, %v3502, %v3506
      %v3508 = vrot.slane %v2778, 3
      %v3509 = vrot.slane %v2781, 4
      %v3510 = vor.u32 %v3508, %v3509
      %v3511 = vsel %vm3475, %v3506, %v3510
      %v3512 = vrot.slane %v2787, 3
      %v3513 = vrot.slane %v2790, 4
      %v3514 = vor.u32 %v3512, %v3513
      %v3515 = vsel %vm3475, %v3510, %v3514
      %v3516 = vrot.slane %v2796, 3
      %v3517 = vrot.slane %v2799, 4
      %v3518 = vor.u32 %v3516, %v3517
      %v3519 = vsel %vm3475, %v3514, %v3518
      %v3520 = vrot.slane %v2805, 3
      %v3521 = vrot.slane %v2808, 4
      %v3522 = vor.u32 %v3520, %v3521
      %v3523 = vsel %vm3475, %v3518, %v3522
      %v3524 = vrot.slane %v2814, 3
      %v3525 = vrot.slane %v2817, 4
      %v3526 = vor.u32 %v3524, %v3525
      %v3527 = vsel %vm3475, %v3522, %v3526
      %v3528 = vrot.slane %v2823, 3
      %v3529 = vrot.slane %v2826, 4
      %v3530 = vor.u32 %v3528, %v3529
      %v3531 = vsel %vm3475, %v3526, %v3530
      %v3532 = vrot.slane %v2832, 3
      %v3533 = vrot.slane %v2835, 4
      %v3534 = vor.u32 %v3532, %v3533
      %v3535 = vsel %vm3475, %v3530, %v3534
      %v3536 = vrot.slane %v2841, 3
      %v3537 = vrot.slane %v2844, 4
      %v3538 = vor.u32 %v3536, %v3537
      %v3539 = vsel %vm3475, %v3534, %v3538
      %v3540 = vrot.slane %v2850, 3
      %v3541 = vrot.slane %v2853, 4
      %v3542 = vor.u32 %v3540, %v3541
      %v3543 = vsel %vm3475, %v3538, %v3542
      %v3544 = vrot.slane %v2859, 3
      %v3545 = vrot.slane %v2862, 4
      %v3546 = vor.u32 %v3544, %v3545
      %v3547 = vsel %vm3475, %v3542, %v3546
      %v3548 = vrot.slane %v2868, 3
      %v3549 = vrot.slane %v2871, 4
      %v3550 = vor.u32 %v3548, %v3549
      %v3551 = vsel %vm3475, %v3546, %v3550
      %v3553 = vshrl.u32 %v3474, 16
      %v3555 = vrot.slane %v3553, 3
      %v3556 = vshll.u32 %v3474, 16
      %v3558 = vrot.slane %v3556, 4
      %v3559 = vor.u32 %v3555, %v3558
      %v3560 = vsel %vm3475, %v3550, %v3559
      %v3562 = vsel %vm351, %v3487, 0
      %v3565 = vsel %vm351, %v3491, 0
      %v3568 = vsel %vm351, %v3495, 0
      %v3571 = vsel %vm351, %v3499, 0
      %v3574 = vsel %vm351, %v3503, 0
      %v3577 = vsel %vm351, %v3507, 0
      %v3580 = vsel %vm351, %v3511, 0
      %v3583 = vsel %vm351, %v3515, 0
      %v3586 = vsel %vm351, %v3519, 0
      %v3589 = vsel %vm351, %v3523, 0
      %v3592 = vsel %vm351, %v3527, 0
      %v3595 = vsel %vm351, %v3531, 0
      %v3598 = vsel %vm351, %v3535, 0
      %v3601 = vsel %vm351, %v3539, 0
      %v3604 = vsel %vm351, %v3543, 0
      %v3607 = vsel %vm351, %v3547, 0
      %v3610 = vsel %vm351, %v3551, 0
      %v3613 = vsel %vm351, %v3560, 0
      %v3616 = vsel %vm406, %v3471, 0
      %3618 = vmatprep.subr.bf16.mxu0 0
      %3619 = vmatpush1.bf16.msra.mxu0 %v3616
      %3620 = vmatprep.subr.bf16.mxu0 0
      %3621 = vmatpush1.bf16.msra.mxu0 0
      %3622 = vmatprep.subr.bf16.mxu0 0
      %3623 = vmatpush1.bf16.msra.mxu0 0
      %3624 = vmatprep.subr.bf16.mxu0 0
      %3625 = vmatpush1.bf16.msra.mxu0 0
      %3626 = vmatprep.subr.bf16.mxu0 0
      %3627 = vmatpush1.bf16.msra.mxu0 0
      %3628 = vmatprep.subr.bf16.mxu0 0
      %3629 = vmatpush1.bf16.msra.mxu0 0
      %3630 = vmatprep.subr.bf16.mxu0 0
      %3631 = vmatpush1.bf16.msra.mxu0 0
      %3632 = vmatprep.subr.bf16.mxu0 0
      %3633 = vmatpush1.bf16.msra.mxu0 0
      %3634 = vmatprep.subr.bf16.mxu0 0
      %3635 = vmatpush1.bf16.msra.mxu0 0
      %3636 = vmatprep.subr.bf16.mxu0 0
      %3637 = vmatpush1.bf16.msra.mxu0 0
      %3638 = vmatprep.subr.bf16.mxu0 0
      %3639 = vmatpush1.bf16.msra.mxu0 0
      %3640 = vmatprep.subr.bf16.mxu0 0
      %3641 = vmatpush1.bf16.msra.mxu0 0
      %3642 = vmatprep.subr.bf16.mxu0 0
      %3643 = vmatpush1.bf16.msra.mxu0 0
      %3644 = vmatprep.subr.bf16.mxu0 0
      %3645 = vmatpush1.bf16.msra.mxu0 0
      %3646 = vmatprep.subr.bf16.mxu0 0
      %3647 = vmatpush1.bf16.msra.mxu0 0
      %3648 = vmatprep.subr.bf16.mxu0 0
      %3649 = vmatpush1.bf16.msra.mxu0 0
      %3650 = vmatprep.mubr.bf16.mxu0 0
      %3651 = vmatmul.mubr.bf16.gmra.mrb[0].mxu0 %v3562
      %v3652 = vpop.f32.mrb[0].mxu0
      %v3653 = vadd.f32 0.0, %v3652
      %v3654 = vpop.f32.mrb[0].mxu0
      %v3655 = vpop.f32.mrb[0].mxu0
      %v3656 = vadd.f32 0.0, %v3655
      %v3657 = vpop.f32.mrb[0].mxu0
      %3658 = vmatprep.mubr.bf16.mxu0 0
      %3659 = vmatmul.mubr.bf16.gmra.mrb[0].mxu0 %v3565
      %v3660 = vpop.f32.mrb[0].mxu0
      %v3661 = vadd.f32 0.0, %v3660
      %v3662 = vpop.f32.mrb[0].mxu0
      %v3663 = vpop.f32.mrb[0].mxu0
      %v3664 = vadd.f32 0.0, %v3663
      %v3665 = vpop.f32.mrb[0].mxu0
      %3666 = vmatprep.mubr.bf16.mxu0 0
      %3667 = vmatmul.mubr.bf16.gmra.mrb[0].mxu0 %v3568
      %v3668 = vpop.f32.mrb[0].mxu0
      %v3669 = vadd.f32 0.0, %v3668
      %v3670 = vpop.f32.mrb[0].mxu0
      %v3671 = vpop.f32.mrb[0].mxu0
      %v3672 = vadd.f32 0.0, %v3671
      %v3673 = vpop.f32.mrb[0].mxu0
      %3674 = vmatprep.mubr.bf16.mxu0 0
      %3675 = vmatmul.mubr.bf16.gmra.mrb[0].mxu0 %v3571
      %v3676 = vpop.f32.mrb[0].mxu0
      %v3677 = vadd.f32 0.0, %v3676
      %v3678 = vpop.f32.mrb[0].mxu0
      %v3679 = vpop.f32.mrb[0].mxu0
      %v3680 = vadd.f32 0.0, %v3679
      %v3681 = vpop.f32.mrb[0].mxu0
      %3682 = vmatprep.mubr.bf16.mxu0 0
      %3683 = vmatmul.mubr.bf16.gmra.mrb[0].mxu0 %v3574
      %v3684 = vpop.f32.mrb[0].mxu0
      %v3685 = vadd.f32 0.0, %v3684
      %v3686 = vpop.f32.mrb[0].mxu0
      %v3687 = vpop.f32.mrb[0].mxu0
      %v3688 = vadd.f32 0.0, %v3687
      %v3689 = vpop.f32.mrb[0].mxu0
      %3690 = vmatprep.mubr.bf16.mxu0 0
      %3691 = vmatmul.mubr.bf16.gmra.mrb[0].mxu0 %v3577
      %v3692 = vpop.f32.mrb[0].mxu0
      %v3693 = vadd.f32 0.0, %v3692
      %v3694 = vpop.f32.mrb[0].mxu0
      %v3695 = vpop.f32.mrb[0].mxu0
      %v3696 = vadd.f32 0.0, %v3695
      %v3697 = vpop.f32.mrb[0].mxu0
      %3698 = vmatprep.mubr.bf16.mxu0 0
      %3699 = vmatmul.mubr.bf16.gmra.mrb[0].mxu0 %v3580
      %v3700 = vpop.f32.mrb[0].mxu0
      %v3701 = vadd.f32 0.0, %v3700
      %v3702 = vpop.f32.mrb[0].mxu0
      %v3703 = vpop.f32.mrb[0].mxu0
      %v3704 = vadd.f32 0.0, %v3703
      %v3705 = vpop.f32.mrb[0].mxu0
      %3706 = vmatprep.mubr.bf16.mxu0 0
      %3707 = vmatmul.mubr.bf16.gmra.mrb[0].mxu0 %v3583
      %v3708 = vpop.f32.mrb[0].mxu0
      %v3709 = vadd.f32 0.0, %v3708
      %v3710 = vpop.f32.mrb[0].mxu0
      %v3711 = vpop.f32.mrb[0].mxu0
      %v3712 = vadd.f32 0.0, %v3711
      %v3713 = vpop.f32.mrb[0].mxu0
      %3714 = vmatprep.mubr.bf16.mxu0 0
      %3715 = vmatmul.mubr.bf16.gmra.mrb[0].mxu0 %v3586
      %v3716 = vpop.f32.mrb[0].mxu0
      %v3717 = vadd.f32 0.0, %v3716
      %v3718 = vpop.f32.mrb[0].mxu0
      %v3719 = vpop.f32.mrb[0].mxu0
      %v3720 = vadd.f32 0.0, %v3719
      %v3721 = vpop.f32.mrb[0].mxu0
      %3722 = vmatprep.mubr.bf16.mxu0 0
      %3723 = vmatmul.mubr.bf16.gmra.mrb[0].mxu0 %v3589
      %v3724 = vpop.f32.mrb[0].mxu0
      %v3725 = vadd.f32 0.0, %v3724
      %v3726 = vpop.f32.mrb[0].mxu0
      %v3727 = vpop.f32.mrb[0].mxu0
      %v3728 = vadd.f32 0.0, %v3727
      %v3729 = vpop.f32.mrb[0].mxu0
      %3730 = vmatprep.mubr.bf16.mxu0 0
      %3731 = vmatmul.mubr.bf16.gmra.mrb[0].mxu0 %v3592
      %v3732 = vpop.f32.mrb[0].mxu0
      %v3733 = vadd.f32 0.0, %v3732
      %v3734 = vpop.f32.mrb[0].mxu0
      %v3735 = vpop.f32.mrb[0].mxu0
      %v3736 = vadd.f32 0.0, %v3735
      %v3737 = vpop.f32.mrb[0].mxu0
      %3738 = vmatprep.mubr.bf16.mxu0 0
      %3739 = vmatmul.mubr.bf16.gmra.mrb[0].mxu0 %v3595
      %v3740 = vpop.f32.mrb[0].mxu0
      %v3741 = vadd.f32 0.0, %v3740
      %v3742 = vpop.f32.mrb[0].mxu0
      %v3743 = vpop.f32.mrb[0].mxu0
      %v3744 = vadd.f32 0.0, %v3743
      %v3745 = vpop.f32.mrb[0].mxu0
      %3746 = vmatprep.mubr.bf16.mxu0 0
      %3747 = vmatmul.mubr.bf16.gmra.mrb[0].mxu0 %v3598
      %v3748 = vpop.f32.mrb[0].mxu0
      %v3749 = vadd.f32 0.0, %v3748
      %v3750 = vpop.f32.mrb[0].mxu0
      %v3751 = vpop.f32.mrb[0].mxu0
      %v3752 = vadd.f32 0.0, %v3751
      %v3753 = vpop.f32.mrb[0].mxu0
      %3754 = vmatprep.mubr.bf16.mxu0 0
      %3755 = vmatmul.mubr.bf16.gmra.mrb[0].mxu0 %v3601
      %v3756 = vpop.f32.mrb[0].mxu0
      %v3757 = vadd.f32 0.0, %v3756
      %v3758 = vpop.f32.mrb[0].mxu0
      %v3759 = vpop.f32.mrb[0].mxu0
      %v3760 = vadd.f32 0.0, %v3759
      %v3761 = vpop.f32.mrb[0].mxu0
      %3762 = vmatprep.mubr.bf16.mxu0 0
      %3763 = vmatmul.mubr.bf16.gmra.mrb[0].mxu0 %v3604
      %v3764 = vpop.f32.mrb[0].mxu0
      %v3765 = vadd.f32 0.0, %v3764
      %v3766 = vpop.f32.mrb[0].mxu0
      %v3767 = vpop.f32.mrb[0].mxu0
      %v3768 = vadd.f32 0.0, %v3767
      %v3769 = vpop.f32.mrb[0].mxu0
      %3770 = vmatprep.mubr.bf16.mxu0 0
      %3771 = vmatmul.mubr.bf16.gmra.mrb[0].mxu0 %v3607
      %v3772 = vpop.f32.mrb[0].mxu0
      %v3773 = vadd.f32 0.0, %v3772
      %v3774 = vpop.f32.mrb[0].mxu0
      %v3775 = vpop.f32.mrb[0].mxu0
      %v3776 = vadd.f32 0.0, %v3775
      %v3777 = vpop.f32.mrb[0].mxu0
      %3778 = vmatprep.mubr.bf16.mxu0 0
      %3779 = vmatmul.mubr.bf16.gmra.mrb[0].mxu0 %v3610
      %v3780 = vpop.f32.mrb[0].mxu0
      %v3781 = vadd.f32 0.0, %v3780
      %v3782 = vpop.f32.mrb[0].mxu0
      %v3783 = vpop.f32.mrb[0].mxu0
      %v3784 = vadd.f32 0.0, %v3783
      %v3785 = vpop.f32.mrb[0].mxu0
      %3786 = vmatprep.mubr.bf16.mxu0 0
      %3787 = vmatmul.mubr.bf16.gmra.mrb[0].mxu0 %v3613
      %v3788 = vpop.f32.mrb[0].mxu0
      %v3789 = vadd.f32 0.0, %v3788
      %v3790 = vpop.f32.mrb[0].mxu0
      %v3791 = vpop.f32.mrb[0].mxu0
      %v3792 = vadd.f32 0.0, %v3791
      %v3793 = vpop.f32.mrb[0].mxu0
      %3794 = vdwg.mxu0
      %v3795 = vadd.f32 %v3433, %v3653
      %v3796 = vadd.f32 %v3434, %v3656
      %v3797 = vadd.f32 %v3435, %v3661
      %v3798 = vadd.f32 %v3436, %v3664
      %v3799 = vadd.f32 %v3437, %v3669
      %v3800 = vadd.f32 %v3438, %v3672
      %v3801 = vadd.f32 %v3439, %v3677
      %v3802 = vadd.f32 %v3440, %v3680
      %v3803 = vadd.f32 %v3441, %v3685
      %v3804 = vadd.f32 %v3442, %v3688
      %v3805 = vadd.f32 %v3443, %v3693
      %v3806 = vadd.f32 %v3444, %v3696
      %v3807 = vadd.f32 %v3445, %v3701
      %v3808 = vadd.f32 %v3446, %v3704
      %v3809 = vadd.f32 %v3447, %v3709
      %v3810 = vadd.f32 %v3448, %v3712
      %v3811 = vadd.f32 %v3449, %v3717
      %v3812 = vadd.f32 %v3450, %v3720
      %v3813 = vadd.f32 %v3451, %v3725
      %v3814 = vadd.f32 %v3452, %v3728
      %v3815 = vadd.f32 %v3453, %v3733
      %v3816 = vadd.f32 %v3454, %v3736
      %v3817 = vadd.f32 %v3455, %v3741
      %v3818 = vadd.f32 %v3456, %v3744
      %v3819 = vadd.f32 %v3457, %v3749
      %v3820 = vadd.f32 %v3458, %v3752
      %v3821 = vadd.f32 %v3459, %v3757
      %v3822 = vadd.f32 %v3460, %v3760
      %v3823 = vadd.f32 %v3461, %v3765
      %v3824 = vadd.f32 %v3462, %v3768
      %v3825 = vadd.f32 %v3463, %v3773
      %v3826 = vadd.f32 %v3464, %v3776
      %v3827 = vadd.f32 %v3465, %v3781
      %v3828 = vadd.f32 %v3466, %v3784
      %v3829 = vadd.f32 %v3467, %v3789
      %v3830 = vadd.f32 %v3468, %v3792
      %v3831 = vlaneseq
      %v3832 = vshrl.u32 %v3831, 7
      %v3833 = vadd.s32 %v3832, 8
      %v3834 = vadd.s32 %v3832, 16
      %v3835 = vadd.s32 %v3832, 24
      %v3836 = vadd.s32 %v3832, 32
      %v3837 = vadd.s32 %v3832, 40
      %v3838 = vadd.s32 %v3832, 48
      %v3839 = vadd.s32 %v3832, 56
      %v3840 = vadd.s32 %v3832, 64
      %v3841 = vadd.s32 %v3832, 72
      %v3842 = vadd.s32 %v3832, 80
      %v3843 = vadd.s32 %v3832, 88
      %v3844 = vadd.s32 %v3832, 96
      %v3845 = vadd.s32 %v3832, 104
      %v3846 = vadd.s32 %v3832, 112
      %v3847 = vadd.s32 %v3832, 120
      %v3848 = vadd.s32 %v3832, 128
      %v3849 = vadd.s32 %v3832, 136
      %v3850 = vadd.s32 %v3832, 144
      %v3851 = vadd.s32 %v3832, 152
      %v3852 = vadd.s32 %v3832, 160
      %v3853 = vadd.s32 %v3832, 168
      %v3854 = vadd.s32 %v3832, 176
      %v3855 = vadd.s32 %v3832, 184
      %v3856 = vadd.s32 %v3832, 192
      %v3857 = vadd.s32 %v3832, 200
      %v3858 = vadd.s32 %v3832, 208
      %v3859 = vadd.s32 %v3832, 216
      %v3860 = vadd.s32 %v3832, 224
      %v3861 = vadd.s32 %v3832, 232
      %v3862 = vadd.s32 %v3832, 240
      %v3863 = vadd.s32 %v3832, 248
      %v3864 = vadd.s32 %v3832, 256
      %v3865 = vadd.s32 %v3832, 264
      %v3866 = vadd.s32 %v3832, 272
      %v3867 = vadd.s32 %v3832, 280
      %vm3868 = vcmp.lt.s32.totalorder %v3832, 0
      %v3869 = vsub.s32 0, %v3832
      %v3870 = vsel %vm3868, %v3869, %v3832
      %v3871 = vmul.u32.u64.compose %v3870, 3817748708
      %v3872 = vextract.low.u32 %v3871
      %v3873 = vextract.high.u32 %v3871
      %v3874 = vshrl.u32 %v3873, 4
      %v3875 = vmul.u32 %v3874, 18
      %v3876 = vsub.s32 %v3870, %v3875
      %v3877 = vsub.s32 0, %v3876
      %v3878 = vsel %vm3868, %v3877, %v3876
      %vm3879 = vcmp.lt.s32.totalorder %v3833, 0
      %v3880 = vsub.s32 0, %v3833
      %v3881 = vsel %vm3879, %v3880, %v3833
      %v3882 = vmul.u32.u64.compose %v3881, 3817748708
      %v3883 = vextract.low.u32 %v3882
      %v3884 = vextract.high.u32 %v3882
      %v3885 = vshrl.u32 %v3884, 4
      %v3886 = vmul.u32 %v3885, 18
      %v3887 = vsub.s32 %v3881, %v3886
      %v3888 = vsub.s32 0, %v3887
      %v3889 = vsel %vm3879, %v3888, %v3887
      %vm3890 = vcmp.lt.s32.totalorder %v3834, 0
      %v3891 = vsub.s32 0, %v3834
      %v3892 = vsel %vm3890, %v3891, %v3834
      %v3893 = vmul.u32.u64.compose %v3892, 3817748708
      %v3894 = vextract.low.u32 %v3893
      %v3895 = vextract.high.u32 %v3893
      %v3896 = vshrl.u32 %v3895, 4
      %v3897 = vmul.u32 %v3896, 18
      %v3898 = vsub.s32 %v3892, %v3897
      %v3899 = vsub.s32 0, %v3898
      %v3900 = vsel %vm3890, %v3899, %v3898
      %vm3901 = vcmp.lt.s32.totalorder %v3835, 0
      %v3902 = vsub.s32 0, %v3835
      %v3903 = vsel %vm3901, %v3902, %v3835
      %v3904 = vmul.u32.u64.compose %v3903, 3817748708
      %v3905 = vextract.low.u32 %v3904
      %v3906 = vextract.high.u32 %v3904
      %v3907 = vshrl.u32 %v3906, 4
      %v3908 = vmul.u32 %v3907, 18
      %v3909 = vsub.s32 %v3903, %v3908
      %v3910 = vsub.s32 0, %v3909
      %v3911 = vsel %vm3901, %v3910, %v3909
      %vm3912 = vcmp.lt.s32.totalorder %v3836, 0
      %v3913 = vsub.s32 0, %v3836
      %v3914 = vsel %vm3912, %v3913, %v3836
      %v3915 = vmul.u32.u64.compose %v3914, 3817748708
      %v3916 = vextract.low.u32 %v3915
      %v3917 = vextract.high.u32 %v3915
      %v3918 = vshrl.u32 %v3917, 4
      %v3919 = vmul.u32 %v3918, 18
      %v3920 = vsub.s32 %v3914, %v3919
      %v3921 = vsub.s32 0, %v3920
      %v3922 = vsel %vm3912, %v3921, %v3920
      %vm3923 = vcmp.lt.s32.totalorder %v3837, 0
      %v3924 = vsub.s32 0, %v3837
      %v3925 = vsel %vm3923, %v3924, %v3837
      %v3926 = vmul.u32.u64.compose %v3925, 3817748708
      %v3927 = vextract.low.u32 %v3926
      %v3928 = vextract.high.u32 %v3926
      %v3929 = vshrl.u32 %v3928, 4
      %v3930 = vmul.u32 %v3929, 18
      %v3931 = vsub.s32 %v3925, %v3930
      %v3932 = vsub.s32 0, %v3931
      %v3933 = vsel %vm3923, %v3932, %v3931
      %vm3934 = vcmp.lt.s32.totalorder %v3838, 0
      %v3935 = vsub.s32 0, %v3838
      %v3936 = vsel %vm3934, %v3935, %v3838
      %v3937 = vmul.u32.u64.compose %v3936, 3817748708
      %v3938 = vextract.low.u32 %v3937
      %v3939 = vextract.high.u32 %v3937
      %v3940 = vshrl.u32 %v3939, 4
      %v3941 = vmul.u32 %v3940, 18
      %v3942 = vsub.s32 %v3936, %v3941
      %v3943 = vsub.s32 0, %v3942
      %v3944 = vsel %vm3934, %v3943, %v3942
      %vm3945 = vcmp.lt.s32.totalorder %v3839, 0
      %v3946 = vsub.s32 0, %v3839
      %v3947 = vsel %vm3945, %v3946, %v3839
      %v3948 = vmul.u32.u64.compose %v3947, 3817748708
      %v3949 = vextract.low.u32 %v3948
      %v3950 = vextract.high.u32 %v3948
      %v3951 = vshrl.u32 %v3950, 4
      %v3952 = vmul.u32 %v3951, 18
      %v3953 = vsub.s32 %v3947, %v3952
      %v3954 = vsub.s32 0, %v3953
      %v3955 = vsel %vm3945, %v3954, %v3953
      %vm3956 = vcmp.lt.s32.totalorder %v3840, 0
      %v3957 = vsub.s32 0, %v3840
      %v3958 = vsel %vm3956, %v3957, %v3840
      %v3959 = vmul.u32.u64.compose %v3958, 3817748708
      %v3960 = vextract.low.u32 %v3959
      %v3961 = vextract.high.u32 %v3959
      %v3962 = vshrl.u32 %v3961, 4
      %v3963 = vmul.u32 %v3962, 18
      %v3964 = vsub.s32 %v3958, %v3963
      %v3965 = vsub.s32 0, %v3964
      %v3966 = vsel %vm3956, %v3965, %v3964
      %vm3967 = vcmp.lt.s32.totalorder %v3841, 0
      %v3968 = vsub.s32 0, %v3841
      %v3969 = vsel %vm3967, %v3968, %v3841
      %v3970 = vmul.u32.u64.compose %v3969, 3817748708
      %v3971 = vextract.low.u32 %v3970
      %v3972 = vextract.high.u32 %v3970
      %v3973 = vshrl.u32 %v3972, 4
      %v3974 = vmul.u32 %v3973, 18
      %v3975 = vsub.s32 %v3969, %v3974
      %v3976 = vsub.s32 0, %v3975
      %v3977 = vsel %vm3967, %v3976, %v3975
      %vm3978 = vcmp.lt.s32.totalorder %v3842, 0
      %v3979 = vsub.s32 0, %v3842
      %v3980 = vsel %vm3978, %v3979, %v3842
      %v3981 = vmul.u32.u64.compose %v3980, 3817748708
      %v3982 = vextract.low.u32 %v3981
      %v3983 = vextract.high.u32 %v3981
      %v3984 = vshrl.u32 %v3983, 4
      %v3985 = vmul.u32 %v3984, 18
      %v3986 = vsub.s32 %v3980, %v3985
      %v3987 = vsub.s32 0, %v3986
      %v3988 = vsel %vm3978, %v3987, %v3986
      %vm3989 = vcmp.lt.s32.totalorder %v3843, 0
      %v3990 = vsub.s32 0, %v3843
      %v3991 = vsel %vm3989, %v3990, %v3843
      %v3992 = vmul.u32.u64.compose %v3991, 3817748708
      %v3993 = vextract.low.u32 %v3992
      %v3994 = vextract.high.u32 %v3992
      %v3995 = vshrl.u32 %v3994, 4
      %v3996 = vmul.u32 %v3995, 18
      %v3997 = vsub.s32 %v3991, %v3996
      %v3998 = vsub.s32 0, %v3997
      %v3999 = vsel %vm3989, %v3998, %v3997
      %vm4000 = vcmp.lt.s32.totalorder %v3844, 0
      %v4001 = vsub.s32 0, %v3844
      %v4002 = vsel %vm4000, %v4001, %v3844
      %v4003 = vmul.u32.u64.compose %v4002, 3817748708
      %v4004 = vextract.low.u32 %v4003
      %v4005 = vextract.high.u32 %v4003
      %v4006 = vshrl.u32 %v4005, 4
      %v4007 = vmul.u32 %v4006, 18
      %v4008 = vsub.s32 %v4002, %v4007
      %v4009 = vsub.s32 0, %v4008
      %v4010 = vsel %vm4000, %v4009, %v4008
      %vm4011 = vcmp.lt.s32.totalorder %v3845, 0
      %v4012 = vsub.s32 0, %v3845
      %v4013 = vsel %vm4011, %v4012, %v3845
      %v4014 = vmul.u32.u64.compose %v4013, 3817748708
      %v4015 = vextract.low.u32 %v4014
      %v4016 = vextract.high.u32 %v4014
      %v4017 = vshrl.u32 %v4016, 4
      %v4018 = vmul.u32 %v4017, 18
      %v4019 = vsub.s32 %v4013, %v4018
      %v4020 = vsub.s32 0, %v4019
      %v4021 = vsel %vm4011, %v4020, %v4019
      %vm4022 = vcmp.lt.s32.totalorder %v3846, 0
      %v4023 = vsub.s32 0, %v3846
      %v4024 = vsel %vm4022, %v4023, %v3846
      %v4025 = vmul.u32.u64.compose %v4024, 3817748708
      %v4026 = vextract.low.u32 %v4025
      %v4027 = vextract.high.u32 %v4025
      %v4028 = vshrl.u32 %v4027, 4
      %v4029 = vmul.u32 %v4028, 18
      %v4030 = vsub.s32 %v4024, %v4029
      %v4031 = vsub.s32 0, %v4030
      %v4032 = vsel %vm4022, %v4031, %v4030
      %vm4033 = vcmp.lt.s32.totalorder %v3847, 0
      %v4034 = vsub.s32 0, %v3847
      %v4035 = vsel %vm4033, %v4034, %v3847
      %v4036 = vmul.u32.u64.compose %v4035, 3817748708
      %v4037 = vextract.low.u32 %v4036
      %v4038 = vextract.high.u32 %v4036
      %v4039 = vshrl.u32 %v4038, 4
      %v4040 = vmul.u32 %v4039, 18
      %v4041 = vsub.s32 %v4035, %v4040
      %v4042 = vsub.s32 0, %v4041
      %v4043 = vsel %vm4033, %v4042, %v4041
      %vm4044 = vcmp.lt.s32.totalorder %v3848, 0
      %v4045 = vsub.s32 0, %v3848
      %v4046 = vsel %vm4044, %v4045, %v3848
      %v4047 = vmul.u32.u64.compose %v4046, 3817748708
      %v4048 = vextract.low.u32 %v4047
      %v4049 = vextract.high.u32 %v4047
      %v4050 = vshrl.u32 %v4049, 4
      %v4051 = vmul.u32 %v4050, 18
      %v4052 = vsub.s32 %v4046, %v4051
      %v4053 = vsub.s32 0, %v4052
      %v4054 = vsel %vm4044, %v4053, %v4052
      %vm4055 = vcmp.lt.s32.totalorder %v3849, 0
      %v4056 = vsub.s32 0, %v3849
      %v4057 = vsel %vm4055, %v4056, %v3849
      %v4058 = vmul.u32.u64.compose %v4057, 3817748708
      %v4059 = vextract.low.u32 %v4058
      %v4060 = vextract.high.u32 %v4058
      %v4061 = vshrl.u32 %v4060, 4
      %v4062 = vmul.u32 %v4061, 18
      %v4063 = vsub.s32 %v4057, %v4062
      %v4064 = vsub.s32 0, %v4063
      %v4065 = vsel %vm4055, %v4064, %v4063
      %vm4066 = vcmp.lt.s32.totalorder %v3850, 0
      %v4067 = vsub.s32 0, %v3850
      %v4068 = vsel %vm4066, %v4067, %v3850
      %v4069 = vmul.u32.u64.compose %v4068, 3817748708
      %v4070 = vextract.low.u32 %v4069
      %v4071 = vextract.high.u32 %v4069
      %v4072 = vshrl.u32 %v4071, 4
      %v4073 = vmul.u32 %v4072, 18
      %v4074 = vsub.s32 %v4068, %v4073
      %v4075 = vsub.s32 0, %v4074
      %v4076 = vsel %vm4066, %v4075, %v4074
      %vm4077 = vcmp.lt.s32.totalorder %v3851, 0
      %v4078 = vsub.s32 0, %v3851
      %v4079 = vsel %vm4077, %v4078, %v3851
      %v4080 = vmul.u32.u64.compose %v4079, 3817748708
      %v4081 = vextract.low.u32 %v4080
      %v4082 = vextract.high.u32 %v4080
      %v4083 = vshrl.u32 %v4082, 4
      %v4084 = vmul.u32 %v4083, 18
      %v4085 = vsub.s32 %v4079, %v4084
      %v4086 = vsub.s32 0, %v4085
      %v4087 = vsel %vm4077, %v4086, %v4085
      %vm4088 = vcmp.lt.s32.totalorder %v3852, 0
      %v4089 = vsub.s32 0, %v3852
      %v4090 = vsel %vm4088, %v4089, %v3852
      %v4091 = vmul.u32.u64.compose %v4090, 3817748708
      %v4092 = vextract.low.u32 %v4091
      %v4093 = vextract.high.u32 %v4091
      %v4094 = vshrl.u32 %v4093, 4
      %v4095 = vmul.u32 %v4094, 18
      %v4096 = vsub.s32 %v4090, %v4095
      %v4097 = vsub.s32 0, %v4096
      %v4098 = vsel %vm4088, %v4097, %v4096
      %vm4099 = vcmp.lt.s32.totalorder %v3853, 0
      %v4100 = vsub.s32 0, %v3853
      %v4101 = vsel %vm4099, %v4100, %v3853
      %v4102 = vmul.u32.u64.compose %v4101, 3817748708
      %v4103 = vextract.low.u32 %v4102
      %v4104 = vextract.high.u32 %v4102
      %v4105 = vshrl.u32 %v4104, 4
      %v4106 = vmul.u32 %v4105, 18
      %v4107 = vsub.s32 %v4101, %v4106
      %v4108 = vsub.s32 0, %v4107
      %v4109 = vsel %vm4099, %v4108, %v4107
      %vm4110 = vcmp.lt.s32.totalorder %v3854, 0
      %v4111 = vsub.s32 0, %v3854
      %v4112 = vsel %vm4110, %v4111, %v3854
      %v4113 = vmul.u32.u64.compose %v4112, 3817748708
      %v4114 = vextract.low.u32 %v4113
      %v4115 = vextract.high.u32 %v4113
      %v4116 = vshrl.u32 %v4115, 4
      %v4117 = vmul.u32 %v4116, 18
      %v4118 = vsub.s32 %v4112, %v4117
      %v4119 = vsub.s32 0, %v4118
      %v4120 = vsel %vm4110, %v4119, %v4118
      %vm4121 = vcmp.lt.s32.totalorder %v3855, 0
      %v4122 = vsub.s32 0, %v3855
      %v4123 = vsel %vm4121, %v4122, %v3855
      %v4124 = vmul.u32.u64.compose %v4123, 3817748708
      %v4125 = vextract.low.u32 %v4124
      %v4126 = vextract.high.u32 %v4124
      %v4127 = vshrl.u32 %v4126, 4
      %v4128 = vmul.u32 %v4127, 18
      %v4129 = vsub.s32 %v4123, %v4128
      %v4130 = vsub.s32 0, %v4129
      %v4131 = vsel %vm4121, %v4130, %v4129
      %vm4132 = vcmp.lt.s32.totalorder %v3856, 0
      %v4133 = vsub.s32 0, %v3856
      %v4134 = vsel %vm4132, %v4133, %v3856
      %v4135 = vmul.u32.u64.compose %v4134, 3817748708
      %v4136 = vextract.low.u32 %v4135
      %v4137 = vextract.high.u32 %v4135
      %v4138 = vshrl.u32 %v4137, 4
      %v4139 = vmul.u32 %v4138, 18
      %v4140 = vsub.s32 %v4134, %v4139
      %v4141 = vsub.s32 0, %v4140
      %v4142 = vsel %vm4132, %v4141, %v4140
      %vm4143 = vcmp.lt.s32.totalorder %v3857, 0
      %v4144 = vsub.s32 0, %v3857
      %v4145 = vsel %vm4143, %v4144, %v3857
      %v4146 = vmul.u32.u64.compose %v4145, 3817748708
      %v4147 = vextract.low.u32 %v4146
      %v4148 = vextract.high.u32 %v4146
      %v4149 = vshrl.u32 %v4148, 4
      %v4150 = vmul.u32 %v4149, 18
      %v4151 = vsub.s32 %v4145, %v4150
      %v4152 = vsub.s32 0, %v4151
      %v4153 = vsel %vm4143, %v4152, %v4151
      %vm4154 = vcmp.lt.s32.totalorder %v3858, 0
      %v4155 = vsub.s32 0, %v3858
      %v4156 = vsel %vm4154, %v4155, %v3858
      %v4157 = vmul.u32.u64.compose %v4156, 3817748708
      %v4158 = vextract.low.u32 %v4157
      %v4159 = vextract.high.u32 %v4157
      %v4160 = vshrl.u32 %v4159, 4
      %v4161 = vmul.u32 %v4160, 18
      %v4162 = vsub.s32 %v4156, %v4161
      %v4163 = vsub.s32 0, %v4162
      %v4164 = vsel %vm4154, %v4163, %v4162
      %vm4165 = vcmp.lt.s32.totalorder %v3859, 0
      %v4166 = vsub.s32 0, %v3859
      %v4167 = vsel %vm4165, %v4166, %v3859
      %v4168 = vmul.u32.u64.compose %v4167, 3817748708
      %v4169 = vextract.low.u32 %v4168
      %v4170 = vextract.high.u32 %v4168
      %v4171 = vshrl.u32 %v4170, 4
      %v4172 = vmul.u32 %v4171, 18
      %v4173 = vsub.s32 %v4167, %v4172
      %v4174 = vsub.s32 0, %v4173
      %v4175 = vsel %vm4165, %v4174, %v4173
      %vm4176 = vcmp.lt.s32.totalorder %v3860, 0
      %v4177 = vsub.s32 0, %v3860
      %v4178 = vsel %vm4176, %v4177, %v3860
      %v4179 = vmul.u32.u64.compose %v4178, 3817748708
      %v4180 = vextract.low.u32 %v4179
      %v4181 = vextract.high.u32 %v4179
      %v4182 = vshrl.u32 %v4181, 4
      %v4183 = vmul.u32 %v4182, 18
      %v4184 = vsub.s32 %v4178, %v4183
      %v4185 = vsub.s32 0, %v4184
      %v4186 = vsel %vm4176, %v4185, %v4184
      %vm4187 = vcmp.lt.s32.totalorder %v3861, 0
      %v4188 = vsub.s32 0, %v3861
      %v4189 = vsel %vm4187, %v4188, %v3861
      %v4190 = vmul.u32.u64.compose %v4189, 3817748708
      %v4191 = vextract.low.u32 %v4190
      %v4192 = vextract.high.u32 %v4190
      %v4193 = vshrl.u32 %v4192, 4
      %v4194 = vmul.u32 %v4193, 18
      %v4195 = vsub.s32 %v4189, %v4194
      %v4196 = vsub.s32 0, %v4195
      %v4197 = vsel %vm4187, %v4196, %v4195
      %vm4198 = vcmp.lt.s32.totalorder %v3862, 0
      %v4199 = vsub.s32 0, %v3862
      %v4200 = vsel %vm4198, %v4199, %v3862
      %v4201 = vmul.u32.u64.compose %v4200, 3817748708
      %v4202 = vextract.low.u32 %v4201
      %v4203 = vextract.high.u32 %v4201
      %v4204 = vshrl.u32 %v4203, 4
      %v4205 = vmul.u32 %v4204, 18
      %v4206 = vsub.s32 %v4200, %v4205
      %v4207 = vsub.s32 0, %v4206
      %v4208 = vsel %vm4198, %v4207, %v4206
      %vm4209 = vcmp.lt.s32.totalorder %v3863, 0
      %v4210 = vsub.s32 0, %v3863
      %v4211 = vsel %vm4209, %v4210, %v3863
      %v4212 = vmul.u32.u64.compose %v4211, 3817748708
      %v4213 = vextract.low.u32 %v4212
      %v4214 = vextract.high.u32 %v4212
      %v4215 = vshrl.u32 %v4214, 4
      %v4216 = vmul.u32 %v4215, 18
      %v4217 = vsub.s32 %v4211, %v4216
      %v4218 = vsub.s32 0, %v4217
      %v4219 = vsel %vm4209, %v4218, %v4217
      %vm4220 = vcmp.lt.s32.totalorder %v3864, 0
      %v4221 = vsub.s32 0, %v3864
      %v4222 = vsel %vm4220, %v4221, %v3864
      %v4223 = vmul.u32.u64.compose %v4222, 3817748708
      %v4224 = vextract.low.u32 %v4223
      %v4225 = vextract.high.u32 %v4223
      %v4226 = vshrl.u32 %v4225, 4
      %v4227 = vmul.u32 %v4226, 18
      %v4228 = vsub.s32 %v4222, %v4227
      %v4229 = vsub.s32 0, %v4228
      %v4230 = vsel %vm4220, %v4229, %v4228
      %vm4231 = vcmp.lt.s32.totalorder %v3865, 0
      %v4232 = vsub.s32 0, %v3865
      %v4233 = vsel %vm4231, %v4232, %v3865
      %v4234 = vmul.u32.u64.compose %v4233, 3817748708
      %v4235 = vextract.low.u32 %v4234
      %v4236 = vextract.high.u32 %v4234
      %v4237 = vshrl.u32 %v4236, 4
      %v4238 = vmul.u32 %v4237, 18
      %v4239 = vsub.s32 %v4233, %v4238
      %v4240 = vsub.s32 0, %v4239
      %v4241 = vsel %vm4231, %v4240, %v4239
      %vm4242 = vcmp.lt.s32.totalorder %v3866, 0
      %v4243 = vsub.s32 0, %v3866
      %v4244 = vsel %vm4242, %v4243, %v3866
      %v4245 = vmul.u32.u64.compose %v4244, 3817748708
      %v4246 = vextract.low.u32 %v4245
      %v4247 = vextract.high.u32 %v4245
      %v4248 = vshrl.u32 %v4247, 4
      %v4249 = vmul.u32 %v4248, 18
      %v4250 = vsub.s32 %v4244, %v4249
      %v4251 = vsub.s32 0, %v4250
      %v4252 = vsel %vm4242, %v4251, %v4250
      %vm4253 = vcmp.lt.s32.totalorder %v3867, 0
      %v4254 = vsub.s32 0, %v3867
      %v4255 = vsel %vm4253, %v4254, %v3867
      %v4256 = vmul.u32.u64.compose %v4255, 3817748708
      %v4257 = vextract.low.u32 %v4256
      %v4258 = vextract.high.u32 %v4256
      %v4259 = vshrl.u32 %v4258, 4
      %v4260 = vmul.u32 %v4259, 18
      %v4261 = vsub.s32 %v4255, %v4260
      %v4262 = vsub.s32 0, %v4261
      %v4263 = vsel %vm4253, %v4262, %v4261
      %vm4264 = vcmp.ne.s32.totalorder %v3878, 0
      %vm4265 = vcmp.ne.s32.totalorder %v3889, 0
      %vm4266 = vcmp.ne.s32.totalorder %v3900, 0
      %vm4267 = vcmp.ne.s32.totalorder %v3911, 0
      %vm4268 = vcmp.ne.s32.totalorder %v3922, 0
      %vm4269 = vcmp.ne.s32.totalorder %v3933, 0
      %vm4270 = vcmp.ne.s32.totalorder %v3944, 0
      %vm4271 = vcmp.ne.s32.totalorder %v3955, 0
      %vm4272 = vcmp.ne.s32.totalorder %v3966, 0
      %vm4273 = vcmp.ne.s32.totalorder %v3977, 0
      %vm4274 = vcmp.ne.s32.totalorder %v3988, 0
      %vm4275 = vcmp.ne.s32.totalorder %v3999, 0
      %vm4276 = vcmp.ne.s32.totalorder %v4010, 0
      %vm4277 = vcmp.ne.s32.totalorder %v4021, 0
      %vm4278 = vcmp.ne.s32.totalorder %v4032, 0
      %vm4279 = vcmp.ne.s32.totalorder %v4043, 0
      %vm4280 = vcmp.ne.s32.totalorder %v4054, 0
      %vm4281 = vcmp.ne.s32.totalorder %v4065, 0
      %vm4282 = vcmp.ne.s32.totalorder %v4076, 0
      %vm4283 = vcmp.ne.s32.totalorder %v4087, 0
      %vm4284 = vcmp.ne.s32.totalorder %v4098, 0
      %vm4285 = vcmp.ne.s32.totalorder %v4109, 0
      %vm4286 = vcmp.ne.s32.totalorder %v4120, 0
      %vm4287 = vcmp.ne.s32.totalorder %v4131, 0
      %vm4288 = vcmp.ne.s32.totalorder %v4142, 0
      %vm4289 = vcmp.ne.s32.totalorder %v4153, 0
      %vm4290 = vcmp.ne.s32.totalorder %v4164, 0
      %vm4291 = vcmp.ne.s32.totalorder %v4175, 0
      %vm4292 = vcmp.ne.s32.totalorder %v4186, 0
      %vm4293 = vcmp.ne.s32.totalorder %v4197, 0
      %vm4294 = vcmp.ne.s32.totalorder %v4208, 0
      %vm4295 = vcmp.ne.s32.totalorder %v4219, 0
      %vm4296 = vcmp.ne.s32.totalorder %v4230, 0
      %vm4297 = vcmp.ne.s32.totalorder %v4241, 0
      %vm4298 = vcmp.ne.s32.totalorder %v4252, 0
      %vm4299 = vcmp.ne.s32.totalorder %v4263, 0
      %vm4300 = vcmp.lt.s32.totalorder %v3878, 0
      %vm4301 = vcmp.lt.s32.totalorder %v3889, 0
      %vm4302 = vcmp.lt.s32.totalorder %v3900, 0
      %vm4303 = vcmp.lt.s32.totalorder %v3911, 0
      %vm4304 = vcmp.lt.s32.totalorder %v3922, 0
      %vm4305 = vcmp.lt.s32.totalorder %v3933, 0
      %vm4306 = vcmp.lt.s32.totalorder %v3944, 0
      %vm4307 = vcmp.lt.s32.totalorder %v3955, 0
      %vm4308 = vcmp.lt.s32.totalorder %v3966, 0
      %vm4309 = vcmp.lt.s32.totalorder %v3977, 0
      %vm4310 = vcmp.lt.s32.totalorder %v3988, 0
      %vm4311 = vcmp.lt.s32.totalorder %v3999, 0
      %vm4312 = vcmp.lt.s32.totalorder %v4010, 0
      %vm4313 = vcmp.lt.s32.totalorder %v4021, 0
      %vm4314 = vcmp.lt.s32.totalorder %v4032, 0
      %vm4315 = vcmp.lt.s32.totalorder %v4043, 0
      %vm4316 = vcmp.lt.s32.totalorder %v4054, 0
      %vm4317 = vcmp.lt.s32.totalorder %v4065, 0
      %vm4318 = vcmp.lt.s32.totalorder %v4076, 0
      %vm4319 = vcmp.lt.s32.totalorder %v4087, 0
      %vm4320 = vcmp.lt.s32.totalorder %v4098, 0
      %vm4321 = vcmp.lt.s32.totalorder %v4109, 0
      %vm4322 = vcmp.lt.s32.totalorder %v4120, 0
      %vm4323 = vcmp.lt.s32.totalorder %v4131, 0
      %vm4324 = vcmp.lt.s32.totalorder %v4142, 0
      %vm4325 = vcmp.lt.s32.totalorder %v4153, 0
      %vm4326 = vcmp.lt.s32.totalorder %v4164, 0
      %vm4327 = vcmp.lt.s32.totalorder %v4175, 0
      %vm4328 = vcmp.lt.s32.totalorder %v4186, 0
      %vm4329 = vcmp.lt.s32.totalorder %v4197, 0
      %vm4330 = vcmp.lt.s32.totalorder %v4208, 0
      %vm4331 = vcmp.lt.s32.totalorder %v4219, 0
      %vm4332 = vcmp.lt.s32.totalorder %v4230, 0
      %vm4333 = vcmp.lt.s32.totalorder %v4241, 0
      %vm4334 = vcmp.lt.s32.totalorder %v4252, 0
      %vm4335 = vcmp.lt.s32.totalorder %v4263, 0
      %vm4336 = vmand %vm4300, %vm4264
      %vm4337 = vmand %vm4301, %vm4265
      %vm4338 = vmand %vm4302, %vm4266
      %vm4339 = vmand %vm4303, %vm4267
      %vm4340 = vmand %vm4304, %vm4268
      %vm4341 = vmand %vm4305, %vm4269
      %vm4342 = vmand %vm4306, %vm4270
      %vm4343 = vmand %vm4307, %vm4271
      %vm4344 = vmand %vm4308, %vm4272
      %vm4345 = vmand %vm4309, %vm4273
      %vm4346 = vmand %vm4310, %vm4274
      %vm4347 = vmand %vm4311, %vm4275
      %vm4348 = vmand %vm4312, %vm4276
      %vm4349 = vmand %vm4313, %vm4277
      %vm4350 = vmand %vm4314, %vm4278
      %vm4351 = vmand %vm4315, %vm4279
      %vm4352 = vmand %vm4316, %vm4280
      %vm4353 = vmand %vm4317, %vm4281
      %vm4354 = vmand %vm4318, %vm4282
      %vm4355 = vmand %vm4319, %vm4283
      %vm4356 = vmand %vm4320, %vm4284
      %vm4357 = vmand %vm4321, %vm4285
      %vm4358 = vmand %vm4322, %vm4286
      %vm4359 = vmand %vm4323, %vm4287
      %vm4360 = vmand %vm4324, %vm4288
      %vm4361 = vmand %vm4325, %vm4289
      %vm4362 = vmand %vm4326, %vm4290
      %vm4363 = vmand %vm4327, %vm4291
      %vm4364 = vmand %vm4328, %vm4292
      %vm4365 = vmand %vm4329, %vm4293
      %vm4366 = vmand %vm4330, %vm4294
      %vm4367 = vmand %vm4331, %vm4295
      %vm4368 = vmand %vm4332, %vm4296
      %vm4369 = vmand %vm4333, %vm4297
      %vm4370 = vmand %vm4334, %vm4298
      %vm4371 = vmand %vm4335, %vm4299
      %v4372 = vadd.s32 %v3878, 18
      %v4373 = vadd.s32 %v3889, 18
      %v4374 = vadd.s32 %v3900, 18
      %v4375 = vadd.s32 %v3911, 18
      %v4376 = vadd.s32 %v3922, 18
      %v4377 = vadd.s32 %v3933, 18
      %v4378 = vadd.s32 %v3944, 18
      %v4379 = vadd.s32 %v3955, 18
      %v4380 = vadd.s32 %v3966, 18
      %v4381 = vadd.s32 %v3977, 18
      %v4382 = vadd.s32 %v3988, 18
      %v4383 = vadd.s32 %v3999, 18
      %v4384 = vadd.s32 %v4010, 18
      %v4385 = vadd.s32 %v4021, 18
      %v4386 = vadd.s32 %v4032, 18
      %v4387 = vadd.s32 %v4043, 18
      %v4388 = vadd.s32 %v4054, 18
      %v4389 = vadd.s32 %v4065, 18
      %v4390 = vadd.s32 %v4076, 18
      %v4391 = vadd.s32 %v4087, 18
      %v4392 = vadd.s32 %v4098, 18
      %v4393 = vadd.s32 %v4109, 18
      %v4394 = vadd.s32 %v4120, 18
      %v4395 = vadd.s32 %v4131, 18
      %v4396 = vadd.s32 %v4142, 18
      %v4397 = vadd.s32 %v4153, 18
      %v4398 = vadd.s32 %v4164, 18
      %v4399 = vadd.s32 %v4175, 18
      %v4400 = vadd.s32 %v4186, 18
      %v4401 = vadd.s32 %v4197, 18
      %v4402 = vadd.s32 %v4208, 18
      %v4403 = vadd.s32 %v4219, 18
      %v4404 = vadd.s32 %v4230, 18
      %v4405 = vadd.s32 %v4241, 18
      %v4406 = vadd.s32 %v4252, 18
      %v4407 = vadd.s32 %v4263, 18
      %v4408 = vsel %vm4336, %v4372, %v3878
      %v4409 = vsel %vm4337, %v4373, %v3889
      %v4410 = vsel %vm4338, %v4374, %v3900
      %v4411 = vsel %vm4339, %v4375, %v3911
      %v4412 = vsel %vm4340, %v4376, %v3922
      %v4413 = vsel %vm4341, %v4377, %v3933
      %v4414 = vsel %vm4342, %v4378, %v3944
      %v4415 = vsel %vm4343, %v4379, %v3955
      %v4416 = vsel %vm4344, %v4380, %v3966
      %v4417 = vsel %vm4345, %v4381, %v3977
      %v4418 = vsel %vm4346, %v4382, %v3988
      %v4419 = vsel %vm4347, %v4383, %v3999
      %v4420 = vsel %vm4348, %v4384, %v4010
      %v4421 = vsel %vm4349, %v4385, %v4021
      %v4422 = vsel %vm4350, %v4386, %v4032
      %v4423 = vsel %vm4351, %v4387, %v4043
      %v4424 = vsel %vm4352, %v4388, %v4054
      %v4425 = vsel %vm4353, %v4389, %v4065
      %v4426 = vsel %vm4354, %v4390, %v4076
      %v4427 = vsel %vm4355, %v4391, %v4087
      %v4428 = vsel %vm4356, %v4392, %v4098
      %v4429 = vsel %vm4357, %v4393, %v4109
      %v4430 = vsel %vm4358, %v4394, %v4120
      %v4431 = vsel %vm4359, %v4395, %v4131
      %v4432 = vsel %vm4360, %v4396, %v4142
      %v4433 = vsel %vm4361, %v4397, %v4153
      %v4434 = vsel %vm4362, %v4398, %v4164
      %v4435 = vsel %vm4363, %v4399, %v4175
      %v4436 = vsel %vm4364, %v4400, %v4186
      %v4437 = vsel %vm4365, %v4401, %v4197
      %v4438 = vsel %vm4366, %v4402, %v4208
      %v4439 = vsel %vm4367, %v4403, %v4219
      %v4440 = vsel %vm4368, %v4404, %v4230
      %v4441 = vsel %vm4369, %v4405, %v4241
      %v4442 = vsel %vm4370, %v4406, %v4252
      %v4443 = vsel %vm4371, %v4407, %v4263
      %vm4444 = vcmp.ge.s32.totalorder %v4408, 1
      %vm4445 = vcmp.ge.s32.totalorder %v4409, 1
      %vm4446 = vcmp.ge.s32.totalorder %v4410, 1
      %vm4447 = vcmp.ge.s32.totalorder %v4411, 1
      %vm4448 = vcmp.ge.s32.totalorder %v4412, 1
      %vm4449 = vcmp.ge.s32.totalorder %v4413, 1
      %vm4450 = vcmp.ge.s32.totalorder %v4414, 1
      %vm4451 = vcmp.ge.s32.totalorder %v4415, 1
      %vm4452 = vcmp.ge.s32.totalorder %v4416, 1
      %vm4453 = vcmp.ge.s32.totalorder %v4417, 1
      %vm4454 = vcmp.ge.s32.totalorder %v4418, 1
      %vm4455 = vcmp.ge.s32.totalorder %v4419, 1
      %vm4456 = vcmp.ge.s32.totalorder %v4420, 1
      %vm4457 = vcmp.ge.s32.totalorder %v4421, 1
      %vm4458 = vcmp.ge.s32.totalorder %v4422, 1
      %vm4459 = vcmp.ge.s32.totalorder %v4423, 1
      %vm4460 = vcmp.ge.s32.totalorder %v4424, 1
      %vm4461 = vcmp.ge.s32.totalorder %v4425, 1
      %vm4462 = vcmp.ge.s32.totalorder %v4426, 1
      %vm4463 = vcmp.ge.s32.totalorder %v4427, 1
      %vm4464 = vcmp.ge.s32.totalorder %v4428, 1
      %vm4465 = vcmp.ge.s32.totalorder %v4429, 1
      %vm4466 = vcmp.ge.s32.totalorder %v4430, 1
      %vm4467 = vcmp.ge.s32.totalorder %v4431, 1
      %vm4468 = vcmp.ge.s32.totalorder %v4432, 1
      %vm4469 = vcmp.ge.s32.totalorder %v4433, 1
      %vm4470 = vcmp.ge.s32.totalorder %v4434, 1
      %vm4471 = vcmp.ge.s32.totalorder %v4435, 1
      %vm4472 = vcmp.ge.s32.totalorder %v4436, 1
      %vm4473 = vcmp.ge.s32.totalorder %v4437, 1
      %vm4474 = vcmp.ge.s32.totalorder %v4438, 1
      %vm4475 = vcmp.ge.s32.totalorder %v4439, 1
      %vm4476 = vcmp.ge.s32.totalorder %v4440, 1
      %vm4477 = vcmp.ge.s32.totalorder %v4441, 1
      %vm4478 = vcmp.ge.s32.totalorder %v4442, 1
      %vm4479 = vcmp.ge.s32.totalorder %v4443, 1
      %vm4480 = vcmp.le.s32.totalorder %v4408, 16
      %vm4481 = vcmp.le.s32.totalorder %v4409, 16
      %vm4482 = vcmp.le.s32.totalorder %v4410, 16
      %vm4483 = vcmp.le.s32.totalorder %v4411, 16
      %vm4484 = vcmp.le.s32.totalorder %v4412, 16
      %vm4485 = vcmp.le.s32.totalorder %v4413, 16
      %vm4486 = vcmp.le.s32.totalorder %v4414, 16
      %vm4487 = vcmp.le.s32.totalorder %v4415, 16
      %vm4488 = vcmp.le.s32.totalorder %v4416, 16
      %vm4489 = vcmp.le.s32.totalorder %v4417, 16
      %vm4490 = vcmp.le.s32.totalorder %v4418, 16
      %vm4491 = vcmp.le.s32.totalorder %v4419, 16
      %vm4492 = vcmp.le.s32.totalorder %v4420, 16
      %vm4493 = vcmp.le.s32.totalorder %v4421, 16
      %vm4494 = vcmp.le.s32.totalorder %v4422, 16
      %vm4495 = vcmp.le.s32.totalorder %v4423, 16
      %vm4496 = vcmp.le.s32.totalorder %v4424, 16
      %vm4497 = vcmp.le.s32.totalorder %v4425, 16
      %vm4498 = vcmp.le.s32.totalorder %v4426, 16
      %vm4499 = vcmp.le.s32.totalorder %v4427, 16
      %vm4500 = vcmp.le.s32.totalorder %v4428, 16
      %vm4501 = vcmp.le.s32.totalorder %v4429, 16
      %vm4502 = vcmp.le.s32.totalorder %v4430, 16
      %vm4503 = vcmp.le.s32.totalorder %v4431, 16
      %vm4504 = vcmp.le.s32.totalorder %v4432, 16
      %vm4505 = vcmp.le.s32.totalorder %v4433, 16
      %vm4506 = vcmp.le.s32.totalorder %v4434, 16
      %vm4507 = vcmp.le.s32.totalorder %v4435, 16
      %vm4508 = vcmp.le.s32.totalorder %v4436, 16
      %vm4509 = vcmp.le.s32.totalorder %v4437, 16
      %vm4510 = vcmp.le.s32.totalorder %v4438, 16
      %vm4511 = vcmp.le.s32.totalorder %v4439, 16
      %vm4512 = vcmp.le.s32.totalorder %v4440, 16
      %vm4513 = vcmp.le.s32.totalorder %v4441, 16
      %vm4514 = vcmp.le.s32.totalorder %v4442, 16
      %vm4515 = vcmp.le.s32.totalorder %v4443, 16
      %vm4516 = vmand %vm4444, %vm4480
      %vm4517 = vmand %vm4445, %vm4481
      %vm4518 = vmand %vm4446, %vm4482
      %vm4519 = vmand %vm4447, %vm4483
      %vm4520 = vmand %vm4448, %vm4484
      %vm4521 = vmand %vm4449, %vm4485
      %vm4522 = vmand %vm4450, %vm4486
      %vm4523 = vmand %vm4451, %vm4487
      %vm4524 = vmand %vm4452, %vm4488
      %vm4525 = vmand %vm4453, %vm4489
      %vm4526 = vmand %vm4454, %vm4490
      %vm4527 = vmand %vm4455, %vm4491
      %vm4528 = vmand %vm4456, %vm4492
      %vm4529 = vmand %vm4457, %vm4493
      %vm4530 = vmand %vm4458, %vm4494
      %vm4531 = vmand %vm4459, %vm4495
      %vm4532 = vmand %vm4460, %vm4496
      %vm4533 = vmand %vm4461, %vm4497
      %vm4534 = vmand %vm4462, %vm4498
      %vm4535 = vmand %vm4463, %vm4499
      %vm4536 = vmand %vm4464, %vm4500
      %vm4537 = vmand %vm4465, %vm4501
      %vm4538 = vmand %vm4466, %vm4502
      %vm4539 = vmand %vm4467, %vm4503
      %vm4540 = vmand %vm4468, %vm4504
      %vm4541 = vmand %vm4469, %vm4505
      %vm4542 = vmand %vm4470, %vm4506
      %vm4543 = vmand %vm4471, %vm4507
      %vm4544 = vmand %vm4472, %vm4508
      %vm4545 = vmand %vm4473, %vm4509
      %vm4546 = vmand %vm4474, %vm4510
      %vm4547 = vmand %vm4475, %vm4511
      %vm4548 = vmand %vm4476, %vm4512
      %vm4549 = vmand %vm4477, %vm4513
      %vm4550 = vmand %vm4478, %vm4514
      %vm4551 = vmand %vm4479, %vm4515
      %v4552 = vsel %vm4516, 1, 0
      %v4553 = vsel %vm4517, 1, 0
      %v4554 = vsel %vm4518, 1, 0
      %v4555 = vsel %vm4519, 1, 0
      %v4556 = vsel %vm4520, 1, 0
      %v4557 = vsel %vm4521, 1, 0
      %v4558 = vsel %vm4522, 1, 0
      %v4559 = vsel %vm4523, 1, 0
      %v4560 = vsel %vm4524, 1, 0
      %v4561 = vsel %vm4525, 1, 0
      %v4562 = vsel %vm4526, 1, 0
      %v4563 = vsel %vm4527, 1, 0
      %v4564 = vsel %vm4528, 1, 0
      %v4565 = vsel %vm4529, 1, 0
      %v4566 = vsel %vm4530, 1, 0
      %v4567 = vsel %vm4531, 1, 0
      %v4568 = vsel %vm4532, 1, 0
      %v4569 = vsel %vm4533, 1, 0
      %v4570 = vsel %vm4534, 1, 0
      %v4571 = vsel %vm4535, 1, 0
      %v4572 = vsel %vm4536, 1, 0
      %v4573 = vsel %vm4537, 1, 0
      %v4574 = vsel %vm4538, 1, 0
      %v4575 = vsel %vm4539, 1, 0
      %v4576 = vsel %vm4540, 1, 0
      %v4577 = vsel %vm4541, 1, 0
      %v4578 = vsel %vm4542, 1, 0
      %v4579 = vsel %vm4543, 1, 0
      %v4580 = vsel %vm4544, 1, 0
      %v4581 = vsel %vm4545, 1, 0
      %v4582 = vsel %vm4546, 1, 0
      %v4583 = vsel %vm4547, 1, 0
      %v4584 = vsel %vm4548, 1, 0
      %v4585 = vsel %vm4549, 1, 0
      %v4586 = vsel %vm4550, 1, 0
      %v4587 = vsel %vm4551, 1, 0
      %v4588 = vcvt.s32.f32 %v4552
      %v4589 = vcvt.s32.f32 %v4553
      %v4590 = vcvt.s32.f32 %v4554
      %v4591 = vcvt.s32.f32 %v4555
      %v4592 = vcvt.s32.f32 %v4556
      %v4593 = vcvt.s32.f32 %v4557
      %v4594 = vcvt.s32.f32 %v4558
      %v4595 = vcvt.s32.f32 %v4559
      %v4596 = vcvt.s32.f32 %v4560
      %v4597 = vcvt.s32.f32 %v4561
      %v4598 = vcvt.s32.f32 %v4562
      %v4599 = vcvt.s32.f32 %v4563
      %v4600 = vcvt.s32.f32 %v4564
      %v4601 = vcvt.s32.f32 %v4565
      %v4602 = vcvt.s32.f32 %v4566
      %v4603 = vcvt.s32.f32 %v4567
      %v4604 = vcvt.s32.f32 %v4568
      %v4605 = vcvt.s32.f32 %v4569
      %v4606 = vcvt.s32.f32 %v4570
      %v4607 = vcvt.s32.f32 %v4571
      %v4608 = vcvt.s32.f32 %v4572
      %v4609 = vcvt.s32.f32 %v4573
      %v4610 = vcvt.s32.f32 %v4574
      %v4611 = vcvt.s32.f32 %v4575
      %v4612 = vcvt.s32.f32 %v4576
      %v4613 = vcvt.s32.f32 %v4577
      %v4614 = vcvt.s32.f32 %v4578
      %v4615 = vcvt.s32.f32 %v4579
      %v4616 = vcvt.s32.f32 %v4580
      %v4617 = vcvt.s32.f32 %v4581
      %v4618 = vcvt.s32.f32 %v4582
      %v4619 = vcvt.s32.f32 %v4583
      %v4620 = vcvt.s32.f32 %v4584
      %v4621 = vcvt.s32.f32 %v4585
      %v4622 = vcvt.s32.f32 %v4586
      %v4623 = vcvt.s32.f32 %v4587
      %v4624 = vmul.f32 %v3795, %v4588
      %v4625 = vmul.f32 %v3796, %v4589
      %v4626 = vmul.f32 %v3797, %v4590
      %v4627 = vmul.f32 %v3798, %v4591
      %v4628 = vmul.f32 %v3799, %v4592
      %v4629 = vmul.f32 %v3800, %v4593
      %v4630 = vmul.f32 %v3801, %v4594
      %v4631 = vmul.f32 %v3802, %v4595
      %v4632 = vmul.f32 %v3803, %v4596
      %v4633 = vmul.f32 %v3804, %v4597
      %v4634 = vmul.f32 %v3805, %v4598
      %v4635 = vmul.f32 %v3806, %v4599
      %v4636 = vmul.f32 %v3807, %v4600
      %v4637 = vmul.f32 %v3808, %v4601
      %v4638 = vmul.f32 %v3809, %v4602
      %v4639 = vmul.f32 %v3810, %v4603
      %v4640 = vmul.f32 %v3811, %v4604
      %v4641 = vmul.f32 %v3812, %v4605
      %v4642 = vmul.f32 %v3813, %v4606
      %v4643 = vmul.f32 %v3814, %v4607
      %v4644 = vmul.f32 %v3815, %v4608
      %v4645 = vmul.f32 %v3816, %v4609
      %v4646 = vmul.f32 %v3817, %v4610
      %v4647 = vmul.f32 %v3818, %v4611
      %v4648 = vmul.f32 %v3819, %v4612
      %v4649 = vmul.f32 %v3820, %v4613
      %v4650 = vmul.f32 %v3821, %v4614
      %v4651 = vmul.f32 %v3822, %v4615
      %v4652 = vmul.f32 %v3823, %v4616
      %v4653 = vmul.f32 %v3824, %v4617
      %v4654 = vmul.f32 %v3825, %v4618
      %v4655 = vmul.f32 %v3826, %v4619
      %v4656 = vmul.f32 %v3827, %v4620
      %v4657 = vmul.f32 %v3828, %v4621
      %v4658 = vmul.f32 %v3829, %v4622
      %v4659 = vmul.f32 %v3830, %v4623
      %v4660 = vadd.f32 %v4624, %v4625
      %v4661 = vadd.f32 %v4660, %v4626
      %v4662 = vadd.f32 %v4661, %v4627
      %v4663 = vadd.f32 %v4662, %v4628
      %v4664 = vadd.f32 %v4663, %v4629
      %v4665 = vadd.f32 %v4664, %v4630
      %v4666 = vadd.f32 %v4665, %v4631
      %v4667 = vadd.f32 %v4666, %v4632
      %v4668 = vadd.f32 %v4667, %v4633
      %v4669 = vadd.f32 %v4668, %v4634
      %v4670 = vadd.f32 %v4669, %v4635
      %v4671 = vadd.f32 %v4670, %v4636
      %v4672 = vadd.f32 %v4671, %v4637
      %v4673 = vadd.f32 %v4672, %v4638
      %v4674 = vadd.f32 %v4673, %v4639
      %v4675 = vadd.f32 %v4674, %v4640
      %v4676 = vadd.f32 %v4675, %v4641
      %v4677 = vadd.f32 %v4676, %v4642
      %v4678 = vadd.f32 %v4677, %v4643
      %v4679 = vadd.f32 %v4678, %v4644
      %v4680 = vadd.f32 %v4679, %v4645
      %v4681 = vadd.f32 %v4680, %v4646
      %v4682 = vadd.f32 %v4681, %v4647
      %v4683 = vadd.f32 %v4682, %v4648
      %v4684 = vadd.f32 %v4683, %v4649
      %v4685 = vadd.f32 %v4684, %v4650
      %v4686 = vadd.f32 %v4685, %v4651
      %v4687 = vadd.f32 %v4686, %v4652
      %v4688 = vadd.f32 %v4687, %v4653
      %v4689 = vadd.f32 %v4688, %v4654
      %v4690 = vadd.f32 %v4689, %v4655
      %v4691 = vadd.f32 %v4690, %v4656
      %v4692 = vadd.f32 %v4691, %v4657
      %v4693 = vadd.f32 %v4692, %v4658
      %v4694 = vadd.f32 %v4693, %v4659
      %v4695 = vrot.slane %v4694, 4
      %v4696 = vadd.f32 %v4694, %v4695
      %v4697 = vrot.slane %v4696, 2
      %v4698 = vadd.f32 %v4696, %v4697
      %v4699 = vrot.slane %v4698, 1
      %v4700 = vadd.f32 %v4698, %v4699
      %4701 = vst [vmem:[%s177] sm:$0x1] %v4700
      %v4702 = vmul.f32 %v4624, %v4624
      %v4703 = vmul.f32 %v4625, %v4625
      %v4704 = vmul.f32 %v4626, %v4626
      %v4705 = vmul.f32 %v4627, %v4627
      %v4706 = vmul.f32 %v4628, %v4628
      %v4707 = vmul.f32 %v4629, %v4629
      %v4708 = vmul.f32 %v4630, %v4630
      %v4709 = vmul.f32 %v4631, %v4631
      %v4710 = vmul.f32 %v4632, %v4632
      %v4711 = vmul.f32 %v4633, %v4633
      %v4712 = vmul.f32 %v4634, %v4634
      %v4713 = vmul.f32 %v4635, %v4635
      %v4714 = vmul.f32 %v4636, %v4636
      %v4715 = vmul.f32 %v4637, %v4637
      %v4716 = vmul.f32 %v4638, %v4638
      %v4717 = vmul.f32 %v4639, %v4639
      %v4718 = vmul.f32 %v4640, %v4640
      %v4719 = vmul.f32 %v4641, %v4641
      %v4720 = vmul.f32 %v4642, %v4642
      %v4721 = vmul.f32 %v4643, %v4643
      %v4722 = vmul.f32 %v4644, %v4644
      %v4723 = vmul.f32 %v4645, %v4645
      %v4724 = vmul.f32 %v4646, %v4646
      %v4725 = vmul.f32 %v4647, %v4647
      %v4726 = vmul.f32 %v4648, %v4648
      %v4727 = vmul.f32 %v4649, %v4649
      %v4728 = vmul.f32 %v4650, %v4650
      %v4729 = vmul.f32 %v4651, %v4651
      %v4730 = vmul.f32 %v4652, %v4652
      %v4731 = vmul.f32 %v4653, %v4653
      %v4732 = vmul.f32 %v4654, %v4654
      %v4733 = vmul.f32 %v4655, %v4655
      %v4734 = vmul.f32 %v4656, %v4656
      %v4735 = vmul.f32 %v4657, %v4657
      %v4736 = vmul.f32 %v4658, %v4658
      %v4737 = vmul.f32 %v4659, %v4659
      %v4738 = vadd.f32 %v4702, %v4703
      %v4739 = vadd.f32 %v4738, %v4704
      %v4740 = vadd.f32 %v4739, %v4705
      %v4741 = vadd.f32 %v4740, %v4706
      %v4742 = vadd.f32 %v4741, %v4707
      %v4743 = vadd.f32 %v4742, %v4708
      %v4744 = vadd.f32 %v4743, %v4709
      %v4745 = vadd.f32 %v4744, %v4710
      %v4746 = vadd.f32 %v4745, %v4711
      %v4747 = vadd.f32 %v4746, %v4712
      %v4748 = vadd.f32 %v4747, %v4713
      %v4749 = vadd.f32 %v4748, %v4714
      %v4750 = vadd.f32 %v4749, %v4715
      %v4751 = vadd.f32 %v4750, %v4716
      %v4752 = vadd.f32 %v4751, %v4717
      %v4753 = vadd.f32 %v4752, %v4718
      %v4754 = vadd.f32 %v4753, %v4719
      %v4755 = vadd.f32 %v4754, %v4720
      %v4756 = vadd.f32 %v4755, %v4721
      %v4757 = vadd.f32 %v4756, %v4722
      %v4758 = vadd.f32 %v4757, %v4723
      %v4759 = vadd.f32 %v4758, %v4724
      %v4760 = vadd.f32 %v4759, %v4725
      %v4761 = vadd.f32 %v4760, %v4726
      %v4762 = vadd.f32 %v4761, %v4727
      %v4763 = vadd.f32 %v4762, %v4728
      %v4764 = vadd.f32 %v4763, %v4729
      %v4765 = vadd.f32 %v4764, %v4730
      %v4766 = vadd.f32 %v4765, %v4731
      %v4767 = vadd.f32 %v4766, %v4732
      %v4768 = vadd.f32 %v4767, %v4733
      %v4769 = vadd.f32 %v4768, %v4734
      %v4770 = vadd.f32 %v4769, %v4735
      %v4771 = vadd.f32 %v4770, %v4736
      %v4772 = vadd.f32 %v4771, %v4737
      %v4773 = vrot.slane %v4772, 4
      %v4774 = vadd.f32 %v4772, %v4773
      %v4775 = vrot.slane %v4774, 2
      %v4776 = vadd.f32 %v4774, %v4775
      %v4777 = vrot.slane %v4776, 1
      %v4778 = vadd.f32 %v4776, %v4777
      %4779 = vst [vmem:[%s177 + $0x1] sm:$0x1] %v4778
      %p4780 = scmp.lt.s32.totalorder %s17, 1
      %s4781 = scalar_select %p4780, %s17, 1
      %p4782 = scmp.lt.s32.totalorder %s18, 3
      %s4783 = scalar_select %p4782, %s18, 3
      %s4784 = smul.addr %s4781, 4
      %s4785 = sadd.s32 %s4783, %s4784
      %s4786 = smul.addr %s4785, 2
      %s4787 = scalar_lea.vmem %s2, %s4786
      // Predicated region
      $region29: #{block_forward.2} parent=27 // pred_check
        %p4788 = pneg %p94
      $region30: #{block_forward.2} parent=27 // pred_check_branch
        %4790 = sbr.rel (%p4788) target = $region32
      $region31: #{block_forward.2} parent=27 // pred_region
        _
      $region32: #{block_forward.2} parent=27 // pred_fallthru
        _
    $region28: #{block_forward.2} parent=5 // pred_fallthru
      _
    %p4791 = scmp.le.s32.totalorder 2, %s8
    // Predicated region
    $region33: #{block_forward.2} parent=5 // pred_check
      %p4792 = pneg %p4791
    $region34: #{block_forward.2} parent=5 // pred_check_branch
      %4794 = sbr.rel (%p4792) target = $region36
    $region35: #{block_forward.2} parent=5 // pred_region
      %s4795 = ssub.s32 %s8, 2
      // Predicated region
      $region37: #{block_forward.2} parent=35 // pred_check
        %p4796 = pneg %p100
      $region38: #{block_forward.2} parent=35 // pred_check_branch
        %4798 = sbr.rel (%p4796) target = $region40
      $region39: #{block_forward.2} parent=35 // pred_region
        %p4799 = scmp.lt.s32.totalorder %s19, 1
        %s4800 = scalar_select %p4799, %s19, 1
        %p4801 = scmp.lt.s32.totalorder %s20, 3
        %s4802 = scalar_select %p4801, %s20, 3
        %s4803 = smul.addr %s4800, 4
        %s4804 = sadd.s32 %s4802, %s4803
        %s4805 = smul.addr %s4804, 2
        %s4806 = scalar_lea.vmem %s2, %s4805
      $region40: #{block_forward.2} parent=35 // pred_fallthru
        _
    $region36: #{block_forward.2} parent=5 // pred_fallthru
      _
  $region6: #{block_forward.2} parent=0 // loop_footer
    %s12 = sadd.s32 1, %s8
  $region7: #{block_forward.2} parent=0 // loop_footer_branch
    %7 = sbr.rel target = $region3
  $region8: #{block_forward.2} parent=0 // loop_exit
    _

// kernel: block_forward.3
$region0: #{block_forward.3}
  #allocation0 [shape = 'u32[]', space=smem, size = 0x4, offset = 0x4, fixed_abs, tag = 'smem constant byte address 0x4 - core index']
  #allocation1 [shape = 'u32[144,128]{1,0:T(1,128)}', space=vmem, size = 0x12000, scoped, tag = 'internal scratch']
  %s0 = inlined_call_operand.vmem [shape: bf16[2,4,360,8], index: 0, kind: input, shape index: {}]
  %s1 = inlined_call_operand.vmem [shape: bf16[9,8,128], index: 1, kind: input, shape index: {}]
  %s2 = inlined_call_operand.vmem [shape: f32[2,1,16], index: 2, kind: input, shape index: {}]
  %s3 = inlined_call_operand.vmem [shape: f32[2,1,16], index: 3, kind: input, shape index: {}]
  %s4 = inlined_call_operand.vmem [shape: f32[2,4,288,16], index: 4, kind: output, shape index: {}]
  %s5 = sld [smem:[#allocation0]]
  $region49: #{block_forward.3} parent=0
    _
  %s7 = ssub.s32 1, %s5
  %s8 = scalar_select 0, %s7, %s5
  loop: start=0, step=1, limit=10
  $region2: #{block_forward.3} parent=0 // loop_pre_header
    _
  $region3: #{block_forward.3} parent=0 // loop_header
    %s10 = sphi 0, %s14
    %p11 = scmp.ge.s32.totalorder %s10, 10
    %s17 = sphi 0, %s29
    %s18 = sphi 0, %s25
    %s19 = sphi 0, %s17
    %s20 = sphi 0, %s18
    %s21 = sphi 0, %s19
    %s22 = sphi 0, %s20
    %s34 = sphi 0, %s36
    %s37 = sphi 0, %s34
    %s38 = sphi 0, %s37
    %s54 = sphi 0, %s38
    %s58 = sphi 0, %s58
    %s60 = sphi 0, %s58
    %s61 = sphi 0, %s60
    %s75 = sphi 0, %s61
    %s81 = sphi 0, %s83
    %s84 = sphi 0, %s81
    %s85 = sphi 0, %s84
    %s101 = sphi 0, %s85
    %s107 = sphi 0, %s109
    %s110 = sphi 0, %s107
    %s111 = sphi 0, %s110
    %s127 = sphi 0, %s111
    %s135 = sphi 0, %s137
    %s138 = sphi 0, %s135
    %s139 = sphi 0, %s138
    %s155 = sphi 0, %s139
  $region4: #{block_forward.3} parent=0 // loop_header_branch
    %13 = sbr.rel (%p11) target = $region8
  $region5: #{block_forward.3} parent=0 // loop_body
    %s15 = ssub.s32 %s10, 1
    %s16 = ssub.s32 %s10, 2
    %s23 = sadd.s32 1, %s18
    %p24 = scmp.ge.s32.totalorder %s23, 4
    %s25 = scalar_select %p24, 0, %s23
    %s26 = sadd.s32 1, %s17
    %s27 = scalar_select %p24, %s26, %s17
    %p28 = scmp.ge.s32.totalorder %s27, 2
    %s29 = scalar_select %p28, 0, %s27
    %s30 = ssub.s32 %s17, %s29
    %s31 = ssub.s32 %s18, %s25
    %s32 = sor.u32 %s30, %s31
    %p33 = scmp.eq.s32.totalorder %s32, 0
    %s35 = sadd.s32 %s34, 1
    %s36 = scalar_select %p33, %s34, %s35
    %p39 = pneg %p33
    %p40 = scmp.eq.s32.totalorder %s10, 7
    %p41 = por %p39, %p40
    %p42 = scmp.ne.s32.totalorder %s34, %s37
    %p43 = scmp.eq.s32.totalorder %s10, 0
    %p44 = por %p42, %p43
    %p45 = scmp.ne.s32.totalorder %s34, %s37
    %p46 = scmp.eq.s32.totalorder %s15, 7
    %p47 = por %p45, %p46
    %p48 = scmp.ne.s32.totalorder %s37, %s38
    %p49 = scmp.eq.s32.totalorder %s15, 0
    %p50 = por %p48, %p49
    %p51 = scmp.ne.s32.totalorder %s37, %s38
    %p52 = scmp.eq.s32.totalorder %s16, 7
    %p53 = por %p51, %p52
    %p55 = scmp.ne.s32.totalorder %s38, %s54
    %p56 = scmp.eq.s32.totalorder %s16, 0
    %p57 = por %p55, %p56
    %s59 = sadd.s32 %s58, 1
    %p62 = scmp.eq.s32.totalorder %s10, 7
    %p63 = scmp.ne.s32.totalorder %s58, %s60
    %p64 = scmp.eq.s32.totalorder %s10, 0
    %p65 = por %p63, %p64
    %p66 = scmp.ne.s32.totalorder %s58, %s60
    %p67 = scmp.eq.s32.totalorder %s15, 7
    %p68 = por %p66, %p67
    %p69 = scmp.ne.s32.totalorder %s60, %s61
    %p70 = scmp.eq.s32.totalorder %s15, 0
    %p71 = por %p69, %p70
    %p72 = scmp.ne.s32.totalorder %s60, %s61
    %p73 = scmp.eq.s32.totalorder %s16, 7
    %p74 = por %p72, %p73
    %p76 = scmp.ne.s32.totalorder %s61, %s75
    %p77 = scmp.eq.s32.totalorder %s16, 0
    %p78 = por %p76, %p77
    %s79 = ssub.s32 %s17, %s29
    %p80 = scmp.eq.s32.totalorder %s79, 0
    %s82 = sadd.s32 %s81, 1
    %s83 = scalar_select %p80, %s81, %s82
    %p86 = pneg %p80
    %p87 = scmp.eq.s32.totalorder %s10, 7
    %p88 = por %p86, %p87
    %p89 = scmp.ne.s32.totalorder %s81, %s84
    %p90 = scmp.eq.s32.totalorder %s10, 0
    %p91 = por %p89, %p90
    %p92 = scmp.ne.s32.totalorder %s81, %s84
    %p93 = scmp.eq.s32.totalorder %s15, 7
    %p94 = por %p92, %p93
    %p95 = scmp.ne.s32.totalorder %s84, %s85
    %p96 = scmp.eq.s32.totalorder %s15, 0
    %p97 = por %p95, %p96
    %p98 = scmp.ne.s32.totalorder %s84, %s85
    %p99 = scmp.eq.s32.totalorder %s16, 7
    %p100 = por %p98, %p99
    %p102 = scmp.ne.s32.totalorder %s85, %s101
    %p103 = scmp.eq.s32.totalorder %s16, 0
    %p104 = por %p102, %p103
    %s105 = ssub.s32 %s17, %s29
    %p106 = scmp.eq.s32.totalorder %s105, 0
    %s108 = sadd.s32 %s107, 1
    %s109 = scalar_select %p106, %s107, %s108
    %p112 = pneg %p106
    %p113 = scmp.eq.s32.totalorder %s10, 7
    %p114 = por %p112, %p113
    %p115 = scmp.ne.s32.totalorder %s107, %s110
    %p116 = scmp.eq.s32.totalorder %s10, 0
    %p117 = por %p115, %p116
    %p118 = scmp.ne.s32.totalorder %s107, %s110
    %p119 = scmp.eq.s32.totalorder %s15, 7
    %p120 = por %p118, %p119
    %p121 = scmp.ne.s32.totalorder %s110, %s111
    %p122 = scmp.eq.s32.totalorder %s15, 0
    %p123 = por %p121, %p122
    %p124 = scmp.ne.s32.totalorder %s110, %s111
    %p125 = scmp.eq.s32.totalorder %s16, 7
    %p126 = por %p124, %p125
    %p128 = scmp.ne.s32.totalorder %s111, %s127
    %p129 = scmp.eq.s32.totalorder %s16, 0
    %p130 = por %p128, %p129
    %s131 = ssub.s32 %s17, %s29
    %s132 = ssub.s32 %s18, %s25
    %s133 = sor.u32 %s131, %s132
    %p134 = scmp.eq.s32.totalorder %s133, 0
    %s136 = sadd.s32 %s135, 1
    %s137 = scalar_select %p134, %s135, %s136
    %p140 = pneg %p134
    %p141 = scmp.eq.s32.totalorder %s10, 7
    %p142 = por %p140, %p141
    %p143 = scmp.ne.s32.totalorder %s135, %s138
    %p144 = scmp.eq.s32.totalorder %s10, 0
    %p145 = por %p143, %p144
    %p146 = scmp.ne.s32.totalorder %s135, %s138
    %p147 = scmp.eq.s32.totalorder %s15, 7
    %p148 = por %p146, %p147
    %p149 = scmp.ne.s32.totalorder %s138, %s139
    %p150 = scmp.eq.s32.totalorder %s15, 0
    %p151 = por %p149, %p150
    %p152 = scmp.ne.s32.totalorder %s138, %s139
    %p153 = scmp.eq.s32.totalorder %s16, 7
    %p154 = por %p152, %p153
    %p156 = scmp.ne.s32.totalorder %s139, %s155
    %p157 = scmp.eq.s32.totalorder %s16, 0
    %p158 = por %p156, %p157
    %p159 = scmp.le.s32.totalorder 1, %s10
    %p160 = scmp.lt.s32.totalorder %s10, 9
    %p161 = pnand %p159, %p160
    %p162 = pneg %p161
    // Predicated region
    $region9: #{block_forward.3} parent=5 // pred_check
      _
    $region10: #{block_forward.3} parent=5 // pred_check_branch
      %164 = sbr.rel (%p161) target = $region12
    $region11: #{block_forward.3} parent=5 // pred_region
      %s165 = ssub.s32 %s10, 1
      // Predicated region
      $region13: #{block_forward.3} parent=11 // pred_check
        %p166 = pneg %p71
      $region14: #{block_forward.3} parent=11 // pred_check_branch
        %168 = sbr.rel (%p166) target = $region16
      $region15: #{block_forward.3} parent=11 // pred_region
        _
      $region16: #{block_forward.3} parent=11 // pred_fallthru
        _
    $region12: #{block_forward.3} parent=5 // pred_fallthru
      _
    %p169 = scmp.lt.s32.totalorder %s10, 8
    // Predicated region
    $region17: #{block_forward.3} parent=5 // pred_check
      %p170 = pneg %p169
    $region18: #{block_forward.3} parent=5 // pred_check_branch
      %172 = sbr.rel (%p170) target = $region20
    $region19: #{block_forward.3} parent=5 // pred_region
      // Predicated region
      $region21: #{block_forward.3} parent=19 // pred_check
        %p173 = pneg %p44
      $region22: #{block_forward.3} parent=19 // pred_check_branch
        %175 = sbr.rel (%p173) target = $region24
      $region23: #{block_forward.3} parent=19 // pred_region
        %p176 = scmp.lt.s32.totalorder %s17, 1
        %s177 = scalar_select %p176, %s17, 1
        %p178 = scmp.lt.s32.totalorder %s18, 3
        %s179 = scalar_select %p178, %s18, 3
        %s180 = smul.addr %s179, 45
        %s181 = smul.addr %s177, 180
        %s182 = sadd.s32 %s180, %s181
        %s183 = smul.addr %s182, 4
        %s184 = scalar_lea.vmem %s0, %s183
      $region24: #{block_forward.3} parent=19 // pred_fallthru
        _
      // Predicated region
      $region25: #{block_forward.3} parent=19 // pred_check
        %p185 = pneg %p91
      $region26: #{block_forward.3} parent=19 // pred_check_branch
        %187 = sbr.rel (%p185) target = $region28
      $region27: #{block_forward.3} parent=19 // pred_region
        %p188 = scmp.lt.s32.totalorder %s17, 1
        %s189 = scalar_select %p188, %s17, 1
        %s190 = scalar_lea.vmem %s2, %s189
      $region28: #{block_forward.3} parent=19 // pred_fallthru
        _
      // Predicated region
      $region29: #{block_forward.3} parent=19 // pred_check
        %p191 = pneg %p117
      $region30: #{block_forward.3} parent=19 // pred_check_branch
        %193 = sbr.rel (%p191) target = $region32
      $region31: #{block_forward.3} parent=19 // pred_region
        %p194 = scmp.lt.s32.totalorder %s17, 1
        %s195 = scalar_select %p194, %s17, 1
        %s196 = scalar_lea.vmem %s3, %s195
      $region32: #{block_forward.3} parent=19 // pred_fallthru
        _
    $region20: #{block_forward.3} parent=5 // pred_fallthru
      _
    %p197 = scmp.le.s32.totalorder 1, %s10
    %p198 = scmp.lt.s32.totalorder %s10, 9
    %p199 = pnand %p197, %p198
    %p200 = pneg %p199
    // Predicated region
    $region33: #{block_forward.3} parent=5 // pred_check
      _
    $region34: #{block_forward.3} parent=5 // pred_check_branch
      %202 = sbr.rel (%p199) target = $region36
    $region35: #{block_forward.3} parent=5 // pred_region
      %s203 = ssub.s32 %s10, 1
      %p204 = scmp.lt.s32.totalorder %s19, 1
      %s205 = scalar_select %p204, %s19, 1
      %p206 = scmp.lt.s32.totalorder %s20, 3
      %s207 = scalar_select %p206, %s20, 3
      %s208 = smul.addr %s207, 45
      %s209 = smul.addr %s205, 180
      %s210 = sadd.s32 %s208, %s209
      %s211 = smul.addr %s210, 4
      %s212 = scalar_lea.vmem %s0, %s211
      %p213 = pneg %p50
      %p214 = pneg %p47
      %p215 = pneg %p71
      %p216 = pneg %p68
      %p217 = scmp.lt.s32.totalorder %s19, 1
      %s218 = scalar_select %p217, %s19, 1
      %s219 = scalar_lea.vmem %s2, %s218
      %p220 = pneg %p97
      %p221 = pneg %p94
      %p222 = scmp.lt.s32.totalorder %s19, 1
      %s223 = scalar_select %p222, %s19, 1
      %s224 = scalar_lea.vmem %s3, %s223
      %p225 = pneg %p123
      %p226 = pneg %p120
      %p227 = pneg %p151
      %p228 = pneg %p148
      %p229 = scmp.lt.s32.totalorder %s19, 1
      %s230 = scalar_select %p229, %s19, 1
      %p231 = scmp.lt.s32.totalorder %s20, 3
      %s232 = scalar_select %p231, %s20, 3
      %s233 = smul.addr %s232, 36
      %s234 = smul.addr %s230, 144
      %s235 = sadd.s32 %s233, %s234
      %s236 = smul.addr %s235, 8
      %s237 = scalar_lea.vmem %s4, %s236
      %p238 = scmp.lt.s32.totalorder %s19, 1
      %s239 = scalar_select %p238, %s19, 1
      %p240 = scmp.lt.s32.totalorder %s20, 3
      %s241 = scalar_select %p240, %s20, 3
      %s242 = smul.addr %s241, 45
      %s243 = smul.addr %s239, 180
      %s244 = sadd.s32 %s242, %s243
      %s245 = smul.addr %s244, 4
      %s246 = scalar_lea.vmem %s0, %s245
      %p247 = scmp.lt.s32.totalorder %s19, 1
      %s248 = scalar_select %p247, %s19, 1
      %s249 = scalar_lea.vmem %s2, %s248
      %p250 = scmp.lt.s32.totalorder %s19, 1
      %s251 = scalar_select %p250, %s19, 1
      %s252 = scalar_lea.vmem %s3, %s251
      %p253 = scmp.lt.s32.totalorder %s19, 1
      %s254 = scalar_select %p253, %s19, 1
      %p255 = scmp.lt.s32.totalorder %s20, 3
      %s256 = scalar_select %p255, %s20, 3
      %s257 = smul.addr %s256, 36
      %s258 = smul.addr %s254, 144
      %s259 = sadd.s32 %s257, %s258
      %s260 = smul.addr %s259, 8
      %s261 = scalar_lea.vmem %s4, %s260
      %v263 = vld [vmem:[%s246 + $0x8] sm:$0xf]
      %v264 = vld [vmem:[%s246 + $0xc] sm:$0xf]
      %v265 = vld [vmem:[%s246 + $0x10] sm:$0xf]
      %v266 = vld [vmem:[%s246 + $0x14] sm:$0xf]
      %v267 = vld [vmem:[%s246 + $0x18] sm:$0xf]
      %v268 = vld [vmem:[%s246 + $0x1c] sm:$0xf]
      %v269 = vld [vmem:[%s246 + $0x20] sm:$0xf]
      %v270 = vld [vmem:[%s246 + $0x24] sm:$0xf]
      %v271 = vld [vmem:[%s246 + $0x28] sm:$0xf]
      %v272 = vld [vmem:[%s246 + $0x2c] sm:$0xf]
      %v273 = vld [vmem:[%s246 + $0x30] sm:$0xf]
      %v274 = vld [vmem:[%s246 + $0x34] sm:$0xf]
      %v275 = vld [vmem:[%s246 + $0x38] sm:$0xf]
      %v276 = vld [vmem:[%s246 + $0x3c] sm:$0xf]
      %v277 = vld [vmem:[%s246 + $0x40] sm:$0xf]
      %v278 = vld [vmem:[%s246 + $0x44] sm:$0xf]
      %v279 = vld [vmem:[%s246 + $0x48] sm:$0xf]
      %v280 = vld [vmem:[%s246 + $0x4c] sm:$0xf]
      %v281 = vld [vmem:[%s246 + $0x50] sm:$0xf]
      %v282 = vld [vmem:[%s246 + $0x54] sm:$0xf]
      %v283 = vld [vmem:[%s246 + $0x58] sm:$0xf]
      %v284 = vld [vmem:[%s246 + $0x5c] sm:$0xf]
      %v285 = vld [vmem:[%s246 + $0x60] sm:$0xf]
      %v286 = vld [vmem:[%s246 + $0x64] sm:$0xf]
      %v287 = vld [vmem:[%s246 + $0x68] sm:$0xf]
      %v288 = vld [vmem:[%s246 + $0x6c] sm:$0xf]
      %v289 = vld [vmem:[%s246 + $0x70] sm:$0xf]
      %v290 = vld [vmem:[%s246 + $0x74] sm:$0xf]
      %v291 = vld [vmem:[%s246 + $0x78] sm:$0xf]
      %v292 = vld [vmem:[%s246 + $0x7c] sm:$0xf]
      %v293 = vld [vmem:[%s246 + $0x80] sm:$0xf]
      %v294 = vld [vmem:[%s246 + $0x84] sm:$0xf]
      %v295 = vld [vmem:[%s246 + $0x88] sm:$0xf]
      %v296 = vld [vmem:[%s246 + $0x8c] sm:$0xf]
      %v297 = vld [vmem:[%s246 + $0x90] sm:$0xf]
      %v298 = vld [vmem:[%s246 + $0x94] sm:$0xf]
      %v299 = vld [vmem:[%s246 + $0x98] sm:$0x1]
      %v300 = vld [vmem:[%s1] sm:$0xf]
      %v301 = vld [vmem:[%s246 + $0x8] sm:$0xe]
      %s302 = scalar_lea.vmem %s1, 4
      %v303 = vld [vmem:[%s302] sm:$0xf]
      %v341 = vunpack.c.l.b16 %v301
      %v342 = vunpack.c.l.b16 %v264
      %v343 = vunpack.c.l.b16 %v265
      %v344 = vunpack.c.l.b16 %v266
      %v345 = vunpack.c.l.b16 %v267
      %v346 = vunpack.c.l.b16 %v268
      %v347 = vunpack.c.l.b16 %v269
      %v348 = vunpack.c.l.b16 %v270
      %v349 = vunpack.c.l.b16 %v271
      %v350 = vunpack.c.l.b16 %v272
      %v351 = vunpack.c.l.b16 %v273
      %v352 = vunpack.c.l.b16 %v274
      %v353 = vunpack.c.l.b16 %v275
      %v354 = vunpack.c.l.b16 %v276
      %v355 = vunpack.c.l.b16 %v277
      %v356 = vunpack.c.l.b16 %v278
      %v357 = vunpack.c.l.b16 %v279
      %v358 = vunpack.c.l.b16 %v280
      %v359 = vunpack.c.l.b16 %v281
      %v360 = vunpack.c.l.b16 %v282
      %v361 = vunpack.c.l.b16 %v283
      %v362 = vunpack.c.l.b16 %v284
      %v363 = vunpack.c.l.b16 %v285
      %v364 = vunpack.c.l.b16 %v286
      %v365 = vunpack.c.l.b16 %v287
      %v366 = vunpack.c.l.b16 %v288
      %v367 = vunpack.c.l.b16 %v289
      %v368 = vunpack.c.l.b16 %v290
      %v369 = vunpack.c.l.b16 %v291
      %v370 = vunpack.c.l.b16 %v292
      %v371 = vunpack.c.l.b16 %v293
      %v372 = vunpack.c.l.b16 %v294
      %v373 = vunpack.c.l.b16 %v295
      %v374 = vunpack.c.l.b16 %v296
      %v375 = vunpack.c.l.b16 %v297
      %v376 = vunpack.c.l.b16 %v298
      %v377 = vunpack.c.l.b16 %v299
      %v378 = vpack.c.b16 %v342, %v341
      %v379 = vpack.c.b16 %v344, %v343
      %v380 = vpack.c.b16 %v346, %v345
      %v381 = vpack.c.b16 %v348, %v347
      %v382 = vpack.c.b16 %v350, %v349
      %v383 = vpack.c.b16 %v352, %v351
      %v384 = vpack.c.b16 %v354, %v353
      %v385 = vpack.c.b16 %v356, %v355
      %v386 = vpack.c.b16 %v358, %v357
      %v387 = vpack.c.b16 %v360, %v359
      %v388 = vpack.c.b16 %v362, %v361
      %v389 = vpack.c.b16 %v364, %v363
      %v390 = vpack.c.b16 %v366, %v365
      %v391 = vpack.c.b16 %v368, %v367
      %v392 = vpack.c.b16 %v370, %v369
      %v393 = vpack.c.b16 %v372, %v371
      %v394 = vpack.c.b16 %v374, %v373
      %v395 = vpack.c.b16 %v376, %v375
      %v396 = vpack.c.b16 %v377, %v377
      %vm397 = vcmask 1046528
      %v398 = vrot.slane %v378, 1
      %v399 = vrot.slane %v379, 1
      %v400 = vsel %vm397, %v398, %v399
      %v401 = vrot.slane %v380, 1
      %v402 = vsel %vm397, %v399, %v401
      %v403 = vrot.slane %v381, 1
      %v404 = vsel %vm397, %v401, %v403
      %v405 = vrot.slane %v382, 1
      %v406 = vsel %vm397, %v403, %v405
      %v407 = vrot.slane %v383, 1
      %v408 = vsel %vm397, %v405, %v407
      %v409 = vrot.slane %v384, 1
      %v410 = vsel %vm397, %v407, %v409
      %v411 = vrot.slane %v385, 1
      %v412 = vsel %vm397, %v409, %v411
      %v413 = vrot.slane %v386, 1
      %v414 = vsel %vm397, %v411, %v413
      %v415 = vrot.slane %v387, 1
      %v416 = vsel %vm397, %v413, %v415
      %v417 = vrot.slane %v388, 1
      %v418 = vsel %vm397, %v415, %v417
      %v419 = vrot.slane %v389, 1
      %v420 = vsel %vm397, %v417, %v419
      %v421 = vrot.slane %v390, 1
      %v422 = vsel %vm397, %v419, %v421
      %v423 = vrot.slane %v391, 1
      %v424 = vsel %vm397, %v421, %v423
      %v425 = vrot.slane %v392, 1
      %v426 = vsel %vm397, %v423, %v425
      %v427 = vrot.slane %v393, 1
      %v428 = vsel %vm397, %v425, %v427
      %v429 = vrot.slane %v394, 1
      %v430 = vsel %vm397, %v427, %v429
      %v431 = vrot.slane %v395, 1
      %v432 = vsel %vm397, %v429, %v431
      %v433 = vrot.slane %v396, 1
      %v434 = vsel %vm397, %v431, %v433
      %vm435 = vcmask 64512
      %v437 = vsel %vm435, %v400, 0
      %v440 = vsel %vm435, %v402, 0
      %v443 = vsel %vm435, %v404, 0
      %v446 = vsel %vm435, %v406, 0
      %v449 = vsel %vm435, %v408, 0
      %v452 = vsel %vm435, %v410, 0
      %v455 = vsel %vm435, %v412, 0
      %v458 = vsel %vm435, %v414, 0
      %v461 = vsel %vm435, %v416, 0
      %v464 = vsel %vm435, %v418, 0
      %v467 = vsel %vm435, %v420, 0
      %v470 = vsel %vm435, %v422, 0
      %v473 = vsel %vm435, %v424, 0
      %v476 = vsel %vm435, %v426, 0
      %v479 = vsel %vm435, %v428, 0
      %v482 = vsel %vm435, %v430, 0
      %v485 = vsel %vm435, %v432, 0
      %v488 = vsel %vm435, %v434, 0
      %vm490 = vcmask 1043456
      %v492 = vsel %vm490, %v303, 0
      %494 = vmatprep.subr.bf16.mxu0 0
      %495 = vmatpush1.bf16.msra.mxu0 %v492
      %496 = vmatprep.subr.bf16.mxu0 0
      %497 = vmatpush1.bf16.msra.mxu0 0
      %498 = vmatprep.subr.bf16.mxu0 0
      %499 = vmatpush1.bf16.msra.mxu0 0
      %500 = vmatprep.subr.bf16.mxu0 0
      %501 = vmatpush1.bf16.msra.mxu0 0
      %502 = vmatprep.subr.bf16.mxu0 0
      %503 = vmatpush1.bf16.msra.mxu0 0
      %504 = vmatprep.subr.bf16.mxu0 0
      %505 = vmatpush1.bf16.msra.mxu0 0
      %506 = vmatprep.subr.bf16.mxu0 0
      %507 = vmatpush1.bf16.msra.mxu0 0
      %508 = vmatprep.subr.bf16.mxu0 0
      %509 = vmatpush1.bf16.msra.mxu0 0
      %510 = vmatprep.subr.bf16.mxu0 0
      %511 = vmatpush1.bf16.msra.mxu0 0
      %512 = vmatprep.subr.bf16.mxu0 0
      %513 = vmatpush1.bf16.msra.mxu0 0
      %514 = vmatprep.subr.bf16.mxu0 0
      %515 = vmatpush1.bf16.msra.mxu0 0
      %516 = vmatprep.subr.bf16.mxu0 0
      %517 = vmatpush1.bf16.msra.mxu0 0
      %518 = vmatprep.subr.bf16.mxu0 0
      %519 = vmatpush1.bf16.msra.mxu0 0
      %520 = vmatprep.subr.bf16.mxu0 0
      %521 = vmatpush1.bf16.msra.mxu0 0
      %522 = vmatprep.subr.bf16.mxu0 0
      %523 = vmatpush1.bf16.msra.mxu0 0
      %524 = vmatprep.subr.bf16.mxu0 0
      %525 = vmatpush1.bf16.msra.mxu0 0
      %526 = vmatprep.mubr.bf16.mxu0 0
      %527 = vmatmul.mubr.bf16.gmra.mrb[0].mxu0 %v437
      %v528 = vpop.f32.mrb[0].mxu0
      %v529 = vadd.f32 0.0, %v528
      %v530 = vpop.f32.mrb[0].mxu0
      %v531 = vpop.f32.mrb[0].mxu0
      %v532 = vadd.f32 0.0, %v531
      %v533 = vpop.f32.mrb[0].mxu0
      %534 = vmatprep.mubr.bf16.mxu0 0
      %535 = vmatmul.mubr.bf16.gmra.mrb[0].mxu0 %v440
      %v536 = vpop.f32.mrb[0].mxu0
      %v537 = vadd.f32 0.0, %v536
      %v538 = vpop.f32.mrb[0].mxu0
      %v539 = vpop.f32.mrb[0].mxu0
      %v540 = vadd.f32 0.0, %v539
      %v541 = vpop.f32.mrb[0].mxu0
      %542 = vmatprep.mubr.bf16.mxu0 0
      %543 = vmatmul.mubr.bf16.gmra.mrb[0].mxu0 %v443
      %v544 = vpop.f32.mrb[0].mxu0
      %v545 = vadd.f32 0.0, %v544
      %v546 = vpop.f32.mrb[0].mxu0
      %v547 = vpop.f32.mrb[0].mxu0
      %v548 = vadd.f32 0.0, %v547
      %v549 = vpop.f32.mrb[0].mxu0
      %550 = vmatprep.mubr.bf16.mxu0 0
      %551 = vmatmul.mubr.bf16.gmra.mrb[0].mxu0 %v446
      %v552 = vpop.f32.mrb[0].mxu0
      %v553 = vadd.f32 0.0, %v552
      %v554 = vpop.f32.mrb[0].mxu0
      %v555 = vpop.f32.mrb[0].mxu0
      %v556 = vadd.f32 0.0, %v555
      %v557 = vpop.f32.mrb[0].mxu0
      %558 = vmatprep.mubr.bf16.mxu0 0
      %559 = vmatmul.mubr.bf16.gmra.mrb[0].mxu0 %v449
      %v560 = vpop.f32.mrb[0].mxu0
      %v561 = vadd.f32 0.0, %v560
      %v562 = vpop.f32.mrb[0].mxu0
      %v563 = vpop.f32.mrb[0].mxu0
      %v564 = vadd.f32 0.0, %v563
      %v565 = vpop.f32.mrb[0].mxu0
      %566 = vmatprep.mubr.bf16.mxu0 0
      %567 = vmatmul.mubr.bf16.gmra.mrb[0].mxu0 %v452
      %v568 = vpop.f32.mrb[0].mxu0
      %v569 = vadd.f32 0.0, %v568
      %v570 = vpop.f32.mrb[0].mxu0
      %v571 = vpop.f32.mrb[0].mxu0
      %v572 = vadd.f32 0.0, %v571
      %v573 = vpop.f32.mrb[0].mxu0
      %574 = vmatprep.mubr.bf16.mxu0 0
      %575 = vmatmul.mubr.bf16.gmra.mrb[0].mxu0 %v455
      %v576 = vpop.f32.mrb[0].mxu0
      %v577 = vadd.f32 0.0, %v576
      %v578 = vpop.f32.mrb[0].mxu0
      %v579 = vpop.f32.mrb[0].mxu0
      %v580 = vadd.f32 0.0, %v579
      %v581 = vpop.f32.mrb[0].mxu0
      %582 = vmatprep.mubr.bf16.mxu0 0
      %583 = vmatmul.mubr.bf16.gmra.mrb[0].mxu0 %v458
      %v584 = vpop.f32.mrb[0].mxu0
      %v585 = vadd.f32 0.0, %v584
      %v586 = vpop.f32.mrb[0].mxu0
      %v587 = vpop.f32.mrb[0].mxu0
      %v588 = vadd.f32 0.0, %v587
      %v589 = vpop.f32.mrb[0].mxu0
      %590 = vmatprep.mubr.bf16.mxu0 0
      %591 = vmatmul.mubr.bf16.gmra.mrb[0].mxu0 %v461
      %v592 = vpop.f32.mrb[0].mxu0
      %v593 = vadd.f32 0.0, %v592
      %v594 = vpop.f32.mrb[0].mxu0
      %v595 = vpop.f32.mrb[0].mxu0
      %v596 = vadd.f32 0.0, %v595
      %v597 = vpop.f32.mrb[0].mxu0
      %598 = vmatprep.mubr.bf16.mxu0 0
      %599 = vmatmul.mubr.bf16.gmra.mrb[0].mxu0 %v464
      %v600 = vpop.f32.mrb[0].mxu0
      %v601 = vadd.f32 0.0, %v600
      %v602 = vpop.f32.mrb[0].mxu0
      %v603 = vpop.f32.mrb[0].mxu0
      %v604 = vadd.f32 0.0, %v603
      %v605 = vpop.f32.mrb[0].mxu0
      %606 = vmatprep.mubr.bf16.mxu0 0
      %607 = vmatmul.mubr.bf16.gmra.mrb[0].mxu0 %v467
      %v608 = vpop.f32.mrb[0].mxu0
      %v609 = vadd.f32 0.0, %v608
      %v610 = vpop.f32.mrb[0].mxu0
      %v611 = vpop.f32.mrb[0].mxu0
      %v612 = vadd.f32 0.0, %v611
      %v613 = vpop.f32.mrb[0].mxu0
      %614 = vmatprep.mubr.bf16.mxu0 0
      %615 = vmatmul.mubr.bf16.gmra.mrb[0].mxu0 %v470
      %v616 = vpop.f32.mrb[0].mxu0
      %v617 = vadd.f32 0.0, %v616
      %v618 = vpop.f32.mrb[0].mxu0
      %v619 = vpop.f32.mrb[0].mxu0
      %v620 = vadd.f32 0.0, %v619
      %v621 = vpop.f32.mrb[0].mxu0
      %622 = vmatprep.mubr.bf16.mxu0 0
      %623 = vmatmul.mubr.bf16.gmra.mrb[0].mxu0 %v473
      %v624 = vpop.f32.mrb[0].mxu0
      %v625 = vadd.f32 0.0, %v624
      %v626 = vpop.f32.mrb[0].mxu0
      %v627 = vpop.f32.mrb[0].mxu0
      %v628 = vadd.f32 0.0, %v627
      %v629 = vpop.f32.mrb[0].mxu0
      %630 = vmatprep.mubr.bf16.mxu0 0
      %631 = vmatmul.mubr.bf16.gmra.mrb[0].mxu0 %v476
      %v632 = vpop.f32.mrb[0].mxu0
      %v633 = vadd.f32 0.0, %v632
      %v634 = vpop.f32.mrb[0].mxu0
      %v635 = vpop.f32.mrb[0].mxu0
      %v636 = vadd.f32 0.0, %v635
      %v637 = vpop.f32.mrb[0].mxu0
      %638 = vmatprep.mubr.bf16.mxu0 0
      %639 = vmatmul.mubr.bf16.gmra.mrb[0].mxu0 %v479
      %v640 = vpop.f32.mrb[0].mxu0
      %v641 = vadd.f32 0.0, %v640
      %v642 = vpop.f32.mrb[0].mxu0
      %v643 = vpop.f32.mrb[0].mxu0
      %v644 = vadd.f32 0.0, %v643
      %v645 = vpop.f32.mrb[0].mxu0
      %646 = vmatprep.mubr.bf16.mxu0 0
      %647 = vmatmul.mubr.bf16.gmra.mrb[0].mxu0 %v482
      %v648 = vpop.f32.mrb[0].mxu0
      %v649 = vadd.f32 0.0, %v648
      %v650 = vpop.f32.mrb[0].mxu0
      %v651 = vpop.f32.mrb[0].mxu0
      %v652 = vadd.f32 0.0, %v651
      %v653 = vpop.f32.mrb[0].mxu0
      %654 = vmatprep.mubr.bf16.mxu0 0
      %655 = vmatmul.mubr.bf16.gmra.mrb[0].mxu0 %v485
      %v656 = vpop.f32.mrb[0].mxu0
      %v657 = vadd.f32 0.0, %v656
      %v658 = vpop.f32.mrb[0].mxu0
      %v659 = vpop.f32.mrb[0].mxu0
      %v660 = vadd.f32 0.0, %v659
      %v661 = vpop.f32.mrb[0].mxu0
      %662 = vmatprep.mubr.bf16.mxu0 0
      %663 = vmatmul.mubr.bf16.gmra.mrb[0].mxu0 %v488
      %v664 = vpop.f32.mrb[0].mxu0
      %v665 = vadd.f32 0.0, %v664
      %v666 = vpop.f32.mrb[0].mxu0
      %v667 = vpop.f32.mrb[0].mxu0
      %v668 = vadd.f32 0.0, %v667
      %v669 = vpop.f32.mrb[0].mxu0
      %670 = vdwg.mxu0
      %v672 = vunpack.c.l.b16 %v263
      %v673 = vpack.c.b16 %v342, %v672
      %vm674 = vsmask.f32 7424
      %v676 = vshrl.u32 %v673, 16
      %v678 = vshll.u32 %v673, 16
      %v680 = vrot.slane %v678, 1
      %v681 = vor.u32 %v676, %v680
      %v683 = vshll.u32 %v379, 16
      %v685 = vrot.slane %v683, 1
      %v686 = vsel %vm674, %v681, %v685
      %v687 = vshrl.u32 %v379, 16
      %v689 = vor.u32 %v687, %v685
      %v691 = vshll.u32 %v380, 16
      %v693 = vrot.slane %v691, 1
      %v694 = vsel %vm674, %v689, %v693
      %v695 = vshrl.u32 %v380, 16
      %v697 = vor.u32 %v695, %v693
      %v699 = vshll.u32 %v381, 16
      %v701 = vrot.slane %v699, 1
      %v702 = vsel %vm674, %v697, %v701
      %v703 = vshrl.u32 %v381, 16
      %v705 = vor.u32 %v703, %v701
      %v707 = vshll.u32 %v382, 16
      %v709 = vrot.slane %v707, 1
      %v710 = vsel %vm674, %v705, %v709
      %v711 = vshrl.u32 %v382, 16
      %v713 = vor.u32 %v711, %v709
      %v715 = vshll.u32 %v383, 16
      %v717 = vrot.slane %v715, 1
      %v718 = vsel %vm674, %v713, %v717
      %v719 = vshrl.u32 %v383, 16
      %v721 = vor.u32 %v719, %v717
      %v723 = vshll.u32 %v384, 16
      %v725 = vrot.slane %v723, 1
      %v726 = vsel %vm674, %v721, %v725
      %v727 = vshrl.u32 %v384, 16
      %v729 = vor.u32 %v727, %v725
      %v731 = vshll.u32 %v385, 16
      %v733 = vrot.slane %v731, 1
      %v734 = vsel %vm674, %v729, %v733
      %v735 = vshrl.u32 %v385, 16
      %v737 = vor.u32 %v735, %v733
      %v739 = vshll.u32 %v386, 16
      %v741 = vrot.slane %v739, 1
      %v742 = vsel %vm674, %v737, %v741
      %v743 = vshrl.u32 %v386, 16
      %v745 = vor.u32 %v743, %v741
      %v747 = vshll.u32 %v387, 16
      %v749 = vrot.slane %v747, 1
      %v750 = vsel %vm674, %v745, %v749
      %v751 = vshrl.u32 %v387, 16
      %v753 = vor.u32 %v751, %v749
      %v755 = vshll.u32 %v388, 16
      %v757 = vrot.slane %v755, 1
      %v758 = vsel %vm674, %v753, %v757
      %v759 = vshrl.u32 %v388, 16
      %v761 = vor.u32 %v759, %v757
      %v763 = vshll.u32 %v389, 16
      %v765 = vrot.slane %v763, 1
      %v766 = vsel %vm674, %v761, %v765
      %v767 = vshrl.u32 %v389, 16
      %v769 = vor.u32 %v767, %v765
      %v771 = vshll.u32 %v390, 16
      %v773 = vrot.slane %v771, 1
      %v774 = vsel %vm674, %v769, %v773
      %v775 = vshrl.u32 %v390, 16
      %v777 = vor.u32 %v775, %v773
      %v779 = vshll.u32 %v391, 16
      %v781 = vrot.slane %v779, 1
      %v782 = vsel %vm674, %v777, %v781
      %v783 = vshrl.u32 %v391, 16
      %v785 = vor.u32 %v783, %v781
      %v787 = vshll.u32 %v392, 16
      %v789 = vrot.slane %v787, 1
      %v790 = vsel %vm674, %v785, %v789
      %v791 = vshrl.u32 %v392, 16
      %v793 = vor.u32 %v791, %v789
      %v795 = vshll.u32 %v393, 16
      %v797 = vrot.slane %v795, 1
      %v798 = vsel %vm674, %v793, %v797
      %v799 = vshrl.u32 %v393, 16
      %v801 = vor.u32 %v799, %v797
      %v803 = vshll.u32 %v394, 16
      %v805 = vrot.slane %v803, 1
      %v806 = vsel %vm674, %v801, %v805
      %v807 = vshrl.u32 %v394, 16
      %v809 = vor.u32 %v807, %v805
      %v811 = vshll.u32 %v395, 16
      %v813 = vrot.slane %v811, 1
      %v814 = vsel %vm674, %v809, %v813
      %v815 = vshrl.u32 %v395, 16
      %v817 = vor.u32 %v815, %v813
      %v819 = vshll.u32 %v396, 16
      %v821 = vrot.slane %v819, 1
      %v822 = vsel %vm674, %v817, %v821
      %v824 = vsel %vm435, %v686, 0
      %v827 = vsel %vm435, %v694, 0
      %v830 = vsel %vm435, %v702, 0
      %v833 = vsel %vm435, %v710, 0
      %v836 = vsel %vm435, %v718, 0
      %v839 = vsel %vm435, %v726, 0
      %v842 = vsel %vm435, %v734, 0
      %v845 = vsel %vm435, %v742, 0
      %v848 = vsel %vm435, %v750, 0
      %v851 = vsel %vm435, %v758, 0
      %v854 = vsel %vm435, %v766, 0
      %v857 = vsel %vm435, %v774, 0
      %v860 = vsel %vm435, %v782, 0
      %v863 = vsel %vm435, %v790, 0
      %v866 = vsel %vm435, %v798, 0
      %v869 = vsel %vm435, %v806, 0
      %v872 = vsel %vm435, %v814, 0
      %v875 = vsel %vm435, %v822, 0
      %v878 = vsel %vm490, %v300, 0
      %880 = vmatprep.subr.bf16.mxu0 0
      %881 = vmatpush1.bf16.msra.mxu0 %v878
      %882 = vmatprep.subr.bf16.mxu0 0
      %883 = vmatpush1.bf16.msra.mxu0 0
      %884 = vmatprep.subr.bf16.mxu0 0
      %885 = vmatpush1.bf16.msra.mxu0 0
      %886 = vmatprep.subr.bf16.mxu0 0
      %887 = vmatpush1.bf16.msra.mxu0 0
      %888 = vmatprep.subr.bf16.mxu0 0
      %889 = vmatpush1.bf16.msra.mxu0 0
      %890 = vmatprep.subr.bf16.mxu0 0
      %891 = vmatpush1.bf16.msra.mxu0 0
      %892 = vmatprep.subr.bf16.mxu0 0
      %893 = vmatpush1.bf16.msra.mxu0 0
      %894 = vmatprep.subr.bf16.mxu0 0
      %895 = vmatpush1.bf16.msra.mxu0 0
      %896 = vmatprep.subr.bf16.mxu0 0
      %897 = vmatpush1.bf16.msra.mxu0 0
      %898 = vmatprep.subr.bf16.mxu0 0
      %899 = vmatpush1.bf16.msra.mxu0 0
      %900 = vmatprep.subr.bf16.mxu0 0
      %901 = vmatpush1.bf16.msra.mxu0 0
      %902 = vmatprep.subr.bf16.mxu0 0
      %903 = vmatpush1.bf16.msra.mxu0 0
      %904 = vmatprep.subr.bf16.mxu0 0
      %905 = vmatpush1.bf16.msra.mxu0 0
      %906 = vmatprep.subr.bf16.mxu0 0
      %907 = vmatpush1.bf16.msra.mxu0 0
      %908 = vmatprep.subr.bf16.mxu0 0
      %909 = vmatpush1.bf16.msra.mxu0 0
      %910 = vmatprep.subr.bf16.mxu0 0
      %911 = vmatpush1.bf16.msra.mxu0 0
      %912 = vmatprep.mubr.bf16.mxu0 0
      %913 = vmatmul.mubr.bf16.gmra.mrb[0].mxu0 %v824
      %v914 = vpop.f32.mrb[0].mxu0
      %v915 = vadd.f32 %v529, %v914
      %v916 = vpop.f32.mrb[0].mxu0
      %v917 = vpop.f32.mrb[0].mxu0
      %v918 = vadd.f32 %v532, %v917
      %v919 = vpop.f32.mrb[0].mxu0
      %920 = vmatprep.mubr.bf16.mxu0 0
      %921 = vmatmul.mubr.bf16.gmra.mrb[0].mxu0 %v827
      %v922 = vpop.f32.mrb[0].mxu0
      %v923 = vadd.f32 %v537, %v922
      %v924 = vpop.f32.mrb[0].mxu0
      %v925 = vpop.f32.mrb[0].mxu0
      %v926 = vadd.f32 %v540, %v925
      %v927 = vpop.f32.mrb[0].mxu0
      %928 = vmatprep.mubr.bf16.mxu0 0
      %929 = vmatmul.mubr.bf16.gmra.mrb[0].mxu0 %v830
      %v930 = vpop.f32.mrb[0].mxu0
      %v931 = vadd.f32 %v545, %v930
      %v932 = vpop.f32.mrb[0].mxu0
      %v933 = vpop.f32.mrb[0].mxu0
      %v934 = vadd.f32 %v548, %v933
      %v935 = vpop.f32.mrb[0].mxu0
      %936 = vmatprep.mubr.bf16.mxu0 0
      %937 = vmatmul.mubr.bf16.gmra.mrb[0].mxu0 %v833
      %v938 = vpop.f32.mrb[0].mxu0
      %v939 = vadd.f32 %v553, %v938
      %v940 = vpop.f32.mrb[0].mxu0
      %v941 = vpop.f32.mrb[0].mxu0
      %v942 = vadd.f32 %v556, %v941
      %v943 = vpop.f32.mrb[0].mxu0
      %944 = vmatprep.mubr.bf16.mxu0 0
      %945 = vmatmul.mubr.bf16.gmra.mrb[0].mxu0 %v836
      %v946 = vpop.f32.mrb[0].mxu0
      %v947 = vadd.f32 %v561, %v946
      %v948 = vpop.f32.mrb[0].mxu0
      %v949 = vpop.f32.mrb[0].mxu0
      %v950 = vadd.f32 %v564, %v949
      %v951 = vpop.f32.mrb[0].mxu0
      %952 = vmatprep.mubr.bf16.mxu0 0
      %953 = vmatmul.mubr.bf16.gmra.mrb[0].mxu0 %v839
      %v954 = vpop.f32.mrb[0].mxu0
      %v955 = vadd.f32 %v569, %v954
      %v956 = vpop.f32.mrb[0].mxu0
      %v957 = vpop.f32.mrb[0].mxu0
      %v958 = vadd.f32 %v572, %v957
      %v959 = vpop.f32.mrb[0].mxu0
      %960 = vmatprep.mubr.bf16.mxu0 0
      %961 = vmatmul.mubr.bf16.gmra.mrb[0].mxu0 %v842
      %v962 = vpop.f32.mrb[0].mxu0
      %v963 = vadd.f32 %v577, %v962
      %v964 = vpop.f32.mrb[0].mxu0
      %v965 = vpop.f32.mrb[0].mxu0
      %v966 = vadd.f32 %v580, %v965
      %v967 = vpop.f32.mrb[0].mxu0
      %968 = vmatprep.mubr.bf16.mxu0 0
      %969 = vmatmul.mubr.bf16.gmra.mrb[0].mxu0 %v845
      %v970 = vpop.f32.mrb[0].mxu0
      %v971 = vadd.f32 %v585, %v970
      %v972 = vpop.f32.mrb[0].mxu0
      %v973 = vpop.f32.mrb[0].mxu0
      %v974 = vadd.f32 %v588, %v973
      %v975 = vpop.f32.mrb[0].mxu0
      %976 = vmatprep.mubr.bf16.mxu0 0
      %977 = vmatmul.mubr.bf16.gmra.mrb[0].mxu0 %v848
      %v978 = vpop.f32.mrb[0].mxu0
      %v979 = vadd.f32 %v593, %v978
      %v980 = vpop.f32.mrb[0].mxu0
      %v981 = vpop.f32.mrb[0].mxu0
      %v982 = vadd.f32 %v596, %v981
      %v983 = vpop.f32.mrb[0].mxu0
      %984 = vmatprep.mubr.bf16.mxu0 0
      %985 = vmatmul.mubr.bf16.gmra.mrb[0].mxu0 %v851
      %v986 = vpop.f32.mrb[0].mxu0
      %v987 = vadd.f32 %v601, %v986
      %v988 = vpop.f32.mrb[0].mxu0
      %v989 = vpop.f32.mrb[0].mxu0
      %v990 = vadd.f32 %v604, %v989
      %v991 = vpop.f32.mrb[0].mxu0
      %992 = vmatprep.mubr.bf16.mxu0 0
      %993 = vmatmul.mubr.bf16.gmra.mrb[0].mxu0 %v854
      %v994 = vpop.f32.mrb[0].mxu0
      %v995 = vadd.f32 %v609, %v994
      %v996 = vpop.f32.mrb[0].mxu0
      %v997 = vpop.f32.mrb[0].mxu0
      %v998 = vadd.f32 %v612, %v997
      %v999 = vpop.f32.mrb[0].mxu0
      %1000 = vmatprep.mubr.bf16.mxu0 0
      %1001 = vmatmul.mubr.bf16.gmra.mrb[0].mxu0 %v857
      %v1002 = vpop.f32.mrb[0].mxu0
      %v1003 = vadd.f32 %v617, %v1002
      %v1004 = vpop.f32.mrb[0].mxu0
      %v1005 = vpop.f32.mrb[0].mxu0
      %v1006 = vadd.f32 %v620, %v1005
      %v1007 = vpop.f32.mrb[0].mxu0
      %1008 = vmatprep.mubr.bf16.mxu0 0
      %1009 = vmatmul.mubr.bf16.gmra.mrb[0].mxu0 %v860
      %v1010 = vpop.f32.mrb[0].mxu0
      %v1011 = vadd.f32 %v625, %v1010
      %v1012 = vpop.f32.mrb[0].mxu0
      %v1013 = vpop.f32.mrb[0].mxu0
      %v1014 = vadd.f32 %v628, %v1013
      %v1015 = vpop.f32.mrb[0].mxu0
      %1016 = vmatprep.mubr.bf16.mxu0 0
      %1017 = vmatmul.mubr.bf16.gmra.mrb[0].mxu0 %v863
      %v1018 = vpop.f32.mrb[0].mxu0
      %v1019 = vadd.f32 %v633, %v1018
      %v1020 = vpop.f32.mrb[0].mxu0
      %v1021 = vpop.f32.mrb[0].mxu0
      %v1022 = vadd.f32 %v636, %v1021
      %v1023 = vpop.f32.mrb[0].mxu0
      %1024 = vmatprep.mubr.bf16.mxu0 0
      %1025 = vmatmul.mubr.bf16.gmra.mrb[0].mxu0 %v866
      %v1026 = vpop.f32.mrb[0].mxu0
      %v1027 = vadd.f32 %v641, %v1026
      %v1028 = vpop.f32.mrb[0].mxu0
      %v1029 = vpop.f32.mrb[0].mxu0
      %v1030 = vadd.f32 %v644, %v1029
      %v1031 = vpop.f32.mrb[0].mxu0
      %1032 = vmatprep.mubr.bf16.mxu0 0
      %1033 = vmatmul.mubr.bf16.gmra.mrb[0].mxu0 %v869
      %v1034 = vpop.f32.mrb[0].mxu0
      %v1035 = vadd.f32 %v649, %v1034
      %v1036 = vpop.f32.mrb[0].mxu0
      %v1037 = vpop.f32.mrb[0].mxu0
      %v1038 = vadd.f32 %v652, %v1037
      %v1039 = vpop.f32.mrb[0].mxu0
      %1040 = vmatprep.mubr.bf16.mxu0 0
      %1041 = vmatmul.mubr.bf16.gmra.mrb[0].mxu0 %v872
      %v1042 = vpop.f32.mrb[0].mxu0
      %v1043 = vadd.f32 %v657, %v1042
      %v1044 = vpop.f32.mrb[0].mxu0
      %v1045 = vpop.f32.mrb[0].mxu0
      %v1046 = vadd.f32 %v660, %v1045
      %v1047 = vpop.f32.mrb[0].mxu0
      %1048 = vmatprep.mubr.bf16.mxu0 0
      %1049 = vmatmul.mubr.bf16.gmra.mrb[0].mxu0 %v875
      %v1050 = vpop.f32.mrb[0].mxu0
      %v1051 = vadd.f32 %v665, %v1050
      %v1052 = vpop.f32.mrb[0].mxu0
      %v1053 = vpop.f32.mrb[0].mxu0
      %v1054 = vadd.f32 %v668, %v1053
      %v1055 = vpop.f32.mrb[0].mxu0
      %1056 = vdwg.mxu0
      %v1057 = vld [vmem:[%s246 + $0x98] sm:$0x3]
      %s1058 = scalar_lea.vmem %s1, 8
      %v1059 = vld [vmem:[%s1058] sm:$0xf]
      %v1061 = vunpack.c.l.b16 %v1057
      %v1062 = vpack.c.b16 %v1061, %v1061
      %vm1063 = vsmask.f32 6400
      %v1065 = vshrl.u32 %v378, 16
      %v1067 = vrot.slane %v1065, 1
      %v1068 = vshll.u32 %v378, 16
      %v1070 = vrot.slane %v1068, 2
      %v1071 = vor.u32 %v1067, %v1070
      %v1072 = vrot.slane %v687, 1
      %v1073 = vrot.slane %v683, 2
      %v1074 = vor.u32 %v1072, %v1073
      %v1075 = vsel %vm1063, %v1071, %v1074
      %v1076 = vrot.slane %v695, 1
      %v1077 = vrot.slane %v691, 2
      %v1078 = vor.u32 %v1076, %v1077
      %v1079 = vsel %vm1063, %v1074, %v1078
      %v1080 = vrot.slane %v703, 1
      %v1081 = vrot.slane %v699, 2
      %v1082 = vor.u32 %v1080, %v1081
      %v1083 = vsel %vm1063, %v1078, %v1082
      %v1084 = vrot.slane %v711, 1
      %v1085 = vrot.slane %v707, 2
      %v1086 = vor.u32 %v1084, %v1085
      %v1087 = vsel %vm1063, %v1082, %v1086
      %v1088 = vrot.slane %v719, 1
      %v1089 = vrot.slane %v715, 2
      %v1090 = vor.u32 %v1088, %v1089
      %v1091 = vsel %vm1063, %v1086, %v1090
      %v1092 = vrot.slane %v727, 1
      %v1093 = vrot.slane %v723, 2
      %v1094 = vor.u32 %v1092, %v1093
      %v1095 = vsel %vm1063, %v1090, %v1094
      %v1096 = vrot.slane %v735, 1
      %v1097 = vrot.slane %v731, 2
      %v1098 = vor.u32 %v1096, %v1097
      %v1099 = vsel %vm1063, %v1094, %v1098
      %v1100 = vrot.slane %v743, 1
      %v1101 = vrot.slane %v739, 2
      %v1102 = vor.u32 %v1100, %v1101
      %v1103 = vsel %vm1063, %v1098, %v1102
      %v1104 = vrot.slane %v751, 1
      %v1105 = vrot.slane %v747, 2
      %v1106 = vor.u32 %v1104, %v1105
      %v1107 = vsel %vm1063, %v1102, %v1106
      %v1108 = vrot.slane %v759, 1
      %v1109 = vrot.slane %v755, 2
      %v1110 = vor.u32 %v1108, %v1109
      %v1111 = vsel %vm1063, %v1106, %v1110
      %v1112 = vrot.slane %v767, 1
      %v1113 = vrot.slane %v763, 2
      %v1114 = vor.u32 %v1112, %v1113
      %v1115 = vsel %vm1063, %v1110, %v1114
      %v1116 = vrot.slane %v775, 1
      %v1117 = vrot.slane %v771, 2
      %v1118 = vor.u32 %v1116, %v1117
      %v1119 = vsel %vm1063, %v1114, %v1118
      %v1120 = vrot.slane %v783, 1
      %v1121 = vrot.slane %v779, 2
      %v1122 = vor.u32 %v1120, %v1121
      %v1123 = vsel %vm1063, %v1118, %v1122
      %v1124 = vrot.slane %v791, 1
      %v1125 = vrot.slane %v787, 2
      %v1126 = vor.u32 %v1124, %v1125
      %v1127 = vsel %vm1063, %v1122, %v1126
      %v1128 = vrot.slane %v799, 1
      %v1129 = vrot.slane %v795, 2
      %v1130 = vor.u32 %v1128, %v1129
      %v1131 = vsel %vm1063, %v1126, %v1130
      %v1132 = vrot.slane %v807, 1
      %v1133 = vrot.slane %v803, 2
      %v1134 = vor.u32 %v1132, %v1133
      %v1135 = vsel %vm1063, %v1130, %v1134
      %v1136 = vrot.slane %v815, 1
      %v1137 = vrot.slane %v811, 2
      %v1138 = vor.u32 %v1136, %v1137
      %v1139 = vsel %vm1063, %v1134, %v1138
      %v1141 = vshrl.u32 %v1062, 16
      %v1143 = vrot.slane %v1141, 1
      %v1144 = vshll.u32 %v1062, 16
      %v1146 = vrot.slane %v1144, 2
      %v1147 = vor.u32 %v1143, %v1146
      %v1148 = vsel %vm1063, %v1138, %v1147
      %v1150 = vsel %vm435, %v1075, 0
      %v1153 = vsel %vm435, %v1079, 0
      %v1156 = vsel %vm435, %v1083, 0
      %v1159 = vsel %vm435, %v1087, 0
      %v1162 = vsel %vm435, %v1091, 0
      %v1165 = vsel %vm435, %v1095, 0
      %v1168 = vsel %vm435, %v1099, 0
      %v1171 = vsel %vm435, %v1103, 0
      %v1174 = vsel %vm435, %v1107, 0
      %v1177 = vsel %vm435, %v1111, 0
      %v1180 = vsel %vm435, %v1115, 0
      %v1183 = vsel %vm435, %v1119, 0
      %v1186 = vsel %vm435, %v1123, 0
      %v1189 = vsel %vm435, %v1127, 0
      %v1192 = vsel %vm435, %v1131, 0
      %v1195 = vsel %vm435, %v1135, 0
      %v1198 = vsel %vm435, %v1139, 0
      %v1201 = vsel %vm435, %v1148, 0
      %v1204 = vsel %vm490, %v1059, 0
      %1206 = vmatprep.subr.bf16.mxu0 0
      %1207 = vmatpush1.bf16.msra.mxu0 %v1204
      %1208 = vmatprep.subr.bf16.mxu0 0
      %1209 = vmatpush1.bf16.msra.mxu0 0
      %1210 = vmatprep.subr.bf16.mxu0 0
      %1211 = vmatpush1.bf16.msra.mxu0 0
      %1212 = vmatprep.subr.bf16.mxu0 0
      %1213 = vmatpush1.bf16.msra.mxu0 0
      %1214 = vmatprep.subr.bf16.mxu0 0
      %1215 = vmatpush1.bf16.msra.mxu0 0
      %1216 = vmatprep.subr.bf16.mxu0 0
      %1217 = vmatpush1.bf16.msra.mxu0 0
      %1218 = vmatprep.subr.bf16.mxu0 0
      %1219 = vmatpush1.bf16.msra.mxu0 0
      %1220 = vmatprep.subr.bf16.mxu0 0
      %1221 = vmatpush1.bf16.msra.mxu0 0
      %1222 = vmatprep.subr.bf16.mxu0 0
      %1223 = vmatpush1.bf16.msra.mxu0 0
      %1224 = vmatprep.subr.bf16.mxu0 0
      %1225 = vmatpush1.bf16.msra.mxu0 0
      %1226 = vmatprep.subr.bf16.mxu0 0
      %1227 = vmatpush1.bf16.msra.mxu0 0
      %1228 = vmatprep.subr.bf16.mxu0 0
      %1229 = vmatpush1.bf16.msra.mxu0 0
      %1230 = vmatprep.subr.bf16.mxu0 0
      %1231 = vmatpush1.bf16.msra.mxu0 0
      %1232 = vmatprep.subr.bf16.mxu0 0
      %1233 = vmatpush1.bf16.msra.mxu0 0
      %1234 = vmatprep.subr.bf16.mxu0 0
      %1235 = vmatpush1.bf16.msra.mxu0 0
      %1236 = vmatprep.subr.bf16.mxu0 0
      %1237 = vmatpush1.bf16.msra.mxu0 0
      %1238 = vmatprep.mubr.bf16.mxu0 0
      %1239 = vmatmul.mubr.bf16.gmra.mrb[0].mxu0 %v1150
      %v1240 = vpop.f32.mrb[0].mxu0
      %v1241 = vadd.f32 0.0, %v1240
      %v1242 = vpop.f32.mrb[0].mxu0
      %v1243 = vpop.f32.mrb[0].mxu0
      %v1244 = vadd.f32 0.0, %v1243
      %v1245 = vpop.f32.mrb[0].mxu0
      %1246 = vmatprep.mubr.bf16.mxu0 0
      %1247 = vmatmul.mubr.bf16.gmra.mrb[0].mxu0 %v1153
      %v1248 = vpop.f32.mrb[0].mxu0
      %v1249 = vadd.f32 0.0, %v1248
      %v1250 = vpop.f32.mrb[0].mxu0
      %v1251 = vpop.f32.mrb[0].mxu0
      %v1252 = vadd.f32 0.0, %v1251
      %v1253 = vpop.f32.mrb[0].mxu0
      %1254 = vmatprep.mubr.bf16.mxu0 0
      %1255 = vmatmul.mubr.bf16.gmra.mrb[0].mxu0 %v1156
      %v1256 = vpop.f32.mrb[0].mxu0
      %v1257 = vadd.f32 0.0, %v1256
      %v1258 = vpop.f32.mrb[0].mxu0
      %v1259 = vpop.f32.mrb[0].mxu0
      %v1260 = vadd.f32 0.0, %v1259
      %v1261 = vpop.f32.mrb[0].mxu0
      %1262 = vmatprep.mubr.bf16.mxu0 0
      %1263 = vmatmul.mubr.bf16.gmra.mrb[0].mxu0 %v1159
      %v1264 = vpop.f32.mrb[0].mxu0
      %v1265 = vadd.f32 0.0, %v1264
      %v1266 = vpop.f32.mrb[0].mxu0
      %v1267 = vpop.f32.mrb[0].mxu0
      %v1268 = vadd.f32 0.0, %v1267
      %v1269 = vpop.f32.mrb[0].mxu0
      %1270 = vmatprep.mubr.bf16.mxu0 0
      %1271 = vmatmul.mubr.bf16.gmra.mrb[0].mxu0 %v1162
      %v1272 = vpop.f32.mrb[0].mxu0
      %v1273 = vadd.f32 0.0, %v1272
      %v1274 = vpop.f32.mrb[0].mxu0
      %v1275 = vpop.f32.mrb[0].mxu0
      %v1276 = vadd.f32 0.0, %v1275
      %v1277 = vpop.f32.mrb[0].mxu0
      %1278 = vmatprep.mubr.bf16.mxu0 0
      %1279 = vmatmul.mubr.bf16.gmra.mrb[0].mxu0 %v1165
      %v1280 = vpop.f32.mrb[0].mxu0
      %v1281 = vadd.f32 0.0, %v1280
      %v1282 = vpop.f32.mrb[0].mxu0
      %v1283 = vpop.f32.mrb[0].mxu0
      %v1284 = vadd.f32 0.0, %v1283
      %v1285 = vpop.f32.mrb[0].mxu0
      %1286 = vmatprep.mubr.bf16.mxu0 0
      %1287 = vmatmul.mubr.bf16.gmra.mrb[0].mxu0 %v1168
      %v1288 = vpop.f32.mrb[0].mxu0
      %v1289 = vadd.f32 0.0, %v1288
      %v1290 = vpop.f32.mrb[0].mxu0
      %v1291 = vpop.f32.mrb[0].mxu0
      %v1292 = vadd.f32 0.0, %v1291
      %v1293 = vpop.f32.mrb[0].mxu0
      %1294 = vmatprep.mubr.bf16.mxu0 0
      %1295 = vmatmul.mubr.bf16.gmra.mrb[0].mxu0 %v1171
      %v1296 = vpop.f32.mrb[0].mxu0
      %v1297 = vadd.f32 0.0, %v1296
      %v1298 = vpop.f32.mrb[0].mxu0
      %v1299 = vpop.f32.mrb[0].mxu0
      %v1300 = vadd.f32 0.0, %v1299
      %v1301 = vpop.f32.mrb[0].mxu0
      %1302 = vmatprep.mubr.bf16.mxu0 0
      %1303 = vmatmul.mubr.bf16.gmra.mrb[0].mxu0 %v1174
      %v1304 = vpop.f32.mrb[0].mxu0
      %v1305 = vadd.f32 0.0, %v1304
      %v1306 = vpop.f32.mrb[0].mxu0
      %v1307 = vpop.f32.mrb[0].mxu0
      %v1308 = vadd.f32 0.0, %v1307
      %v1309 = vpop.f32.mrb[0].mxu0
      %1310 = vmatprep.mubr.bf16.mxu0 0
      %1311 = vmatmul.mubr.bf16.gmra.mrb[0].mxu0 %v1177
      %v1312 = vpop.f32.mrb[0].mxu0
      %v1313 = vadd.f32 0.0, %v1312
      %v1314 = vpop.f32.mrb[0].mxu0
      %v1315 = vpop.f32.mrb[0].mxu0
      %v1316 = vadd.f32 0.0, %v1315
      %v1317 = vpop.f32.mrb[0].mxu0
      %1318 = vmatprep.mubr.bf16.mxu0 0
      %1319 = vmatmul.mubr.bf16.gmra.mrb[0].mxu0 %v1180
      %v1320 = vpop.f32.mrb[0].mxu0
      %v1321 = vadd.f32 0.0, %v1320
      %v1322 = vpop.f32.mrb[0].mxu0
      %v1323 = vpop.f32.mrb[0].mxu0
      %v1324 = vadd.f32 0.0, %v1323
      %v1325 = vpop.f32.mrb[0].mxu0
      %1326 = vmatprep.mubr.bf16.mxu0 0
      %1327 = vmatmul.mubr.bf16.gmra.mrb[0].mxu0 %v1183
      %v1328 = vpop.f32.mrb[0].mxu0
      %v1329 = vadd.f32 0.0, %v1328
      %v1330 = vpop.f32.mrb[0].mxu0
      %v1331 = vpop.f32.mrb[0].mxu0
      %v1332 = vadd.f32 0.0, %v1331
      %v1333 = vpop.f32.mrb[0].mxu0
      %1334 = vmatprep.mubr.bf16.mxu0 0
      %1335 = vmatmul.mubr.bf16.gmra.mrb[0].mxu0 %v1186
      %v1336 = vpop.f32.mrb[0].mxu0
      %v1337 = vadd.f32 0.0, %v1336
      %v1338 = vpop.f32.mrb[0].mxu0
      %v1339 = vpop.f32.mrb[0].mxu0
      %v1340 = vadd.f32 0.0, %v1339
      %v1341 = vpop.f32.mrb[0].mxu0
      %1342 = vmatprep.mubr.bf16.mxu0 0
      %1343 = vmatmul.mubr.bf16.gmra.mrb[0].mxu0 %v1189
      %v1344 = vpop.f32.mrb[0].mxu0
      %v1345 = vadd.f32 0.0, %v1344
      %v1346 = vpop.f32.mrb[0].mxu0
      %v1347 = vpop.f32.mrb[0].mxu0
      %v1348 = vadd.f32 0.0, %v1347
      %v1349 = vpop.f32.mrb[0].mxu0
      %1350 = vmatprep.mubr.bf16.mxu0 0
      %1351 = vmatmul.mubr.bf16.gmra.mrb[0].mxu0 %v1192
      %v1352 = vpop.f32.mrb[0].mxu0
      %v1353 = vadd.f32 0.0, %v1352
      %v1354 = vpop.f32.mrb[0].mxu0
      %v1355 = vpop.f32.mrb[0].mxu0
      %v1356 = vadd.f32 0.0, %v1355
      %v1357 = vpop.f32.mrb[0].mxu0
      %1358 = vmatprep.mubr.bf16.mxu0 0
      %1359 = vmatmul.mubr.bf16.gmra.mrb[0].mxu0 %v1195
      %v1360 = vpop.f32.mrb[0].mxu0
      %v1361 = vadd.f32 0.0, %v1360
      %v1362 = vpop.f32.mrb[0].mxu0
      %v1363 = vpop.f32.mrb[0].mxu0
      %v1364 = vadd.f32 0.0, %v1363
      %v1365 = vpop.f32.mrb[0].mxu0
      %1366 = vmatprep.mubr.bf16.mxu0 0
      %1367 = vmatmul.mubr.bf16.gmra.mrb[0].mxu0 %v1198
      %v1368 = vpop.f32.mrb[0].mxu0
      %v1369 = vadd.f32 0.0, %v1368
      %v1370 = vpop.f32.mrb[0].mxu0
      %v1371 = vpop.f32.mrb[0].mxu0
      %v1372 = vadd.f32 0.0, %v1371
      %v1373 = vpop.f32.mrb[0].mxu0
      %1374 = vmatprep.mubr.bf16.mxu0 0
      %1375 = vmatmul.mubr.bf16.gmra.mrb[0].mxu0 %v1201
      %v1376 = vpop.f32.mrb[0].mxu0
      %v1377 = vadd.f32 0.0, %v1376
      %v1378 = vpop.f32.mrb[0].mxu0
      %v1379 = vpop.f32.mrb[0].mxu0
      %v1380 = vadd.f32 0.0, %v1379
      %v1381 = vpop.f32.mrb[0].mxu0
      %1382 = vdwg.mxu0
      %v1383 = vadd.f32 %v915, %v1241
      %v1384 = vadd.f32 %v918, %v1244
      %v1385 = vadd.f32 %v923, %v1249
      %v1386 = vadd.f32 %v926, %v1252
      %v1387 = vadd.f32 %v931, %v1257
      %v1388 = vadd.f32 %v934, %v1260
      %v1389 = vadd.f32 %v939, %v1265
      %v1390 = vadd.f32 %v942, %v1268
      %v1391 = vadd.f32 %v947, %v1273
      %v1392 = vadd.f32 %v950, %v1276
      %v1393 = vadd.f32 %v955, %v1281
      %v1394 = vadd.f32 %v958, %v1284
      %v1395 = vadd.f32 %v963, %v1289
      %v1396 = vadd.f32 %v966, %v1292
      %v1397 = vadd.f32 %v971, %v1297
      %v1398 = vadd.f32 %v974, %v1300
      %v1399 = vadd.f32 %v979, %v1305
      %v1400 = vadd.f32 %v982, %v1308
      %v1401 = vadd.f32 %v987, %v1313
      %v1402 = vadd.f32 %v990, %v1316
      %v1403 = vadd.f32 %v995, %v1321
      %v1404 = vadd.f32 %v998, %v1324
      %v1405 = vadd.f32 %v1003, %v1329
      %v1406 = vadd.f32 %v1006, %v1332
      %v1407 = vadd.f32 %v1011, %v1337
      %v1408 = vadd.f32 %v1014, %v1340
      %v1409 = vadd.f32 %v1019, %v1345
      %v1410 = vadd.f32 %v1022, %v1348
      %v1411 = vadd.f32 %v1027, %v1353
      %v1412 = vadd.f32 %v1030, %v1356
      %v1413 = vadd.f32 %v1035, %v1361
      %v1414 = vadd.f32 %v1038, %v1364
      %v1415 = vadd.f32 %v1043, %v1369
      %v1416 = vadd.f32 %v1046, %v1372
      %v1417 = vadd.f32 %v1051, %v1377
      %v1418 = vadd.f32 %v1054, %v1380
      %v1419 = vld [vmem:[%s246 + $0x10] sm:$0xe]
      %v1420 = vld [vmem:[%s246 + $0x14] sm:$0xf]
      %v1421 = vld [vmem:[%s246 + $0x18] sm:$0xf]
      %v1422 = vld [vmem:[%s246 + $0x1c] sm:$0xf]
      %v1423 = vld [vmem:[%s246 + $0x20] sm:$0xf]
      %v1424 = vld [vmem:[%s246 + $0x24] sm:$0xf]
      %v1425 = vld [vmem:[%s246 + $0x28] sm:$0xf]
      %v1426 = vld [vmem:[%s246 + $0x2c] sm:$0xf]
      %v1427 = vld [vmem:[%s246 + $0x30] sm:$0xf]
      %v1428 = vld [vmem:[%s246 + $0x34] sm:$0xf]
      %v1429 = vld [vmem:[%s246 + $0x38] sm:$0xf]
      %v1430 = vld [vmem:[%s246 + $0x3c] sm:$0xf]
      %v1431 = vld [vmem:[%s246 + $0x40] sm:$0xf]
      %v1432 = vld [vmem:[%s246 + $0x44] sm:$0xf]
      %v1433 = vld [vmem:[%s246 + $0x48] sm:$0xf]
      %v1434 = vld [vmem:[%s246 + $0x4c] sm:$0xf]
      %v1435 = vld [vmem:[%s246 + $0x50] sm:$0xf]
      %v1436 = vld [vmem:[%s246 + $0x54] sm:$0xf]
      %v1437 = vld [vmem:[%s246 + $0x58] sm:$0xf]
      %v1438 = vld [vmem:[%s246 + $0x5c] sm:$0xf]
      %v1439 = vld [vmem:[%s246 + $0x60] sm:$0xf]
      %v1440 = vld [vmem:[%s246 + $0x64] sm:$0xf]
      %v1441 = vld [vmem:[%s246 + $0x68] sm:$0xf]
      %v1442 = vld [vmem:[%s246 + $0x6c] sm:$0xf]
      %v1443 = vld [vmem:[%s246 + $0x70] sm:$0xf]
      %v1444 = vld [vmem:[%s246 + $0x74] sm:$0xf]
      %v1445 = vld [vmem:[%s246 + $0x78] sm:$0xf]
      %v1446 = vld [vmem:[%s246 + $0x7c] sm:$0xf]
      %v1447 = vld [vmem:[%s246 + $0x80] sm:$0xf]
      %v1448 = vld [vmem:[%s246 + $0x84] sm:$0xf]
      %v1449 = vld [vmem:[%s246 + $0x88] sm:$0xf]
      %v1450 = vld [vmem:[%s246 + $0x8c] sm:$0xf]
      %v1451 = vld [vmem:[%s246 + $0x90] sm:$0xf]
      %v1452 = vld [vmem:[%s246 + $0x94] sm:$0xf]
      %v1453 = vld [vmem:[%s246 + $0x98] sm:$0xf]
      %v1454 = vld [vmem:[%s246 + $0x9c] sm:$0xf]
      %v1455 = vld [vmem:[%s246 + $0xa0] sm:$0x3]
      %s1456 = scalar_lea.vmem %s1, 12
      %v1457 = vld [vmem:[%s1456] sm:$0xf]
      %v1495 = vunpack.c.l.b16 %v1419
      %v1496 = vunpack.c.l.b16 %v1420
      %v1497 = vunpack.c.l.b16 %v1421
      %v1498 = vunpack.c.l.b16 %v1422
      %v1499 = vunpack.c.l.b16 %v1423
      %v1500 = vunpack.c.l.b16 %v1424
      %v1501 = vunpack.c.l.b16 %v1425
      %v1502 = vunpack.c.l.b16 %v1426
      %v1503 = vunpack.c.l.b16 %v1427
      %v1504 = vunpack.c.l.b16 %v1428
      %v1505 = vunpack.c.l.b16 %v1429
      %v1506 = vunpack.c.l.b16 %v1430
      %v1507 = vunpack.c.l.b16 %v1431
      %v1508 = vunpack.c.l.b16 %v1432
      %v1509 = vunpack.c.l.b16 %v1433
      %v1510 = vunpack.c.l.b16 %v1434
      %v1511 = vunpack.c.l.b16 %v1435
      %v1512 = vunpack.c.l.b16 %v1436
      %v1513 = vunpack.c.l.b16 %v1437
      %v1514 = vunpack.c.l.b16 %v1438
      %v1515 = vunpack.c.l.b16 %v1439
      %v1516 = vunpack.c.l.b16 %v1440
      %v1517 = vunpack.c.l.b16 %v1441
      %v1518 = vunpack.c.l.b16 %v1442
      %v1519 = vunpack.c.l.b16 %v1443
      %v1520 = vunpack.c.l.b16 %v1444
      %v1521 = vunpack.c.l.b16 %v1445
      %v1522 = vunpack.c.l.b16 %v1446
      %v1523 = vunpack.c.l.b16 %v1447
      %v1524 = vunpack.c.l.b16 %v1448
      %v1525 = vunpack.c.l.b16 %v1449
      %v1526 = vunpack.c.l.b16 %v1450
      %v1527 = vunpack.c.l.b16 %v1451
      %v1528 = vunpack.c.l.b16 %v1452
      %v1529 = vunpack.c.l.b16 %v1453
      %v1530 = vunpack.c.l.b16 %v1454
      %v1531 = vunpack.c.l.b16 %v1455
      %v1532 = vpack.c.b16 %v1496, %v1495
      %v1533 = vpack.c.b16 %v1498, %v1497
      %v1534 = vpack.c.b16 %v1500, %v1499
      %v1535 = vpack.c.b16 %v1502, %v1501
      %v1536 = vpack.c.b16 %v1504, %v1503
      %v1537 = vpack.c.b16 %v1506, %v1505
      %v1538 = vpack.c.b16 %v1508, %v1507
      %v1539 = vpack.c.b16 %v1510, %v1509
      %v1540 = vpack.c.b16 %v1512, %v1511
      %v1541 = vpack.c.b16 %v1514, %v1513
      %v1542 = vpack.c.b16 %v1516, %v1515
      %v1543 = vpack.c.b16 %v1518, %v1517
      %v1544 = vpack.c.b16 %v1520, %v1519
      %v1545 = vpack.c.b16 %v1522, %v1521
      %v1546 = vpack.c.b16 %v1524, %v1523
      %v1547 = vpack.c.b16 %v1526, %v1525
      %v1548 = vpack.c.b16 %v1528, %v1527
      %v1549 = vpack.c.b16 %v1530, %v1529
      %v1550 = vpack.c.b16 %v1531, %v1531
      %v1552 = vshrl.u32 %v1532, 16
      %v1554 = vrot.slane %v1552, 1
      %v1555 = vshll.u32 %v1532, 16
      %v1557 = vrot.slane %v1555, 2
      %v1558 = vor.u32 %v1554, %v1557
      %v1560 = vshrl.u32 %v1533, 16
      %v1562 = vrot.slane %v1560, 1
      %v1563 = vshll.u32 %v1533, 16
      %v1565 = vrot.slane %v1563, 2
      %v1566 = vor.u32 %v1562, %v1565
      %v1567 = vsel %vm1063, %v1558, %v1566
      %v1569 = vshrl.u32 %v1534, 16
      %v1571 = vrot.slane %v1569, 1
      %v1572 = vshll.u32 %v1534, 16
      %v1574 = vrot.slane %v1572, 2
      %v1575 = vor.u32 %v1571, %v1574
      %v1576 = vsel %vm1063, %v1566, %v1575
      %v1578 = vshrl.u32 %v1535, 16
      %v1580 = vrot.slane %v1578, 1
      %v1581 = vshll.u32 %v1535, 16
      %v1583 = vrot.slane %v1581, 2
      %v1584 = vor.u32 %v1580, %v1583
      %v1585 = vsel %vm1063, %v1575, %v1584
      %v1587 = vshrl.u32 %v1536, 16
      %v1589 = vrot.slane %v1587, 1
      %v1590 = vshll.u32 %v1536, 16
      %v1592 = vrot.slane %v1590, 2
      %v1593 = vor.u32 %v1589, %v1592
      %v1594 = vsel %vm1063, %v1584, %v1593
      %v1596 = vshrl.u32 %v1537, 16
      %v1598 = vrot.slane %v1596, 1
      %v1599 = vshll.u32 %v1537, 16
      %v1601 = vrot.slane %v1599, 2
      %v1602 = vor.u32 %v1598, %v1601
      %v1603 = vsel %vm1063, %v1593, %v1602
      %v1605 = vshrl.u32 %v1538, 16
      %v1607 = vrot.slane %v1605, 1
      %v1608 = vshll.u32 %v1538, 16
      %v1610 = vrot.slane %v1608, 2
      %v1611 = vor.u32 %v1607, %v1610
      %v1612 = vsel %vm1063, %v1602, %v1611
      %v1614 = vshrl.u32 %v1539, 16
      %v1616 = vrot.slane %v1614, 1
      %v1617 = vshll.u32 %v1539, 16
      %v1619 = vrot.slane %v1617, 2
      %v1620 = vor.u32 %v1616, %v1619
      %v1621 = vsel %vm1063, %v1611, %v1620
      %v1623 = vshrl.u32 %v1540, 16
      %v1625 = vrot.slane %v1623, 1
      %v1626 = vshll.u32 %v1540, 16
      %v1628 = vrot.slane %v1626, 2
      %v1629 = vor.u32 %v1625, %v1628
      %v1630 = vsel %vm1063, %v1620, %v1629
      %v1632 = vshrl.u32 %v1541, 16
      %v1634 = vrot.slane %v1632, 1
      %v1635 = vshll.u32 %v1541, 16
      %v1637 = vrot.slane %v1635, 2
      %v1638 = vor.u32 %v1634, %v1637
      %v1639 = vsel %vm1063, %v1629, %v1638
      %v1641 = vshrl.u32 %v1542, 16
      %v1643 = vrot.slane %v1641, 1
      %v1644 = vshll.u32 %v1542, 16
      %v1646 = vrot.slane %v1644, 2
      %v1647 = vor.u32 %v1643, %v1646
      %v1648 = vsel %vm1063, %v1638, %v1647
      %v1650 = vshrl.u32 %v1543, 16
      %v1652 = vrot.slane %v1650, 1
      %v1653 = vshll.u32 %v1543, 16
      %v1655 = vrot.slane %v1653, 2
      %v1656 = vor.u32 %v1652, %v1655
      %v1657 = vsel %vm1063, %v1647, %v1656
      %v1659 = vshrl.u32 %v1544, 16
      %v1661 = vrot.slane %v1659, 1
      %v1662 = vshll.u32 %v1544, 16
      %v1664 = vrot.slane %v1662, 2
      %v1665 = vor.u32 %v1661, %v1664
      %v1666 = vsel %vm1063, %v1656, %v1665
      %v1668 = vshrl.u32 %v1545, 16
      %v1670 = vrot.slane %v1668, 1
      %v1671 = vshll.u32 %v1545, 16
      %v1673 = vrot.slane %v1671, 2
      %v1674 = vor.u32 %v1670, %v1673
      %v1675 = vsel %vm1063, %v1665, %v1674
      %v1677 = vshrl.u32 %v1546, 16
      %v1679 = vrot.slane %v1677, 1
      %v1680 = vshll.u32 %v1546, 16
      %v1682 = vrot.slane %v1680, 2
      %v1683 = vor.u32 %v1679, %v1682
      %v1684 = vsel %vm1063, %v1674, %v1683
      %v1686 = vshrl.u32 %v1547, 16
      %v1688 = vrot.slane %v1686, 1
      %v1689 = vshll.u32 %v1547, 16
      %v1691 = vrot.slane %v1689, 2
      %v1692 = vor.u32 %v1688, %v1691
      %v1693 = vsel %vm1063, %v1683, %v1692
      %v1695 = vshrl.u32 %v1548, 16
      %v1697 = vrot.slane %v1695, 1
      %v1698 = vshll.u32 %v1548, 16
      %v1700 = vrot.slane %v1698, 2
      %v1701 = vor.u32 %v1697, %v1700
      %v1702 = vsel %vm1063, %v1692, %v1701
      %v1704 = vshrl.u32 %v1549, 16
      %v1706 = vrot.slane %v1704, 1
      %v1707 = vshll.u32 %v1549, 16
      %v1709 = vrot.slane %v1707, 2
      %v1710 = vor.u32 %v1706, %v1709
      %v1711 = vsel %vm1063, %v1701, %v1710
      %v1713 = vshrl.u32 %v1550, 16
      %v1715 = vrot.slane %v1713, 1
      %v1716 = vshll.u32 %v1550, 16
      %v1718 = vrot.slane %v1716, 2
      %v1719 = vor.u32 %v1715, %v1718
      %v1720 = vsel %vm1063, %v1710, %v1719
      %v1722 = vsel %vm435, %v1567, 0
      %v1725 = vsel %vm435, %v1576, 0
      %v1728 = vsel %vm435, %v1585, 0
      %v1731 = vsel %vm435, %v1594, 0
      %v1734 = vsel %vm435, %v1603, 0
      %v1737 = vsel %vm435, %v1612, 0
      %v1740 = vsel %vm435, %v1621, 0
      %v1743 = vsel %vm435, %v1630, 0
      %v1746 = vsel %vm435, %v1639, 0
      %v1749 = vsel %vm435, %v1648, 0
      %v1752 = vsel %vm435, %v1657, 0
      %v1755 = vsel %vm435, %v1666, 0
      %v1758 = vsel %vm435, %v1675, 0
      %v1761 = vsel %vm435, %v1684, 0
      %v1764 = vsel %vm435, %v1693, 0
      %v1767 = vsel %vm435, %v1702, 0
      %v1770 = vsel %vm435, %v1711, 0
      %v1773 = vsel %vm435, %v1720, 0
      %v1776 = vsel %vm490, %v1457, 0
      %1778 = vmatprep.subr.bf16.mxu0 0
      %1779 = vmatpush1.bf16.msra.mxu0 %v1776
      %1780 = vmatprep.subr.bf16.mxu0 0
      %1781 = vmatpush1.bf16.msra.mxu0 0
      %1782 = vmatprep.subr.bf16.mxu0 0
      %1783 = vmatpush1.bf16.msra.mxu0 0
      %1784 = vmatprep.subr.bf16.mxu0 0
      %1785 = vmatpush1.bf16.msra.mxu0 0
      %1786 = vmatprep.subr.bf16.mxu0 0
      %1787 = vmatpush1.bf16.msra.mxu0 0
      %1788 = vmatprep.subr.bf16.mxu0 0
      %1789 = vmatpush1.bf16.msra.mxu0 0
      %1790 = vmatprep.subr.bf16.mxu0 0
      %1791 = vmatpush1.bf16.msra.mxu0 0
      %1792 = vmatprep.subr.bf16.mxu0 0
      %1793 = vmatpush1.bf16.msra.mxu0 0
      %1794 = vmatprep.subr.bf16.mxu0 0
      %1795 = vmatpush1.bf16.msra.mxu0 0
      %1796 = vmatprep.subr.bf16.mxu0 0
      %1797 = vmatpush1.bf16.msra.mxu0 0
      %1798 = vmatprep.subr.bf16.mxu0 0
      %1799 = vmatpush1.bf16.msra.mxu0 0
      %1800 = vmatprep.subr.bf16.mxu0 0
      %1801 = vmatpush1.bf16.msra.mxu0 0
      %1802 = vmatprep.subr.bf16.mxu0 0
      %1803 = vmatpush1.bf16.msra.mxu0 0
      %1804 = vmatprep.subr.bf16.mxu0 0
      %1805 = vmatpush1.bf16.msra.mxu0 0
      %1806 = vmatprep.subr.bf16.mxu0 0
      %1807 = vmatpush1.bf16.msra.mxu0 0
      %1808 = vmatprep.subr.bf16.mxu0 0
      %1809 = vmatpush1.bf16.msra.mxu0 0
      %1810 = vmatprep.mubr.bf16.mxu0 0
      %1811 = vmatmul.mubr.bf16.gmra.mrb[0].mxu0 %v1722
      %v1812 = vpop.f32.mrb[0].mxu0
      %v1813 = vadd.f32 0.0, %v1812
      %v1814 = vpop.f32.mrb[0].mxu0
      %v1815 = vpop.f32.mrb[0].mxu0
      %v1816 = vadd.f32 0.0, %v1815
      %v1817 = vpop.f32.mrb[0].mxu0
      %1818 = vmatprep.mubr.bf16.mxu0 0
      %1819 = vmatmul.mubr.bf16.gmra.mrb[0].mxu0 %v1725
      %v1820 = vpop.f32.mrb[0].mxu0
      %v1821 = vadd.f32 0.0, %v1820
      %v1822 = vpop.f32.mrb[0].mxu0
      %v1823 = vpop.f32.mrb[0].mxu0
      %v1824 = vadd.f32 0.0, %v1823
      %v1825 = vpop.f32.mrb[0].mxu0
      %1826 = vmatprep.mubr.bf16.mxu0 0
      %1827 = vmatmul.mubr.bf16.gmra.mrb[0].mxu0 %v1728
      %v1828 = vpop.f32.mrb[0].mxu0
      %v1829 = vadd.f32 0.0, %v1828
      %v1830 = vpop.f32.mrb[0].mxu0
      %v1831 = vpop.f32.mrb[0].mxu0
      %v1832 = vadd.f32 0.0, %v1831
      %v1833 = vpop.f32.mrb[0].mxu0
      %1834 = vmatprep.mubr.bf16.mxu0 0
      %1835 = vmatmul.mubr.bf16.gmra.mrb[0].mxu0 %v1731
      %v1836 = vpop.f32.mrb[0].mxu0
      %v1837 = vadd.f32 0.0, %v1836
      %v1838 = vpop.f32.mrb[0].mxu0
      %v1839 = vpop.f32.mrb[0].mxu0
      %v1840 = vadd.f32 0.0, %v1839
      %v1841 = vpop.f32.mrb[0].mxu0
      %1842 = vmatprep.mubr.bf16.mxu0 0
      %1843 = vmatmul.mubr.bf16.gmra.mrb[0].mxu0 %v1734
      %v1844 = vpop.f32.mrb[0].mxu0
      %v1845 = vadd.f32 0.0, %v1844
      %v1846 = vpop.f32.mrb[0].mxu0
      %v1847 = vpop.f32.mrb[0].mxu0
      %v1848 = vadd.f32 0.0, %v1847
      %v1849 = vpop.f32.mrb[0].mxu0
      %1850 = vmatprep.mubr.bf16.mxu0 0
      %1851 = vmatmul.mubr.bf16.gmra.mrb[0].mxu0 %v1737
      %v1852 = vpop.f32.mrb[0].mxu0
      %v1853 = vadd.f32 0.0, %v1852
      %v1854 = vpop.f32.mrb[0].mxu0
      %v1855 = vpop.f32.mrb[0].mxu0
      %v1856 = vadd.f32 0.0, %v1855
      %v1857 = vpop.f32.mrb[0].mxu0
      %1858 = vmatprep.mubr.bf16.mxu0 0
      %1859 = vmatmul.mubr.bf16.gmra.mrb[0].mxu0 %v1740
      %v1860 = vpop.f32.mrb[0].mxu0
      %v1861 = vadd.f32 0.0, %v1860
      %v1862 = vpop.f32.mrb[0].mxu0
      %v1863 = vpop.f32.mrb[0].mxu0
      %v1864 = vadd.f32 0.0, %v1863
      %v1865 = vpop.f32.mrb[0].mxu0
      %1866 = vmatprep.mubr.bf16.mxu0 0
      %1867 = vmatmul.mubr.bf16.gmra.mrb[0].mxu0 %v1743
      %v1868 = vpop.f32.mrb[0].mxu0
      %v1869 = vadd.f32 0.0, %v1868
      %v1870 = vpop.f32.mrb[0].mxu0
      %v1871 = vpop.f32.mrb[0].mxu0
      %v1872 = vadd.f32 0.0, %v1871
      %v1873 = vpop.f32.mrb[0].mxu0
      %1874 = vmatprep.mubr.bf16.mxu0 0
      %1875 = vmatmul.mubr.bf16.gmra.mrb[0].mxu0 %v1746
      %v1876 = vpop.f32.mrb[0].mxu0
      %v1877 = vadd.f32 0.0, %v1876
      %v1878 = vpop.f32.mrb[0].mxu0
      %v1879 = vpop.f32.mrb[0].mxu0
      %v1880 = vadd.f32 0.0, %v1879
      %v1881 = vpop.f32.mrb[0].mxu0
      %1882 = vmatprep.mubr.bf16.mxu0 0
      %1883 = vmatmul.mubr.bf16.gmra.mrb[0].mxu0 %v1749
      %v1884 = vpop.f32.mrb[0].mxu0
      %v1885 = vadd.f32 0.0, %v1884
      %v1886 = vpop.f32.mrb[0].mxu0
      %v1887 = vpop.f32.mrb[0].mxu0
      %v1888 = vadd.f32 0.0, %v1887
      %v1889 = vpop.f32.mrb[0].mxu0
      %1890 = vmatprep.mubr.bf16.mxu0 0
      %1891 = vmatmul.mubr.bf16.gmra.mrb[0].mxu0 %v1752
      %v1892 = vpop.f32.mrb[0].mxu0
      %v1893 = vadd.f32 0.0, %v1892
      %v1894 = vpop.f32.mrb[0].mxu0
      %v1895 = vpop.f32.mrb[0].mxu0
      %v1896 = vadd.f32 0.0, %v1895
      %v1897 = vpop.f32.mrb[0].mxu0
      %1898 = vmatprep.mubr.bf16.mxu0 0
      %1899 = vmatmul.mubr.bf16.gmra.mrb[0].mxu0 %v1755
      %v1900 = vpop.f32.mrb[0].mxu0
      %v1901 = vadd.f32 0.0, %v1900
      %v1902 = vpop.f32.mrb[0].mxu0
      %v1903 = vpop.f32.mrb[0].mxu0
      %v1904 = vadd.f32 0.0, %v1903
      %v1905 = vpop.f32.mrb[0].mxu0
      %1906 = vmatprep.mubr.bf16.mxu0 0
      %1907 = vmatmul.mubr.bf16.gmra.mrb[0].mxu0 %v1758
      %v1908 = vpop.f32.mrb[0].mxu0
      %v1909 = vadd.f32 0.0, %v1908
      %v1910 = vpop.f32.mrb[0].mxu0
      %v1911 = vpop.f32.mrb[0].mxu0
      %v1912 = vadd.f32 0.0, %v1911
      %v1913 = vpop.f32.mrb[0].mxu0
      %1914 = vmatprep.mubr.bf16.mxu0 0
      %1915 = vmatmul.mubr.bf16.gmra.mrb[0].mxu0 %v1761
      %v1916 = vpop.f32.mrb[0].mxu0
      %v1917 = vadd.f32 0.0, %v1916
      %v1918 = vpop.f32.mrb[0].mxu0
      %v1919 = vpop.f32.mrb[0].mxu0
      %v1920 = vadd.f32 0.0, %v1919
      %v1921 = vpop.f32.mrb[0].mxu0
      %1922 = vmatprep.mubr.bf16.mxu0 0
      %1923 = vmatmul.mubr.bf16.gmra.mrb[0].mxu0 %v1764
      %v1924 = vpop.f32.mrb[0].mxu0
      %v1925 = vadd.f32 0.0, %v1924
      %v1926 = vpop.f32.mrb[0].mxu0
      %v1927 = vpop.f32.mrb[0].mxu0
      %v1928 = vadd.f32 0.0, %v1927
      %v1929 = vpop.f32.mrb[0].mxu0
      %1930 = vmatprep.mubr.bf16.mxu0 0
      %1931 = vmatmul.mubr.bf16.gmra.mrb[0].mxu0 %v1767
      %v1932 = vpop.f32.mrb[0].mxu0
      %v1933 = vadd.f32 0.0, %v1932
      %v1934 = vpop.f32.mrb[0].mxu0
      %v1935 = vpop.f32.mrb[0].mxu0
      %v1936 = vadd.f32 0.0, %v1935
      %v1937 = vpop.f32.mrb[0].mxu0
      %1938 = vmatprep.mubr.bf16.mxu0 0
      %1939 = vmatmul.mubr.bf16.gmra.mrb[0].mxu0 %v1770
      %v1940 = vpop.f32.mrb[0].mxu0
      %v1941 = vadd.f32 0.0, %v1940
      %v1942 = vpop.f32.mrb[0].mxu0
      %v1943 = vpop.f32.mrb[0].mxu0
      %v1944 = vadd.f32 0.0, %v1943
      %v1945 = vpop.f32.mrb[0].mxu0
      %1946 = vmatprep.mubr.bf16.mxu0 0
      %1947 = vmatmul.mubr.bf16.gmra.mrb[0].mxu0 %v1773
      %v1948 = vpop.f32.mrb[0].mxu0
      %v1949 = vadd.f32 0.0, %v1948
      %v1950 = vpop.f32.mrb[0].mxu0
      %v1951 = vpop.f32.mrb[0].mxu0
      %v1952 = vadd.f32 0.0, %v1951
      %v1953 = vpop.f32.mrb[0].mxu0
      %1954 = vdwg.mxu0
      %v1955 = vadd.f32 %v1383, %v1813
      %v1956 = vadd.f32 %v1384, %v1816
      %v1957 = vadd.f32 %v1385, %v1821
      %v1958 = vadd.f32 %v1386, %v1824
      %v1959 = vadd.f32 %v1387, %v1829
      %v1960 = vadd.f32 %v1388, %v1832
      %v1961 = vadd.f32 %v1389, %v1837
      %v1962 = vadd.f32 %v1390, %v1840
      %v1963 = vadd.f32 %v1391, %v1845
      %v1964 = vadd.f32 %v1392, %v1848
      %v1965 = vadd.f32 %v1393, %v1853
      %v1966 = vadd.f32 %v1394, %v1856
      %v1967 = vadd.f32 %v1395, %v1861
      %v1968 = vadd.f32 %v1396, %v1864
      %v1969 = vadd.f32 %v1397, %v1869
      %v1970 = vadd.f32 %v1398, %v1872
      %v1971 = vadd.f32 %v1399, %v1877
      %v1972 = vadd.f32 %v1400, %v1880
      %v1973 = vadd.f32 %v1401, %v1885
      %v1974 = vadd.f32 %v1402, %v1888
      %v1975 = vadd.f32 %v1403, %v1893
      %v1976 = vadd.f32 %v1404, %v1896
      %v1977 = vadd.f32 %v1405, %v1901
      %v1978 = vadd.f32 %v1406, %v1904
      %v1979 = vadd.f32 %v1407, %v1909
      %v1980 = vadd.f32 %v1408, %v1912
      %v1981 = vadd.f32 %v1409, %v1917
      %v1982 = vadd.f32 %v1410, %v1920
      %v1983 = vadd.f32 %v1411, %v1925
      %v1984 = vadd.f32 %v1412, %v1928
      %v1985 = vadd.f32 %v1413, %v1933
      %v1986 = vadd.f32 %v1414, %v1936
      %v1987 = vadd.f32 %v1415, %v1941
      %v1988 = vadd.f32 %v1416, %v1944
      %v1989 = vadd.f32 %v1417, %v1949
      %v1990 = vadd.f32 %v1418, %v1952
      %v1991 = vld [vmem:[%s246 + $0x10] sm:$0xc]
      %s1992 = scalar_lea.vmem %s1, 16
      %v1993 = vld [vmem:[%s1992] sm:$0xf]
      %v1995 = vunpack.c.l.b16 %v1991
      %v1996 = vpack.c.b16 %v1496, %v1995
      %vm1997 = vcmask 1045504
      %v1998 = vrot.slane %v1996, 2
      %v1999 = vrot.slane %v1533, 2
      %v2000 = vsel %vm1997, %v1998, %v1999
      %v2001 = vrot.slane %v1534, 2
      %v2002 = vsel %vm1997, %v1999, %v2001
      %v2003 = vrot.slane %v1535, 2
      %v2004 = vsel %vm1997, %v2001, %v2003
      %v2005 = vrot.slane %v1536, 2
      %v2006 = vsel %vm1997, %v2003, %v2005
      %v2007 = vrot.slane %v1537, 2
      %v2008 = vsel %vm1997, %v2005, %v2007
      %v2009 = vrot.slane %v1538, 2
      %v2010 = vsel %vm1997, %v2007, %v2009
      %v2011 = vrot.slane %v1539, 2
      %v2012 = vsel %vm1997, %v2009, %v2011
      %v2013 = vrot.slane %v1540, 2
      %v2014 = vsel %vm1997, %v2011, %v2013
      %v2015 = vrot.slane %v1541, 2
      %v2016 = vsel %vm1997, %v2013, %v2015
      %v2017 = vrot.slane %v1542, 2
      %v2018 = vsel %vm1997, %v2015, %v2017
      %v2019 = vrot.slane %v1543, 2
      %v2020 = vsel %vm1997, %v2017, %v2019
      %v2021 = vrot.slane %v1544, 2
      %v2022 = vsel %vm1997, %v2019, %v2021
      %v2023 = vrot.slane %v1545, 2
      %v2024 = vsel %vm1997, %v2021, %v2023
      %v2025 = vrot.slane %v1546, 2
      %v2026 = vsel %vm1997, %v2023, %v2025
      %v2027 = vrot.slane %v1547, 2
      %v2028 = vsel %vm1997, %v2025, %v2027
      %v2029 = vrot.slane %v1548, 2
      %v2030 = vsel %vm1997, %v2027, %v2029
      %v2031 = vrot.slane %v1549, 2
      %v2032 = vsel %vm1997, %v2029, %v2031
      %v2033 = vrot.slane %v1550, 2
      %v2034 = vsel %vm1997, %v2031, %v2033
      %v2036 = vsel %vm435, %v2000, 0
      %v2039 = vsel %vm435, %v2002, 0
      %v2042 = vsel %vm435, %v2004, 0
      %v2045 = vsel %vm435, %v2006, 0
      %v2048 = vsel %vm435, %v2008, 0
      %v2051 = vsel %vm435, %v2010, 0
      %v2054 = vsel %vm435, %v2012, 0
      %v2057 = vsel %vm435, %v2014, 0
      %v2060 = vsel %vm435, %v2016, 0
      %v2063 = vsel %vm435, %v2018, 0
      %v2066 = vsel %vm435, %v2020, 0
      %v2069 = vsel %vm435, %v2022, 0
      %v2072 = vsel %vm435, %v2024, 0
      %v2075 = vsel %vm435, %v2026, 0
      %v2078 = vsel %vm435, %v2028, 0
      %v2081 = vsel %vm435, %v2030, 0
      %v2084 = vsel %vm435, %v2032, 0
      %v2087 = vsel %vm435, %v2034, 0
      %v2090 = vsel %vm490, %v1993, 0
      %2092 = vmatprep.subr.bf16.mxu0 0
      %2093 = vmatpush1.bf16.msra.mxu0 %v2090
      %2094 = vmatprep.subr.bf16.mxu0 0
      %2095 = vmatpush1.bf16.msra.mxu0 0
      %2096 = vmatprep.subr.bf16.mxu0 0
      %2097 = vmatpush1.bf16.msra.mxu0 0
      %2098 = vmatprep.subr.bf16.mxu0 0
      %2099 = vmatpush1.bf16.msra.mxu0 0
      %2100 = vmatprep.subr.bf16.mxu0 0
      %2101 = vmatpush1.bf16.msra.mxu0 0
      %2102 = vmatprep.subr.bf16.mxu0 0
      %2103 = vmatpush1.bf16.msra.mxu0 0
      %2104 = vmatprep.subr.bf16.mxu0 0
      %2105 = vmatpush1.bf16.msra.mxu0 0
      %2106 = vmatprep.subr.bf16.mxu0 0
      %2107 = vmatpush1.bf16.msra.mxu0 0
      %2108 = vmatprep.subr.bf16.mxu0 0
      %2109 = vmatpush1.bf16.msra.mxu0 0
      %2110 = vmatprep.subr.bf16.mxu0 0
      %2111 = vmatpush1.bf16.msra.mxu0 0
      %2112 = vmatprep.subr.bf16.mxu0 0
      %2113 = vmatpush1.bf16.msra.mxu0 0
      %2114 = vmatprep.subr.bf16.mxu0 0
      %2115 = vmatpush1.bf16.msra.mxu0 0
      %2116 = vmatprep.subr.bf16.mxu0 0
      %2117 = vmatpush1.bf16.msra.mxu0 0
      %2118 = vmatprep.subr.bf16.mxu0 0
      %2119 = vmatpush1.bf16.msra.mxu0 0
      %2120 = vmatprep.subr.bf16.mxu0 0
      %2121 = vmatpush1.bf16.msra.mxu0 0
      %2122 = vmatprep.subr.bf16.mxu0 0
      %2123 = vmatpush1.bf16.msra.mxu0 0
      %2124 = vmatprep.mubr.bf16.mxu0 0
      %2125 = vmatmul.mubr.bf16.gmra.mrb[0].mxu0 %v2036
      %v2126 = vpop.f32.mrb[0].mxu0
      %v2127 = vadd.f32 0.0, %v2126
      %v2128 = vpop.f32.mrb[0].mxu0
      %v2129 = vpop.f32.mrb[0].mxu0
      %v2130 = vadd.f32 0.0, %v2129
      %v2131 = vpop.f32.mrb[0].mxu0
      %2132 = vmatprep.mubr.bf16.mxu0 0
      %2133 = vmatmul.mubr.bf16.gmra.mrb[0].mxu0 %v2039
      %v2134 = vpop.f32.mrb[0].mxu0
      %v2135 = vadd.f32 0.0, %v2134
      %v2136 = vpop.f32.mrb[0].mxu0
      %v2137 = vpop.f32.mrb[0].mxu0
      %v2138 = vadd.f32 0.0, %v2137
      %v2139 = vpop.f32.mrb[0].mxu0
      %2140 = vmatprep.mubr.bf16.mxu0 0
      %2141 = vmatmul.mubr.bf16.gmra.mrb[0].mxu0 %v2042
      %v2142 = vpop.f32.mrb[0].mxu0
      %v2143 = vadd.f32 0.0, %v2142
      %v2144 = vpop.f32.mrb[0].mxu0
      %v2145 = vpop.f32.mrb[0].mxu0
      %v2146 = vadd.f32 0.0, %v2145
      %v2147 = vpop.f32.mrb[0].mxu0
      %2148 = vmatprep.mubr.bf16.mxu0 0
      %2149 = vmatmul.mubr.bf16.gmra.mrb[0].mxu0 %v2045
      %v2150 = vpop.f32.mrb[0].mxu0
      %v2151 = vadd.f32 0.0, %v2150
      %v2152 = vpop.f32.mrb[0].mxu0
      %v2153 = vpop.f32.mrb[0].mxu0
      %v2154 = vadd.f32 0.0, %v2153
      %v2155 = vpop.f32.mrb[0].mxu0
      %2156 = vmatprep.mubr.bf16.mxu0 0
      %2157 = vmatmul.mubr.bf16.gmra.mrb[0].mxu0 %v2048
      %v2158 = vpop.f32.mrb[0].mxu0
      %v2159 = vadd.f32 0.0, %v2158
      %v2160 = vpop.f32.mrb[0].mxu0
      %v2161 = vpop.f32.mrb[0].mxu0
      %v2162 = vadd.f32 0.0, %v2161
      %v2163 = vpop.f32.mrb[0].mxu0
      %2164 = vmatprep.mubr.bf16.mxu0 0
      %2165 = vmatmul.mubr.bf16.gmra.mrb[0].mxu0 %v2051
      %v2166 = vpop.f32.mrb[0].mxu0
      %v2167 = vadd.f32 0.0, %v2166
      %v2168 = vpop.f32.mrb[0].mxu0
      %v2169 = vpop.f32.mrb[0].mxu0
      %v2170 = vadd.f32 0.0, %v2169
      %v2171 = vpop.f32.mrb[0].mxu0
      %2172 = vmatprep.mubr.bf16.mxu0 0
      %2173 = vmatmul.mubr.bf16.gmra.mrb[0].mxu0 %v2054
      %v2174 = vpop.f32.mrb[0].mxu0
      %v2175 = vadd.f32 0.0, %v2174
      %v2176 = vpop.f32.mrb[0].mxu0
      %v2177 = vpop.f32.mrb[0].mxu0
      %v2178 = vadd.f32 0.0, %v2177
      %v2179 = vpop.f32.mrb[0].mxu0
      %2180 = vmatprep.mubr.bf16.mxu0 0
      %2181 = vmatmul.mubr.bf16.gmra.mrb[0].mxu0 %v2057
      %v2182 = vpop.f32.mrb[0].mxu0
      %v2183 = vadd.f32 0.0, %v2182
      %v2184 = vpop.f32.mrb[0].mxu0
      %v2185 = vpop.f32.mrb[0].mxu0
      %v2186 = vadd.f32 0.0, %v2185
      %v2187 = vpop.f32.mrb[0].mxu0
      %2188 = vmatprep.mubr.bf16.mxu0 0
      %2189 = vmatmul.mubr.bf16.gmra.mrb[0].mxu0 %v2060
      %v2190 = vpop.f32.mrb[0].mxu0
      %v2191 = vadd.f32 0.0, %v2190
      %v2192 = vpop.f32.mrb[0].mxu0
      %v2193 = vpop.f32.mrb[0].mxu0
      %v2194 = vadd.f32 0.0, %v2193
      %v2195 = vpop.f32.mrb[0].mxu0
      %2196 = vmatprep.mubr.bf16.mxu0 0
      %2197 = vmatmul.mubr.bf16.gmra.mrb[0].mxu0 %v2063
      %v2198 = vpop.f32.mrb[0].mxu0
      %v2199 = vadd.f32 0.0, %v2198
      %v2200 = vpop.f32.mrb[0].mxu0
      %v2201 = vpop.f32.mrb[0].mxu0
      %v2202 = vadd.f32 0.0, %v2201
      %v2203 = vpop.f32.mrb[0].mxu0
      %2204 = vmatprep.mubr.bf16.mxu0 0
      %2205 = vmatmul.mubr.bf16.gmra.mrb[0].mxu0 %v2066
      %v2206 = vpop.f32.mrb[0].mxu0
      %v2207 = vadd.f32 0.0, %v2206
      %v2208 = vpop.f32.mrb[0].mxu0
      %v2209 = vpop.f32.mrb[0].mxu0
      %v2210 = vadd.f32 0.0, %v2209
      %v2211 = vpop.f32.mrb[0].mxu0
      %2212 = vmatprep.mubr.bf16.mxu0 0
      %2213 = vmatmul.mubr.bf16.gmra.mrb[0].mxu0 %v2069
      %v2214 = vpop.f32.mrb[0].mxu0
      %v2215 = vadd.f32 0.0, %v2214
      %v2216 = vpop.f32.mrb[0].mxu0
      %v2217 = vpop.f32.mrb[0].mxu0
      %v2218 = vadd.f32 0.0, %v2217
      %v2219 = vpop.f32.mrb[0].mxu0
      %2220 = vmatprep.mubr.bf16.mxu0 0
      %2221 = vmatmul.mubr.bf16.gmra.mrb[0].mxu0 %v2072
      %v2222 = vpop.f32.mrb[0].mxu0
      %v2223 = vadd.f32 0.0, %v2222
      %v2224 = vpop.f32.mrb[0].mxu0
      %v2225 = vpop.f32.mrb[0].mxu0
      %v2226 = vadd.f32 0.0, %v2225
      %v2227 = vpop.f32.mrb[0].mxu0
      %2228 = vmatprep.mubr.bf16.mxu0 0
      %2229 = vmatmul.mubr.bf16.gmra.mrb[0].mxu0 %v2075
      %v2230 = vpop.f32.mrb[0].mxu0
      %v2231 = vadd.f32 0.0, %v2230
      %v2232 = vpop.f32.mrb[0].mxu0
      %v2233 = vpop.f32.mrb[0].mxu0
      %v2234 = vadd.f32 0.0, %v2233
      %v2235 = vpop.f32.mrb[0].mxu0
      %2236 = vmatprep.mubr.bf16.mxu0 0
      %2237 = vmatmul.mubr.bf16.gmra.mrb[0].mxu0 %v2078
      %v2238 = vpop.f32.mrb[0].mxu0
      %v2239 = vadd.f32 0.0, %v2238
      %v2240 = vpop.f32.mrb[0].mxu0
      %v2241 = vpop.f32.mrb[0].mxu0
      %v2242 = vadd.f32 0.0, %v2241
      %v2243 = vpop.f32.mrb[0].mxu0
      %2244 = vmatprep.mubr.bf16.mxu0 0
      %2245 = vmatmul.mubr.bf16.gmra.mrb[0].mxu0 %v2081
      %v2246 = vpop.f32.mrb[0].mxu0
      %v2247 = vadd.f32 0.0, %v2246
      %v2248 = vpop.f32.mrb[0].mxu0
      %v2249 = vpop.f32.mrb[0].mxu0
      %v2250 = vadd.f32 0.0, %v2249
      %v2251 = vpop.f32.mrb[0].mxu0
      %2252 = vmatprep.mubr.bf16.mxu0 0
      %2253 = vmatmul.mubr.bf16.gmra.mrb[0].mxu0 %v2084
      %v2254 = vpop.f32.mrb[0].mxu0
      %v2255 = vadd.f32 0.0, %v2254
      %v2256 = vpop.f32.mrb[0].mxu0
      %v2257 = vpop.f32.mrb[0].mxu0
      %v2258 = vadd.f32 0.0, %v2257
      %v2259 = vpop.f32.mrb[0].mxu0
      %2260 = vmatprep.mubr.bf16.mxu0 0
      %2261 = vmatmul.mubr.bf16.gmra.mrb[0].mxu0 %v2087
      %v2262 = vpop.f32.mrb[0].mxu0
      %v2263 = vadd.f32 0.0, %v2262
      %v2264 = vpop.f32.mrb[0].mxu0
      %v2265 = vpop.f32.mrb[0].mxu0
      %v2266 = vadd.f32 0.0, %v2265
      %v2267 = vpop.f32.mrb[0].mxu0
      %2268 = vdwg.mxu0
      %v2269 = vadd.f32 %v1955, %v2127
      %v2270 = vadd.f32 %v1956, %v2130
      %v2271 = vadd.f32 %v1957, %v2135
      %v2272 = vadd.f32 %v1958, %v2138
      %v2273 = vadd.f32 %v1959, %v2143
      %v2274 = vadd.f32 %v1960, %v2146
      %v2275 = vadd.f32 %v1961, %v2151
      %v2276 = vadd.f32 %v1962, %v2154
      %v2277 = vadd.f32 %v1963, %v2159
      %v2278 = vadd.f32 %v1964, %v2162
      %v2279 = vadd.f32 %v1965, %v2167
      %v2280 = vadd.f32 %v1966, %v2170
      %v2281 = vadd.f32 %v1967, %v2175
      %v2282 = vadd.f32 %v1968, %v2178
      %v2283 = vadd.f32 %v1969, %v2183
      %v2284 = vadd.f32 %v1970, %v2186
      %v2285 = vadd.f32 %v1971, %v2191
      %v2286 = vadd.f32 %v1972, %v2194
      %v2287 = vadd.f32 %v1973, %v2199
      %v2288 = vadd.f32 %v1974, %v2202
      %v2289 = vadd.f32 %v1975, %v2207
      %v2290 = vadd.f32 %v1976, %v2210
      %v2291 = vadd.f32 %v1977, %v2215
      %v2292 = vadd.f32 %v1978, %v2218
      %v2293 = vadd.f32 %v1979, %v2223
      %v2294 = vadd.f32 %v1980, %v2226
      %v2295 = vadd.f32 %v1981, %v2231
      %v2296 = vadd.f32 %v1982, %v2234
      %v2297 = vadd.f32 %v1983, %v2239
      %v2298 = vadd.f32 %v1984, %v2242
      %v2299 = vadd.f32 %v1985, %v2247
      %v2300 = vadd.f32 %v1986, %v2250
      %v2301 = vadd.f32 %v1987, %v2255
      %v2302 = vadd.f32 %v1988, %v2258
      %v2303 = vadd.f32 %v1989, %v2263
      %v2304 = vadd.f32 %v1990, %v2266
      %v2305 = vld [vmem:[%s246 + $0xa0] sm:$0x7]
      %s2306 = scalar_lea.vmem %s1, 20
      %v2307 = vld [vmem:[%s2306] sm:$0xf]
      %v2309 = vunpack.c.l.b16 %v2305
      %v2310 = vpack.c.b16 %v2309, %v2309
      %vm2311 = vsmask.f32 5376
      %v2313 = vshrl.u32 %v1996, 16
      %v2315 = vrot.slane %v2313, 2
      %v2316 = vshll.u32 %v1996, 16
      %v2318 = vrot.slane %v2316, 3
      %v2319 = vor.u32 %v2315, %v2318
      %v2320 = vrot.slane %v1560, 2
      %v2321 = vrot.slane %v1563, 3
      %v2322 = vor.u32 %v2320, %v2321
      %v2323 = vsel %vm2311, %v2319, %v2322
      %v2324 = vrot.slane %v1569, 2
      %v2325 = vrot.slane %v1572, 3
      %v2326 = vor.u32 %v2324, %v2325
      %v2327 = vsel %vm2311, %v2322, %v2326
      %v2328 = vrot.slane %v1578, 2
      %v2329 = vrot.slane %v1581, 3
      %v2330 = vor.u32 %v2328, %v2329
      %v2331 = vsel %vm2311, %v2326, %v2330
      %v2332 = vrot.slane %v1587, 2
      %v2333 = vrot.slane %v1590, 3
      %v2334 = vor.u32 %v2332, %v2333
      %v2335 = vsel %vm2311, %v2330, %v2334
      %v2336 = vrot.slane %v1596, 2
      %v2337 = vrot.slane %v1599, 3
      %v2338 = vor.u32 %v2336, %v2337
      %v2339 = vsel %vm2311, %v2334, %v2338
      %v2340 = vrot.slane %v1605, 2
      %v2341 = vrot.slane %v1608, 3
      %v2342 = vor.u32 %v2340, %v2341
      %v2343 = vsel %vm2311, %v2338, %v2342
      %v2344 = vrot.slane %v1614, 2
      %v2345 = vrot.slane %v1617, 3
      %v2346 = vor.u32 %v2344, %v2345
      %v2347 = vsel %vm2311, %v2342, %v2346
      %v2348 = vrot.slane %v1623, 2
      %v2349 = vrot.slane %v1626, 3
      %v2350 = vor.u32 %v2348, %v2349
      %v2351 = vsel %vm2311, %v2346, %v2350
      %v2352 = vrot.slane %v1632, 2
      %v2353 = vrot.slane %v1635, 3
      %v2354 = vor.u32 %v2352, %v2353
      %v2355 = vsel %vm2311, %v2350, %v2354
      %v2356 = vrot.slane %v1641, 2
      %v2357 = vrot.slane %v1644, 3
      %v2358 = vor.u32 %v2356, %v2357
      %v2359 = vsel %vm2311, %v2354, %v2358
      %v2360 = vrot.slane %v1650, 2
      %v2361 = vrot.slane %v1653, 3
      %v2362 = vor.u32 %v2360, %v2361
      %v2363 = vsel %vm2311, %v2358, %v2362
      %v2364 = vrot.slane %v1659, 2
      %v2365 = vrot.slane %v1662, 3
      %v2366 = vor.u32 %v2364, %v2365
      %v2367 = vsel %vm2311, %v2362, %v2366
      %v2368 = vrot.slane %v1668, 2
      %v2369 = vrot.slane %v1671, 3
      %v2370 = vor.u32 %v2368, %v2369
      %v2371 = vsel %vm2311, %v2366, %v2370
      %v2372 = vrot.slane %v1677, 2
      %v2373 = vrot.slane %v1680, 3
      %v2374 = vor.u32 %v2372, %v2373
      %v2375 = vsel %vm2311, %v2370, %v2374
      %v2376 = vrot.slane %v1686, 2
      %v2377 = vrot.slane %v1689, 3
      %v2378 = vor.u32 %v2376, %v2377
      %v2379 = vsel %vm2311, %v2374, %v2378
      %v2380 = vrot.slane %v1695, 2
      %v2381 = vrot.slane %v1698, 3
      %v2382 = vor.u32 %v2380, %v2381
      %v2383 = vsel %vm2311, %v2378, %v2382
      %v2384 = vrot.slane %v1704, 2
      %v2385 = vrot.slane %v1707, 3
      %v2386 = vor.u32 %v2384, %v2385
      %v2387 = vsel %vm2311, %v2382, %v2386
      %v2389 = vshrl.u32 %v2310, 16
      %v2391 = vrot.slane %v2389, 2
      %v2392 = vshll.u32 %v2310, 16
      %v2394 = vrot.slane %v2392, 3
      %v2395 = vor.u32 %v2391, %v2394
      %v2396 = vsel %vm2311, %v2386, %v2395
      %v2398 = vsel %vm435, %v2323, 0
      %v2401 = vsel %vm435, %v2327, 0
      %v2404 = vsel %vm435, %v2331, 0
      %v2407 = vsel %vm435, %v2335, 0
      %v2410 = vsel %vm435, %v2339, 0
      %v2413 = vsel %vm435, %v2343, 0
      %v2416 = vsel %vm435, %v2347, 0
      %v2419 = vsel %vm435, %v2351, 0
      %v2422 = vsel %vm435, %v2355, 0
      %v2425 = vsel %vm435, %v2359, 0
      %v2428 = vsel %vm435, %v2363, 0
      %v2431 = vsel %vm435, %v2367, 0
      %v2434 = vsel %vm435, %v2371, 0
      %v2437 = vsel %vm435, %v2375, 0
      %v2440 = vsel %vm435, %v2379, 0
      %v2443 = vsel %vm435, %v2383, 0
      %v2446 = vsel %vm435, %v2387, 0
      %v2449 = vsel %vm435, %v2396, 0
      %v2452 = vsel %vm490, %v2307, 0
      %2454 = vmatprep.subr.bf16.mxu0 0
      %2455 = vmatpush1.bf16.msra.mxu0 %v2452
      %2456 = vmatprep.subr.bf16.mxu0 0
      %2457 = vmatpush1.bf16.msra.mxu0 0
      %2458 = vmatprep.subr.bf16.mxu0 0
      %2459 = vmatpush1.bf16.msra.mxu0 0
      %2460 = vmatprep.subr.bf16.mxu0 0
      %2461 = vmatpush1.bf16.msra.mxu0 0
      %2462 = vmatprep.subr.bf16.mxu0 0
      %2463 = vmatpush1.bf16.msra.mxu0 0
      %2464 = vmatprep.subr.bf16.mxu0 0
      %2465 = vmatpush1.bf16.msra.mxu0 0
      %2466 = vmatprep.subr.bf16.mxu0 0
      %2467 = vmatpush1.bf16.msra.mxu0 0
      %2468 = vmatprep.subr.bf16.mxu0 0
      %2469 = vmatpush1.bf16.msra.mxu0 0
      %2470 = vmatprep.subr.bf16.mxu0 0
      %2471 = vmatpush1.bf16.msra.mxu0 0
      %2472 = vmatprep.subr.bf16.mxu0 0
      %2473 = vmatpush1.bf16.msra.mxu0 0
      %2474 = vmatprep.subr.bf16.mxu0 0
      %2475 = vmatpush1.bf16.msra.mxu0 0
      %2476 = vmatprep.subr.bf16.mxu0 0
      %2477 = vmatpush1.bf16.msra.mxu0 0
      %2478 = vmatprep.subr.bf16.mxu0 0
      %2479 = vmatpush1.bf16.msra.mxu0 0
      %2480 = vmatprep.subr.bf16.mxu0 0
      %2481 = vmatpush1.bf16.msra.mxu0 0
      %2482 = vmatprep.subr.bf16.mxu0 0
      %2483 = vmatpush1.bf16.msra.mxu0 0
      %2484 = vmatprep.subr.bf16.mxu0 0
      %2485 = vmatpush1.bf16.msra.mxu0 0
      %2486 = vmatprep.mubr.bf16.mxu0 0
      %2487 = vmatmul.mubr.bf16.gmra.mrb[0].mxu0 %v2398
      %v2488 = vpop.f32.mrb[0].mxu0
      %v2489 = vadd.f32 0.0, %v2488
      %v2490 = vpop.f32.mrb[0].mxu0
      %v2491 = vpop.f32.mrb[0].mxu0
      %v2492 = vadd.f32 0.0, %v2491
      %v2493 = vpop.f32.mrb[0].mxu0
      %2494 = vmatprep.mubr.bf16.mxu0 0
      %2495 = vmatmul.mubr.bf16.gmra.mrb[0].mxu0 %v2401
      %v2496 = vpop.f32.mrb[0].mxu0
      %v2497 = vadd.f32 0.0, %v2496
      %v2498 = vpop.f32.mrb[0].mxu0
      %v2499 = vpop.f32.mrb[0].mxu0
      %v2500 = vadd.f32 0.0, %v2499
      %v2501 = vpop.f32.mrb[0].mxu0
      %2502 = vmatprep.mubr.bf16.mxu0 0
      %2503 = vmatmul.mubr.bf16.gmra.mrb[0].mxu0 %v2404
      %v2504 = vpop.f32.mrb[0].mxu0
      %v2505 = vadd.f32 0.0, %v2504
      %v2506 = vpop.f32.mrb[0].mxu0
      %v2507 = vpop.f32.mrb[0].mxu0
      %v2508 = vadd.f32 0.0, %v2507
      %v2509 = vpop.f32.mrb[0].mxu0
      %2510 = vmatprep.mubr.bf16.mxu0 0
      %2511 = vmatmul.mubr.bf16.gmra.mrb[0].mxu0 %v2407
      %v2512 = vpop.f32.mrb[0].mxu0
      %v2513 = vadd.f32 0.0, %v2512
      %v2514 = vpop.f32.mrb[0].mxu0
      %v2515 = vpop.f32.mrb[0].mxu0
      %v2516 = vadd.f32 0.0, %v2515
      %v2517 = vpop.f32.mrb[0].mxu0
      %2518 = vmatprep.mubr.bf16.mxu0 0
      %2519 = vmatmul.mubr.bf16.gmra.mrb[0].mxu0 %v2410
      %v2520 = vpop.f32.mrb[0].mxu0
      %v2521 = vadd.f32 0.0, %v2520
      %v2522 = vpop.f32.mrb[0].mxu0
      %v2523 = vpop.f32.mrb[0].mxu0
      %v2524 = vadd.f32 0.0, %v2523
      %v2525 = vpop.f32.mrb[0].mxu0
      %2526 = vmatprep.mubr.bf16.mxu0 0
      %2527 = vmatmul.mubr.bf16.gmra.mrb[0].mxu0 %v2413
      %v2528 = vpop.f32.mrb[0].mxu0
      %v2529 = vadd.f32 0.0, %v2528
      %v2530 = vpop.f32.mrb[0].mxu0
      %v2531 = vpop.f32.mrb[0].mxu0
      %v2532 = vadd.f32 0.0, %v2531
      %v2533 = vpop.f32.mrb[0].mxu0
      %2534 = vmatprep.mubr.bf16.mxu0 0
      %2535 = vmatmul.mubr.bf16.gmra.mrb[0].mxu0 %v2416
      %v2536 = vpop.f32.mrb[0].mxu0
      %v2537 = vadd.f32 0.0, %v2536
      %v2538 = vpop.f32.mrb[0].mxu0
      %v2539 = vpop.f32.mrb[0].mxu0
      %v2540 = vadd.f32 0.0, %v2539
      %v2541 = vpop.f32.mrb[0].mxu0
      %2542 = vmatprep.mubr.bf16.mxu0 0
      %2543 = vmatmul.mubr.bf16.gmra.mrb[0].mxu0 %v2419
      %v2544 = vpop.f32.mrb[0].mxu0
      %v2545 = vadd.f32 0.0, %v2544
      %v2546 = vpop.f32.mrb[0].mxu0
      %v2547 = vpop.f32.mrb[0].mxu0
      %v2548 = vadd.f32 0.0, %v2547
      %v2549 = vpop.f32.mrb[0].mxu0
      %2550 = vmatprep.mubr.bf16.mxu0 0
      %2551 = vmatmul.mubr.bf16.gmra.mrb[0].mxu0 %v2422
      %v2552 = vpop.f32.mrb[0].mxu0
      %v2553 = vadd.f32 0.0, %v2552
      %v2554 = vpop.f32.mrb[0].mxu0
      %v2555 = vpop.f32.mrb[0].mxu0
      %v2556 = vadd.f32 0.0, %v2555
      %v2557 = vpop.f32.mrb[0].mxu0
      %2558 = vmatprep.mubr.bf16.mxu0 0
      %2559 = vmatmul.mubr.bf16.gmra.mrb[0].mxu0 %v2425
      %v2560 = vpop.f32.mrb[0].mxu0
      %v2561 = vadd.f32 0.0, %v2560
      %v2562 = vpop.f32.mrb[0].mxu0
      %v2563 = vpop.f32.mrb[0].mxu0
      %v2564 = vadd.f32 0.0, %v2563
      %v2565 = vpop.f32.mrb[0].mxu0
      %2566 = vmatprep.mubr.bf16.mxu0 0
      %2567 = vmatmul.mubr.bf16.gmra.mrb[0].mxu0 %v2428
      %v2568 = vpop.f32.mrb[0].mxu0
      %v2569 = vadd.f32 0.0, %v2568
      %v2570 = vpop.f32.mrb[0].mxu0
      %v2571 = vpop.f32.mrb[0].mxu0
      %v2572 = vadd.f32 0.0, %v2571
      %v2573 = vpop.f32.mrb[0].mxu0
      %2574 = vmatprep.mubr.bf16.mxu0 0
      %2575 = vmatmul.mubr.bf16.gmra.mrb[0].mxu0 %v2431
      %v2576 = vpop.f32.mrb[0].mxu0
      %v2577 = vadd.f32 0.0, %v2576
      %v2578 = vpop.f32.mrb[0].mxu0
      %v2579 = vpop.f32.mrb[0].mxu0
      %v2580 = vadd.f32 0.0, %v2579
      %v2581 = vpop.f32.mrb[0].mxu0
      %2582 = vmatprep.mubr.bf16.mxu0 0
      %2583 = vmatmul.mubr.bf16.gmra.mrb[0].mxu0 %v2434
      %v2584 = vpop.f32.mrb[0].mxu0
      %v2585 = vadd.f32 0.0, %v2584
      %v2586 = vpop.f32.mrb[0].mxu0
      %v2587 = vpop.f32.mrb[0].mxu0
      %v2588 = vadd.f32 0.0, %v2587
      %v2589 = vpop.f32.mrb[0].mxu0
      %2590 = vmatprep.mubr.bf16.mxu0 0
      %2591 = vmatmul.mubr.bf16.gmra.mrb[0].mxu0 %v2437
      %v2592 = vpop.f32.mrb[0].mxu0
      %v2593 = vadd.f32 0.0, %v2592
      %v2594 = vpop.f32.mrb[0].mxu0
      %v2595 = vpop.f32.mrb[0].mxu0
      %v2596 = vadd.f32 0.0, %v2595
      %v2597 = vpop.f32.mrb[0].mxu0
      %2598 = vmatprep.mubr.bf16.mxu0 0
      %2599 = vmatmul.mubr.bf16.gmra.mrb[0].mxu0 %v2440
      %v2600 = vpop.f32.mrb[0].mxu0
      %v2601 = vadd.f32 0.0, %v2600
      %v2602 = vpop.f32.mrb[0].mxu0
      %v2603 = vpop.f32.mrb[0].mxu0
      %v2604 = vadd.f32 0.0, %v2603
      %v2605 = vpop.f32.mrb[0].mxu0
      %2606 = vmatprep.mubr.bf16.mxu0 0
      %2607 = vmatmul.mubr.bf16.gmra.mrb[0].mxu0 %v2443
      %v2608 = vpop.f32.mrb[0].mxu0
      %v2609 = vadd.f32 0.0, %v2608
      %v2610 = vpop.f32.mrb[0].mxu0
      %v2611 = vpop.f32.mrb[0].mxu0
      %v2612 = vadd.f32 0.0, %v2611
      %v2613 = vpop.f32.mrb[0].mxu0
      %2614 = vmatprep.mubr.bf16.mxu0 0
      %2615 = vmatmul.mubr.bf16.gmra.mrb[0].mxu0 %v2446
      %v2616 = vpop.f32.mrb[0].mxu0
      %v2617 = vadd.f32 0.0, %v2616
      %v2618 = vpop.f32.mrb[0].mxu0
      %v2619 = vpop.f32.mrb[0].mxu0
      %v2620 = vadd.f32 0.0, %v2619
      %v2621 = vpop.f32.mrb[0].mxu0
      %2622 = vmatprep.mubr.bf16.mxu0 0
      %2623 = vmatmul.mubr.bf16.gmra.mrb[0].mxu0 %v2449
      %v2624 = vpop.f32.mrb[0].mxu0
      %v2625 = vadd.f32 0.0, %v2624
      %v2626 = vpop.f32.mrb[0].mxu0
      %v2627 = vpop.f32.mrb[0].mxu0
      %v2628 = vadd.f32 0.0, %v2627
      %v2629 = vpop.f32.mrb[0].mxu0
      %2630 = vdwg.mxu0
      %v2631 = vadd.f32 %v2269, %v2489
      %v2632 = vadd.f32 %v2270, %v2492
      %v2633 = vadd.f32 %v2271, %v2497
      %v2634 = vadd.f32 %v2272, %v2500
      %v2635 = vadd.f32 %v2273, %v2505
      %v2636 = vadd.f32 %v2274, %v2508
      %v2637 = vadd.f32 %v2275, %v2513
      %v2638 = vadd.f32 %v2276, %v2516
      %v2639 = vadd.f32 %v2277, %v2521
      %v2640 = vadd.f32 %v2278, %v2524
      %v2641 = vadd.f32 %v2279, %v2529
      %v2642 = vadd.f32 %v2280, %v2532
      %v2643 = vadd.f32 %v2281, %v2537
      %v2644 = vadd.f32 %v2282, %v2540
      %v2645 = vadd.f32 %v2283, %v2545
      %v2646 = vadd.f32 %v2284, %v2548
      %v2647 = vadd.f32 %v2285, %v2553
      %v2648 = vadd.f32 %v2286, %v2556
      %v2649 = vadd.f32 %v2287, %v2561
      %v2650 = vadd.f32 %v2288, %v2564
      %v2651 = vadd.f32 %v2289, %v2569
      %v2652 = vadd.f32 %v2290, %v2572
      %v2653 = vadd.f32 %v2291, %v2577
      %v2654 = vadd.f32 %v2292, %v2580
      %v2655 = vadd.f32 %v2293, %v2585
      %v2656 = vadd.f32 %v2294, %v2588
      %v2657 = vadd.f32 %v2295, %v2593
      %v2658 = vadd.f32 %v2296, %v2596
      %v2659 = vadd.f32 %v2297, %v2601
      %v2660 = vadd.f32 %v2298, %v2604
      %v2661 = vadd.f32 %v2299, %v2609
      %v2662 = vadd.f32 %v2300, %v2612
      %v2663 = vadd.f32 %v2301, %v2617
      %v2664 = vadd.f32 %v2302, %v2620
      %v2665 = vadd.f32 %v2303, %v2625
      %v2666 = vadd.f32 %v2304, %v2628
      %v2667 = vld [vmem:[%s246 + $0x18] sm:$0xc]
      %v2668 = vld [vmem:[%s246 + $0x1c] sm:$0xf]
      %v2669 = vld [vmem:[%s246 + $0x20] sm:$0xf]
      %v2670 = vld [vmem:[%s246 + $0x24] sm:$0xf]
      %v2671 = vld [vmem:[%s246 + $0x28] sm:$0xf]
      %v2672 = vld [vmem:[%s246 + $0x2c] sm:$0xf]
      %v2673 = vld [vmem:[%s246 + $0x30] sm:$0xf]
      %v2674 = vld [vmem:[%s246 + $0x34] sm:$0xf]
      %v2675 = vld [vmem:[%s246 + $0x38] sm:$0xf]
      %v2676 = vld [vmem:[%s246 + $0x3c] sm:$0xf]
      %v2677 = vld [vmem:[%s246 + $0x40] sm:$0xf]
      %v2678 = vld [vmem:[%s246 + $0x44] sm:$0xf]
      %v2679 = vld [vmem:[%s246 + $0x48] sm:$0xf]
      %v2680 = vld [vmem:[%s246 + $0x4c] sm:$0xf]
      %v2681 = vld [vmem:[%s246 + $0x50] sm:$0xf]
      %v2682 = vld [vmem:[%s246 + $0x54] sm:$0xf]
      %v2683 = vld [vmem:[%s246 + $0x58] sm:$0xf]
      %v2684 = vld [vmem:[%s246 + $0x5c] sm:$0xf]
      %v2685 = vld [vmem:[%s246 + $0x60] sm:$0xf]
      %v2686 = vld [vmem:[%s246 + $0x64] sm:$0xf]
      %v2687 = vld [vmem:[%s246 + $0x68] sm:$0xf]
      %v2688 = vld [vmem:[%s246 + $0x6c] sm:$0xf]
      %v2689 = vld [vmem:[%s246 + $0x70] sm:$0xf]
      %v2690 = vld [vmem:[%s246 + $0x74] sm:$0xf]
      %v2691 = vld [vmem:[%s246 + $0x78] sm:$0xf]
      %v2692 = vld [vmem:[%s246 + $0x7c] sm:$0xf]
      %v2693 = vld [vmem:[%s246 + $0x80] sm:$0xf]
      %v2694 = vld [vmem:[%s246 + $0x84] sm:$0xf]
      %v2695 = vld [vmem:[%s246 + $0x88] sm:$0xf]
      %v2696 = vld [vmem:[%s246 + $0x8c] sm:$0xf]
      %v2697 = vld [vmem:[%s246 + $0x90] sm:$0xf]
      %v2698 = vld [vmem:[%s246 + $0x94] sm:$0xf]
      %v2699 = vld [vmem:[%s246 + $0x98] sm:$0xf]
      %v2700 = vld [vmem:[%s246 + $0x9c] sm:$0xf]
      %v2701 = vld [vmem:[%s246 + $0xa0] sm:$0xf]
      %v2702 = vld [vmem:[%s246 + $0xa4] sm:$0xf]
      %v2703 = vld [vmem:[%s246 + $0xa8] sm:$0x7]
      %s2704 = scalar_lea.vmem %s1, 24
      %v2705 = vld [vmem:[%s2704] sm:$0xf]
      %v2743 = vunpack.c.l.b16 %v2667
      %v2744 = vunpack.c.l.b16 %v2668
      %v2745 = vunpack.c.l.b16 %v2669
      %v2746 = vunpack.c.l.b16 %v2670
      %v2747 = vunpack.c.l.b16 %v2671
      %v2748 = vunpack.c.l.b16 %v2672
      %v2749 = vunpack.c.l.b16 %v2673
      %v2750 = vunpack.c.l.b16 %v2674
      %v2751 = vunpack.c.l.b16 %v2675
      %v2752 = vunpack.c.l.b16 %v2676
      %v2753 = vunpack.c.l.b16 %v2677
      %v2754 = vunpack.c.l.b16 %v2678
      %v2755 = vunpack.c.l.b16 %v2679
      %v2756 = vunpack.c.l.b16 %v2680
      %v2757 = vunpack.c.l.b16 %v2681
      %v2758 = vunpack.c.l.b16 %v2682
      %v2759 = vunpack.c.l.b16 %v2683
      %v2760 = vunpack.c.l.b16 %v2684
      %v2761 = vunpack.c.l.b16 %v2685
      %v2762 = vunpack.c.l.b16 %v2686
      %v2763 = vunpack.c.l.b16 %v2687
      %v2764 = vunpack.c.l.b16 %v2688
      %v2765 = vunpack.c.l.b16 %v2689
      %v2766 = vunpack.c.l.b16 %v2690
      %v2767 = vunpack.c.l.b16 %v2691
      %v2768 = vunpack.c.l.b16 %v2692
      %v2769 = vunpack.c.l.b16 %v2693
      %v2770 = vunpack.c.l.b16 %v2694
      %v2771 = vunpack.c.l.b16 %v2695
      %v2772 = vunpack.c.l.b16 %v2696
      %v2773 = vunpack.c.l.b16 %v2697
      %v2774 = vunpack.c.l.b16 %v2698
      %v2775 = vunpack.c.l.b16 %v2699
      %v2776 = vunpack.c.l.b16 %v2700
      %v2777 = vunpack.c.l.b16 %v2701
      %v2778 = vunpack.c.l.b16 %v2702
      %v2779 = vunpack.c.l.b16 %v2703
      %v2780 = vpack.c.b16 %v2744, %v2743
      %v2781 = vpack.c.b16 %v2746, %v2745
      %v2782 = vpack.c.b16 %v2748, %v2747
      %v2783 = vpack.c.b16 %v2750, %v2749
      %v2784 = vpack.c.b16 %v2752, %v2751
      %v2785 = vpack.c.b16 %v2754, %v2753
      %v2786 = vpack.c.b16 %v2756, %v2755
      %v2787 = vpack.c.b16 %v2758, %v2757
      %v2788 = vpack.c.b16 %v2760, %v2759
      %v2789 = vpack.c.b16 %v2762, %v2761
      %v2790 = vpack.c.b16 %v2764, %v2763
      %v2791 = vpack.c.b16 %v2766, %v2765
      %v2792 = vpack.c.b16 %v2768, %v2767
      %v2793 = vpack.c.b16 %v2770, %v2769
      %v2794 = vpack.c.b16 %v2772, %v2771
      %v2795 = vpack.c.b16 %v2774, %v2773
      %v2796 = vpack.c.b16 %v2776, %v2775
      %v2797 = vpack.c.b16 %v2778, %v2777
      %v2798 = vpack.c.b16 %v2779, %v2779
      %v2800 = vshrl.u32 %v2780, 16
      %v2802 = vrot.slane %v2800, 2
      %v2803 = vshll.u32 %v2780, 16
      %v2805 = vrot.slane %v2803, 3
      %v2806 = vor.u32 %v2802, %v2805
      %v2808 = vshrl.u32 %v2781, 16
      %v2810 = vrot.slane %v2808, 2
      %v2811 = vshll.u32 %v2781, 16
      %v2813 = vrot.slane %v2811, 3
      %v2814 = vor.u32 %v2810, %v2813
      %v2815 = vsel %vm2311, %v2806, %v2814
      %v2817 = vshrl.u32 %v2782, 16
      %v2819 = vrot.slane %v2817, 2
      %v2820 = vshll.u32 %v2782, 16
      %v2822 = vrot.slane %v2820, 3
      %v2823 = vor.u32 %v2819, %v2822
      %v2824 = vsel %vm2311, %v2814, %v2823
      %v2826 = vshrl.u32 %v2783, 16
      %v2828 = vrot.slane %v2826, 2
      %v2829 = vshll.u32 %v2783, 16
      %v2831 = vrot.slane %v2829, 3
      %v2832 = vor.u32 %v2828, %v2831
      %v2833 = vsel %vm2311, %v2823, %v2832
      %v2835 = vshrl.u32 %v2784, 16
      %v2837 = vrot.slane %v2835, 2
      %v2838 = vshll.u32 %v2784, 16
      %v2840 = vrot.slane %v2838, 3
      %v2841 = vor.u32 %v2837, %v2840
      %v2842 = vsel %vm2311, %v2832, %v2841
      %v2844 = vshrl.u32 %v2785, 16
      %v2846 = vrot.slane %v2844, 2
      %v2847 = vshll.u32 %v2785, 16
      %v2849 = vrot.slane %v2847, 3
      %v2850 = vor.u32 %v2846, %v2849
      %v2851 = vsel %vm2311, %v2841, %v2850
      %v2853 = vshrl.u32 %v2786, 16
      %v2855 = vrot.slane %v2853, 2
      %v2856 = vshll.u32 %v2786, 16
      %v2858 = vrot.slane %v2856, 3
      %v2859 = vor.u32 %v2855, %v2858
      %v2860 = vsel %vm2311, %v2850, %v2859
      %v2862 = vshrl.u32 %v2787, 16
      %v2864 = vrot.slane %v2862, 2
      %v2865 = vshll.u32 %v2787, 16
      %v2867 = vrot.slane %v2865, 3
      %v2868 = vor.u32 %v2864, %v2867
      %v2869 = vsel %vm2311, %v2859, %v2868
      %v2871 = vshrl.u32 %v2788, 16
      %v2873 = vrot.slane %v2871, 2
      %v2874 = vshll.u32 %v2788, 16
      %v2876 = vrot.slane %v2874, 3
      %v2877 = vor.u32 %v2873, %v2876
      %v2878 = vsel %vm2311, %v2868, %v2877
      %v2880 = vshrl.u32 %v2789, 16
      %v2882 = vrot.slane %v2880, 2
      %v2883 = vshll.u32 %v2789, 16
      %v2885 = vrot.slane %v2883, 3
      %v2886 = vor.u32 %v2882, %v2885
      %v2887 = vsel %vm2311, %v2877, %v2886
      %v2889 = vshrl.u32 %v2790, 16
      %v2891 = vrot.slane %v2889, 2
      %v2892 = vshll.u32 %v2790, 16
      %v2894 = vrot.slane %v2892, 3
      %v2895 = vor.u32 %v2891, %v2894
      %v2896 = vsel %vm2311, %v2886, %v2895
      %v2898 = vshrl.u32 %v2791, 16
      %v2900 = vrot.slane %v2898, 2
      %v2901 = vshll.u32 %v2791, 16
      %v2903 = vrot.slane %v2901, 3
      %v2904 = vor.u32 %v2900, %v2903
      %v2905 = vsel %vm2311, %v2895, %v2904
      %v2907 = vshrl.u32 %v2792, 16
      %v2909 = vrot.slane %v2907, 2
      %v2910 = vshll.u32 %v2792, 16
      %v2912 = vrot.slane %v2910, 3
      %v2913 = vor.u32 %v2909, %v2912
      %v2914 = vsel %vm2311, %v2904, %v2913
      %v2916 = vshrl.u32 %v2793, 16
      %v2918 = vrot.slane %v2916, 2
      %v2919 = vshll.u32 %v2793, 16
      %v2921 = vrot.slane %v2919, 3
      %v2922 = vor.u32 %v2918, %v2921
      %v2923 = vsel %vm2311, %v2913, %v2922
      %v2925 = vshrl.u32 %v2794, 16
      %v2927 = vrot.slane %v2925, 2
      %v2928 = vshll.u32 %v2794, 16
      %v2930 = vrot.slane %v2928, 3
      %v2931 = vor.u32 %v2927, %v2930
      %v2932 = vsel %vm2311, %v2922, %v2931
      %v2934 = vshrl.u32 %v2795, 16
      %v2936 = vrot.slane %v2934, 2
      %v2937 = vshll.u32 %v2795, 16
      %v2939 = vrot.slane %v2937, 3
      %v2940 = vor.u32 %v2936, %v2939
      %v2941 = vsel %vm2311, %v2931, %v2940
      %v2943 = vshrl.u32 %v2796, 16
      %v2945 = vrot.slane %v2943, 2
      %v2946 = vshll.u32 %v2796, 16
      %v2948 = vrot.slane %v2946, 3
      %v2949 = vor.u32 %v2945, %v2948
      %v2950 = vsel %vm2311, %v2940, %v2949
      %v2952 = vshrl.u32 %v2797, 16
      %v2954 = vrot.slane %v2952, 2
      %v2955 = vshll.u32 %v2797, 16
      %v2957 = vrot.slane %v2955, 3
      %v2958 = vor.u32 %v2954, %v2957
      %v2959 = vsel %vm2311, %v2949, %v2958
      %v2961 = vshrl.u32 %v2798, 16
      %v2963 = vrot.slane %v2961, 2
      %v2964 = vshll.u32 %v2798, 16
      %v2966 = vrot.slane %v2964, 3
      %v2967 = vor.u32 %v2963, %v2966
      %v2968 = vsel %vm2311, %v2958, %v2967
      %v2970 = vsel %vm435, %v2815, 0
      %v2973 = vsel %vm435, %v2824, 0
      %v2976 = vsel %vm435, %v2833, 0
      %v2979 = vsel %vm435, %v2842, 0
      %v2982 = vsel %vm435, %v2851, 0
      %v2985 = vsel %vm435, %v2860, 0
      %v2988 = vsel %vm435, %v2869, 0
      %v2991 = vsel %vm435, %v2878, 0
      %v2994 = vsel %vm435, %v2887, 0
      %v2997 = vsel %vm435, %v2896, 0
      %v3000 = vsel %vm435, %v2905, 0
      %v3003 = vsel %vm435, %v2914, 0
      %v3006 = vsel %vm435, %v2923, 0
      %v3009 = vsel %vm435, %v2932, 0
      %v3012 = vsel %vm435, %v2941, 0
      %v3015 = vsel %vm435, %v2950, 0
      %v3018 = vsel %vm435, %v2959, 0
      %v3021 = vsel %vm435, %v2968, 0
      %v3024 = vsel %vm490, %v2705, 0
      %3026 = vmatprep.subr.bf16.mxu0 0
      %3027 = vmatpush1.bf16.msra.mxu0 %v3024
      %3028 = vmatprep.subr.bf16.mxu0 0
      %3029 = vmatpush1.bf16.msra.mxu0 0
      %3030 = vmatprep.subr.bf16.mxu0 0
      %3031 = vmatpush1.bf16.msra.mxu0 0
      %3032 = vmatprep.subr.bf16.mxu0 0
      %3033 = vmatpush1.bf16.msra.mxu0 0
      %3034 = vmatprep.subr.bf16.mxu0 0
      %3035 = vmatpush1.bf16.msra.mxu0 0
      %3036 = vmatprep.subr.bf16.mxu0 0
      %3037 = vmatpush1.bf16.msra.mxu0 0
      %3038 = vmatprep.subr.bf16.mxu0 0
      %3039 = vmatpush1.bf16.msra.mxu0 0
      %3040 = vmatprep.subr.bf16.mxu0 0
      %3041 = vmatpush1.bf16.msra.mxu0 0
      %3042 = vmatprep.subr.bf16.mxu0 0
      %3043 = vmatpush1.bf16.msra.mxu0 0
      %3044 = vmatprep.subr.bf16.mxu0 0
      %3045 = vmatpush1.bf16.msra.mxu0 0
      %3046 = vmatprep.subr.bf16.mxu0 0
      %3047 = vmatpush1.bf16.msra.mxu0 0
      %3048 = vmatprep.subr.bf16.mxu0 0
      %3049 = vmatpush1.bf16.msra.mxu0 0
      %3050 = vmatprep.subr.bf16.mxu0 0
      %3051 = vmatpush1.bf16.msra.mxu0 0
      %3052 = vmatprep.subr.bf16.mxu0 0
      %3053 = vmatpush1.bf16.msra.mxu0 0
      %3054 = vmatprep.subr.bf16.mxu0 0
      %3055 = vmatpush1.bf16.msra.mxu0 0
      %3056 = vmatprep.subr.bf16.mxu0 0
      %3057 = vmatpush1.bf16.msra.mxu0 0
      %3058 = vmatprep.mubr.bf16.mxu0 0
      %3059 = vmatmul.mubr.bf16.gmra.mrb[0].mxu0 %v2970
      %v3060 = vpop.f32.mrb[0].mxu0
      %v3061 = vadd.f32 0.0, %v3060
      %v3062 = vpop.f32.mrb[0].mxu0
      %v3063 = vpop.f32.mrb[0].mxu0
      %v3064 = vadd.f32 0.0, %v3063
      %v3065 = vpop.f32.mrb[0].mxu0
      %3066 = vmatprep.mubr.bf16.mxu0 0
      %3067 = vmatmul.mubr.bf16.gmra.mrb[0].mxu0 %v2973
      %v3068 = vpop.f32.mrb[0].mxu0
      %v3069 = vadd.f32 0.0, %v3068
      %v3070 = vpop.f32.mrb[0].mxu0
      %v3071 = vpop.f32.mrb[0].mxu0
      %v3072 = vadd.f32 0.0, %v3071
      %v3073 = vpop.f32.mrb[0].mxu0
      %3074 = vmatprep.mubr.bf16.mxu0 0
      %3075 = vmatmul.mubr.bf16.gmra.mrb[0].mxu0 %v2976
      %v3076 = vpop.f32.mrb[0].mxu0
      %v3077 = vadd.f32 0.0, %v3076
      %v3078 = vpop.f32.mrb[0].mxu0
      %v3079 = vpop.f32.mrb[0].mxu0
      %v3080 = vadd.f32 0.0, %v3079
      %v3081 = vpop.f32.mrb[0].mxu0
      %3082 = vmatprep.mubr.bf16.mxu0 0
      %3083 = vmatmul.mubr.bf16.gmra.mrb[0].mxu0 %v2979
      %v3084 = vpop.f32.mrb[0].mxu0
      %v3085 = vadd.f32 0.0, %v3084
      %v3086 = vpop.f32.mrb[0].mxu0
      %v3087 = vpop.f32.mrb[0].mxu0
      %v3088 = vadd.f32 0.0, %v3087
      %v3089 = vpop.f32.mrb[0].mxu0
      %3090 = vmatprep.mubr.bf16.mxu0 0
      %3091 = vmatmul.mubr.bf16.gmra.mrb[0].mxu0 %v2982
      %v3092 = vpop.f32.mrb[0].mxu0
      %v3093 = vadd.f32 0.0, %v3092
      %v3094 = vpop.f32.mrb[0].mxu0
      %v3095 = vpop.f32.mrb[0].mxu0
      %v3096 = vadd.f32 0.0, %v3095
      %v3097 = vpop.f32.mrb[0].mxu0
      %3098 = vmatprep.mubr.bf16.mxu0 0
      %3099 = vmatmul.mubr.bf16.gmra.mrb[0].mxu0 %v2985
      %v3100 = vpop.f32.mrb[0].mxu0
      %v3101 = vadd.f32 0.0, %v3100
      %v3102 = vpop.f32.mrb[0].mxu0
      %v3103 = vpop.f32.mrb[0].mxu0
      %v3104 = vadd.f32 0.0, %v3103
      %v3105 = vpop.f32.mrb[0].mxu0
      %3106 = vmatprep.mubr.bf16.mxu0 0
      %3107 = vmatmul.mubr.bf16.gmra.mrb[0].mxu0 %v2988
      %v3108 = vpop.f32.mrb[0].mxu0
      %v3109 = vadd.f32 0.0, %v3108
      %v3110 = vpop.f32.mrb[0].mxu0
      %v3111 = vpop.f32.mrb[0].mxu0
      %v3112 = vadd.f32 0.0, %v3111
      %v3113 = vpop.f32.mrb[0].mxu0
      %3114 = vmatprep.mubr.bf16.mxu0 0
      %3115 = vmatmul.mubr.bf16.gmra.mrb[0].mxu0 %v2991
      %v3116 = vpop.f32.mrb[0].mxu0
      %v3117 = vadd.f32 0.0, %v3116
      %v3118 = vpop.f32.mrb[0].mxu0
      %v3119 = vpop.f32.mrb[0].mxu0
      %v3120 = vadd.f32 0.0, %v3119
      %v3121 = vpop.f32.mrb[0].mxu0
      %3122 = vmatprep.mubr.bf16.mxu0 0
      %3123 = vmatmul.mubr.bf16.gmra.mrb[0].mxu0 %v2994
      %v3124 = vpop.f32.mrb[0].mxu0
      %v3125 = vadd.f32 0.0, %v3124
      %v3126 = vpop.f32.mrb[0].mxu0
      %v3127 = vpop.f32.mrb[0].mxu0
      %v3128 = vadd.f32 0.0, %v3127
      %v3129 = vpop.f32.mrb[0].mxu0
      %3130 = vmatprep.mubr.bf16.mxu0 0
      %3131 = vmatmul.mubr.bf16.gmra.mrb[0].mxu0 %v2997
      %v3132 = vpop.f32.mrb[0].mxu0
      %v3133 = vadd.f32 0.0, %v3132
      %v3134 = vpop.f32.mrb[0].mxu0
      %v3135 = vpop.f32.mrb[0].mxu0
      %v3136 = vadd.f32 0.0, %v3135
      %v3137 = vpop.f32.mrb[0].mxu0
      %3138 = vmatprep.mubr.bf16.mxu0 0
      %3139 = vmatmul.mubr.bf16.gmra.mrb[0].mxu0 %v3000
      %v3140 = vpop.f32.mrb[0].mxu0
      %v3141 = vadd.f32 0.0, %v3140
      %v3142 = vpop.f32.mrb[0].mxu0
      %v3143 = vpop.f32.mrb[0].mxu0
      %v3144 = vadd.f32 0.0, %v3143
      %v3145 = vpop.f32.mrb[0].mxu0
      %3146 = vmatprep.mubr.bf16.mxu0 0
      %3147 = vmatmul.mubr.bf16.gmra.mrb[0].mxu0 %v3003
      %v3148 = vpop.f32.mrb[0].mxu0
      %v3149 = vadd.f32 0.0, %v3148
      %v3150 = vpop.f32.mrb[0].mxu0
      %v3151 = vpop.f32.mrb[0].mxu0
      %v3152 = vadd.f32 0.0, %v3151
      %v3153 = vpop.f32.mrb[0].mxu0
      %3154 = vmatprep.mubr.bf16.mxu0 0
      %3155 = vmatmul.mubr.bf16.gmra.mrb[0].mxu0 %v3006
      %v3156 = vpop.f32.mrb[0].mxu0
      %v3157 = vadd.f32 0.0, %v3156
      %v3158 = vpop.f32.mrb[0].mxu0
      %v3159 = vpop.f32.mrb[0].mxu0
      %v3160 = vadd.f32 0.0, %v3159
      %v3161 = vpop.f32.mrb[0].mxu0
      %3162 = vmatprep.mubr.bf16.mxu0 0
      %3163 = vmatmul.mubr.bf16.gmra.mrb[0].mxu0 %v3009
      %v3164 = vpop.f32.mrb[0].mxu0
      %v3165 = vadd.f32 0.0, %v3164
      %v3166 = vpop.f32.mrb[0].mxu0
      %v3167 = vpop.f32.mrb[0].mxu0
      %v3168 = vadd.f32 0.0, %v3167
      %v3169 = vpop.f32.mrb[0].mxu0
      %3170 = vmatprep.mubr.bf16.mxu0 0
      %3171 = vmatmul.mubr.bf16.gmra.mrb[0].mxu0 %v3012
      %v3172 = vpop.f32.mrb[0].mxu0
      %v3173 = vadd.f32 0.0, %v3172
      %v3174 = vpop.f32.mrb[0].mxu0
      %v3175 = vpop.f32.mrb[0].mxu0
      %v3176 = vadd.f32 0.0, %v3175
      %v3177 = vpop.f32.mrb[0].mxu0
      %3178 = vmatprep.mubr.bf16.mxu0 0
      %3179 = vmatmul.mubr.bf16.gmra.mrb[0].mxu0 %v3015
      %v3180 = vpop.f32.mrb[0].mxu0
      %v3181 = vadd.f32 0.0, %v3180
      %v3182 = vpop.f32.mrb[0].mxu0
      %v3183 = vpop.f32.mrb[0].mxu0
      %v3184 = vadd.f32 0.0, %v3183
      %v3185 = vpop.f32.mrb[0].mxu0
      %3186 = vmatprep.mubr.bf16.mxu0 0
      %3187 = vmatmul.mubr.bf16.gmra.mrb[0].mxu0 %v3018
      %v3188 = vpop.f32.mrb[0].mxu0
      %v3189 = vadd.f32 0.0, %v3188
      %v3190 = vpop.f32.mrb[0].mxu0
      %v3191 = vpop.f32.mrb[0].mxu0
      %v3192 = vadd.f32 0.0, %v3191
      %v3193 = vpop.f32.mrb[0].mxu0
      %3194 = vmatprep.mubr.bf16.mxu0 0
      %3195 = vmatmul.mubr.bf16.gmra.mrb[0].mxu0 %v3021
      %v3196 = vpop.f32.mrb[0].mxu0
      %v3197 = vadd.f32 0.0, %v3196
      %v3198 = vpop.f32.mrb[0].mxu0
      %v3199 = vpop.f32.mrb[0].mxu0
      %v3200 = vadd.f32 0.0, %v3199
      %v3201 = vpop.f32.mrb[0].mxu0
      %3202 = vdwg.mxu0
      %v3203 = vadd.f32 %v2631, %v3061
      %v3204 = vadd.f32 %v2632, %v3064
      %v3205 = vadd.f32 %v2633, %v3069
      %v3206 = vadd.f32 %v2634, %v3072
      %v3207 = vadd.f32 %v2635, %v3077
      %v3208 = vadd.f32 %v2636, %v3080
      %v3209 = vadd.f32 %v2637, %v3085
      %v3210 = vadd.f32 %v2638, %v3088
      %v3211 = vadd.f32 %v2639, %v3093
      %v3212 = vadd.f32 %v2640, %v3096
      %v3213 = vadd.f32 %v2641, %v3101
      %v3214 = vadd.f32 %v2642, %v3104
      %v3215 = vadd.f32 %v2643, %v3109
      %v3216 = vadd.f32 %v2644, %v3112
      %v3217 = vadd.f32 %v2645, %v3117
      %v3218 = vadd.f32 %v2646, %v3120
      %v3219 = vadd.f32 %v2647, %v3125
      %v3220 = vadd.f32 %v2648, %v3128
      %v3221 = vadd.f32 %v2649, %v3133
      %v3222 = vadd.f32 %v2650, %v3136
      %v3223 = vadd.f32 %v2651, %v3141
      %v3224 = vadd.f32 %v2652, %v3144
      %v3225 = vadd.f32 %v2653, %v3149
      %v3226 = vadd.f32 %v2654, %v3152
      %v3227 = vadd.f32 %v2655, %v3157
      %v3228 = vadd.f32 %v2656, %v3160
      %v3229 = vadd.f32 %v2657, %v3165
      %v3230 = vadd.f32 %v2658, %v3168
      %v3231 = vadd.f32 %v2659, %v3173
      %v3232 = vadd.f32 %v2660, %v3176
      %v3233 = vadd.f32 %v2661, %v3181
      %v3234 = vadd.f32 %v2662, %v3184
      %v3235 = vadd.f32 %v2663, %v3189
      %v3236 = vadd.f32 %v2664, %v3192
      %v3237 = vadd.f32 %v2665, %v3197
      %v3238 = vadd.f32 %v2666, %v3200
      %v3239 = vld [vmem:[%s246 + $0x18] sm:$0x8]
      %s3240 = scalar_lea.vmem %s1, 28
      %v3241 = vld [vmem:[%s3240] sm:$0xf]
      %v3243 = vunpack.c.l.b16 %v3239
      %v3244 = vpack.c.b16 %v2744, %v3243
      %vm3245 = vcmask 1044480
      %v3246 = vrot.slane %v3244, 3
      %v3247 = vrot.slane %v2781, 3
      %v3248 = vsel %vm3245, %v3246, %v3247
      %v3249 = vrot.slane %v2782, 3
      %v3250 = vsel %vm3245, %v3247, %v3249
      %v3251 = vrot.slane %v2783, 3
      %v3252 = vsel %vm3245, %v3249, %v3251
      %v3253 = vrot.slane %v2784, 3
      %v3254 = vsel %vm3245, %v3251, %v3253
      %v3255 = vrot.slane %v2785, 3
      %v3256 = vsel %vm3245, %v3253, %v3255
      %v3257 = vrot.slane %v2786, 3
      %v3258 = vsel %vm3245, %v3255, %v3257
      %v3259 = vrot.slane %v2787, 3
      %v3260 = vsel %vm3245, %v3257, %v3259
      %v3261 = vrot.slane %v2788, 3
      %v3262 = vsel %vm3245, %v3259, %v3261
      %v3263 = vrot.slane %v2789, 3
      %v3264 = vsel %vm3245, %v3261, %v3263
      %v3265 = vrot.slane %v2790, 3
      %v3266 = vsel %vm3245, %v3263, %v3265
      %v3267 = vrot.slane %v2791, 3
      %v3268 = vsel %vm3245, %v3265, %v3267
      %v3269 = vrot.slane %v2792, 3
      %v3270 = vsel %vm3245, %v3267, %v3269
      %v3271 = vrot.slane %v2793, 3
      %v3272 = vsel %vm3245, %v3269, %v3271
      %v3273 = vrot.slane %v2794, 3
      %v3274 = vsel %vm3245, %v3271, %v3273
      %v3275 = vrot.slane %v2795, 3
      %v3276 = vsel %vm3245, %v3273, %v3275
      %v3277 = vrot.slane %v2796, 3
      %v3278 = vsel %vm3245, %v3275, %v3277
      %v3279 = vrot.slane %v2797, 3
      %v3280 = vsel %vm3245, %v3277, %v3279
      %v3281 = vrot.slane %v2798, 3
      %v3282 = vsel %vm3245, %v3279, %v3281
      %v3284 = vsel %vm435, %v3248, 0
      %v3287 = vsel %vm435, %v3250, 0
      %v3290 = vsel %vm435, %v3252, 0
      %v3293 = vsel %vm435, %v3254, 0
      %v3296 = vsel %vm435, %v3256, 0
      %v3299 = vsel %vm435, %v3258, 0
      %v3302 = vsel %vm435, %v3260, 0
      %v3305 = vsel %vm435, %v3262, 0
      %v3308 = vsel %vm435, %v3264, 0
      %v3311 = vsel %vm435, %v3266, 0
      %v3314 = vsel %vm435, %v3268, 0
      %v3317 = vsel %vm435, %v3270, 0
      %v3320 = vsel %vm435, %v3272, 0
      %v3323 = vsel %vm435, %v3274, 0
      %v3326 = vsel %vm435, %v3276, 0
      %v3329 = vsel %vm435, %v3278, 0
      %v3332 = vsel %vm435, %v3280, 0
      %v3335 = vsel %vm435, %v3282, 0
      %v3338 = vsel %vm490, %v3241, 0
      %3340 = vmatprep.subr.bf16.mxu0 0
      %3341 = vmatpush1.bf16.msra.mxu0 %v3338
      %3342 = vmatprep.subr.bf16.mxu0 0
      %3343 = vmatpush1.bf16.msra.mxu0 0
      %3344 = vmatprep.subr.bf16.mxu0 0
      %3345 = vmatpush1.bf16.msra.mxu0 0
      %3346 = vmatprep.subr.bf16.mxu0 0
      %3347 = vmatpush1.bf16.msra.mxu0 0
      %3348 = vmatprep.subr.bf16.mxu0 0
      %3349 = vmatpush1.bf16.msra.mxu0 0
      %3350 = vmatprep.subr.bf16.mxu0 0
      %3351 = vmatpush1.bf16.msra.mxu0 0
      %3352 = vmatprep.subr.bf16.mxu0 0
      %3353 = vmatpush1.bf16.msra.mxu0 0
      %3354 = vmatprep.subr.bf16.mxu0 0
      %3355 = vmatpush1.bf16.msra.mxu0 0
      %3356 = vmatprep.subr.bf16.mxu0 0
      %3357 = vmatpush1.bf16.msra.mxu0 0
      %3358 = vmatprep.subr.bf16.mxu0 0
      %3359 = vmatpush1.bf16.msra.mxu0 0
      %3360 = vmatprep.subr.bf16.mxu0 0
      %3361 = vmatpush1.bf16.msra.mxu0 0
      %3362 = vmatprep.subr.bf16.mxu0 0
      %3363 = vmatpush1.bf16.msra.mxu0 0
      %3364 = vmatprep.subr.bf16.mxu0 0
      %3365 = vmatpush1.bf16.msra.mxu0 0
      %3366 = vmatprep.subr.bf16.mxu0 0
      %3367 = vmatpush1.bf16.msra.mxu0 0
      %3368 = vmatprep.subr.bf16.mxu0 0
      %3369 = vmatpush1.bf16.msra.mxu0 0
      %3370 = vmatprep.subr.bf16.mxu0 0
      %3371 = vmatpush1.bf16.msra.mxu0 0
      %3372 = vmatprep.mubr.bf16.mxu0 0
      %3373 = vmatmul.mubr.bf16.gmra.mrb[0].mxu0 %v3284
      %v3374 = vpop.f32.mrb[0].mxu0
      %v3375 = vadd.f32 0.0, %v3374
      %v3376 = vpop.f32.mrb[0].mxu0
      %v3377 = vpop.f32.mrb[0].mxu0
      %v3378 = vadd.f32 0.0, %v3377
      %v3379 = vpop.f32.mrb[0].mxu0
      %3380 = vmatprep.mubr.bf16.mxu0 0
      %3381 = vmatmul.mubr.bf16.gmra.mrb[0].mxu0 %v3287
      %v3382 = vpop.f32.mrb[0].mxu0
      %v3383 = vadd.f32 0.0, %v3382
      %v3384 = vpop.f32.mrb[0].mxu0
      %v3385 = vpop.f32.mrb[0].mxu0
      %v3386 = vadd.f32 0.0, %v3385
      %v3387 = vpop.f32.mrb[0].mxu0
      %3388 = vmatprep.mubr.bf16.mxu0 0
      %3389 = vmatmul.mubr.bf16.gmra.mrb[0].mxu0 %v3290
      %v3390 = vpop.f32.mrb[0].mxu0
      %v3391 = vadd.f32 0.0, %v3390
      %v3392 = vpop.f32.mrb[0].mxu0
      %v3393 = vpop.f32.mrb[0].mxu0
      %v3394 = vadd.f32 0.0, %v3393
      %v3395 = vpop.f32.mrb[0].mxu0
      %3396 = vmatprep.mubr.bf16.mxu0 0
      %3397 = vmatmul.mubr.bf16.gmra.mrb[0].mxu0 %v3293
      %v3398 = vpop.f32.mrb[0].mxu0
      %v3399 = vadd.f32 0.0, %v3398
      %v3400 = vpop.f32.mrb[0].mxu0
      %v3401 = vpop.f32.mrb[0].mxu0
      %v3402 = vadd.f32 0.0, %v3401
      %v3403 = vpop.f32.mrb[0].mxu0
      %3404 = vmatprep.mubr.bf16.mxu0 0
      %3405 = vmatmul.mubr.bf16.gmra.mrb[0].mxu0 %v3296
      %v3406 = vpop.f32.mrb[0].mxu0
      %v3407 = vadd.f32 0.0, %v3406
      %v3408 = vpop.f32.mrb[0].mxu0
      %v3409 = vpop.f32.mrb[0].mxu0
      %v3410 = vadd.f32 0.0, %v3409
      %v3411 = vpop.f32.mrb[0].mxu0
      %3412 = vmatprep.mubr.bf16.mxu0 0
      %3413 = vmatmul.mubr.bf16.gmra.mrb[0].mxu0 %v3299
      %v3414 = vpop.f32.mrb[0].mxu0
      %v3415 = vadd.f32 0.0, %v3414
      %v3416 = vpop.f32.mrb[0].mxu0
      %v3417 = vpop.f32.mrb[0].mxu0
      %v3418 = vadd.f32 0.0, %v3417
      %v3419 = vpop.f32.mrb[0].mxu0
      %3420 = vmatprep.mubr.bf16.mxu0 0
      %3421 = vmatmul.mubr.bf16.gmra.mrb[0].mxu0 %v3302
      %v3422 = vpop.f32.mrb[0].mxu0
      %v3423 = vadd.f32 0.0, %v3422
      %v3424 = vpop.f32.mrb[0].mxu0
      %v3425 = vpop.f32.mrb[0].mxu0
      %v3426 = vadd.f32 0.0, %v3425
      %v3427 = vpop.f32.mrb[0].mxu0
      %3428 = vmatprep.mubr.bf16.mxu0 0
      %3429 = vmatmul.mubr.bf16.gmra.mrb[0].mxu0 %v3305
      %v3430 = vpop.f32.mrb[0].mxu0
      %v3431 = vadd.f32 0.0, %v3430
      %v3432 = vpop.f32.mrb[0].mxu0
      %v3433 = vpop.f32.mrb[0].mxu0
      %v3434 = vadd.f32 0.0, %v3433
      %v3435 = vpop.f32.mrb[0].mxu0
      %3436 = vmatprep.mubr.bf16.mxu0 0
      %3437 = vmatmul.mubr.bf16.gmra.mrb[0].mxu0 %v3308
      %v3438 = vpop.f32.mrb[0].mxu0
      %v3439 = vadd.f32 0.0, %v3438
      %v3440 = vpop.f32.mrb[0].mxu0
      %v3441 = vpop.f32.mrb[0].mxu0
      %v3442 = vadd.f32 0.0, %v3441
      %v3443 = vpop.f32.mrb[0].mxu0
      %3444 = vmatprep.mubr.bf16.mxu0 0
      %3445 = vmatmul.mubr.bf16.gmra.mrb[0].mxu0 %v3311
      %v3446 = vpop.f32.mrb[0].mxu0
      %v3447 = vadd.f32 0.0, %v3446
      %v3448 = vpop.f32.mrb[0].mxu0
      %v3449 = vpop.f32.mrb[0].mxu0
      %v3450 = vadd.f32 0.0, %v3449
      %v3451 = vpop.f32.mrb[0].mxu0
      %3452 = vmatprep.mubr.bf16.mxu0 0
      %3453 = vmatmul.mubr.bf16.gmra.mrb[0].mxu0 %v3314
      %v3454 = vpop.f32.mrb[0].mxu0
      %v3455 = vadd.f32 0.0, %v3454
      %v3456 = vpop.f32.mrb[0].mxu0
      %v3457 = vpop.f32.mrb[0].mxu0
      %v3458 = vadd.f32 0.0, %v3457
      %v3459 = vpop.f32.mrb[0].mxu0
      %3460 = vmatprep.mubr.bf16.mxu0 0
      %3461 = vmatmul.mubr.bf16.gmra.mrb[0].mxu0 %v3317
      %v3462 = vpop.f32.mrb[0].mxu0
      %v3463 = vadd.f32 0.0, %v3462
      %v3464 = vpop.f32.mrb[0].mxu0
      %v3465 = vpop.f32.mrb[0].mxu0
      %v3466 = vadd.f32 0.0, %v3465
      %v3467 = vpop.f32.mrb[0].mxu0
      %3468 = vmatprep.mubr.bf16.mxu0 0
      %3469 = vmatmul.mubr.bf16.gmra.mrb[0].mxu0 %v3320
      %v3470 = vpop.f32.mrb[0].mxu0
      %v3471 = vadd.f32 0.0, %v3470
      %v3472 = vpop.f32.mrb[0].mxu0
      %v3473 = vpop.f32.mrb[0].mxu0
      %v3474 = vadd.f32 0.0, %v3473
      %v3475 = vpop.f32.mrb[0].mxu0
      %3476 = vmatprep.mubr.bf16.mxu0 0
      %3477 = vmatmul.mubr.bf16.gmra.mrb[0].mxu0 %v3323
      %v3478 = vpop.f32.mrb[0].mxu0
      %v3479 = vadd.f32 0.0, %v3478
      %v3480 = vpop.f32.mrb[0].mxu0
      %v3481 = vpop.f32.mrb[0].mxu0
      %v3482 = vadd.f32 0.0, %v3481
      %v3483 = vpop.f32.mrb[0].mxu0
      %3484 = vmatprep.mubr.bf16.mxu0 0
      %3485 = vmatmul.mubr.bf16.gmra.mrb[0].mxu0 %v3326
      %v3486 = vpop.f32.mrb[0].mxu0
      %v3487 = vadd.f32 0.0, %v3486
      %v3488 = vpop.f32.mrb[0].mxu0
      %v3489 = vpop.f32.mrb[0].mxu0
      %v3490 = vadd.f32 0.0, %v3489
      %v3491 = vpop.f32.mrb[0].mxu0
      %3492 = vmatprep.mubr.bf16.mxu0 0
      %3493 = vmatmul.mubr.bf16.gmra.mrb[0].mxu0 %v3329
      %v3494 = vpop.f32.mrb[0].mxu0
      %v3495 = vadd.f32 0.0, %v3494
      %v3496 = vpop.f32.mrb[0].mxu0
      %v3497 = vpop.f32.mrb[0].mxu0
      %v3498 = vadd.f32 0.0, %v3497
      %v3499 = vpop.f32.mrb[0].mxu0
      %3500 = vmatprep.mubr.bf16.mxu0 0
      %3501 = vmatmul.mubr.bf16.gmra.mrb[0].mxu0 %v3332
      %v3502 = vpop.f32.mrb[0].mxu0
      %v3503 = vadd.f32 0.0, %v3502
      %v3504 = vpop.f32.mrb[0].mxu0
      %v3505 = vpop.f32.mrb[0].mxu0
      %v3506 = vadd.f32 0.0, %v3505
      %v3507 = vpop.f32.mrb[0].mxu0
      %3508 = vmatprep.mubr.bf16.mxu0 0
      %3509 = vmatmul.mubr.bf16.gmra.mrb[0].mxu0 %v3335
      %v3510 = vpop.f32.mrb[0].mxu0
      %v3511 = vadd.f32 0.0, %v3510
      %v3512 = vpop.f32.mrb[0].mxu0
      %v3513 = vpop.f32.mrb[0].mxu0
      %v3514 = vadd.f32 0.0, %v3513
      %v3515 = vpop.f32.mrb[0].mxu0
      %3516 = vdwg.mxu0
      %v3517 = vadd.f32 %v3203, %v3375
      %v3518 = vadd.f32 %v3204, %v3378
      %v3519 = vadd.f32 %v3205, %v3383
      %v3520 = vadd.f32 %v3206, %v3386
      %v3521 = vadd.f32 %v3207, %v3391
      %v3522 = vadd.f32 %v3208, %v3394
      %v3523 = vadd.f32 %v3209, %v3399
      %v3524 = vadd.f32 %v3210, %v3402
      %v3525 = vadd.f32 %v3211, %v3407
      %v3526 = vadd.f32 %v3212, %v3410
      %v3527 = vadd.f32 %v3213, %v3415
      %v3528 = vadd.f32 %v3214, %v3418
      %v3529 = vadd.f32 %v3215, %v3423
      %v3530 = vadd.f32 %v3216, %v3426
      %v3531 = vadd.f32 %v3217, %v3431
      %v3532 = vadd.f32 %v3218, %v3434
      %v3533 = vadd.f32 %v3219, %v3439
      %v3534 = vadd.f32 %v3220, %v3442
      %v3535 = vadd.f32 %v3221, %v3447
      %v3536 = vadd.f32 %v3222, %v3450
      %v3537 = vadd.f32 %v3223, %v3455
      %v3538 = vadd.f32 %v3224, %v3458
      %v3539 = vadd.f32 %v3225, %v3463
      %v3540 = vadd.f32 %v3226, %v3466
      %v3541 = vadd.f32 %v3227, %v3471
      %v3542 = vadd.f32 %v3228, %v3474
      %v3543 = vadd.f32 %v3229, %v3479
      %v3544 = vadd.f32 %v3230, %v3482
      %v3545 = vadd.f32 %v3231, %v3487
      %v3546 = vadd.f32 %v3232, %v3490
      %v3547 = vadd.f32 %v3233, %v3495
      %v3548 = vadd.f32 %v3234, %v3498
      %v3549 = vadd.f32 %v3235, %v3503
      %v3550 = vadd.f32 %v3236, %v3506
      %v3551 = vadd.f32 %v3237, %v3511
      %v3552 = vadd.f32 %v3238, %v3514
      %v3553 = vld [vmem:[%s246 + $0xa8] sm:$0xf]
      %s3554 = scalar_lea.vmem %s1, 32
      %v3555 = vld [vmem:[%s3554] sm:$0xf]
      %v3557 = vunpack.c.l.b16 %v3553
      %v3558 = vpack.c.b16 %v3557, %v3557
      %vm3559 = vsmask.f32 4352
      %v3561 = vshrl.u32 %v3244, 16
      %v3563 = vrot.slane %v3561, 3
      %v3564 = vshll.u32 %v3244, 16
      %v3566 = vrot.slane %v3564, 4
      %v3567 = vor.u32 %v3563, %v3566
      %v3568 = vrot.slane %v2808, 3
      %v3569 = vrot.slane %v2811, 4
      %v3570 = vor.u32 %v3568, %v3569
      %v3571 = vsel %vm3559, %v3567, %v3570
      %v3572 = vrot.slane %v2817, 3
      %v3573 = vrot.slane %v2820, 4
      %v3574 = vor.u32 %v3572, %v3573
      %v3575 = vsel %vm3559, %v3570, %v3574
      %v3576 = vrot.slane %v2826, 3
      %v3577 = vrot.slane %v2829, 4
      %v3578 = vor.u32 %v3576, %v3577
      %v3579 = vsel %vm3559, %v3574, %v3578
      %v3580 = vrot.slane %v2835, 3
      %v3581 = vrot.slane %v2838, 4
      %v3582 = vor.u32 %v3580, %v3581
      %v3583 = vsel %vm3559, %v3578, %v3582
      %v3584 = vrot.slane %v2844, 3
      %v3585 = vrot.slane %v2847, 4
      %v3586 = vor.u32 %v3584, %v3585
      %v3587 = vsel %vm3559, %v3582, %v3586
      %v3588 = vrot.slane %v2853, 3
      %v3589 = vrot.slane %v2856, 4
      %v3590 = vor.u32 %v3588, %v3589
      %v3591 = vsel %vm3559, %v3586, %v3590
      %v3592 = vrot.slane %v2862, 3
      %v3593 = vrot.slane %v2865, 4
      %v3594 = vor.u32 %v3592, %v3593
      %v3595 = vsel %vm3559, %v3590, %v3594
      %v3596 = vrot.slane %v2871, 3
      %v3597 = vrot.slane %v2874, 4
      %v3598 = vor.u32 %v3596, %v3597
      %v3599 = vsel %vm3559, %v3594, %v3598
      %v3600 = vrot.slane %v2880, 3
      %v3601 = vrot.slane %v2883, 4
      %v3602 = vor.u32 %v3600, %v3601
      %v3603 = vsel %vm3559, %v3598, %v3602
      %v3604 = vrot.slane %v2889, 3
      %v3605 = vrot.slane %v2892, 4
      %v3606 = vor.u32 %v3604, %v3605
      %v3607 = vsel %vm3559, %v3602, %v3606
      %v3608 = vrot.slane %v2898, 3
      %v3609 = vrot.slane %v2901, 4
      %v3610 = vor.u32 %v3608, %v3609
      %v3611 = vsel %vm3559, %v3606, %v3610
      %v3612 = vrot.slane %v2907, 3
      %v3613 = vrot.slane %v2910, 4
      %v3614 = vor.u32 %v3612, %v3613
      %v3615 = vsel %vm3559, %v3610, %v3614
      %v3616 = vrot.slane %v2916, 3
      %v3617 = vrot.slane %v2919, 4
      %v3618 = vor.u32 %v3616, %v3617
      %v3619 = vsel %vm3559, %v3614, %v3618
      %v3620 = vrot.slane %v2925, 3
      %v3621 = vrot.slane %v2928, 4
      %v3622 = vor.u32 %v3620, %v3621
      %v3623 = vsel %vm3559, %v3618, %v3622
      %v3624 = vrot.slane %v2934, 3
      %v3625 = vrot.slane %v2937, 4
      %v3626 = vor.u32 %v3624, %v3625
      %v3627 = vsel %vm3559, %v3622, %v3626
      %v3628 = vrot.slane %v2943, 3
      %v3629 = vrot.slane %v2946, 4
      %v3630 = vor.u32 %v3628, %v3629
      %v3631 = vsel %vm3559, %v3626, %v3630
      %v3632 = vrot.slane %v2952, 3
      %v3633 = vrot.slane %v2955, 4
      %v3634 = vor.u32 %v3632, %v3633
      %v3635 = vsel %vm3559, %v3630, %v3634
      %v3637 = vshrl.u32 %v3558, 16
      %v3639 = vrot.slane %v3637, 3
      %v3640 = vshll.u32 %v3558, 16
      %v3642 = vrot.slane %v3640, 4
      %v3643 = vor.u32 %v3639, %v3642
      %v3644 = vsel %vm3559, %v3634, %v3643
      %v3646 = vsel %vm435, %v3571, 0
      %v3649 = vsel %vm435, %v3575, 0
      %v3652 = vsel %vm435, %v3579, 0
      %v3655 = vsel %vm435, %v3583, 0
      %v3658 = vsel %vm435, %v3587, 0
      %v3661 = vsel %vm435, %v3591, 0
      %v3664 = vsel %vm435, %v3595, 0
      %v3667 = vsel %vm435, %v3599, 0
      %v3670 = vsel %vm435, %v3603, 0
      %v3673 = vsel %vm435, %v3607, 0
      %v3676 = vsel %vm435, %v3611, 0
      %v3679 = vsel %vm435, %v3615, 0
      %v3682 = vsel %vm435, %v3619, 0
      %v3685 = vsel %vm435, %v3623, 0
      %v3688 = vsel %vm435, %v3627, 0
      %v3691 = vsel %vm435, %v3631, 0
      %v3694 = vsel %vm435, %v3635, 0
      %v3697 = vsel %vm435, %v3644, 0
      %v3700 = vsel %vm490, %v3555, 0
      %3702 = vmatprep.subr.bf16.mxu0 0
      %3703 = vmatpush1.bf16.msra.mxu0 %v3700
      %3704 = vmatprep.subr.bf16.mxu0 0
      %3705 = vmatpush1.bf16.msra.mxu0 0
      %3706 = vmatprep.subr.bf16.mxu0 0
      %3707 = vmatpush1.bf16.msra.mxu0 0
      %3708 = vmatprep.subr.bf16.mxu0 0
      %3709 = vmatpush1.bf16.msra.mxu0 0
      %3710 = vmatprep.subr.bf16.mxu0 0
      %3711 = vmatpush1.bf16.msra.mxu0 0
      %3712 = vmatprep.subr.bf16.mxu0 0
      %3713 = vmatpush1.bf16.msra.mxu0 0
      %3714 = vmatprep.subr.bf16.mxu0 0
      %3715 = vmatpush1.bf16.msra.mxu0 0
      %3716 = vmatprep.subr.bf16.mxu0 0
      %3717 = vmatpush1.bf16.msra.mxu0 0
      %3718 = vmatprep.subr.bf16.mxu0 0
      %3719 = vmatpush1.bf16.msra.mxu0 0
      %3720 = vmatprep.subr.bf16.mxu0 0
      %3721 = vmatpush1.bf16.msra.mxu0 0
      %3722 = vmatprep.subr.bf16.mxu0 0
      %3723 = vmatpush1.bf16.msra.mxu0 0
      %3724 = vmatprep.subr.bf16.mxu0 0
      %3725 = vmatpush1.bf16.msra.mxu0 0
      %3726 = vmatprep.subr.bf16.mxu0 0
      %3727 = vmatpush1.bf16.msra.mxu0 0
      %3728 = vmatprep.subr.bf16.mxu0 0
      %3729 = vmatpush1.bf16.msra.mxu0 0
      %3730 = vmatprep.subr.bf16.mxu0 0
      %3731 = vmatpush1.bf16.msra.mxu0 0
      %3732 = vmatprep.subr.bf16.mxu0 0
      %3733 = vmatpush1.bf16.msra.mxu0 0
      %3734 = vmatprep.mubr.bf16.mxu0 0
      %3735 = vmatmul.mubr.bf16.gmra.mrb[0].mxu0 %v3646
      %v3736 = vpop.f32.mrb[0].mxu0
      %v3737 = vadd.f32 0.0, %v3736
      %v3738 = vpop.f32.mrb[0].mxu0
      %v3739 = vpop.f32.mrb[0].mxu0
      %v3740 = vadd.f32 0.0, %v3739
      %v3741 = vpop.f32.mrb[0].mxu0
      %3742 = vmatprep.mubr.bf16.mxu0 0
      %3743 = vmatmul.mubr.bf16.gmra.mrb[0].mxu0 %v3649
      %v3744 = vpop.f32.mrb[0].mxu0
      %v3745 = vadd.f32 0.0, %v3744
      %v3746 = vpop.f32.mrb[0].mxu0
      %v3747 = vpop.f32.mrb[0].mxu0
      %v3748 = vadd.f32 0.0, %v3747
      %v3749 = vpop.f32.mrb[0].mxu0
      %3750 = vmatprep.mubr.bf16.mxu0 0
      %3751 = vmatmul.mubr.bf16.gmra.mrb[0].mxu0 %v3652
      %v3752 = vpop.f32.mrb[0].mxu0
      %v3753 = vadd.f32 0.0, %v3752
      %v3754 = vpop.f32.mrb[0].mxu0
      %v3755 = vpop.f32.mrb[0].mxu0
      %v3756 = vadd.f32 0.0, %v3755
      %v3757 = vpop.f32.mrb[0].mxu0
      %3758 = vmatprep.mubr.bf16.mxu0 0
      %3759 = vmatmul.mubr.bf16.gmra.mrb[0].mxu0 %v3655
      %v3760 = vpop.f32.mrb[0].mxu0
      %v3761 = vadd.f32 0.0, %v3760
      %v3762 = vpop.f32.mrb[0].mxu0
      %v3763 = vpop.f32.mrb[0].mxu0
      %v3764 = vadd.f32 0.0, %v3763
      %v3765 = vpop.f32.mrb[0].mxu0
      %3766 = vmatprep.mubr.bf16.mxu0 0
      %3767 = vmatmul.mubr.bf16.gmra.mrb[0].mxu0 %v3658
      %v3768 = vpop.f32.mrb[0].mxu0
      %v3769 = vadd.f32 0.0, %v3768
      %v3770 = vpop.f32.mrb[0].mxu0
      %v3771 = vpop.f32.mrb[0].mxu0
      %v3772 = vadd.f32 0.0, %v3771
      %v3773 = vpop.f32.mrb[0].mxu0
      %3774 = vmatprep.mubr.bf16.mxu0 0
      %3775 = vmatmul.mubr.bf16.gmra.mrb[0].mxu0 %v3661
      %v3776 = vpop.f32.mrb[0].mxu0
      %v3777 = vadd.f32 0.0, %v3776
      %v3778 = vpop.f32.mrb[0].mxu0
      %v3779 = vpop.f32.mrb[0].mxu0
      %v3780 = vadd.f32 0.0, %v3779
      %v3781 = vpop.f32.mrb[0].mxu0
      %3782 = vmatprep.mubr.bf16.mxu0 0
      %3783 = vmatmul.mubr.bf16.gmra.mrb[0].mxu0 %v3664
      %v3784 = vpop.f32.mrb[0].mxu0
      %v3785 = vadd.f32 0.0, %v3784
      %v3786 = vpop.f32.mrb[0].mxu0
      %v3787 = vpop.f32.mrb[0].mxu0
      %v3788 = vadd.f32 0.0, %v3787
      %v3789 = vpop.f32.mrb[0].mxu0
      %3790 = vmatprep.mubr.bf16.mxu0 0
      %3791 = vmatmul.mubr.bf16.gmra.mrb[0].mxu0 %v3667
      %v3792 = vpop.f32.mrb[0].mxu0
      %v3793 = vadd.f32 0.0, %v3792
      %v3794 = vpop.f32.mrb[0].mxu0
      %v3795 = vpop.f32.mrb[0].mxu0
      %v3796 = vadd.f32 0.0, %v3795
      %v3797 = vpop.f32.mrb[0].mxu0
      %3798 = vmatprep.mubr.bf16.mxu0 0
      %3799 = vmatmul.mubr.bf16.gmra.mrb[0].mxu0 %v3670
      %v3800 = vpop.f32.mrb[0].mxu0
      %v3801 = vadd.f32 0.0, %v3800
      %v3802 = vpop.f32.mrb[0].mxu0
      %v3803 = vpop.f32.mrb[0].mxu0
      %v3804 = vadd.f32 0.0, %v3803
      %v3805 = vpop.f32.mrb[0].mxu0
      %3806 = vmatprep.mubr.bf16.mxu0 0
      %3807 = vmatmul.mubr.bf16.gmra.mrb[0].mxu0 %v3673
      %v3808 = vpop.f32.mrb[0].mxu0
      %v3809 = vadd.f32 0.0, %v3808
      %v3810 = vpop.f32.mrb[0].mxu0
      %v3811 = vpop.f32.mrb[0].mxu0
      %v3812 = vadd.f32 0.0, %v3811
      %v3813 = vpop.f32.mrb[0].mxu0
      %3814 = vmatprep.mubr.bf16.mxu0 0
      %3815 = vmatmul.mubr.bf16.gmra.mrb[0].mxu0 %v3676
      %v3816 = vpop.f32.mrb[0].mxu0
      %v3817 = vadd.f32 0.0, %v3816
      %v3818 = vpop.f32.mrb[0].mxu0
      %v3819 = vpop.f32.mrb[0].mxu0
      %v3820 = vadd.f32 0.0, %v3819
      %v3821 = vpop.f32.mrb[0].mxu0
      %3822 = vmatprep.mubr.bf16.mxu0 0
      %3823 = vmatmul.mubr.bf16.gmra.mrb[0].mxu0 %v3679
      %v3824 = vpop.f32.mrb[0].mxu0
      %v3825 = vadd.f32 0.0, %v3824
      %v3826 = vpop.f32.mrb[0].mxu0
      %v3827 = vpop.f32.mrb[0].mxu0
      %v3828 = vadd.f32 0.0, %v3827
      %v3829 = vpop.f32.mrb[0].mxu0
      %3830 = vmatprep.mubr.bf16.mxu0 0
      %3831 = vmatmul.mubr.bf16.gmra.mrb[0].mxu0 %v3682
      %v3832 = vpop.f32.mrb[0].mxu0
      %v3833 = vadd.f32 0.0, %v3832
      %v3834 = vpop.f32.mrb[0].mxu0
      %v3835 = vpop.f32.mrb[0].mxu0
      %v3836 = vadd.f32 0.0, %v3835
      %v3837 = vpop.f32.mrb[0].mxu0
      %3838 = vmatprep.mubr.bf16.mxu0 0
      %3839 = vmatmul.mubr.bf16.gmra.mrb[0].mxu0 %v3685
      %v3840 = vpop.f32.mrb[0].mxu0
      %v3841 = vadd.f32 0.0, %v3840
      %v3842 = vpop.f32.mrb[0].mxu0
      %v3843 = vpop.f32.mrb[0].mxu0
      %v3844 = vadd.f32 0.0, %v3843
      %v3845 = vpop.f32.mrb[0].mxu0
      %3846 = vmatprep.mubr.bf16.mxu0 0
      %3847 = vmatmul.mubr.bf16.gmra.mrb[0].mxu0 %v3688
      %v3848 = vpop.f32.mrb[0].mxu0
      %v3849 = vadd.f32 0.0, %v3848
      %v3850 = vpop.f32.mrb[0].mxu0
      %v3851 = vpop.f32.mrb[0].mxu0
      %v3852 = vadd.f32 0.0, %v3851
      %v3853 = vpop.f32.mrb[0].mxu0
      %3854 = vmatprep.mubr.bf16.mxu0 0
      %3855 = vmatmul.mubr.bf16.gmra.mrb[0].mxu0 %v3691
      %v3856 = vpop.f32.mrb[0].mxu0
      %v3857 = vadd.f32 0.0, %v3856
      %v3858 = vpop.f32.mrb[0].mxu0
      %v3859 = vpop.f32.mrb[0].mxu0
      %v3860 = vadd.f32 0.0, %v3859
      %v3861 = vpop.f32.mrb[0].mxu0
      %3862 = vmatprep.mubr.bf16.mxu0 0
      %3863 = vmatmul.mubr.bf16.gmra.mrb[0].mxu0 %v3694
      %v3864 = vpop.f32.mrb[0].mxu0
      %v3865 = vadd.f32 0.0, %v3864
      %v3866 = vpop.f32.mrb[0].mxu0
      %v3867 = vpop.f32.mrb[0].mxu0
      %v3868 = vadd.f32 0.0, %v3867
      %v3869 = vpop.f32.mrb[0].mxu0
      %3870 = vmatprep.mubr.bf16.mxu0 0
      %3871 = vmatmul.mubr.bf16.gmra.mrb[0].mxu0 %v3697
      %v3872 = vpop.f32.mrb[0].mxu0
      %v3873 = vadd.f32 0.0, %v3872
      %v3874 = vpop.f32.mrb[0].mxu0
      %v3875 = vpop.f32.mrb[0].mxu0
      %v3876 = vadd.f32 0.0, %v3875
      %v3877 = vpop.f32.mrb[0].mxu0
      %3878 = vdwg.mxu0
      %v3879 = vadd.f32 %v3517, %v3737
      %v3880 = vadd.f32 %v3518, %v3740
      %v3881 = vadd.f32 %v3519, %v3745
      %v3882 = vadd.f32 %v3520, %v3748
      %v3883 = vadd.f32 %v3521, %v3753
      %v3884 = vadd.f32 %v3522, %v3756
      %v3885 = vadd.f32 %v3523, %v3761
      %v3886 = vadd.f32 %v3524, %v3764
      %v3887 = vadd.f32 %v3525, %v3769
      %v3888 = vadd.f32 %v3526, %v3772
      %v3889 = vadd.f32 %v3527, %v3777
      %v3890 = vadd.f32 %v3528, %v3780
      %v3891 = vadd.f32 %v3529, %v3785
      %v3892 = vadd.f32 %v3530, %v3788
      %v3893 = vadd.f32 %v3531, %v3793
      %v3894 = vadd.f32 %v3532, %v3796
      %v3895 = vadd.f32 %v3533, %v3801
      %v3896 = vadd.f32 %v3534, %v3804
      %v3897 = vadd.f32 %v3535, %v3809
      %v3898 = vadd.f32 %v3536, %v3812
      %v3899 = vadd.f32 %v3537, %v3817
      %v3900 = vadd.f32 %v3538, %v3820
      %v3901 = vadd.f32 %v3539, %v3825
      %v3902 = vadd.f32 %v3540, %v3828
      %v3903 = vadd.f32 %v3541, %v3833
      %v3904 = vadd.f32 %v3542, %v3836
      %v3905 = vadd.f32 %v3543, %v3841
      %v3906 = vadd.f32 %v3544, %v3844
      %v3907 = vadd.f32 %v3545, %v3849
      %v3908 = vadd.f32 %v3546, %v3852
      %v3909 = vadd.f32 %v3547, %v3857
      %v3910 = vadd.f32 %v3548, %v3860
      %v3911 = vadd.f32 %v3549, %v3865
      %v3912 = vadd.f32 %v3550, %v3868
      %v3913 = vadd.f32 %v3551, %v3873
      %v3914 = vadd.f32 %v3552, %v3876
      %v3915 = vld [vmem:[%s249] sm:$0x1]
      %v3917 = vlaneseq
      %v3918 = vshrl.u32 %v3917, 7
      %v3919 = vsub.s32 0, %v3918
      %v3920 = vrot.slane %v3915, %v3919
      %v3922 = vmul.f32 %v3879, %v3920
      %v3923 = vmul.f32 %v3880, %v3920
      %v3924 = vmul.f32 %v3881, %v3920
      %v3925 = vmul.f32 %v3882, %v3920
      %v3926 = vmul.f32 %v3883, %v3920
      %v3927 = vmul.f32 %v3884, %v3920
      %v3928 = vmul.f32 %v3885, %v3920
      %v3929 = vmul.f32 %v3886, %v3920
      %v3930 = vmul.f32 %v3887, %v3920
      %v3931 = vmul.f32 %v3888, %v3920
      %v3932 = vmul.f32 %v3889, %v3920
      %v3933 = vmul.f32 %v3890, %v3920
      %v3934 = vmul.f32 %v3891, %v3920
      %v3935 = vmul.f32 %v3892, %v3920
      %v3936 = vmul.f32 %v3893, %v3920
      %v3937 = vmul.f32 %v3894, %v3920
      %v3938 = vmul.f32 %v3895, %v3920
      %v3939 = vmul.f32 %v3896, %v3920
      %v3940 = vmul.f32 %v3897, %v3920
      %v3941 = vmul.f32 %v3898, %v3920
      %v3942 = vmul.f32 %v3899, %v3920
      %v3943 = vmul.f32 %v3900, %v3920
      %v3944 = vmul.f32 %v3901, %v3920
      %v3945 = vmul.f32 %v3902, %v3920
      %v3946 = vmul.f32 %v3903, %v3920
      %v3947 = vmul.f32 %v3904, %v3920
      %v3948 = vmul.f32 %v3905, %v3920
      %v3949 = vmul.f32 %v3906, %v3920
      %v3950 = vmul.f32 %v3907, %v3920
      %v3951 = vmul.f32 %v3908, %v3920
      %v3952 = vmul.f32 %v3909, %v3920
      %v3953 = vmul.f32 %v3910, %v3920
      %v3954 = vmul.f32 %v3911, %v3920
      %v3955 = vmul.f32 %v3912, %v3920
      %v3956 = vmul.f32 %v3913, %v3920
      %v3957 = vmul.f32 %v3914, %v3920
      %v3958 = vld [vmem:[%s252] sm:$0x1]
      %v3960 = vlaneseq
      %v3961 = vshrl.u32 %v3960, 7
      %v3962 = vsub.s32 0, %v3961
      %v3963 = vrot.slane %v3958, %v3962
      %v3965 = vadd.f32 %v3922, %v3963
      %v3966 = vadd.f32 %v3923, %v3963
      %v3967 = vadd.f32 %v3924, %v3963
      %v3968 = vadd.f32 %v3925, %v3963
      %v3969 = vadd.f32 %v3926, %v3963
      %v3970 = vadd.f32 %v3927, %v3963
      %v3971 = vadd.f32 %v3928, %v3963
      %v3972 = vadd.f32 %v3929, %v3963
      %v3973 = vadd.f32 %v3930, %v3963
      %v3974 = vadd.f32 %v3931, %v3963
      %v3975 = vadd.f32 %v3932, %v3963
      %v3976 = vadd.f32 %v3933, %v3963
      %v3977 = vadd.f32 %v3934, %v3963
      %v3978 = vadd.f32 %v3935, %v3963
      %v3979 = vadd.f32 %v3936, %v3963
      %v3980 = vadd.f32 %v3937, %v3963
      %v3981 = vadd.f32 %v3938, %v3963
      %v3982 = vadd.f32 %v3939, %v3963
      %v3983 = vadd.f32 %v3940, %v3963
      %v3984 = vadd.f32 %v3941, %v3963
      %v3985 = vadd.f32 %v3942, %v3963
      %v3986 = vadd.f32 %v3943, %v3963
      %v3987 = vadd.f32 %v3944, %v3963
      %v3988 = vadd.f32 %v3945, %v3963
      %v3989 = vadd.f32 %v3946, %v3963
      %v3990 = vadd.f32 %v3947, %v3963
      %v3991 = vadd.f32 %v3948, %v3963
      %v3992 = vadd.f32 %v3949, %v3963
      %v3993 = vadd.f32 %v3950, %v3963
      %v3994 = vadd.f32 %v3951, %v3963
      %v3995 = vadd.f32 %v3952, %v3963
      %v3996 = vadd.f32 %v3953, %v3963
      %v3997 = vadd.f32 %v3954, %v3963
      %v3998 = vadd.f32 %v3955, %v3963
      %v3999 = vadd.f32 %v3956, %v3963
      %v4000 = vadd.f32 %v3957, %v3963
      %v4001 = vmul.f32 %v3965, 0.5
      %v4002 = vmul.f32 %v3966, 0.5
      %v4003 = vmul.f32 %v3967, 0.5
      %v4004 = vmul.f32 %v3968, 0.5
      %v4005 = vmul.f32 %v3969, 0.5
      %v4006 = vmul.f32 %v3970, 0.5
      %v4007 = vmul.f32 %v3971, 0.5
      %v4008 = vmul.f32 %v3972, 0.5
      %v4009 = vmul.f32 %v3973, 0.5
      %v4010 = vmul.f32 %v3974, 0.5
      %v4011 = vmul.f32 %v3975, 0.5
      %v4012 = vmul.f32 %v3976, 0.5
      %v4013 = vmul.f32 %v3977, 0.5
      %v4014 = vmul.f32 %v3978, 0.5
      %v4015 = vmul.f32 %v3979, 0.5
      %v4016 = vmul.f32 %v3980, 0.5
      %v4017 = vmul.f32 %v3981, 0.5
      %v4018 = vmul.f32 %v3982, 0.5
      %v4019 = vmul.f32 %v3983, 0.5
      %v4020 = vmul.f32 %v3984, 0.5
      %v4021 = vmul.f32 %v3985, 0.5
      %v4022 = vmul.f32 %v3986, 0.5
      %v4023 = vmul.f32 %v3987, 0.5
      %v4024 = vmul.f32 %v3988, 0.5
      %v4025 = vmul.f32 %v3989, 0.5
      %v4026 = vmul.f32 %v3990, 0.5
      %v4027 = vmul.f32 %v3991, 0.5
      %v4028 = vmul.f32 %v3992, 0.5
      %v4029 = vmul.f32 %v3993, 0.5
      %v4030 = vmul.f32 %v3994, 0.5
      %v4031 = vmul.f32 %v3995, 0.5
      %v4032 = vmul.f32 %v3996, 0.5
      %v4033 = vmul.f32 %v3997, 0.5
      %v4034 = vmul.f32 %v3998, 0.5
      %v4035 = vmul.f32 %v3999, 0.5
      %v4036 = vmul.f32 %v4000, 0.5
      %v4037 = vtanh.pop %v4001
      %v4038 = vtanh.pop %v4002
      %v4039 = vtanh.pop %v4003
      %v4040 = vtanh.pop %v4004
      %v4041 = vtanh.pop %v4005
      %v4042 = vtanh.pop %v4006
      %v4043 = vtanh.pop %v4007
      %v4044 = vtanh.pop %v4008
      %v4045 = vtanh.pop %v4009
      %v4046 = vtanh.pop %v4010
      %v4047 = vtanh.pop %v4011
      %v4048 = vtanh.pop %v4012
      %v4049 = vtanh.pop %v4013
      %v4050 = vtanh.pop %v4014
      %v4051 = vtanh.pop %v4015
      %v4052 = vtanh.pop %v4016
      %v4053 = vtanh.pop %v4017
      %v4054 = vtanh.pop %v4018
      %v4055 = vtanh.pop %v4019
      %v4056 = vtanh.pop %v4020
      %v4057 = vtanh.pop %v4021
      %v4058 = vtanh.pop %v4022
      %v4059 = vtanh.pop %v4023
      %v4060 = vtanh.pop %v4024
      %v4061 = vtanh.pop %v4025
      %v4062 = vtanh.pop %v4026
      %v4063 = vtanh.pop %v4027
      %v4064 = vtanh.pop %v4028
      %v4065 = vtanh.pop %v4029
      %v4066 = vtanh.pop %v4030
      %v4067 = vtanh.pop %v4031
      %v4068 = vtanh.pop %v4032
      %v4069 = vtanh.pop %v4033
      %v4070 = vtanh.pop %v4034
      %v4071 = vtanh.pop %v4035
      %v4072 = vtanh.pop %v4036
      %v4073 = vadd.f32 %v4037, 1.0
      %v4074 = vadd.f32 %v4038, 1.0
      %v4075 = vadd.f32 %v4039, 1.0
      %v4076 = vadd.f32 %v4040, 1.0
      %v4077 = vadd.f32 %v4041, 1.0
      %v4078 = vadd.f32 %v4042, 1.0
      %v4079 = vadd.f32 %v4043, 1.0
      %v4080 = vadd.f32 %v4044, 1.0
      %v4081 = vadd.f32 %v4045, 1.0
      %v4082 = vadd.f32 %v4046, 1.0
      %v4083 = vadd.f32 %v4047, 1.0
      %v4084 = vadd.f32 %v4048, 1.0
      %v4085 = vadd.f32 %v4049, 1.0
      %v4086 = vadd.f32 %v4050, 1.0
      %v4087 = vadd.f32 %v4051, 1.0
      %v4088 = vadd.f32 %v4052, 1.0
      %v4089 = vadd.f32 %v4053, 1.0
      %v4090 = vadd.f32 %v4054, 1.0
      %v4091 = vadd.f32 %v4055, 1.0
      %v4092 = vadd.f32 %v4056, 1.0
      %v4093 = vadd.f32 %v4057, 1.0
      %v4094 = vadd.f32 %v4058, 1.0
      %v4095 = vadd.f32 %v4059, 1.0
      %v4096 = vadd.f32 %v4060, 1.0
      %v4097 = vadd.f32 %v4061, 1.0
      %v4098 = vadd.f32 %v4062, 1.0
      %v4099 = vadd.f32 %v4063, 1.0
      %v4100 = vadd.f32 %v4064, 1.0
      %v4101 = vadd.f32 %v4065, 1.0
      %v4102 = vadd.f32 %v4066, 1.0
      %v4103 = vadd.f32 %v4067, 1.0
      %v4104 = vadd.f32 %v4068, 1.0
      %v4105 = vadd.f32 %v4069, 1.0
      %v4106 = vadd.f32 %v4070, 1.0
      %v4107 = vadd.f32 %v4071, 1.0
      %v4108 = vadd.f32 %v4072, 1.0
      %v4109 = vmul.f32 %v4001, %v4073
      %v4110 = vmul.f32 %v4002, %v4074
      %v4111 = vmul.f32 %v4003, %v4075
      %v4112 = vmul.f32 %v4004, %v4076
      %v4113 = vmul.f32 %v4005, %v4077
      %v4114 = vmul.f32 %v4006, %v4078
      %v4115 = vmul.f32 %v4007, %v4079
      %v4116 = vmul.f32 %v4008, %v4080
      %v4117 = vmul.f32 %v4009, %v4081
      %v4118 = vmul.f32 %v4010, %v4082
      %v4119 = vmul.f32 %v4011, %v4083
      %v4120 = vmul.f32 %v4012, %v4084
      %v4121 = vmul.f32 %v4013, %v4085
      %v4122 = vmul.f32 %v4014, %v4086
      %v4123 = vmul.f32 %v4015, %v4087
      %v4124 = vmul.f32 %v4016, %v4088
      %v4125 = vmul.f32 %v4017, %v4089
      %v4126 = vmul.f32 %v4018, %v4090
      %v4127 = vmul.f32 %v4019, %v4091
      %v4128 = vmul.f32 %v4020, %v4092
      %v4129 = vmul.f32 %v4021, %v4093
      %v4130 = vmul.f32 %v4022, %v4094
      %v4131 = vmul.f32 %v4023, %v4095
      %v4132 = vmul.f32 %v4024, %v4096
      %v4133 = vmul.f32 %v4025, %v4097
      %v4134 = vmul.f32 %v4026, %v4098
      %v4135 = vmul.f32 %v4027, %v4099
      %v4136 = vmul.f32 %v4028, %v4100
      %v4137 = vmul.f32 %v4029, %v4101
      %v4138 = vmul.f32 %v4030, %v4102
      %v4139 = vmul.f32 %v4031, %v4103
      %v4140 = vmul.f32 %v4032, %v4104
      %v4141 = vmul.f32 %v4033, %v4105
      %v4142 = vmul.f32 %v4034, %v4106
      %v4143 = vmul.f32 %v4035, %v4107
      %v4144 = vmul.f32 %v4036, %v4108
      %vm4145 = vcmask 130048
      %4146 = vst.msk [vmem:[%s261] sm:$0xff] %vm4145, %v4109
      %4147 = vst.msk [vmem:[%s261 + $0x8] sm:$0xff] %vm4145, %v4110
      %4148 = vst.msk [vmem:[%s261 + $0x10] sm:$0xff] %vm4145, %v4111
      %4149 = vst.msk [vmem:[%s261 + $0x18] sm:$0xff] %vm4145, %v4112
      %4150 = vst.msk [vmem:[%s261 + $0x20] sm:$0xff] %vm4145, %v4113
      %4151 = vst.msk [vmem:[%s261 + $0x28] sm:$0xff] %vm4145, %v4114
      %4152 = vst.msk [vmem:[%s261 + $0x30] sm:$0xff] %vm4145, %v4115
      %4153 = vst.msk [vmem:[%s261 + $0x38] sm:$0xff] %vm4145, %v4116
      %4154 = vst.msk [vmem:[%s261 + $0x40] sm:$0xff] %vm4145, %v4117
      %4155 = vst.msk [vmem:[%s261 + $0x48] sm:$0xff] %vm4145, %v4118
      %4156 = vst.msk [vmem:[%s261 + $0x50] sm:$0xff] %vm4145, %v4119
      %4157 = vst.msk [vmem:[%s261 + $0x58] sm:$0xff] %vm4145, %v4120
      %4158 = vst.msk [vmem:[%s261 + $0x60] sm:$0xff] %vm4145, %v4121
      %4159 = vst.msk [vmem:[%s261 + $0x68] sm:$0xff] %vm4145, %v4122
      %4160 = vst.msk [vmem:[%s261 + $0x70] sm:$0xff] %vm4145, %v4123
      %4161 = vst.msk [vmem:[%s261 + $0x78] sm:$0xff] %vm4145, %v4124
      %4162 = vst.msk [vmem:[%s261 + $0x80] sm:$0xff] %vm4145, %v4125
      %4163 = vst.msk [vmem:[%s261 + $0x88] sm:$0xff] %vm4145, %v4126
      %4164 = vst.msk [vmem:[%s261 + $0x90] sm:$0xff] %vm4145, %v4127
      %4165 = vst.msk [vmem:[%s261 + $0x98] sm:$0xff] %vm4145, %v4128
      %4166 = vst.msk [vmem:[%s261 + $0xa0] sm:$0xff] %vm4145, %v4129
      %4167 = vst.msk [vmem:[%s261 + $0xa8] sm:$0xff] %vm4145, %v4130
      %4168 = vst.msk [vmem:[%s261 + $0xb0] sm:$0xff] %vm4145, %v4131
      %4169 = vst.msk [vmem:[%s261 + $0xb8] sm:$0xff] %vm4145, %v4132
      %4170 = vst.msk [vmem:[%s261 + $0xc0] sm:$0xff] %vm4145, %v4133
      %4171 = vst.msk [vmem:[%s261 + $0xc8] sm:$0xff] %vm4145, %v4134
      %4172 = vst.msk [vmem:[%s261 + $0xd0] sm:$0xff] %vm4145, %v4135
      %4173 = vst.msk [vmem:[%s261 + $0xd8] sm:$0xff] %vm4145, %v4136
      %4174 = vst.msk [vmem:[%s261 + $0xe0] sm:$0xff] %vm4145, %v4137
      %4175 = vst.msk [vmem:[%s261 + $0xe8] sm:$0xff] %vm4145, %v4138
      %4176 = vst.msk [vmem:[%s261 + $0xf0] sm:$0xff] %vm4145, %v4139
      %4177 = vst.msk [vmem:[%s261 + $0xf8] sm:$0xff] %vm4145, %v4140
      %4178 = vst.msk [vmem:[%s261 + $0x100] sm:$0xff] %vm4145, %v4141
      %4179 = vst.msk [vmem:[%s261 + $0x108] sm:$0xff] %vm4145, %v4142
      %4180 = vst.msk [vmem:[%s261 + $0x110] sm:$0xff] %vm4145, %v4143
      %4181 = vst.msk [vmem:[%s261 + $0x118] sm:$0xff] %vm4145, %v4144
      %p4182 = scmp.lt.s32.totalorder %s19, 1
      %s4183 = scalar_select %p4182, %s19, 1
      %p4184 = scmp.lt.s32.totalorder %s20, 3
      %s4185 = scalar_select %p4184, %s20, 3
      %s4186 = smul.addr %s4185, 36
      %s4187 = smul.addr %s4183, 144
      %s4188 = sadd.s32 %s4186, %s4187
      %s4189 = smul.addr %s4188, 8
      %s4190 = scalar_lea.vmem %s4, %s4189
      // Predicated region
      $region37: #{block_forward.3} parent=35 // pred_check
        %p4191 = pneg %p148
      $region38: #{block_forward.3} parent=35 // pred_check_branch
        %4193 = sbr.rel (%p4191) target = $region40
      $region39: #{block_forward.3} parent=35 // pred_region
        _
      $region40: #{block_forward.3} parent=35 // pred_fallthru
        _
    $region36: #{block_forward.3} parent=5 // pred_fallthru
      _
    %p4194 = scmp.le.s32.totalorder 2, %s10
    // Predicated region
    $region41: #{block_forward.3} parent=5 // pred_check
      %p4195 = pneg %p4194
    $region42: #{block_forward.3} parent=5 // pred_check_branch
      %4197 = sbr.rel (%p4195) target = $region44
    $region43: #{block_forward.3} parent=5 // pred_region
      %s4198 = ssub.s32 %s10, 2
      // Predicated region
      $region45: #{block_forward.3} parent=43 // pred_check
        %p4199 = pneg %p154
      $region46: #{block_forward.3} parent=43 // pred_check_branch
        %4201 = sbr.rel (%p4199) target = $region48
      $region47: #{block_forward.3} parent=43 // pred_region
        %p4202 = scmp.lt.s32.totalorder %s21, 1
        %s4203 = scalar_select %p4202, %s21, 1
        %p4204 = scmp.lt.s32.totalorder %s22, 3
        %s4205 = scalar_select %p4204, %s22, 3
        %s4206 = smul.addr %s4205, 36
        %s4207 = smul.addr %s4203, 144
        %s4208 = sadd.s32 %s4206, %s4207
        %s4209 = smul.addr %s4208, 8
        %s4210 = scalar_lea.vmem %s4, %s4209
      $region48: #{block_forward.3} parent=43 // pred_fallthru
        _
    $region44: #{block_forward.3} parent=5 // pred_fallthru
      _
  $region6: #{block_forward.3} parent=0 // loop_footer
    %s14 = sadd.s32 1, %s10
  $region7: #{block_forward.3} parent=0 // loop_footer_branch
    %9 = sbr.rel target = $region3
  $region8: #{block_forward.3} parent=0 // loop_exit
    _

</llo_original>
